<compile_context>
chip_gen: v6e
topology: v6e:2x2x1
jax: 0.10.0
libtpu: 0.0.40
codegen_flags: <defaults>
</compile_context>

<pallas_src>
import functools

import jax
import jax.numpy as jnp
from jax import lax
from jax.experimental import pallas as pl
from jax.experimental.pallas import tpu as pltpu


def _round_up(x, m):
    return (x + m - 1) // m * m


def _vmem_limit_bytes():
    # Explicit scoped-VMEM limit: ~3/4 of physical (96 MiB v5e/v6e, 48 MiB v7x),
    # capped at 100 MiB; safe fallback if the trace-time HW query is unavailable.
    try:
        cap = pltpu.get_tpu_info().vmem_capacity_bytes
        return int(min(cap * 3 // 4, 100 * 1024 * 1024))
    except Exception:
        return 48 * 1024 * 1024


# ---------------------------------------------------------------------------
# pass A: conv1 as one im2col matmul + per-image channel sum / sumsq
# ---------------------------------------------------------------------------
def _conv1_kernel(slab_ref, w1_ref, y_ref, st_ref):
    # (HWp, 9*Cin) x (9*Cin, Cp) -> (HWp, Cp) on the MXU (bf16 operands, f32 acc).
    y = jnp.dot(slab_ref[...], w1_ref[...], preferred_element_type=jnp.float32)
    y_ref[...] = y.astype(y_ref.dtype)
    # pad columns of the slab are zero, so they contribute 0 to the stats.
    st_ref[0:1, :] = jnp.sum(y, axis=0, keepdims=True)
    st_ref[1:2, :] = jnp.sum(y * y, axis=0, keepdims=True)


# ---------------------------------------------------------------------------
# pass B: folded BN1 + ReLU -> conv2 (9 MXU taps) + per-image sum / sumsq
# ---------------------------------------------------------------------------
def _bn_conv2_kernel(y1_ref, sc_ref, sh_ref, w2_ref, y2_ref, st_ref, ext_ref,
                     *, H, W, Wp, pad):
    HWp = H * Wp
    Cp = y2_ref.shape[-1]
    # "real column" mask (columns w >= W are zero padding of the row stride)
    col = lax.broadcasted_iota(jnp.int32, (HWp, 1), 0) % Wp
    real = col < W

    a1 = jnp.maximum(
        y1_ref[...].astype(jnp.float32) * sc_ref[...] + sh_ref[...], 0.0)
    a1 = jnp.where(real, a1, 0.0)          # keep zero-column invariant for conv2

    # flat row-padded scratch: zero halo rows + interior (all slices 8-aligned).
    # Zeroed every step so megacore sharding of the batch axis stays correct.
    ext_ref[0:pad, :] = jnp.zeros((pad, Cp), ext_ref.dtype)
    ext_ref[pad + HWp:pad + HWp + pad, :] = jnp.zeros((pad, Cp), ext_ref.dtype)
    ext_ref[pad:pad + HWp, :] = a1.astype(ext_ref.dtype)

    # 3x3 conv as 9 (HWp, Cp) x (Cp, Cp) matmuls; the +-1 column taps read the
    # zero pad column / zero halo rows, so no per-tap masks are needed.
    acc = None
    for dy in range(3):
        for dx in range(3):
            start = pad + (dy - 1) * Wp + (dx - 1)
            part = jnp.dot(ext_ref[start:start + HWp, :], w2_ref[dy * 3 + dx],
                           preferred_element_type=jnp.float32)
            acc = part if acc is None else acc + part

    y2 = jnp.where(real, acc, 0.0)         # zero pad columns (stats + pass C)
    y2_ref[...] = y2.astype(y2_ref.dtype)
    st_ref[0:1, :] = jnp.sum(y2, axis=0, keepdims=True)
    st_ref[1:2, :] = jnp.sum(y2 * y2, axis=0, keepdims=True)


# ---------------------------------------------------------------------------
# pass C: folded BN2 + ReLU -> x ; 2x2 / stride-2 max pool -> p
# ---------------------------------------------------------------------------
def _bn_relu_pool_kernel(y2_ref, sc_ref, sh_ref, x_ref, p_ref, *, H, W, Wp):
    Cp = y2_ref.shape[-1]
    Hh, Wh = H // 2, W // 2
    a = jnp.maximum(
        y2_ref[...].astype(jnp.float32) * sc_ref[...] + sh_ref[...], 0.0)
    x_ref[...] = a.reshape(H, Wp, Cp).astype(x_ref.dtype)   # lane-dense store
    # column pairs via strided sublane loads (only real columns are touched)
    even = x_ref[:, pl.ds(0, Wh, stride=2), :]
    odd = x_ref[:, pl.ds(1, Wh, stride=2), :]
    cm = jnp.maximum(even, odd)                              # (H, Wh, Cp)
    # row pairs via a contiguous sublane split (no strided value ops)
    cm2 = cm.reshape(Hh, 2 * Wh, Cp)
    p_ref[...] = jnp.maximum(cm2[:, :Wh, :], cm2[:, Wh:, :]).astype(p_ref.dtype)


# ---------------------------------------------------------------------------
# wrapper
# ---------------------------------------------------------------------------
def encoder_block_pallas(x_nchw, params, eps=1e-5):
    """EncoderBlock forward.  Returns (x, p) in NCHW (PyTorch convention)."""
    w1, b1, g1, be1, w2, b2, g2, be2 = params
    # Conv biases shift the per-channel batch mean and cancel exactly inside
    # training-mode BatchNorm, so they are folded away (never loaded).
    del b1, b2

    N, Cin, H, W = x_nchw.shape
    Cout = w1.shape[-1]
    assert H % 2 == 0 and W % 2 == 0, "MaxPool2d(2,2) needs even H and W"

    f32, bf16 = jnp.float32, jnp.bfloat16
    Cp = _round_up(Cout, 128)          # lane-dense channel padding
    Wp = _round_up(W + 1, 8)           # >= W+1 zero columns: wrap reads hit zeros
    PAD = _round_up(Wp + 1, 8)         # halo rows above/below (>= Wp+1), 8-aligned
    HWp = H * Wp
    L = HWp + 2 * PAD
    K9 = 9 * Cin
    Hh, Wh = H // 2, W // 2

    # ---- wrapper-side layout plumbing (done once by XLA) ----
    x = jnp.transpose(x_nchw, (0, 2, 3, 1)).astype(f32)           # NHWC
    xp = jnp.pad(x, ((0, 0), (1, 1), (1, 1), (0, 0)))
    slab = jnp.concatenate(
        [xp[:, dy:dy + H, dx:dx + W, :] for dy in range(3) for dx in range(3)],
        axis=-1)                                                  # (N, H, W, 9*Cin)
    slab = jnp.pad(slab, ((0, 0), (0, 0), (0, Wp - W), (0, 0)))   # zero pad columns
    slab = slab.reshape(N, HWp, K9).astype(bf16)

    w1_c = jnp.pad(w1.astype(f32).reshape(K9, Cout),
                   ((0, 0), (0, Cp - Cout))).astype(bf16)         # (9*Cin, Cp)
    w2_c = jnp.pad(w2.astype(f32),
                   ((0, 0), (0, 0), (0, Cp - Cout), (0, Cp - Cout)))
    w2_c = w2_c.reshape(9, Cp, Cp).astype(bf16)                   # per-tap

    pad_c = lambda v: jnp.pad(v.astype(f32), (0, Cp - Cout))
    g1p, be1p, g2p, be2p = pad_c(g1), pad_c(be1), pad_c(g2), pad_c(be2)

    cparams = pltpu.CompilerParams(dimension_semantics=("parallel",),
                                   vmem_limit_bytes=_vmem_limit_bytes())

    # ---- pass A: conv1 (im2col matmul) + stats ----
    y1, st1 = pl.pallas_call(
        _conv1_kernel,
        grid=(N,),
        in_specs=[pl.BlockSpec((None, HWp, K9), lambda n: (n, 0, 0)),
                  pl.BlockSpec((K9, Cp), lambda n: (0, 0))],
        out_specs=[pl.BlockSpec((None, HWp, Cp), lambda n: (n, 0, 0)),
                   pl.BlockSpec((None, 2, Cp), lambda n: (n, 0, 0))],
        out_shape=(jax.ShapeDtypeStruct((N, HWp, Cp), bf16),
                   jax.ShapeDtypeStruct((N, 2, Cp), f32)),
        compiler_params=cparams,
    )(slab, w1_c)

    def fold_bn(st, gamma, beta):
        # per-channel batch stats (biased variance), folded with gamma/beta
        cnt = jnp.float32(N * H * W)
        mean = jnp.sum(st[:, 0, :], axis=0) / cnt
        var = jnp.sum(st[:, 1, :], axis=0) / cnt - mean * mean
        scale = gamma * lax.rsqrt(var + eps)
        shift = beta - mean * scale
        return scale.reshape(1, Cp), shift.reshape(1, Cp)

    sc1, sh1 = fold_bn(st1, g1p, be1p)

    # ---- pass B: BN1+ReLU -> conv2 + stats ----
    y2, st2 = pl.pallas_call(
        functools.partial(_bn_conv2_kernel, H=H, W=W, Wp=Wp, pad=PAD),
        grid=(N,),
        in_specs=[pl.BlockSpec((None, HWp, Cp), lambda n: (n, 0, 0)),
                  pl.BlockSpec((1, Cp), lambda n: (0, 0)),
                  pl.BlockSpec((1, Cp), lambda n: (0, 0)),
                  pl.BlockSpec((9, Cp, Cp), lambda n: (0, 0, 0))],
        out_specs=[pl.BlockSpec((None, HWp, Cp), lambda n: (n, 0, 0)),
                   pl.BlockSpec((None, 2, Cp), lambda n: (n, 0, 0))],
        out_shape=(jax.ShapeDtypeStruct((N, HWp, Cp), bf16),
                   jax.ShapeDtypeStruct((N, 2, Cp), f32)),
        scratch_shapes=[pltpu.VMEM((L, Cp), bf16)],
        compiler_params=cparams,
    )(y1, sc1, sh1, w2_c)

    sc2, sh2 = fold_bn(st2, g2p, be2p)

    # ---- pass C: BN2+ReLU -> x ; maxpool -> p ----
    out_x, out_p = pl.pallas_call(
        functools.partial(_bn_relu_pool_kernel, H=H, W=W, Wp=Wp),
        grid=(N,),
        in_specs=[pl.BlockSpec((None, HWp, Cp), lambda n: (n, 0, 0)),
                  pl.BlockSpec((1, Cp), lambda n: (0, 0)),
                  pl.BlockSpec((1, Cp), lambda n: (0, 0))],
        out_specs=[pl.BlockSpec((None, H, Wp, Cp), lambda n: (n, 0, 0, 0)),
                   pl.BlockSpec((None, Hh, Wh, Cp), lambda n: (n, 0, 0, 0))],
        out_shape=(jax.ShapeDtypeStruct((N, H, Wp, Cp), f32),
                   jax.ShapeDtypeStruct((N, Hh, Wh, Cp), f32)),
        compiler_params=cparams,
    )(y2, sc2, sh2)

    # drop column / channel padding, back to NCHW
    x_out = jnp.transpose(out_x[:, :, :W, :Cout], (0, 3, 1, 2))
    p_out = jnp.transpose(out_p[..., :Cout], (0, 3, 1, 2))
    return x_out, p_out


# ---------------------------------------------------------------------------
# plain-JAX reference (identical PyTorch training-mode semantics, f32)
# ---------------------------------------------------------------------------
def encoder_block_ref(x_nchw, params, eps=1e-5):
    w1, b1, g1, be1, w2, b2, g2, be2 = params
    x = jnp.transpose(x_nchw, (0, 2, 3, 1))

    def conv(x, w, b):
        y = lax.conv_general_dilated(
            x, w, window_strides=(1, 1), padding=((1, 1), (1, 1)),
            dimension_numbers=("NHWC", "HWIO", "NHWC"))
        return y + b

    def bn_relu(x, g, b):
        mean = jnp.mean(x, axis=(0, 1, 2), keepdims=True)
        var = jnp.mean((x - mean) ** 2, axis=(0, 1, 2), keepdims=True)
        return jnp.maximum((x - mean) * lax.rsqrt(var + eps) * g + b, 0.0)

    y = bn_relu(conv(x, w1, b1), g1, be1)
    y = bn_relu(conv(y, w2, b2), g2, be2)
    p = lax.reduce_window(y, -jnp.inf, lax.max, (1, 2, 2, 1), (1, 2, 2, 1), "VALID")
    return jnp.transpose(y, (0, 3, 1, 2)), jnp.transpose(p, (0, 3, 1, 2))


if __name__ == "__main__":
    N, Cin, Cout, H, W = 2, 4, 8, 16, 16
    key = jax.random.PRNGKey(0)
    ks = jax.random.split(key, 9)

    x = jax.random.normal(ks[0], (N, Cin, H, W), jnp.float32)        # NCHW input
    # conv weights stored HWIO = (3, 3, in_c, out_c); biases / BN params (out_c,)
    w1 = 0.2 * jax.random.normal(ks[1], (3, 3, Cin, Cout), jnp.float32)
    b1 = 0.1 * jax.random.normal(ks[2], (Cout,), jnp.float32)
    g1 = 1.0 + 0.1 * jax.random.normal(ks[3], (Cout,), jnp.float32)
    be1 = 0.1 * jax.random.normal(ks[4], (Cout,), jnp.float32)
    w2 = 0.2 * jax.random.normal(ks[5], (3, 3, Cout, Cout), jnp.float32)
    b2 = 0.1 * jax.random.normal(ks[6], (Cout,), jnp.float32)
    g2 = 1.0 + 0.1 * jax.random.normal(ks[7], (Cout,), jnp.float32)
    be2 = 0.1 * jax.random.normal(ks[8], (Cout,), jnp.float32)
    params = (w1, b1, g1, be1, w2, b2, g2, be2)

    fwd = jax.jit(encoder_block_pallas)
    out_x, out_p = jax.block_until_ready(fwd(x, params))
    ref_x, ref_p = encoder_block_ref(x, params)

    assert out_x.shape == (N, Cout, H, W)
    assert out_p.shape == (N, Cout, H // 2, W // 2)
    # bf16 intermediates / MXU operands -> loose tolerance vs the f32 reference
    assert jnp.allclose(out_x, ref_x, atol=5e-2, rtol=5e-2), \
        float(jnp.max(jnp.abs(out_x - ref_x)))
    assert jnp.allclose(out_p, ref_p, atol=5e-2, rtol=5e-2), \
        float(jnp.max(jnp.abs(out_p - ref_p)))
    print("KERNEL_OK")
</pallas_src>

<mosaic_0001>
module attributes {stable_mosaic.version = 11 : i64} {
  func.func @_conv1_kernel(%arg0: i32, %arg1: memref<1x384x36xbf16, #tpu.memory_space<vmem>>, %arg2: memref<36x128xbf16, #tpu.memory_space<vmem>>, %arg3: memref<1x384x128xbf16, #tpu.memory_space<vmem>>, %arg4: memref<1x2x128xf32, #tpu.memory_space<vmem>>) attributes {dimension_semantics = [#tpu.dimension_semantics<parallel>], iteration_bounds = array<i64: 2>, scalar_prefetch = 0 : i64, scratch_operands = 0 : i64, tpu.core_type = #tpu.core_type<tc>, window_params = [{transform_indices = @transform_0, window_bounds = array<i64: 1, 384, 36>}, {pipeline_mode = #tpu.pipeline_mode<synchronous>, transform_indices = @transform_1, window_bounds = array<i64: 36, 128>}, {transform_indices = @transform_2, window_bounds = array<i64: 1, 384, 128>}, {transform_indices = @transform_3, window_bounds = array<i64: 1, 2, 128>}]} {
    %c0 = arith.constant 0 : index
    %c0_0 = arith.constant 0 : index
    %c0_1 = arith.constant 0 : index
    %0 = vector.load %arg1[%c0, %c0_0, %c0_1] : memref<1x384x36xbf16, #tpu.memory_space<vmem>>, vector<1x384x36xbf16>
    %1 = vector.shape_cast %0 : vector<1x384x36xbf16> to vector<384x36xbf16>
    %c0_2 = arith.constant 0 : index
    %c0_3 = arith.constant 0 : index
    %2 = vector.load %arg2[%c0_2, %c0_3] : memref<36x128xbf16, #tpu.memory_space<vmem>>, vector<36x128xbf16>
    %cst = arith.constant dense<0.000000e+00> : vector<384x128xf32>
    %3 = tpu.matmul %1, %2, %cst {dimension_numbers = #tpu.dot_dimension_numbers<[1], [0], [0], [1], [0, 0, 1, 1], [], []>} : vector<384x36xbf16>, vector<36x128xbf16>, vector<384x128xf32> -> vector<384x128xf32>
    %4 = arith.truncf %3 : vector<384x128xf32> to vector<384x128xbf16>
    %c0_4 = arith.constant 0 : index
    %c0_5 = arith.constant 0 : index
    %c0_6 = arith.constant 0 : index
    %5 = vector.load %arg3[%c0_4, %c0_5, %c0_6] : memref<1x384x128xbf16, #tpu.memory_space<vmem>>, vector<1x384x128xbf16>
    %6 = vector.shape_cast %5 : vector<1x384x128xbf16> to vector<384x128xbf16>
    %7 = vector.shape_cast %4 : vector<384x128xbf16> to vector<1x384x128xbf16>
    tpu.vector_store %arg3[%c0_4, %c0_5, %c0_6], %7 {strides = array<i32>} : memref<1x384x128xbf16, #tpu.memory_space<vmem>>, vector<1x384x128xbf16>,
    %cst_7 = arith.constant dense<0.000000e+00> : vector<128xf32>
    %8 = vector.multi_reduction <add>, %3, %cst_7 [0] : vector<384x128xf32> to vector<128xf32>
    %9 = vector.shape_cast %8 : vector<128xf32> to vector<1x128xf32>
    %c0_8 = arith.constant 0 : index
    %c0_9 = arith.constant 0 : index
    %c0_10 = arith.constant 0 : index
    %10 = vector.load %arg4[%c0_8, %c0_9, %c0_10] : memref<1x2x128xf32, #tpu.memory_space<vmem>>, vector<1x1x128xf32>
    %11 = vector.shape_cast %10 : vector<1x1x128xf32> to vector<1x128xf32>
    %12 = vector.shape_cast %9 : vector<1x128xf32> to vector<1x1x128xf32>
    tpu.vector_store %arg4[%c0_8, %c0_9, %c0_10], %12 {strides = array<i32>} : memref<1x2x128xf32, #tpu.memory_space<vmem>>, vector<1x1x128xf32>,
    %13 = arith.mulf %3, %3 : vector<384x128xf32>
    %cst_11 = arith.constant dense<0.000000e+00> : vector<128xf32>
    %14 = vector.multi_reduction <add>, %13, %cst_11 [0] : vector<384x128xf32> to vector<128xf32>
    %15 = vector.shape_cast %14 : vector<128xf32> to vector<1x128xf32>
    %c0_12 = arith.constant 0 : index
    %c1 = arith.constant 1 : index
    %c0_13 = arith.constant 0 : index
    %16 = vector.load %arg4[%c0_12, %c1, %c0_13] : memref<1x2x128xf32, #tpu.memory_space<vmem>>, vector<1x1x128xf32>
    %17 = vector.shape_cast %16 : vector<1x1x128xf32> to vector<1x128xf32>
    %18 = vector.shape_cast %15 : vector<1x128xf32> to vector<1x1x128xf32>
    tpu.vector_store %arg4[%c0_12, %c1, %c0_13], %18 {strides = array<i32>} : memref<1x2x128xf32, #tpu.memory_space<vmem>>, vector<1x1x128xf32>,
    return
  }
  func.func @transform_0(%arg0: i32) -> (i32, i32, i32) {
    %c0_i32 = arith.constant 0 : i32
    %c0_i32_0 = arith.constant 0 : i32
    %c0_i32_1 = arith.constant 0 : i32
    return %arg0, %c0_i32, %c0_i32_0 : i32, i32, i32
  }
  func.func @transform_1(%arg0: i32) -> (i32, i32) {
    %c0_i32 = arith.constant 0 : i32
    %c0_i32_0 = arith.constant 0 : i32
    %c0_i32_1 = arith.constant 0 : i32
    return %c0_i32, %c0_i32_0 : i32, i32
  }
  func.func @transform_2(%arg0: i32) -> (i32, i32, i32) {
    %c0_i32 = arith.constant 0 : i32
    %c0_i32_0 = arith.constant 0 : i32
    %c0_i32_1 = arith.constant 0 : i32
    return %arg0, %c0_i32, %c0_i32_0 : i32, i32, i32
  }
  func.func @transform_3(%arg0: i32) -> (i32, i32, i32) {
    %c0_i32 = arith.constant 0 : i32
    %c0_i32_0 = arith.constant 0 : i32
    %c0_i32_1 = arith.constant 0 : i32
    return %arg0, %c0_i32, %c0_i32_0 : i32, i32, i32
  }
}

module attributes {stable_mosaic.version = 11 : i64} {
  func.func @_bn_relu_pool_kernel(%arg0: i32, %arg1: memref<1x384x128xbf16, #tpu.memory_space<vmem>>, %arg2: memref<1x128xf32, #tpu.memory_space<vmem>>, %arg3: memref<1x128xf32, #tpu.memory_space<vmem>>, %arg4: memref<1x16x24x128xf32, #tpu.memory_space<vmem>>, %arg5: memref<1x8x8x128xf32, #tpu.memory_space<vmem>>) attributes {dimension_semantics = [#tpu.dimension_semantics<parallel>], iteration_bounds = array<i64: 2>, scalar_prefetch = 0 : i64, scratch_operands = 0 : i64, tpu.core_type = #tpu.core_type<tc>, window_params = [{transform_indices = @transform_0, window_bounds = array<i64: 1, 384, 128>}, {pipeline_mode = #tpu.pipeline_mode<synchronous>, transform_indices = @transform_1, window_bounds = array<i64: 1, 128>}, {pipeline_mode = #tpu.pipeline_mode<synchronous>, transform_indices = @transform_2, window_bounds = array<i64: 1, 128>}, {transform_indices = @transform_3, window_bounds = array<i64: 1, 16, 24, 128>}, {transform_indices = @transform_4, window_bounds = array<i64: 1, 8, 8, 128>}]} {
    %c0 = arith.constant 0 : index
    %c0_0 = arith.constant 0 : index
    %c0_1 = arith.constant 0 : index
    %0 = vector.load %arg1[%c0, %c0_0, %c0_1] : memref<1x384x128xbf16, #tpu.memory_space<vmem>>, vector<1x384x128xbf16>
    %1 = vector.shape_cast %0 : vector<1x384x128xbf16> to vector<384x128xbf16>
    %2 = arith.extf %1 : vector<384x128xbf16> to vector<384x128xf32>
    %c0_2 = arith.constant 0 : index
    %c0_3 = arith.constant 0 : index
    %3 = vector.load %arg2[%c0_2, %c0_3] : memref<1x128xf32, #tpu.memory_space<vmem>>, vector<1x128xf32>
    %4 = vector.broadcast %3 : vector<1x128xf32> to vector<384x128xf32>
    %5 = arith.mulf %2, %4 : vector<384x128xf32>
    %c0_4 = arith.constant 0 : index
    %c0_5 = arith.constant 0 : index
    %6 = vector.load %arg3[%c0_4, %c0_5] : memref<1x128xf32, #tpu.memory_space<vmem>>, vector<1x128xf32>
    %7 = vector.broadcast %6 : vector<1x128xf32> to vector<384x128xf32>
    %8 = arith.addf %5, %7 : vector<384x128xf32>
    %cst = arith.constant 0.000000e+00 : f32
    %9 = vector.broadcast %cst : f32 to vector<384x128xf32>
    %10 = arith.maximumf %8, %9 : vector<384x128xf32>
    %11 = vector.shape_cast %10 : vector<384x128xf32> to vector<16x24x128xf32>
    %c0_6 = arith.constant 0 : index
    %c0_7 = arith.constant 0 : index
    %c0_8 = arith.constant 0 : index
    %c0_9 = arith.constant 0 : index
    %12 = vector.load %arg4[%c0_6, %c0_7, %c0_8, %c0_9] : memref<1x16x24x128xf32, #tpu.memory_space<vmem>>, vector<1x16x24x128xf32>
    %13 = vector.shape_cast %12 : vector<1x16x24x128xf32> to vector<16x24x128xf32>
    %14 = vector.shape_cast %11 : vector<16x24x128xf32> to vector<1x16x24x128xf32>
    tpu.vector_store %arg4[%c0_6, %c0_7, %c0_8, %c0_9], %14 {strides = array<i32>} : memref<1x16x24x128xf32, #tpu.memory_space<vmem>>, vector<1x16x24x128xf32>,
    %c0_10 = arith.constant 0 : index
    %c0_11 = arith.constant 0 : index
    %c0_12 = arith.constant 0 : index
    %c0_13 = arith.constant 0 : index
    %15 = tpu.strided_load %arg4[%c0_10, %c0_11, %c0_12, %c0_13] {strides = array<i32: 1, 1, 2, 1>} : memref<1x16x24x128xf32, #tpu.memory_space<vmem>>, vector<1x16x8x128xf32>
    %16 = vector.shape_cast %15 : vector<1x16x8x128xf32> to vector<16x8x128xf32>
    %c0_14 = arith.constant 0 : index
    %c0_15 = arith.constant 0 : index
    %c1 = arith.constant 1 : index
    %c0_16 = arith.constant 0 : index
    %17 = tpu.strided_load %arg4[%c0_14, %c0_15, %c1, %c0_16] {strides = array<i32: 1, 1, 2, 1>} : memref<1x16x24x128xf32, #tpu.memory_space<vmem>>, vector<1x16x8x128xf32>
    %18 = vector.shape_cast %17 : vector<1x16x8x128xf32> to vector<16x8x128xf32>
    %19 = arith.maximumf %16, %18 : vector<16x8x128xf32>
    %20 = vector.shape_cast %19 : vector<16x8x128xf32> to vector<8x16x128xf32>
    %21 = vector.extract_strided_slice %20 {offsets = [0, 0, 0], sizes = [8, 8, 128], strides = [1, 1, 1]} : vector<8x16x128xf32> to vector<8x8x128xf32>
    %22 = vector.extract_strided_slice %20 {offsets = [0, 8, 0], sizes = [8, 8, 128], strides = [1, 1, 1]} : vector<8x16x128xf32> to vector<8x8x128xf32>
    %23 = arith.maximumf %21, %22 : vector<8x8x128xf32>
    %c0_17 = arith.constant 0 : index
    %c0_18 = arith.constant 0 : index
    %c0_19 = arith.constant 0 : index
    %c0_20 = arith.constant 0 : index
    %24 = vector.load %arg5[%c0_17, %c0_18, %c0_19, %c0_20] : memref<1x8x8x128xf32, #tpu.memory_space<vmem>>, vector<1x8x8x128xf32>
    %25 = vector.shape_cast %24 : vector<1x8x8x128xf32> to vector<8x8x128xf32>
    %26 = vector.shape_cast %23 : vector<8x8x128xf32> to vector<1x8x8x128xf32>
    tpu.vector_store %arg5[%c0_17, %c0_18, %c0_19, %c0_20], %26 {strides = array<i32>} : memref<1x8x8x128xf32, #tpu.memory_space<vmem>>, vector<1x8x8x128xf32>,
    return
  }
  func.func @transform_0(%arg0: i32) -> (i32, i32, i32) {
    %c0_i32 = arith.constant 0 : i32
    %c0_i32_0 = arith.constant 0 : i32
    %c0_i32_1 = arith.constant 0 : i32
    return %arg0, %c0_i32, %c0_i32_0 : i32, i32, i32
  }
  func.func @transform_1(%arg0: i32) -> (i32, i32) {
    %c0_i32 = arith.constant 0 : i32
    %c0_i32_0 = arith.constant 0 : i32
    %c0_i32_1 = arith.constant 0 : i32
    return %c0_i32, %c0_i32_0 : i32, i32
  }
  func.func @transform_2(%arg0: i32) -> (i32, i32) {
    %c0_i32 = arith.constant 0 : i32
    %c0_i32_0 = arith.constant 0 : i32
    %c0_i32_1 = arith.constant 0 : i32
    return %c0_i32, %c0_i32_0 : i32, i32
  }
  func.func @transform_3(%arg0: i32) -> (i32, i32, i32, i32) {
    %c0_i32 = arith.constant 0 : i32
    %c0_i32_0 = arith.constant 0 : i32
    %c0_i32_1 = arith.constant 0 : i32
    %c0_i32_2 = arith.constant 0 : i32
    return %arg0, %c0_i32, %c0_i32_0, %c0_i32_1 : i32, i32, i32, i32
  }
  func.func @transform_4(%arg0: i32) -> (i32, i32, i32, i32) {
    %c0_i32 = arith.constant 0 : i32
    %c0_i32_0 = arith.constant 0 : i32
    %c0_i32_1 = arith.constant 0 : i32
    %c0_i32_2 = arith.constant 0 : i32
    return %arg0, %c0_i32, %c0_i32_0, %c0_i32_1 : i32, i32, i32, i32
  }
}

module attributes {stable_mosaic.version = 11 : i64} {
  func.func @_bn_conv2_kernel(%arg0: i32, %arg1: memref<1x384x128xbf16, #tpu.memory_space<vmem>>, %arg2: memref<1x128xf32, #tpu.memory_space<vmem>>, %arg3: memref<1x128xf32, #tpu.memory_space<vmem>>, %arg4: memref<9x128x128xbf16, #tpu.memory_space<vmem>>, %arg5: memref<1x384x128xbf16, #tpu.memory_space<vmem>>, %arg6: memref<1x2x128xf32, #tpu.memory_space<vmem>>, %arg7: memref<448x128xbf16, #tpu.memory_space<vmem>>) attributes {dimension_semantics = [#tpu.dimension_semantics<parallel>], iteration_bounds = array<i64: 2>, scalar_prefetch = 0 : i64, scratch_operands = 1 : i64, tpu.core_type = #tpu.core_type<tc>, window_params = [{transform_indices = @transform_0, window_bounds = array<i64: 1, 384, 128>}, {pipeline_mode = #tpu.pipeline_mode<synchronous>, transform_indices = @transform_1, window_bounds = array<i64: 1, 128>}, {pipeline_mode = #tpu.pipeline_mode<synchronous>, transform_indices = @transform_2, window_bounds = array<i64: 1, 128>}, {pipeline_mode = #tpu.pipeline_mode<synchronous>, transform_indices = @transform_3, window_bounds = array<i64: 9, 128, 128>}, {transform_indices = @transform_4, window_bounds = array<i64: 1, 384, 128>}, {transform_indices = @transform_5, window_bounds = array<i64: 1, 2, 128>}]} {
    %0 = tpu.iota {dimensions = array<i32: 0>} : vector<384x1xi32>
    %c24_i32 = arith.constant 24 : i32
    %c0_i32 = arith.constant 0 : i32
    %1 = arith.cmpi eq, %c24_i32, %c0_i32 : i32
    %c1_i32 = arith.constant 1 : i32
    %2 = arith.select %1, %c1_i32, %c24_i32 : i32
    %3 = vector.broadcast %2 : i32 to vector<384x1xi32>
    %4 = arith.remsi %0, %3 : vector<384x1xi32>
    %c0_i32_0 = arith.constant 0 : i32
    %5 = vector.broadcast %c0_i32_0 : i32 to vector<384x1xi32>
    %6 = arith.cmpi ne, %4, %5 : vector<384x1xi32>
    %c0_i32_1 = arith.constant 0 : i32
    %7 = vector.broadcast %c0_i32_1 : i32 to vector<384x1xi32>
    %8 = arith.cmpi slt, %4, %7 : vector<384x1xi32>
    %c0_i32_2 = arith.constant 0 : i32
    %9 = arith.cmpi slt, %2, %c0_i32_2 : i32
    %10 = vector.broadcast %9 : i1 to vector<384x1xi1>
    %11 = vector.broadcast %10 : vector<384x1xi1> to vector<384x1xi1>
    %12 = arith.xori %8, %11 : vector<384x1xi1>
    %13 = arith.andi %12, %6 : vector<384x1xi1>
    %14 = vector.broadcast %2 : i32 to vector<384x1xi32>
    %15 = arith.addi %4, %14 : vector<384x1xi32>
    %16 = arith.select %13, %15, %4 : vector<384x1xi1>, vector<384x1xi32>
    %c16_i32 = arith.constant 16 : i32
    %17 = vector.broadcast %c16_i32 : i32 to vector<384x1xi32>
    %18 = arith.cmpi slt, %16, %17 : vector<384x1xi32>
    %c0 = arith.constant 0 : index
    %c0_3 = arith.constant 0 : index
    %c0_4 = arith.constant 0 : index
    %19 = vector.load %arg1[%c0, %c0_3, %c0_4] : memref<1x384x128xbf16, #tpu.memory_space<vmem>>, vector<1x384x128xbf16>
    %20 = vector.shape_cast %19 : vector<1x384x128xbf16> to vector<384x128xbf16>
    %21 = arith.extf %20 : vector<384x128xbf16> to vector<384x128xf32>
    %c0_5 = arith.constant 0 : index
    %c0_6 = arith.constant 0 : index
    %22 = vector.load %arg2[%c0_5, %c0_6] : memref<1x128xf32, #tpu.memory_space<vmem>>, vector<1x128xf32>
    %23 = vector.broadcast %22 : vector<1x128xf32> to vector<384x128xf32>
    %24 = arith.mulf %21, %23 : vector<384x128xf32>
    %c0_7 = arith.constant 0 : index
    %c0_8 = arith.constant 0 : index
    %25 = vector.load %arg3[%c0_7, %c0_8] : memref<1x128xf32, #tpu.memory_space<vmem>>, vector<1x128xf32>
    %26 = vector.broadcast %25 : vector<1x128xf32> to vector<384x128xf32>
    %27 = arith.addf %24, %26 : vector<384x128xf32>
    %cst = arith.constant 0.000000e+00 : f32
    %28 = vector.broadcast %cst : f32 to vector<384x128xf32>
    %29 = arith.maximumf %27, %28 : vector<384x128xf32>
    %cst_9 = arith.constant 0.000000e+00 : f32
    %30 = vector.shape_cast %18 : vector<384x1xi1> to vector<384x1xi1>
    %31 = vector.broadcast %30 : vector<384x1xi1> to vector<384x128xi1>
    %32 = vector.broadcast %cst_9 : f32 to vector<384x128xf32>
    %33 = arith.select %31, %29, %32 : vector<384x128xi1>, vector<384x128xf32>
    %cst_10 = arith.constant 0.000000e+00 : bf16
    %34 = vector.broadcast %cst_10 : bf16 to vector<32x128xbf16>
    %c0_11 = arith.constant 0 : index
    %c0_12 = arith.constant 0 : index
    %35 = vector.load %arg7[%c0_11, %c0_12] : memref<448x128xbf16, #tpu.memory_space<vmem>>, vector<32x128xbf16>
    tpu.vector_store %arg7[%c0_11, %c0_12], %34 {strides = array<i32>} : memref<448x128xbf16, #tpu.memory_space<vmem>>, vector<32x128xbf16>,
    %cst_13 = arith.constant 0.000000e+00 : bf16
    %36 = vector.broadcast %cst_13 : bf16 to vector<32x128xbf16>
    %c416 = arith.constant 416 : index
    %c0_14 = arith.constant 0 : index
    %37 = vector.load %arg7[%c416, %c0_14] : memref<448x128xbf16, #tpu.memory_space<vmem>>, vector<32x128xbf16>
    tpu.vector_store %arg7[%c416, %c0_14], %36 {strides = array<i32>} : memref<448x128xbf16, #tpu.memory_space<vmem>>, vector<32x128xbf16>,
    %38 = arith.truncf %33 : vector<384x128xf32> to vector<384x128xbf16>
    %c32 = arith.constant 32 : index
    %c0_15 = arith.constant 0 : index
    %39 = vector.load %arg7[%c32, %c0_15] : memref<448x128xbf16, #tpu.memory_space<vmem>>, vector<384x128xbf16>
    tpu.vector_store %arg7[%c32, %c0_15], %38 {strides = array<i32>} : memref<448x128xbf16, #tpu.memory_space<vmem>>, vector<384x128xbf16>,
    %c7 = arith.constant 7 : index
    %c0_16 = arith.constant 0 : index
    %40 = vector.load %arg7[%c7, %c0_16] : memref<448x128xbf16, #tpu.memory_space<vmem>>, vector<384x128xbf16>
    %c0_17 = arith.constant 0 : index
    %c0_18 = arith.constant 0 : index
    %c0_19 = arith.constant 0 : index
    %41 = vector.load %arg4[%c0_17, %c0_18, %c0_19] : memref<9x128x128xbf16, #tpu.memory_space<vmem>>, vector<1x128x128xbf16>
    %42 = vector.shape_cast %41 : vector<1x128x128xbf16> to vector<128x128xbf16>
    %cst_20 = arith.constant dense<0.000000e+00> : vector<384x128xf32>
    %43 = tpu.matmul %40, %42, %cst_20 {dimension_numbers = #tpu.dot_dimension_numbers<[1], [0], [0], [1], [0, 0, 1, 1], [], []>} : vector<384x128xbf16>, vector<128x128xbf16>, vector<384x128xf32> -> vector<384x128xf32>
    %c8 = arith.constant 8 : index
    %c0_21 = arith.constant 0 : index
    %44 = vector.load %arg7[%c8, %c0_21] : memref<448x128xbf16, #tpu.memory_space<vmem>>, vector<384x128xbf16>
    %c1 = arith.constant 1 : index
    %c0_22 = arith.constant 0 : index
    %c0_23 = arith.constant 0 : index
    %45 = vector.load %arg4[%c1, %c0_22, %c0_23] : memref<9x128x128xbf16, #tpu.memory_space<vmem>>, vector<1x128x128xbf16>
    %46 = vector.shape_cast %45 : vector<1x128x128xbf16> to vector<128x128xbf16>
    %cst_24 = arith.constant dense<0.000000e+00> : vector<384x128xf32>
    %47 = tpu.matmul %44, %46, %cst_24 {dimension_numbers = #tpu.dot_dimension_numbers<[1], [0], [0], [1], [0, 0, 1, 1], [], []>} : vector<384x128xbf16>, vector<128x128xbf16>, vector<384x128xf32> -> vector<384x128xf32>
    %48 = arith.addf %43, %47 : vector<384x128xf32>
    %c9 = arith.constant 9 : index
    %c0_25 = arith.constant 0 : index
    %49 = vector.load %arg7[%c9, %c0_25] : memref<448x128xbf16, #tpu.memory_space<vmem>>, vector<384x128xbf16>
    %c2 = arith.constant 2 : index
    %c0_26 = arith.constant 0 : index
    %c0_27 = arith.constant 0 : index
    %50 = vector.load %arg4[%c2, %c0_26, %c0_27] : memref<9x128x128xbf16, #tpu.memory_space<vmem>>, vector<1x128x128xbf16>
    %51 = vector.shape_cast %50 : vector<1x128x128xbf16> to vector<128x128xbf16>
    %cst_28 = arith.constant dense<0.000000e+00> : vector<384x128xf32>
    %52 = tpu.matmul %49, %51, %cst_28 {dimension_numbers = #tpu.dot_dimension_numbers<[1], [0], [0], [1], [0, 0, 1, 1], [], []>} : vector<384x128xbf16>, vector<128x128xbf16>, vector<384x128xf32> -> vector<384x128xf32>
    %53 = arith.addf %48, %52 : vector<384x128xf32>
    %c31 = arith.constant 31 : index
    %c0_29 = arith.constant 0 : index
    %54 = vector.load %arg7[%c31, %c0_29] : memref<448x128xbf16, #tpu.memory_space<vmem>>, vector<384x128xbf16>
    %c3 = arith.constant 3 : index
    %c0_30 = arith.constant 0 : index
    %c0_31 = arith.constant 0 : index
    %55 = vector.load %arg4[%c3, %c0_30, %c0_31] : memref<9x128x128xbf16, #tpu.memory_space<vmem>>, vector<1x128x128xbf16>
    %56 = vector.shape_cast %55 : vector<1x128x128xbf16> to vector<128x128xbf16>
    %cst_32 = arith.constant dense<0.000000e+00> : vector<384x128xf32>
    %57 = tpu.matmul %54, %56, %cst_32 {dimension_numbers = #tpu.dot_dimension_numbers<[1], [0], [0], [1], [0, 0, 1, 1], [], []>} : vector<384x128xbf16>, vector<128x128xbf16>, vector<384x128xf32> -> vector<384x128xf32>
    %58 = arith.addf %53, %57 : vector<384x128xf32>
    %c32_33 = arith.constant 32 : index
    %c0_34 = arith.constant 0 : index
    %59 = vector.load %arg7[%c32_33, %c0_34] : memref<448x128xbf16, #tpu.memory_space<vmem>>, vector<384x128xbf16>
    %c4 = arith.constant 4 : index
    %c0_35 = arith.constant 0 : index
    %c0_36 = arith.constant 0 : index
    %60 = vector.load %arg4[%c4, %c0_35, %c0_36] : memref<9x128x128xbf16, #tpu.memory_space<vmem>>, vector<1x128x128xbf16>
    %61 = vector.shape_cast %60 : vector<1x128x128xbf16> to vector<128x128xbf16>
    %cst_37 = arith.constant dense<0.000000e+00> : vector<384x128xf32>
    %62 = tpu.matmul %59, %61, %cst_37 {dimension_numbers = #tpu.dot_dimension_numbers<[1], [0], [0], [1], [0, 0, 1, 1], [], []>} : vector<384x128xbf16>, vector<128x128xbf16>, vector<384x128xf32> -> vector<384x128xf32>
    %63 = arith.addf %58, %62 : vector<384x128xf32>
    %c33 = arith.constant 33 : index
    %c0_38 = arith.constant 0 : index
    %64 = vector.load %arg7[%c33, %c0_38] : memref<448x128xbf16, #tpu.memory_space<vmem>>, vector<384x128xbf16>
    %c5 = arith.constant 5 : index
    %c0_39 = arith.constant 0 : index
    %c0_40 = arith.constant 0 : index
    %65 = vector.load %arg4[%c5, %c0_39, %c0_40] : memref<9x128x128xbf16, #tpu.memory_space<vmem>>, vector<1x128x128xbf16>
    %66 = vector.shape_cast %65 : vector<1x128x128xbf16> to vector<128x128xbf16>
    %cst_41 = arith.constant dense<0.000000e+00> : vector<384x128xf32>
    %67 = tpu.matmul %64, %66, %cst_41 {dimension_numbers = #tpu.dot_dimension_numbers<[1], [0], [0], [1], [0, 0, 1, 1], [], []>} : vector<384x128xbf16>, vector<128x128xbf16>, vector<384x128xf32> -> vector<384x128xf32>
    %68 = arith.addf %63, %67 : vector<384x128xf32>
    %c55 = arith.constant 55 : index
    %c0_42 = arith.constant 0 : index
    %69 = vector.load %arg7[%c55, %c0_42] : memref<448x128xbf16, #tpu.memory_space<vmem>>, vector<384x128xbf16>
    %c6 = arith.constant 6 : index
    %c0_43 = arith.constant 0 : index
    %c0_44 = arith.constant 0 : index
    %70 = vector.load %arg4[%c6, %c0_43, %c0_44] : memref<9x128x128xbf16, #tpu.memory_space<vmem>>, vector<1x128x128xbf16>
    %71 = vector.shape_cast %70 : vector<1x128x128xbf16> to vector<128x128xbf16>
    %cst_45 = arith.constant dense<0.000000e+00> : vector<384x128xf32>
    %72 = tpu.matmul %69, %71, %cst_45 {dimension_numbers = #tpu.dot_dimension_numbers<[1], [0], [0], [1], [0, 0, 1, 1], [], []>} : vector<384x128xbf16>, vector<128x128xbf16>, vector<384x128xf32> -> vector<384x128xf32>
    %73 = arith.addf %68, %72 : vector<384x128xf32>
    %c56 = arith.constant 56 : index
    %c0_46 = arith.constant 0 : index
    %74 = vector.load %arg7[%c56, %c0_46] : memref<448x128xbf16, #tpu.memory_space<vmem>>, vector<384x128xbf16>
    %c7_47 = arith.constant 7 : index
    %c0_48 = arith.constant 0 : index
    %c0_49 = arith.constant 0 : index
    %75 = vector.load %arg4[%c7_47, %c0_48, %c0_49] : memref<9x128x128xbf16, #tpu.memory_space<vmem>>, vector<1x128x128xbf16>
    %76 = vector.shape_cast %75 : vector<1x128x128xbf16> to vector<128x128xbf16>
    %cst_50 = arith.constant dense<0.000000e+00> : vector<384x128xf32>
    %77 = tpu.matmul %74, %76, %cst_50 {dimension_numbers = #tpu.dot_dimension_numbers<[1], [0], [0], [1], [0, 0, 1, 1], [], []>} : vector<384x128xbf16>, vector<128x128xbf16>, vector<384x128xf32> -> vector<384x128xf32>
    %78 = arith.addf %73, %77 : vector<384x128xf32>
    %c57 = arith.constant 57 : index
    %c0_51 = arith.constant 0 : index
    %79 = vector.load %arg7[%c57, %c0_51] : memref<448x128xbf16, #tpu.memory_space<vmem>>, vector<384x128xbf16>
    %c8_52 = arith.constant 8 : index
    %c0_53 = arith.constant 0 : index
    %c0_54 = arith.constant 0 : index
    %80 = vector.load %arg4[%c8_52, %c0_53, %c0_54] : memref<9x128x128xbf16, #tpu.memory_space<vmem>>, vector<1x128x128xbf16>
    %81 = vector.shape_cast %80 : vector<1x128x128xbf16> to vector<128x128xbf16>
    %cst_55 = arith.constant dense<0.000000e+00> : vector<384x128xf32>
    %82 = tpu.matmul %79, %81, %cst_55 {dimension_numbers = #tpu.dot_dimension_numbers<[1], [0], [0], [1], [0, 0, 1, 1], [], []>} : vector<384x128xbf16>, vector<128x128xbf16>, vector<384x128xf32> -> vector<384x128xf32>
    %83 = arith.addf %78, %82 : vector<384x128xf32>
    %cst_56 = arith.constant 0.000000e+00 : f32
    %84 = vector.shape_cast %18 : vector<384x1xi1> to vector<384x1xi1>
    %85 = vector.broadcast %84 : vector<384x1xi1> to vector<384x128xi1>
    %86 = vector.broadcast %cst_56 : f32 to vector<384x128xf32>
    %87 = arith.select %85, %83, %86 : vector<384x128xi1>, vector<384x128xf32>
    %88 = arith.truncf %87 : vector<384x128xf32> to vector<384x128xbf16>
    %c0_57 = arith.constant 0 : index
    %c0_58 = arith.constant 0 : index
    %c0_59 = arith.constant 0 : index
    %89 = vector.load %arg5[%c0_57, %c0_58, %c0_59] : memref<1x384x128xbf16, #tpu.memory_space<vmem>>, vector<1x384x128xbf16>
    %90 = vector.shape_cast %89 : vector<1x384x128xbf16> to vector<384x128xbf16>
    %91 = vector.shape_cast %88 : vector<384x128xbf16> to vector<1x384x128xbf16>
    tpu.vector_store %arg5[%c0_57, %c0_58, %c0_59], %91 {strides = array<i32>} : memref<1x384x128xbf16, #tpu.memory_space<vmem>>, vector<1x384x128xbf16>,
    %cst_60 = arith.constant dense<0.000000e+00> : vector<128xf32>
    %92 = vector.multi_reduction <add>, %87, %cst_60 [0] : vector<384x128xf32> to vector<128xf32>
    %93 = vector.shape_cast %92 : vector<128xf32> to vector<1x128xf32>
    %c0_61 = arith.constant 0 : index
    %c0_62 = arith.constant 0 : index
    %c0_63 = arith.constant 0 : index
    %94 = vector.load %arg6[%c0_61, %c0_62, %c0_63] : memref<1x2x128xf32, #tpu.memory_space<vmem>>, vector<1x1x128xf32>
    %95 = vector.shape_cast %94 : vector<1x1x128xf32> to vector<1x128xf32>
    %96 = vector.shape_cast %93 : vector<1x128xf32> to vector<1x1x128xf32>
    tpu.vector_store %arg6[%c0_61, %c0_62, %c0_63], %96 {strides = array<i32>} : memref<1x2x128xf32, #tpu.memory_space<vmem>>, vector<1x1x128xf32>,
    %97 = arith.mulf %87, %87 : vector<384x128xf32>
    %cst_64 = arith.constant dense<0.000000e+00> : vector<128xf32>
    %98 = vector.multi_reduction <add>, %97, %cst_64 [0] : vector<384x128xf32> to vector<128xf32>
    %99 = vector.shape_cast %98 : vector<128xf32> to vector<1x128xf32>
    %c0_65 = arith.constant 0 : index
    %c1_66 = arith.constant 1 : index
    %c0_67 = arith.constant 0 : index
    %100 = vector.load %arg6[%c0_65, %c1_66, %c0_67] : memref<1x2x128xf32, #tpu.memory_space<vmem>>, vector<1x1x128xf32>
    %101 = vector.shape_cast %100 : vector<1x1x128xf32> to vector<1x128xf32>
    %102 = vector.shape_cast %99 : vector<1x128xf32> to vector<1x1x128xf32>
    tpu.vector_store %arg6[%c0_65, %c1_66, %c0_67], %102 {strides = array<i32>} : memref<1x2x128xf32, #tpu.memory_space<vmem>>, vector<1x1x128xf32>,
    return
  }
  func.func @transform_0(%arg0: i32) -> (i32, i32, i32) {
    %c0_i32 = arith.constant 0 : i32
    %c0_i32_0 = arith.constant 0 : i32
    %c0_i32_1 = arith.constant 0 : i32
    return %arg0, %c0_i32, %c0_i32_0 : i32, i32, i32
  }
  func.func @transform_1(%arg0: i32) -> (i32, i32) {
    %c0_i32 = arith.constant 0 : i32
    %c0_i32_0 = arith.constant 0 : i32
    %c0_i32_1 = arith.constant 0 : i32
    return %c0_i32, %c0_i32_0 : i32, i32
  }
  func.func @transform_2(%arg0: i32) -> (i32, i32) {
    %c0_i32 = arith.constant 0 : i32
    %c0_i32_0 = arith.constant 0 : i32
    %c0_i32_1 = arith.constant 0 : i32
    return %c0_i32, %c0_i32_0 : i32, i32
  }
  func.func @transform_3(%arg0: i32) -> (i32, i32, i32) {
    %c0_i32 = arith.constant 0 : i32
    %c0_i32_0 = arith.constant 0 : i32
    %c0_i32_1 = arith.constant 0 : i32
    %c0_i32_2 = arith.constant 0 : i32
    return %c0_i32, %c0_i32_0, %c0_i32_1 : i32, i32, i32
  }
  func.func @transform_4(%arg0: i32) -> (i32, i32, i32) {
    %c0_i32 = arith.constant 0 : i32
    %c0_i32_0 = arith.constant 0 : i32
    %c0_i32_1 = arith.constant 0 : i32
    return %arg0, %c0_i32, %c0_i32_0 : i32, i32, i32
  }
  func.func @transform_5(%arg0: i32) -> (i32, i32, i32) {
    %c0_i32 = arith.constant 0 : i32
    %c0_i32_0 = arith.constant 0 : i32
    %c0_i32_1 = arith.constant 0 : i32
    return %arg0, %c0_i32, %c0_i32_0 : i32, i32, i32
  }
}

</mosaic_0001>

<llo_original>
// kernel: encoder_block_pallas.5
$region0: #{encoder_block_pallas.5}
  #allocation0 [shape = 'u32[]', space=smem, size = 0x4, offset = 0x4, fixed_abs, tag = 'smem constant byte address 0x4 - core index']
  #allocation1 [shape = 'u32[144,128]{1,0:T(1,128)}', space=vmem, size = 0x12000, scoped, tag = 'internal scratch']
  %s0 = inlined_call_operand.vmem [shape: bf16[2,384,128], index: 0, kind: input, shape index: {}]
  %s1 = inlined_call_operand.vmem [shape: f32[1,128], index: 1, kind: input, shape index: {}]
  %s2 = inlined_call_operand.vmem [shape: f32[1,128], index: 2, kind: input, shape index: {}]
  %s3 = inlined_call_operand.vmem [shape: f32[2,16,24,128], index: 3, kind: output, shape index: {0}]
  %s4 = inlined_call_operand.vmem [shape: f32[2,8,8,128], index: 4, kind: output, shape index: {1}]
  %5 = xla_tuple %s3, %s4
  %s6 = sld [smem:[#allocation0]]
  $region53: #{encoder_block_pallas.5} parent=0
    _
  %s8 = ssub.s32 1, %s6
  %s9 = scalar_select 0, %s8, %s6
  loop: start=0, step=1, limit=4
  $region2: #{encoder_block_pallas.5} parent=0 // loop_pre_header
    _
  $region3: #{encoder_block_pallas.5} parent=0 // loop_header
    %s11 = sphi 0, %s15
    %p12 = scmp.ge.s32.totalorder %s11, 4
    %s21 = sphi 0, %s23
    %s24 = sphi 0, %s21
    %s25 = sphi 0, %s24
    %s41 = sphi 0, %s25
    %s45 = sphi 0, %s45
    %s47 = sphi 0, %s45
    %s48 = sphi 0, %s47
    %s62 = sphi 0, %s48
    %s66 = sphi 0, %s66
    %s68 = sphi 0, %s66
    %s69 = sphi 0, %s68
    %s83 = sphi 0, %s69
    %s89 = sphi 0, %s91
    %s92 = sphi 0, %s89
    %s93 = sphi 0, %s92
    %s109 = sphi 0, %s93
    %s115 = sphi 0, %s117
    %s118 = sphi 0, %s115
    %s119 = sphi 0, %s118
    %s135 = sphi 0, %s119
  $region4: #{encoder_block_pallas.5} parent=0 // loop_header_branch
    %14 = sbr.rel (%p12) target = $region8
  $region5: #{encoder_block_pallas.5} parent=0 // loop_body
    %s16 = ssub.s32 %s11, 1
    %s17 = ssub.s32 %s11, 2
    %s18 = sadd.s32 %s11, 1
    %s19 = ssub.s32 %s11, %s18
    %p20 = scmp.eq.s32.totalorder %s19, 0
    %s22 = sadd.s32 %s21, 1
    %s23 = scalar_select %p20, %s21, %s22
    %p26 = pneg %p20
    %p27 = scmp.eq.s32.totalorder %s11, 1
    %p28 = por %p26, %p27
    %p29 = scmp.ne.s32.totalorder %s21, %s24
    %p30 = scmp.eq.s32.totalorder %s11, 0
    %p31 = por %p29, %p30
    %p32 = scmp.ne.s32.totalorder %s21, %s24
    %p33 = scmp.eq.s32.totalorder %s16, 1
    %p34 = por %p32, %p33
    %p35 = scmp.ne.s32.totalorder %s24, %s25
    %p36 = scmp.eq.s32.totalorder %s16, 0
    %p37 = por %p35, %p36
    %p38 = scmp.ne.s32.totalorder %s24, %s25
    %p39 = scmp.eq.s32.totalorder %s17, 1
    %p40 = por %p38, %p39
    %p42 = scmp.ne.s32.totalorder %s25, %s41
    %p43 = scmp.eq.s32.totalorder %s17, 0
    %p44 = por %p42, %p43
    %s46 = sadd.s32 %s45, 1
    %p49 = scmp.eq.s32.totalorder %s11, 1
    %p50 = scmp.ne.s32.totalorder %s45, %s47
    %p51 = scmp.eq.s32.totalorder %s11, 0
    %p52 = por %p50, %p51
    %p53 = scmp.ne.s32.totalorder %s45, %s47
    %p54 = scmp.eq.s32.totalorder %s16, 1
    %p55 = por %p53, %p54
    %p56 = scmp.ne.s32.totalorder %s47, %s48
    %p57 = scmp.eq.s32.totalorder %s16, 0
    %p58 = por %p56, %p57
    %p59 = scmp.ne.s32.totalorder %s47, %s48
    %p60 = scmp.eq.s32.totalorder %s17, 1
    %p61 = por %p59, %p60
    %p63 = scmp.ne.s32.totalorder %s48, %s62
    %p64 = scmp.eq.s32.totalorder %s17, 0
    %p65 = por %p63, %p64
    %s67 = sadd.s32 %s66, 1
    %p70 = scmp.eq.s32.totalorder %s11, 1
    %p71 = scmp.ne.s32.totalorder %s66, %s68
    %p72 = scmp.eq.s32.totalorder %s11, 0
    %p73 = por %p71, %p72
    %p74 = scmp.ne.s32.totalorder %s66, %s68
    %p75 = scmp.eq.s32.totalorder %s16, 1
    %p76 = por %p74, %p75
    %p77 = scmp.ne.s32.totalorder %s68, %s69
    %p78 = scmp.eq.s32.totalorder %s16, 0
    %p79 = por %p77, %p78
    %p80 = scmp.ne.s32.totalorder %s68, %s69
    %p81 = scmp.eq.s32.totalorder %s17, 1
    %p82 = por %p80, %p81
    %p84 = scmp.ne.s32.totalorder %s69, %s83
    %p85 = scmp.eq.s32.totalorder %s17, 0
    %p86 = por %p84, %p85
    %s87 = ssub.s32 %s11, %s18
    %p88 = scmp.eq.s32.totalorder %s87, 0
    %s90 = sadd.s32 %s89, 1
    %s91 = scalar_select %p88, %s89, %s90
    %p94 = pneg %p88
    %p95 = scmp.eq.s32.totalorder %s11, 1
    %p96 = por %p94, %p95
    %p97 = scmp.ne.s32.totalorder %s89, %s92
    %p98 = scmp.eq.s32.totalorder %s11, 0
    %p99 = por %p97, %p98
    %p100 = scmp.ne.s32.totalorder %s89, %s92
    %p101 = scmp.eq.s32.totalorder %s16, 1
    %p102 = por %p100, %p101
    %p103 = scmp.ne.s32.totalorder %s92, %s93
    %p104 = scmp.eq.s32.totalorder %s16, 0
    %p105 = por %p103, %p104
    %p106 = scmp.ne.s32.totalorder %s92, %s93
    %p107 = scmp.eq.s32.totalorder %s17, 1
    %p108 = por %p106, %p107
    %p110 = scmp.ne.s32.totalorder %s93, %s109
    %p111 = scmp.eq.s32.totalorder %s17, 0
    %p112 = por %p110, %p111
    %s113 = ssub.s32 %s11, %s18
    %p114 = scmp.eq.s32.totalorder %s113, 0
    %s116 = sadd.s32 %s115, 1
    %s117 = scalar_select %p114, %s115, %s116
    %p120 = pneg %p114
    %p121 = scmp.eq.s32.totalorder %s11, 1
    %p122 = por %p120, %p121
    %p123 = scmp.ne.s32.totalorder %s115, %s118
    %p124 = scmp.eq.s32.totalorder %s11, 0
    %p125 = por %p123, %p124
    %p126 = scmp.ne.s32.totalorder %s115, %s118
    %p127 = scmp.eq.s32.totalorder %s16, 1
    %p128 = por %p126, %p127
    %p129 = scmp.ne.s32.totalorder %s118, %s119
    %p130 = scmp.eq.s32.totalorder %s16, 0
    %p131 = por %p129, %p130
    %p132 = scmp.ne.s32.totalorder %s118, %s119
    %p133 = scmp.eq.s32.totalorder %s17, 1
    %p134 = por %p132, %p133
    %p136 = scmp.ne.s32.totalorder %s119, %s135
    %p137 = scmp.eq.s32.totalorder %s17, 0
    %p138 = por %p136, %p137
    %p139 = scmp.le.s32.totalorder 1, %s11
    %p140 = scmp.lt.s32.totalorder %s11, 3
    %p141 = pnand %p139, %p140
    %p142 = pneg %p141
    // Predicated region
    $region9: #{encoder_block_pallas.5} parent=5 // pred_check
      _
    $region10: #{encoder_block_pallas.5} parent=5 // pred_check_branch
      %144 = sbr.rel (%p141) target = $region12
    $region11: #{encoder_block_pallas.5} parent=5 // pred_region
      %s145 = ssub.s32 %s11, 1
      // Predicated region
      $region13: #{encoder_block_pallas.5} parent=11 // pred_check
        %p146 = pneg %p58
      $region14: #{encoder_block_pallas.5} parent=11 // pred_check_branch
        %148 = sbr.rel (%p146) target = $region16
      $region15: #{encoder_block_pallas.5} parent=11 // pred_region
        _
      $region16: #{encoder_block_pallas.5} parent=11 // pred_fallthru
        _
      // Predicated region
      $region17: #{encoder_block_pallas.5} parent=11 // pred_check
        %p149 = pneg %p79
      $region18: #{encoder_block_pallas.5} parent=11 // pred_check_branch
        %151 = sbr.rel (%p149) target = $region20
      $region19: #{encoder_block_pallas.5} parent=11 // pred_region
        _
      $region20: #{encoder_block_pallas.5} parent=11 // pred_fallthru
        _
    $region12: #{encoder_block_pallas.5} parent=5 // pred_fallthru
      _
    %p152 = scmp.lt.s32.totalorder %s11, 2
    // Predicated region
    $region21: #{encoder_block_pallas.5} parent=5 // pred_check
      %p153 = pneg %p152
    $region22: #{encoder_block_pallas.5} parent=5 // pred_check_branch
      %155 = sbr.rel (%p153) target = $region24
    $region23: #{encoder_block_pallas.5} parent=5 // pred_region
      // Predicated region
      $region25: #{encoder_block_pallas.5} parent=23 // pred_check
        %p156 = pneg %p31
      $region26: #{encoder_block_pallas.5} parent=23 // pred_check_branch
        %158 = sbr.rel (%p156) target = $region28
      $region27: #{encoder_block_pallas.5} parent=23 // pred_region
        %p159 = scmp.lt.s32.totalorder %s11, 1
        %s160 = scalar_select %p159, %s11, 1
        %s161 = smul.addr %s160, 48
        %s162 = smul.addr %s161, 4
        %s163 = scalar_lea.vmem %s0, %s162
      $region28: #{encoder_block_pallas.5} parent=23 // pred_fallthru
        _
    $region24: #{encoder_block_pallas.5} parent=5 // pred_fallthru
      _
    %p164 = scmp.le.s32.totalorder 1, %s11
    %p165 = scmp.lt.s32.totalorder %s11, 3
    %p166 = pnand %p164, %p165
    %p167 = pneg %p166
    // Predicated region
    $region29: #{encoder_block_pallas.5} parent=5 // pred_check
      _
    $region30: #{encoder_block_pallas.5} parent=5 // pred_check_branch
      %169 = sbr.rel (%p166) target = $region32
    $region31: #{encoder_block_pallas.5} parent=5 // pred_region
      %s170 = ssub.s32 %s11, 1
      %p171 = scmp.lt.s32.totalorder %s16, 1
      %s172 = scalar_select %p171, %s16, 1
      %s173 = smul.addr %s172, 48
      %s174 = smul.addr %s173, 4
      %s175 = scalar_lea.vmem %s0, %s174
      %p176 = pneg %p37
      %p177 = pneg %p34
      %p178 = pneg %p58
      %p179 = pneg %p55
      %p180 = pneg %p79
      %p181 = pneg %p76
      %p182 = pneg %p105
      %p183 = pneg %p102
      %p184 = scmp.lt.s32.totalorder %s16, 1
      %s185 = scalar_select %p184, %s16, 1
      %s186 = smul.addr %s185, 48
      %s187 = smul.addr %s186, 8
      %s188 = scalar_lea.vmem %s3, %s187
      %p189 = pneg %p131
      %p190 = pneg %p128
      %p191 = scmp.lt.s32.totalorder %s16, 1
      %s192 = scalar_select %p191, %s16, 1
      %s193 = smul.addr %s192, 8
      %s194 = smul.addr %s193, 8
      %s195 = scalar_lea.vmem %s4, %s194
      %p196 = scmp.lt.s32.totalorder %s16, 1
      %s197 = scalar_select %p196, %s16, 1
      %s198 = smul.addr %s197, 48
      %s199 = smul.addr %s198, 4
      %s200 = scalar_lea.vmem %s0, %s199
      %p201 = scmp.lt.s32.totalorder %s16, 1
      %s202 = scalar_select %p201, %s16, 1
      %s203 = smul.addr %s202, 48
      %s204 = smul.addr %s203, 8
      %s205 = scalar_lea.vmem %s3, %s204
      %p206 = scmp.lt.s32.totalorder %s16, 1
      %s207 = scalar_select %p206, %s16, 1
      %s208 = smul.addr %s207, 8
      %s209 = smul.addr %s208, 8
      %s210 = scalar_lea.vmem %s4, %s209
      %v211 = vld [vmem:[%s200] sm:$0xf]
      %v212 = vld [vmem:[%s200 + $0x4] sm:$0xf]
      %v213 = vld [vmem:[%s200 + $0x8] sm:$0xf]
      %v214 = vld [vmem:[%s200 + $0xc] sm:$0xf]
      %v215 = vld [vmem:[%s200 + $0x10] sm:$0xf]
      %v216 = vld [vmem:[%s200 + $0x14] sm:$0xf]
      %v217 = vld [vmem:[%s200 + $0x18] sm:$0xf]
      %v218 = vld [vmem:[%s200 + $0x1c] sm:$0xf]
      %v219 = vld [vmem:[%s200 + $0x20] sm:$0xf]
      %v220 = vld [vmem:[%s200 + $0x24] sm:$0xf]
      %v221 = vld [vmem:[%s200 + $0x28] sm:$0xf]
      %v222 = vld [vmem:[%s200 + $0x2c] sm:$0xf]
      %v223 = vld [vmem:[%s200 + $0x30] sm:$0xf]
      %v224 = vld [vmem:[%s200 + $0x34] sm:$0xf]
      %v225 = vld [vmem:[%s200 + $0x38] sm:$0xf]
      %v226 = vld [vmem:[%s200 + $0x3c] sm:$0xf]
      %v227 = vld [vmem:[%s200 + $0x40] sm:$0xf]
      %v228 = vld [vmem:[%s200 + $0x44] sm:$0xf]
      %v229 = vld [vmem:[%s200 + $0x48] sm:$0xf]
      %v230 = vld [vmem:[%s200 + $0x4c] sm:$0xf]
      %v231 = vld [vmem:[%s200 + $0x50] sm:$0xf]
      %v232 = vld [vmem:[%s200 + $0x54] sm:$0xf]
      %v233 = vld [vmem:[%s200 + $0x58] sm:$0xf]
      %v234 = vld [vmem:[%s200 + $0x5c] sm:$0xf]
      %v235 = vld [vmem:[%s200 + $0x60] sm:$0xf]
      %v236 = vld [vmem:[%s200 + $0x64] sm:$0xf]
      %v237 = vld [vmem:[%s200 + $0x68] sm:$0xf]
      %v238 = vld [vmem:[%s200 + $0x6c] sm:$0xf]
      %v239 = vld [vmem:[%s200 + $0x70] sm:$0xf]
      %v240 = vld [vmem:[%s200 + $0x74] sm:$0xf]
      %v241 = vld [vmem:[%s200 + $0x78] sm:$0xf]
      %v242 = vld [vmem:[%s200 + $0x7c] sm:$0xf]
      %v243 = vld [vmem:[%s200 + $0x80] sm:$0xf]
      %v244 = vld [vmem:[%s200 + $0x84] sm:$0xf]
      %v245 = vld [vmem:[%s200 + $0x88] sm:$0xf]
      %v246 = vld [vmem:[%s200 + $0x8c] sm:$0xf]
      %v247 = vld [vmem:[%s200 + $0x90] sm:$0xf]
      %v248 = vld [vmem:[%s200 + $0x94] sm:$0xf]
      %v249 = vld [vmem:[%s200 + $0x98] sm:$0xf]
      %v250 = vld [vmem:[%s200 + $0x9c] sm:$0xf]
      %v251 = vld [vmem:[%s200 + $0xa0] sm:$0xf]
      %v252 = vld [vmem:[%s200 + $0xa4] sm:$0xf]
      %v253 = vld [vmem:[%s200 + $0xa8] sm:$0xf]
      %v254 = vld [vmem:[%s200 + $0xac] sm:$0xf]
      %v255 = vld [vmem:[%s200 + $0xb0] sm:$0xf]
      %v256 = vld [vmem:[%s200 + $0xb4] sm:$0xf]
      %v257 = vld [vmem:[%s200 + $0xb8] sm:$0xf]
      %v258 = vld [vmem:[%s200 + $0xbc] sm:$0xf]
      %v259 = vunpack.c.l.bf16 %v211
      %v260 = vunpack.c.l.bf16 %v212
      %v261 = vunpack.c.l.bf16 %v213
      %v262 = vunpack.c.l.bf16 %v214
      %v263 = vunpack.c.l.bf16 %v215
      %v264 = vunpack.c.l.bf16 %v216
      %v265 = vunpack.c.l.bf16 %v217
      %v266 = vunpack.c.l.bf16 %v218
      %v267 = vunpack.c.l.bf16 %v219
      %v268 = vunpack.c.l.bf16 %v220
      %v269 = vunpack.c.l.bf16 %v221
      %v270 = vunpack.c.l.bf16 %v222
      %v271 = vunpack.c.l.bf16 %v223
      %v272 = vunpack.c.l.bf16 %v224
      %v273 = vunpack.c.l.bf16 %v225
      %v274 = vunpack.c.l.bf16 %v226
      %v275 = vunpack.c.l.bf16 %v227
      %v276 = vunpack.c.l.bf16 %v228
      %v277 = vunpack.c.l.bf16 %v229
      %v278 = vunpack.c.l.bf16 %v230
      %v279 = vunpack.c.l.bf16 %v231
      %v280 = vunpack.c.l.bf16 %v232
      %v281 = vunpack.c.l.bf16 %v233
      %v282 = vunpack.c.l.bf16 %v234
      %v283 = vunpack.c.l.bf16 %v235
      %v284 = vunpack.c.l.bf16 %v236
      %v285 = vunpack.c.l.bf16 %v237
      %v286 = vunpack.c.l.bf16 %v238
      %v287 = vunpack.c.l.bf16 %v239
      %v288 = vunpack.c.l.bf16 %v240
      %v289 = vunpack.c.l.bf16 %v241
      %v290 = vunpack.c.l.bf16 %v242
      %v291 = vunpack.c.l.bf16 %v243
      %v292 = vunpack.c.l.bf16 %v244
      %v293 = vunpack.c.l.bf16 %v245
      %v294 = vunpack.c.l.bf16 %v246
      %v295 = vunpack.c.l.bf16 %v247
      %v296 = vunpack.c.l.bf16 %v248
      %v297 = vunpack.c.l.bf16 %v249
      %v298 = vunpack.c.l.bf16 %v250
      %v299 = vunpack.c.l.bf16 %v251
      %v300 = vunpack.c.l.bf16 %v252
      %v301 = vunpack.c.l.bf16 %v253
      %v302 = vunpack.c.l.bf16 %v254
      %v303 = vunpack.c.l.bf16 %v255
      %v304 = vunpack.c.l.bf16 %v256
      %v305 = vunpack.c.l.bf16 %v257
      %v306 = vunpack.c.l.bf16 %v258
      %v307 = vld [vmem:[%s1] sm:$0x1]
      %v309 = vlaneseq
      %v310 = vshrl.u32 %v309, 7
      %v311 = vsub.s32 0, %v310
      %v312 = vrot.slane %v307, %v311
      %v314 = vmul.f32 %v259, %v312
      %v315 = vmul.f32 %v260, %v312
      %v316 = vmul.f32 %v261, %v312
      %v317 = vmul.f32 %v262, %v312
      %v318 = vmul.f32 %v263, %v312
      %v319 = vmul.f32 %v264, %v312
      %v320 = vmul.f32 %v265, %v312
      %v321 = vmul.f32 %v266, %v312
      %v322 = vmul.f32 %v267, %v312
      %v323 = vmul.f32 %v268, %v312
      %v324 = vmul.f32 %v269, %v312
      %v325 = vmul.f32 %v270, %v312
      %v326 = vmul.f32 %v271, %v312
      %v327 = vmul.f32 %v272, %v312
      %v328 = vmul.f32 %v273, %v312
      %v329 = vmul.f32 %v274, %v312
      %v330 = vmul.f32 %v275, %v312
      %v331 = vmul.f32 %v276, %v312
      %v332 = vmul.f32 %v277, %v312
      %v333 = vmul.f32 %v278, %v312
      %v334 = vmul.f32 %v279, %v312
      %v335 = vmul.f32 %v280, %v312
      %v336 = vmul.f32 %v281, %v312
      %v337 = vmul.f32 %v282, %v312
      %v338 = vmul.f32 %v283, %v312
      %v339 = vmul.f32 %v284, %v312
      %v340 = vmul.f32 %v285, %v312
      %v341 = vmul.f32 %v286, %v312
      %v342 = vmul.f32 %v287, %v312
      %v343 = vmul.f32 %v288, %v312
      %v344 = vmul.f32 %v289, %v312
      %v345 = vmul.f32 %v290, %v312
      %v346 = vmul.f32 %v291, %v312
      %v347 = vmul.f32 %v292, %v312
      %v348 = vmul.f32 %v293, %v312
      %v349 = vmul.f32 %v294, %v312
      %v350 = vmul.f32 %v295, %v312
      %v351 = vmul.f32 %v296, %v312
      %v352 = vmul.f32 %v297, %v312
      %v353 = vmul.f32 %v298, %v312
      %v354 = vmul.f32 %v299, %v312
      %v355 = vmul.f32 %v300, %v312
      %v356 = vmul.f32 %v301, %v312
      %v357 = vmul.f32 %v302, %v312
      %v358 = vmul.f32 %v303, %v312
      %v359 = vmul.f32 %v304, %v312
      %v360 = vmul.f32 %v305, %v312
      %v361 = vmul.f32 %v306, %v312
      %v362 = vld [vmem:[%s2] sm:$0x1]
      %v364 = vlaneseq
      %v365 = vshrl.u32 %v364, 7
      %v366 = vsub.s32 0, %v365
      %v367 = vrot.slane %v362, %v366
      %v369 = vadd.f32 %v314, %v367
      %v370 = vadd.f32 %v315, %v367
      %v371 = vadd.f32 %v316, %v367
      %v372 = vadd.f32 %v317, %v367
      %v373 = vadd.f32 %v318, %v367
      %v374 = vadd.f32 %v319, %v367
      %v375 = vadd.f32 %v320, %v367
      %v376 = vadd.f32 %v321, %v367
      %v377 = vadd.f32 %v322, %v367
      %v378 = vadd.f32 %v323, %v367
      %v379 = vadd.f32 %v324, %v367
      %v380 = vadd.f32 %v325, %v367
      %v381 = vadd.f32 %v326, %v367
      %v382 = vadd.f32 %v327, %v367
      %v383 = vadd.f32 %v328, %v367
      %v384 = vadd.f32 %v329, %v367
      %v385 = vadd.f32 %v330, %v367
      %v386 = vadd.f32 %v331, %v367
      %v387 = vadd.f32 %v332, %v367
      %v388 = vadd.f32 %v333, %v367
      %v389 = vadd.f32 %v334, %v367
      %v390 = vadd.f32 %v335, %v367
      %v391 = vadd.f32 %v336, %v367
      %v392 = vadd.f32 %v337, %v367
      %v393 = vadd.f32 %v338, %v367
      %v394 = vadd.f32 %v339, %v367
      %v395 = vadd.f32 %v340, %v367
      %v396 = vadd.f32 %v341, %v367
      %v397 = vadd.f32 %v342, %v367
      %v398 = vadd.f32 %v343, %v367
      %v399 = vadd.f32 %v344, %v367
      %v400 = vadd.f32 %v345, %v367
      %v401 = vadd.f32 %v346, %v367
      %v402 = vadd.f32 %v347, %v367
      %v403 = vadd.f32 %v348, %v367
      %v404 = vadd.f32 %v349, %v367
      %v405 = vadd.f32 %v350, %v367
      %v406 = vadd.f32 %v351, %v367
      %v407 = vadd.f32 %v352, %v367
      %v408 = vadd.f32 %v353, %v367
      %v409 = vadd.f32 %v354, %v367
      %v410 = vadd.f32 %v355, %v367
      %v411 = vadd.f32 %v356, %v367
      %v412 = vadd.f32 %v357, %v367
      %v413 = vadd.f32 %v358, %v367
      %v414 = vadd.f32 %v359, %v367
      %v415 = vadd.f32 %v360, %v367
      %v416 = vadd.f32 %v361, %v367
      %v417 = vmax.f32 %v369, 0.0
      %v418 = vmax.f32 %v370, 0.0
      %v419 = vmax.f32 %v371, 0.0
      %v420 = vmax.f32 %v372, 0.0
      %v421 = vmax.f32 %v373, 0.0
      %v422 = vmax.f32 %v374, 0.0
      %v423 = vmax.f32 %v375, 0.0
      %v424 = vmax.f32 %v376, 0.0
      %v425 = vmax.f32 %v377, 0.0
      %v426 = vmax.f32 %v378, 0.0
      %v427 = vmax.f32 %v379, 0.0
      %v428 = vmax.f32 %v380, 0.0
      %v429 = vmax.f32 %v381, 0.0
      %v430 = vmax.f32 %v382, 0.0
      %v431 = vmax.f32 %v383, 0.0
      %v432 = vmax.f32 %v384, 0.0
      %v433 = vmax.f32 %v385, 0.0
      %v434 = vmax.f32 %v386, 0.0
      %v435 = vmax.f32 %v387, 0.0
      %v436 = vmax.f32 %v388, 0.0
      %v437 = vmax.f32 %v389, 0.0
      %v438 = vmax.f32 %v390, 0.0
      %v439 = vmax.f32 %v391, 0.0
      %v440 = vmax.f32 %v392, 0.0
      %v441 = vmax.f32 %v393, 0.0
      %v442 = vmax.f32 %v394, 0.0
      %v443 = vmax.f32 %v395, 0.0
      %v444 = vmax.f32 %v396, 0.0
      %v445 = vmax.f32 %v397, 0.0
      %v446 = vmax.f32 %v398, 0.0
      %v447 = vmax.f32 %v399, 0.0
      %v448 = vmax.f32 %v400, 0.0
      %v449 = vmax.f32 %v401, 0.0
      %v450 = vmax.f32 %v402, 0.0
      %v451 = vmax.f32 %v403, 0.0
      %v452 = vmax.f32 %v404, 0.0
      %v453 = vmax.f32 %v405, 0.0
      %v454 = vmax.f32 %v406, 0.0
      %v455 = vmax.f32 %v407, 0.0
      %v456 = vmax.f32 %v408, 0.0
      %v457 = vmax.f32 %v409, 0.0
      %v458 = vmax.f32 %v410, 0.0
      %v459 = vmax.f32 %v411, 0.0
      %v460 = vmax.f32 %v412, 0.0
      %v461 = vmax.f32 %v413, 0.0
      %v462 = vmax.f32 %v414, 0.0
      %v463 = vmax.f32 %v415, 0.0
      %v464 = vmax.f32 %v416, 0.0
      %465 = vst [vmem:[%s205] sm:$0xff] %v417
      %466 = vst [vmem:[%s205 + $0x8] sm:$0xff] %v418
      %467 = vst [vmem:[%s205 + $0x10] sm:$0xff] %v419
      %468 = vst [vmem:[%s205 + $0x18] sm:$0xff] %v420
      %469 = vst [vmem:[%s205 + $0x20] sm:$0xff] %v421
      %470 = vst [vmem:[%s205 + $0x28] sm:$0xff] %v422
      %471 = vst [vmem:[%s205 + $0x30] sm:$0xff] %v423
      %472 = vst [vmem:[%s205 + $0x38] sm:$0xff] %v424
      %473 = vst [vmem:[%s205 + $0x40] sm:$0xff] %v425
      %474 = vst [vmem:[%s205 + $0x48] sm:$0xff] %v426
      %475 = vst [vmem:[%s205 + $0x50] sm:$0xff] %v427
      %476 = vst [vmem:[%s205 + $0x58] sm:$0xff] %v428
      %477 = vst [vmem:[%s205 + $0x60] sm:$0xff] %v429
      %478 = vst [vmem:[%s205 + $0x68] sm:$0xff] %v430
      %479 = vst [vmem:[%s205 + $0x70] sm:$0xff] %v431
      %480 = vst [vmem:[%s205 + $0x78] sm:$0xff] %v432
      %481 = vst [vmem:[%s205 + $0x80] sm:$0xff] %v433
      %482 = vst [vmem:[%s205 + $0x88] sm:$0xff] %v434
      %483 = vst [vmem:[%s205 + $0x90] sm:$0xff] %v435
      %484 = vst [vmem:[%s205 + $0x98] sm:$0xff] %v436
      %485 = vst [vmem:[%s205 + $0xa0] sm:$0xff] %v437
      %486 = vst [vmem:[%s205 + $0xa8] sm:$0xff] %v438
      %487 = vst [vmem:[%s205 + $0xb0] sm:$0xff] %v439
      %488 = vst [vmem:[%s205 + $0xb8] sm:$0xff] %v440
      %489 = vst [vmem:[%s205 + $0xc0] sm:$0xff] %v441
      %490 = vst [vmem:[%s205 + $0xc8] sm:$0xff] %v442
      %491 = vst [vmem:[%s205 + $0xd0] sm:$0xff] %v443
      %492 = vst [vmem:[%s205 + $0xd8] sm:$0xff] %v444
      %493 = vst [vmem:[%s205 + $0xe0] sm:$0xff] %v445
      %494 = vst [vmem:[%s205 + $0xe8] sm:$0xff] %v446
      %495 = vst [vmem:[%s205 + $0xf0] sm:$0xff] %v447
      %496 = vst [vmem:[%s205 + $0xf8] sm:$0xff] %v448
      %497 = vst [vmem:[%s205 + $0x100] sm:$0xff] %v449
      %498 = vst [vmem:[%s205 + $0x108] sm:$0xff] %v450
      %499 = vst [vmem:[%s205 + $0x110] sm:$0xff] %v451
      %500 = vst [vmem:[%s205 + $0x118] sm:$0xff] %v452
      %501 = vst [vmem:[%s205 + $0x120] sm:$0xff] %v453
      %502 = vst [vmem:[%s205 + $0x128] sm:$0xff] %v454
      %503 = vst [vmem:[%s205 + $0x130] sm:$0xff] %v455
      %504 = vst [vmem:[%s205 + $0x138] sm:$0xff] %v456
      %505 = vst [vmem:[%s205 + $0x140] sm:$0xff] %v457
      %506 = vst [vmem:[%s205 + $0x148] sm:$0xff] %v458
      %507 = vst [vmem:[%s205 + $0x150] sm:$0xff] %v459
      %508 = vst [vmem:[%s205 + $0x158] sm:$0xff] %v460
      %509 = vst [vmem:[%s205 + $0x160] sm:$0xff] %v461
      %510 = vst [vmem:[%s205 + $0x168] sm:$0xff] %v462
      %511 = vst [vmem:[%s205 + $0x170] sm:$0xff] %v463
      %512 = vst [vmem:[%s205 + $0x178] sm:$0xff] %v464
      %v513 = vld [vmem:[%s205] ss:$2 sm:$0xff]
      %s514 = scalar_lea.vmem %s205, 24
      %v515 = vld [vmem:[%s514] ss:$2 sm:$0xff]
      %s516 = scalar_lea.vmem %s205, 48
      %v517 = vld [vmem:[%s516] ss:$2 sm:$0xff]
      %s518 = scalar_lea.vmem %s205, 72
      %v519 = vld [vmem:[%s518] ss:$2 sm:$0xff]
      %s520 = scalar_lea.vmem %s205, 96
      %v521 = vld [vmem:[%s520] ss:$2 sm:$0xff]
      %s522 = scalar_lea.vmem %s205, 120
      %v523 = vld [vmem:[%s522] ss:$2 sm:$0xff]
      %s524 = scalar_lea.vmem %s205, 144
      %v525 = vld [vmem:[%s524] ss:$2 sm:$0xff]
      %s526 = scalar_lea.vmem %s205, 168
      %v527 = vld [vmem:[%s526] ss:$2 sm:$0xff]
      %s528 = scalar_lea.vmem %s205, 192
      %v529 = vld [vmem:[%s528] ss:$2 sm:$0xff]
      %s530 = scalar_lea.vmem %s205, 216
      %v531 = vld [vmem:[%s530] ss:$2 sm:$0xff]
      %s532 = scalar_lea.vmem %s205, 240
      %v533 = vld [vmem:[%s532] ss:$2 sm:$0xff]
      %s534 = scalar_lea.vmem %s205, 264
      %v535 = vld [vmem:[%s534] ss:$2 sm:$0xff]
      %s536 = scalar_lea.vmem %s205, 288
      %v537 = vld [vmem:[%s536] ss:$2 sm:$0xff]
      %s538 = scalar_lea.vmem %s205, 312
      %v539 = vld [vmem:[%s538] ss:$2 sm:$0xff]
      %s540 = scalar_lea.vmem %s205, 336
      %v541 = vld [vmem:[%s540] ss:$2 sm:$0xff]
      %s542 = scalar_lea.vmem %s205, 360
      %v543 = vld [vmem:[%s542] ss:$2 sm:$0xff]
      %s544 = scalar_lea.vmem %s205, 1
      %v545 = vld [vmem:[%s544] ss:$2 sm:$0xff]
      %s546 = scalar_lea.vmem %s205, 25
      %v547 = vld [vmem:[%s546] ss:$2 sm:$0xff]
      %s548 = scalar_lea.vmem %s205, 49
      %v549 = vld [vmem:[%s548] ss:$2 sm:$0xff]
      %s550 = scalar_lea.vmem %s205, 73
      %v551 = vld [vmem:[%s550] ss:$2 sm:$0xff]
      %s552 = scalar_lea.vmem %s205, 97
      %v553 = vld [vmem:[%s552] ss:$2 sm:$0xff]
      %s554 = scalar_lea.vmem %s205, 121
      %v555 = vld [vmem:[%s554] ss:$2 sm:$0xff]
      %s556 = scalar_lea.vmem %s205, 145
      %v557 = vld [vmem:[%s556] ss:$2 sm:$0xff]
      %s558 = scalar_lea.vmem %s205, 169
      %v559 = vld [vmem:[%s558] ss:$2 sm:$0xff]
      %s560 = scalar_lea.vmem %s205, 193
      %v561 = vld [vmem:[%s560] ss:$2 sm:$0xff]
      %s562 = scalar_lea.vmem %s205, 217
      %v563 = vld [vmem:[%s562] ss:$2 sm:$0xff]
      %s564 = scalar_lea.vmem %s205, 241
      %v565 = vld [vmem:[%s564] ss:$2 sm:$0xff]
      %s566 = scalar_lea.vmem %s205, 265
      %v567 = vld [vmem:[%s566] ss:$2 sm:$0xff]
      %s568 = scalar_lea.vmem %s205, 289
      %v569 = vld [vmem:[%s568] ss:$2 sm:$0xff]
      %s570 = scalar_lea.vmem %s205, 313
      %v571 = vld [vmem:[%s570] ss:$2 sm:$0xff]
      %s572 = scalar_lea.vmem %s205, 337
      %v573 = vld [vmem:[%s572] ss:$2 sm:$0xff]
      %s574 = scalar_lea.vmem %s205, 361
      %v575 = vld [vmem:[%s574] ss:$2 sm:$0xff]
      %v576 = vmax.f32 %v513, %v545
      %v577 = vmax.f32 %v515, %v547
      %v578 = vmax.f32 %v517, %v549
      %v579 = vmax.f32 %v519, %v551
      %v580 = vmax.f32 %v521, %v553
      %v581 = vmax.f32 %v523, %v555
      %v582 = vmax.f32 %v525, %v557
      %v583 = vmax.f32 %v527, %v559
      %v584 = vmax.f32 %v529, %v561
      %v585 = vmax.f32 %v531, %v563
      %v586 = vmax.f32 %v533, %v565
      %v587 = vmax.f32 %v535, %v567
      %v588 = vmax.f32 %v537, %v569
      %v589 = vmax.f32 %v539, %v571
      %v590 = vmax.f32 %v541, %v573
      %v591 = vmax.f32 %v543, %v575
      %v592 = vmax.f32 %v576, %v577
      %v593 = vmax.f32 %v578, %v579
      %v594 = vmax.f32 %v580, %v581
      %v595 = vmax.f32 %v582, %v583
      %v596 = vmax.f32 %v584, %v585
      %v597 = vmax.f32 %v586, %v587
      %v598 = vmax.f32 %v588, %v589
      %v599 = vmax.f32 %v590, %v591
      %600 = vst [vmem:[%s210] sm:$0xff] %v592
      %601 = vst [vmem:[%s210 + $0x8] sm:$0xff] %v593
      %602 = vst [vmem:[%s210 + $0x10] sm:$0xff] %v594
      %603 = vst [vmem:[%s210 + $0x18] sm:$0xff] %v595
      %604 = vst [vmem:[%s210 + $0x20] sm:$0xff] %v596
      %605 = vst [vmem:[%s210 + $0x28] sm:$0xff] %v597
      %606 = vst [vmem:[%s210 + $0x30] sm:$0xff] %v598
      %607 = vst [vmem:[%s210 + $0x38] sm:$0xff] %v599
      %p608 = scmp.lt.s32.totalorder %s16, 1
      %s609 = scalar_select %p608, %s16, 1
      %s610 = smul.addr %s609, 48
      %s611 = smul.addr %s610, 8
      %s612 = scalar_lea.vmem %s3, %s611
      %p613 = scmp.lt.s32.totalorder %s16, 1
      %s614 = scalar_select %p613, %s16, 1
      %s615 = smul.addr %s614, 8
      %s616 = smul.addr %s615, 8
      %s617 = scalar_lea.vmem %s4, %s616
      // Predicated region
      $region33: #{encoder_block_pallas.5} parent=31 // pred_check
        %p618 = pneg %p102
      $region34: #{encoder_block_pallas.5} parent=31 // pred_check_branch
        %620 = sbr.rel (%p618) target = $region36
      $region35: #{encoder_block_pallas.5} parent=31 // pred_region
        _
      $region36: #{encoder_block_pallas.5} parent=31 // pred_fallthru
        _
      // Predicated region
      $region37: #{encoder_block_pallas.5} parent=31 // pred_check
        %p621 = pneg %p128
      $region38: #{encoder_block_pallas.5} parent=31 // pred_check_branch
        %623 = sbr.rel (%p621) target = $region40
      $region39: #{encoder_block_pallas.5} parent=31 // pred_region
        _
      $region40: #{encoder_block_pallas.5} parent=31 // pred_fallthru
        _
    $region32: #{encoder_block_pallas.5} parent=5 // pred_fallthru
      _
    %p624 = scmp.le.s32.totalorder 2, %s11
    // Predicated region
    $region41: #{encoder_block_pallas.5} parent=5 // pred_check
      %p625 = pneg %p624
    $region42: #{encoder_block_pallas.5} parent=5 // pred_check_branch
      %627 = sbr.rel (%p625) target = $region44
    $region43: #{encoder_block_pallas.5} parent=5 // pred_region
      %s628 = ssub.s32 %s11, 2
      // Predicated region
      $region45: #{encoder_block_pallas.5} parent=43 // pred_check
        %p629 = pneg %p108
      $region46: #{encoder_block_pallas.5} parent=43 // pred_check_branch
        %631 = sbr.rel (%p629) target = $region48
      $region47: #{encoder_block_pallas.5} parent=43 // pred_region
        %p632 = scmp.lt.s32.totalorder %s17, 1
        %s633 = scalar_select %p632, %s17, 1
        %s634 = smul.addr %s633, 48
        %s635 = smul.addr %s634, 8
        %s636 = scalar_lea.vmem %s3, %s635
      $region48: #{encoder_block_pallas.5} parent=43 // pred_fallthru
        _
      // Predicated region
      $region49: #{encoder_block_pallas.5} parent=43 // pred_check
        %p637 = pneg %p134
      $region50: #{encoder_block_pallas.5} parent=43 // pred_check_branch
        %639 = sbr.rel (%p637) target = $region52
      $region51: #{encoder_block_pallas.5} parent=43 // pred_region
        %p640 = scmp.lt.s32.totalorder %s17, 1
        %s641 = scalar_select %p640, %s17, 1
        %s642 = smul.addr %s641, 8
        %s643 = smul.addr %s642, 8
        %s644 = scalar_lea.vmem %s4, %s643
      $region52: #{encoder_block_pallas.5} parent=43 // pred_fallthru
        _
    $region44: #{encoder_block_pallas.5} parent=5 // pred_fallthru
      _
  $region6: #{encoder_block_pallas.5} parent=0 // loop_footer
    %s15 = sadd.s32 1, %s11
  $region7: #{encoder_block_pallas.5} parent=0 // loop_footer_branch
    %10 = sbr.rel target = $region3
  $region8: #{encoder_block_pallas.5} parent=0 // loop_exit
    _

// kernel: encoder_block_pallas.3
$region0: #{encoder_block_pallas.3}
  #allocation0 [shape = 'u32[]', space=smem, size = 0x4, offset = 0x4, fixed_abs, tag = 'smem constant byte address 0x4 - core index']
  #allocation1 [shape = 'u32[144,128]{1,0:T(1,128)}', space=vmem, size = 0x12000, scoped, tag = 'internal scratch']
  %s0 = inlined_call_operand.vmem [shape: bf16[2,384,36], index: 0, kind: input, shape index: {}]
  %s1 = inlined_call_operand.vmem [shape: bf16[36,128], index: 1, kind: input, shape index: {}]
  %s2 = inlined_call_operand.vmem [shape: bf16[2,384,128], index: 2, kind: output, shape index: {0}]
  %s3 = inlined_call_operand.vmem [shape: f32[2,2,128], index: 3, kind: output, shape index: {1}]
  %4 = xla_tuple %s2, %s3
  %s5 = sld [smem:[#allocation0]]
  $region49: #{encoder_block_pallas.3} parent=0
    _
  %s7 = ssub.s32 1, %s5
  %s8 = scalar_select 0, %s7, %s5
  loop: start=0, step=1, limit=4
  $region2: #{encoder_block_pallas.3} parent=0 // loop_pre_header
    _
  $region3: #{encoder_block_pallas.3} parent=0 // loop_header
    %s10 = sphi 0, %s14
    %p11 = scmp.ge.s32.totalorder %s10, 4
    %s20 = sphi 0, %s22
    %s23 = sphi 0, %s20
    %s24 = sphi 0, %s23
    %s40 = sphi 0, %s24
    %s44 = sphi 0, %s44
    %s46 = sphi 0, %s44
    %s47 = sphi 0, %s46
    %s61 = sphi 0, %s47
    %s67 = sphi 0, %s69
    %s70 = sphi 0, %s67
    %s71 = sphi 0, %s70
    %s87 = sphi 0, %s71
    %s93 = sphi 0, %s95
    %s96 = sphi 0, %s93
    %s97 = sphi 0, %s96
    %s113 = sphi 0, %s97
  $region4: #{encoder_block_pallas.3} parent=0 // loop_header_branch
    %13 = sbr.rel (%p11) target = $region8
  $region5: #{encoder_block_pallas.3} parent=0 // loop_body
    %s15 = ssub.s32 %s10, 1
    %s16 = ssub.s32 %s10, 2
    %s17 = sadd.s32 %s10, 1
    %s18 = ssub.s32 %s10, %s17
    %p19 = scmp.eq.s32.totalorder %s18, 0
    %s21 = sadd.s32 %s20, 1
    %s22 = scalar_select %p19, %s20, %s21
    %p25 = pneg %p19
    %p26 = scmp.eq.s32.totalorder %s10, 1
    %p27 = por %p25, %p26
    %p28 = scmp.ne.s32.totalorder %s20, %s23
    %p29 = scmp.eq.s32.totalorder %s10, 0
    %p30 = por %p28, %p29
    %p31 = scmp.ne.s32.totalorder %s20, %s23
    %p32 = scmp.eq.s32.totalorder %s15, 1
    %p33 = por %p31, %p32
    %p34 = scmp.ne.s32.totalorder %s23, %s24
    %p35 = scmp.eq.s32.totalorder %s15, 0
    %p36 = por %p34, %p35
    %p37 = scmp.ne.s32.totalorder %s23, %s24
    %p38 = scmp.eq.s32.totalorder %s16, 1
    %p39 = por %p37, %p38
    %p41 = scmp.ne.s32.totalorder %s24, %s40
    %p42 = scmp.eq.s32.totalorder %s16, 0
    %p43 = por %p41, %p42
    %s45 = sadd.s32 %s44, 1
    %p48 = scmp.eq.s32.totalorder %s10, 1
    %p49 = scmp.ne.s32.totalorder %s44, %s46
    %p50 = scmp.eq.s32.totalorder %s10, 0
    %p51 = por %p49, %p50
    %p52 = scmp.ne.s32.totalorder %s44, %s46
    %p53 = scmp.eq.s32.totalorder %s15, 1
    %p54 = por %p52, %p53
    %p55 = scmp.ne.s32.totalorder %s46, %s47
    %p56 = scmp.eq.s32.totalorder %s15, 0
    %p57 = por %p55, %p56
    %p58 = scmp.ne.s32.totalorder %s46, %s47
    %p59 = scmp.eq.s32.totalorder %s16, 1
    %p60 = por %p58, %p59
    %p62 = scmp.ne.s32.totalorder %s47, %s61
    %p63 = scmp.eq.s32.totalorder %s16, 0
    %p64 = por %p62, %p63
    %s65 = ssub.s32 %s10, %s17
    %p66 = scmp.eq.s32.totalorder %s65, 0
    %s68 = sadd.s32 %s67, 1
    %s69 = scalar_select %p66, %s67, %s68
    %p72 = pneg %p66
    %p73 = scmp.eq.s32.totalorder %s10, 1
    %p74 = por %p72, %p73
    %p75 = scmp.ne.s32.totalorder %s67, %s70
    %p76 = scmp.eq.s32.totalorder %s10, 0
    %p77 = por %p75, %p76
    %p78 = scmp.ne.s32.totalorder %s67, %s70
    %p79 = scmp.eq.s32.totalorder %s15, 1
    %p80 = por %p78, %p79
    %p81 = scmp.ne.s32.totalorder %s70, %s71
    %p82 = scmp.eq.s32.totalorder %s15, 0
    %p83 = por %p81, %p82
    %p84 = scmp.ne.s32.totalorder %s70, %s71
    %p85 = scmp.eq.s32.totalorder %s16, 1
    %p86 = por %p84, %p85
    %p88 = scmp.ne.s32.totalorder %s71, %s87
    %p89 = scmp.eq.s32.totalorder %s16, 0
    %p90 = por %p88, %p89
    %s91 = ssub.s32 %s10, %s17
    %p92 = scmp.eq.s32.totalorder %s91, 0
    %s94 = sadd.s32 %s93, 1
    %s95 = scalar_select %p92, %s93, %s94
    %p98 = pneg %p92
    %p99 = scmp.eq.s32.totalorder %s10, 1
    %p100 = por %p98, %p99
    %p101 = scmp.ne.s32.totalorder %s93, %s96
    %p102 = scmp.eq.s32.totalorder %s10, 0
    %p103 = por %p101, %p102
    %p104 = scmp.ne.s32.totalorder %s93, %s96
    %p105 = scmp.eq.s32.totalorder %s15, 1
    %p106 = por %p104, %p105
    %p107 = scmp.ne.s32.totalorder %s96, %s97
    %p108 = scmp.eq.s32.totalorder %s15, 0
    %p109 = por %p107, %p108
    %p110 = scmp.ne.s32.totalorder %s96, %s97
    %p111 = scmp.eq.s32.totalorder %s16, 1
    %p112 = por %p110, %p111
    %p114 = scmp.ne.s32.totalorder %s97, %s113
    %p115 = scmp.eq.s32.totalorder %s16, 0
    %p116 = por %p114, %p115
    %p117 = scmp.le.s32.totalorder 1, %s10
    %p118 = scmp.lt.s32.totalorder %s10, 3
    %p119 = pnand %p117, %p118
    %p120 = pneg %p119
    // Predicated region
    $region9: #{encoder_block_pallas.3} parent=5 // pred_check
      _
    $region10: #{encoder_block_pallas.3} parent=5 // pred_check_branch
      %122 = sbr.rel (%p119) target = $region12
    $region11: #{encoder_block_pallas.3} parent=5 // pred_region
      %s123 = ssub.s32 %s10, 1
      // Predicated region
      $region13: #{encoder_block_pallas.3} parent=11 // pred_check
        %p124 = pneg %p57
      $region14: #{encoder_block_pallas.3} parent=11 // pred_check_branch
        %126 = sbr.rel (%p124) target = $region16
      $region15: #{encoder_block_pallas.3} parent=11 // pred_region
        _
      $region16: #{encoder_block_pallas.3} parent=11 // pred_fallthru
        _
    $region12: #{encoder_block_pallas.3} parent=5 // pred_fallthru
      _
    %p127 = scmp.lt.s32.totalorder %s10, 2
    // Predicated region
    $region17: #{encoder_block_pallas.3} parent=5 // pred_check
      %p128 = pneg %p127
    $region18: #{encoder_block_pallas.3} parent=5 // pred_check_branch
      %130 = sbr.rel (%p128) target = $region20
    $region19: #{encoder_block_pallas.3} parent=5 // pred_region
      // Predicated region
      $region21: #{encoder_block_pallas.3} parent=19 // pred_check
        %p131 = pneg %p30
      $region22: #{encoder_block_pallas.3} parent=19 // pred_check_branch
        %133 = sbr.rel (%p131) target = $region24
      $region23: #{encoder_block_pallas.3} parent=19 // pred_region
        %p134 = scmp.lt.s32.totalorder %s10, 1
        %s135 = scalar_select %p134, %s10, 1
        %s136 = smul.addr %s135, 48
        %s137 = smul.addr %s136, 4
        %s138 = scalar_lea.vmem %s0, %s137
      $region24: #{encoder_block_pallas.3} parent=19 // pred_fallthru
        _
    $region20: #{encoder_block_pallas.3} parent=5 // pred_fallthru
      _
    %p139 = scmp.le.s32.totalorder 1, %s10
    %p140 = scmp.lt.s32.totalorder %s10, 3
    %p141 = pnand %p139, %p140
    %p142 = pneg %p141
    // Predicated region
    $region25: #{encoder_block_pallas.3} parent=5 // pred_check
      _
    $region26: #{encoder_block_pallas.3} parent=5 // pred_check_branch
      %144 = sbr.rel (%p141) target = $region28
    $region27: #{encoder_block_pallas.3} parent=5 // pred_region
      %s145 = ssub.s32 %s10, 1
      %p146 = scmp.lt.s32.totalorder %s15, 1
      %s147 = scalar_select %p146, %s15, 1
      %s148 = smul.addr %s147, 48
      %s149 = smul.addr %s148, 4
      %s150 = scalar_lea.vmem %s0, %s149
      %p151 = pneg %p36
      %p152 = pneg %p33
      %p153 = pneg %p57
      %p154 = pneg %p54
      %p155 = pneg %p83
      %p156 = pneg %p80
      %p157 = scmp.lt.s32.totalorder %s15, 1
      %s158 = scalar_select %p157, %s15, 1
      %s159 = smul.addr %s158, 48
      %s160 = smul.addr %s159, 4
      %s161 = scalar_lea.vmem %s2, %s160
      %p162 = pneg %p109
      %p163 = pneg %p106
      %p164 = scmp.lt.s32.totalorder %s15, 1
      %s165 = scalar_select %p164, %s15, 1
      %s166 = smul.addr %s165, 2
      %s167 = scalar_lea.vmem %s3, %s166
      %p168 = scmp.lt.s32.totalorder %s15, 1
      %s169 = scalar_select %p168, %s15, 1
      %s170 = smul.addr %s169, 48
      %s171 = smul.addr %s170, 4
      %s172 = scalar_lea.vmem %s0, %s171
      %p173 = scmp.lt.s32.totalorder %s15, 1
      %s174 = scalar_select %p173, %s15, 1
      %s175 = smul.addr %s174, 48
      %s176 = smul.addr %s175, 4
      %s177 = scalar_lea.vmem %s2, %s176
      %p178 = scmp.lt.s32.totalorder %s15, 1
      %s179 = scalar_select %p178, %s15, 1
      %s180 = smul.addr %s179, 2
      %s181 = scalar_lea.vmem %s3, %s180
      %v183 = vld [vmem:[%s172] sm:$0xf]
      %v184 = vld [vmem:[%s172 + $0x4] sm:$0xf]
      %v185 = vld [vmem:[%s172 + $0x8] sm:$0xf]
      %v186 = vld [vmem:[%s172 + $0xc] sm:$0xf]
      %v187 = vld [vmem:[%s172 + $0x10] sm:$0xf]
      %v188 = vld [vmem:[%s172 + $0x14] sm:$0xf]
      %v189 = vld [vmem:[%s172 + $0x18] sm:$0xf]
      %v190 = vld [vmem:[%s172 + $0x1c] sm:$0xf]
      %v191 = vld [vmem:[%s172 + $0x20] sm:$0xf]
      %v192 = vld [vmem:[%s172 + $0x24] sm:$0xf]
      %v193 = vld [vmem:[%s172 + $0x28] sm:$0xf]
      %v194 = vld [vmem:[%s172 + $0x2c] sm:$0xf]
      %v195 = vld [vmem:[%s172 + $0x30] sm:$0xf]
      %v196 = vld [vmem:[%s172 + $0x34] sm:$0xf]
      %v197 = vld [vmem:[%s172 + $0x38] sm:$0xf]
      %v198 = vld [vmem:[%s172 + $0x3c] sm:$0xf]
      %v199 = vld [vmem:[%s172 + $0x40] sm:$0xf]
      %v200 = vld [vmem:[%s172 + $0x44] sm:$0xf]
      %v201 = vld [vmem:[%s172 + $0x48] sm:$0xf]
      %v202 = vld [vmem:[%s172 + $0x4c] sm:$0xf]
      %v203 = vld [vmem:[%s172 + $0x50] sm:$0xf]
      %v204 = vld [vmem:[%s172 + $0x54] sm:$0xf]
      %v205 = vld [vmem:[%s172 + $0x58] sm:$0xf]
      %v206 = vld [vmem:[%s172 + $0x5c] sm:$0xf]
      %v207 = vld [vmem:[%s172 + $0x60] sm:$0xf]
      %v208 = vld [vmem:[%s172 + $0x64] sm:$0xf]
      %v209 = vld [vmem:[%s172 + $0x68] sm:$0xf]
      %v210 = vld [vmem:[%s172 + $0x6c] sm:$0xf]
      %v211 = vld [vmem:[%s172 + $0x70] sm:$0xf]
      %v212 = vld [vmem:[%s172 + $0x74] sm:$0xf]
      %v213 = vld [vmem:[%s172 + $0x78] sm:$0xf]
      %v214 = vld [vmem:[%s172 + $0x7c] sm:$0xf]
      %v215 = vld [vmem:[%s172 + $0x80] sm:$0xf]
      %v216 = vld [vmem:[%s172 + $0x84] sm:$0xf]
      %v217 = vld [vmem:[%s172 + $0x88] sm:$0xf]
      %v218 = vld [vmem:[%s172 + $0x8c] sm:$0xf]
      %v219 = vld [vmem:[%s172 + $0x90] sm:$0xf]
      %v220 = vld [vmem:[%s172 + $0x94] sm:$0xf]
      %v221 = vld [vmem:[%s172 + $0x98] sm:$0xf]
      %v222 = vld [vmem:[%s172 + $0x9c] sm:$0xf]
      %v223 = vld [vmem:[%s172 + $0xa0] sm:$0xf]
      %v224 = vld [vmem:[%s172 + $0xa4] sm:$0xf]
      %v225 = vld [vmem:[%s172 + $0xa8] sm:$0xf]
      %v226 = vld [vmem:[%s172 + $0xac] sm:$0xf]
      %v227 = vld [vmem:[%s172 + $0xb0] sm:$0xf]
      %v228 = vld [vmem:[%s172 + $0xb4] sm:$0xf]
      %v229 = vld [vmem:[%s172 + $0xb8] sm:$0xf]
      %v230 = vld [vmem:[%s172 + $0xbc] sm:$0xf]
      %v231 = vld [vmem:[%s1] sm:$0xf]
      %v232 = vld [vmem:[%s1 + $0x4] sm:$0xf]
      %v233 = vld [vmem:[%s1 + $0x8] sm:$0xf]
      %v234 = vld [vmem:[%s1 + $0xc] sm:$0xf]
      %v235 = vld [vmem:[%s1 + $0x10] sm:$0x3]
      %v284 = vunpack.c.l.b16 %v183
      %v285 = vunpack.c.l.b16 %v184
      %v286 = vunpack.c.l.b16 %v185
      %v287 = vunpack.c.l.b16 %v186
      %v288 = vunpack.c.l.b16 %v187
      %v289 = vunpack.c.l.b16 %v188
      %v290 = vunpack.c.l.b16 %v189
      %v291 = vunpack.c.l.b16 %v190
      %v292 = vunpack.c.l.b16 %v191
      %v293 = vunpack.c.l.b16 %v192
      %v294 = vunpack.c.l.b16 %v193
      %v295 = vunpack.c.l.b16 %v194
      %v296 = vunpack.c.l.b16 %v195
      %v297 = vunpack.c.l.b16 %v196
      %v298 = vunpack.c.l.b16 %v197
      %v299 = vunpack.c.l.b16 %v198
      %v300 = vunpack.c.l.b16 %v199
      %v301 = vunpack.c.l.b16 %v200
      %v302 = vunpack.c.l.b16 %v201
      %v303 = vunpack.c.l.b16 %v202
      %v304 = vunpack.c.l.b16 %v203
      %v305 = vunpack.c.l.b16 %v204
      %v306 = vunpack.c.l.b16 %v205
      %v307 = vunpack.c.l.b16 %v206
      %v308 = vunpack.c.l.b16 %v207
      %v309 = vunpack.c.l.b16 %v208
      %v310 = vunpack.c.l.b16 %v209
      %v311 = vunpack.c.l.b16 %v210
      %v312 = vunpack.c.l.b16 %v211
      %v313 = vunpack.c.l.b16 %v212
      %v314 = vunpack.c.l.b16 %v213
      %v315 = vunpack.c.l.b16 %v214
      %v316 = vunpack.c.l.b16 %v215
      %v317 = vunpack.c.l.b16 %v216
      %v318 = vunpack.c.l.b16 %v217
      %v319 = vunpack.c.l.b16 %v218
      %v320 = vunpack.c.l.b16 %v219
      %v321 = vunpack.c.l.b16 %v220
      %v322 = vunpack.c.l.b16 %v221
      %v323 = vunpack.c.l.b16 %v222
      %v324 = vunpack.c.l.b16 %v223
      %v325 = vunpack.c.l.b16 %v224
      %v326 = vunpack.c.l.b16 %v225
      %v327 = vunpack.c.l.b16 %v226
      %v328 = vunpack.c.l.b16 %v227
      %v329 = vunpack.c.l.b16 %v228
      %v330 = vunpack.c.l.b16 %v229
      %v331 = vunpack.c.l.b16 %v230
      %v332 = vpack.c.b16 %v285, %v284
      %v333 = vpack.c.b16 %v287, %v286
      %v334 = vpack.c.b16 %v289, %v288
      %v335 = vpack.c.b16 %v291, %v290
      %v336 = vpack.c.b16 %v293, %v292
      %v337 = vpack.c.b16 %v295, %v294
      %v338 = vpack.c.b16 %v297, %v296
      %v339 = vpack.c.b16 %v299, %v298
      %v340 = vpack.c.b16 %v301, %v300
      %v341 = vpack.c.b16 %v303, %v302
      %v342 = vpack.c.b16 %v305, %v304
      %v343 = vpack.c.b16 %v307, %v306
      %v344 = vpack.c.b16 %v309, %v308
      %v345 = vpack.c.b16 %v311, %v310
      %v346 = vpack.c.b16 %v313, %v312
      %v347 = vpack.c.b16 %v315, %v314
      %v348 = vpack.c.b16 %v317, %v316
      %v349 = vpack.c.b16 %v319, %v318
      %v350 = vpack.c.b16 %v321, %v320
      %v351 = vpack.c.b16 %v323, %v322
      %v352 = vpack.c.b16 %v325, %v324
      %v353 = vpack.c.b16 %v327, %v326
      %v354 = vpack.c.b16 %v329, %v328
      %v355 = vpack.c.b16 %v331, %v330
      %v361 = vunpack.c.l.b16 %v231
      %v362 = vunpack.c.l.b16 %v232
      %v363 = vunpack.c.l.b16 %v233
      %v364 = vunpack.c.l.b16 %v234
      %v365 = vunpack.c.l.b16 %v235
      %v366 = vpack.c.b16 %v362, %v361
      %v367 = vpack.c.b16 %v364, %v363
      %v368 = vpack.c.b16 %v365, %v365
      %vm371 = vcmask 293888
      %v373 = vsel %vm371, %v332, 0
      %v376 = vsel %vm371, %v333, 0
      %v379 = vsel %vm371, %v334, 0
      %v382 = vsel %vm371, %v335, 0
      %v385 = vsel %vm371, %v336, 0
      %v388 = vsel %vm371, %v337, 0
      %v391 = vsel %vm371, %v338, 0
      %v394 = vsel %vm371, %v339, 0
      %v397 = vsel %vm371, %v340, 0
      %v400 = vsel %vm371, %v341, 0
      %v403 = vsel %vm371, %v342, 0
      %v406 = vsel %vm371, %v343, 0
      %v409 = vsel %vm371, %v344, 0
      %v412 = vsel %vm371, %v345, 0
      %v415 = vsel %vm371, %v346, 0
      %v418 = vsel %vm371, %v347, 0
      %v421 = vsel %vm371, %v348, 0
      %v424 = vsel %vm371, %v349, 0
      %v427 = vsel %vm371, %v350, 0
      %v430 = vsel %vm371, %v351, 0
      %v433 = vsel %vm371, %v352, 0
      %v436 = vsel %vm371, %v353, 0
      %v439 = vsel %vm371, %v354, 0
      %v442 = vsel %vm371, %v355, 0
      %vm444 = vcmask 1041408
      %v446 = vsel %vm444, %v368, 0
      %448 = vmatprep.subr.bf16.mxu0 0
      %449 = vmatpush1.bf16.msra.mxu0 0
      %450 = vmatprep.subr.bf16.mxu0 0
      %451 = vmatpush1.bf16.msra.mxu0 0
      %452 = vmatprep.subr.bf16.mxu0 0
      %453 = vmatpush1.bf16.msra.mxu0 0
      %454 = vmatprep.subr.bf16.mxu0 0
      %455 = vmatpush1.bf16.msra.mxu0 0
      %456 = vmatprep.subr.bf16.mxu0 0
      %457 = vmatpush1.bf16.msra.mxu0 0
      %458 = vmatprep.subr.bf16.mxu0 0
      %459 = vmatpush1.bf16.msra.mxu0 %v446
      %460 = vmatprep.subr.bf16.mxu0 0
      %461 = vmatpush1.bf16.msra.mxu0 %v367
      %462 = vmatprep.subr.bf16.mxu0 0
      %463 = vmatpush1.bf16.msra.mxu0 %v366
      %464 = vmatprep.subr.bf16.mxu0 0
      %465 = vmatpush2.bf16.msra.mxu0 0
      %466 = vmatprep.subr.bf16.mxu0 0
      %467 = vmatpush2.bf16.msra.mxu0 0
      %468 = vmatprep.subr.bf16.mxu0 0
      %469 = vmatpush2.bf16.msra.mxu0 0
      %470 = vmatprep.subr.bf16.mxu0 0
      %471 = vmatpush2.bf16.msra.mxu0 0
      %472 = vmatprep.subr.bf16.mxu0 0
      %473 = vmatpush2.bf16.msra.mxu0 0
      %474 = vmatprep.subr.bf16.mxu0 0
      %475 = vmatpush2.bf16.msra.mxu0 0
      %476 = vmatprep.subr.bf16.mxu0 0
      %477 = vmatpush2.bf16.msra.mxu0 0
      %478 = vmatprep.subr.bf16.mxu0 0
      %479 = vmatpush2.bf16.msra.mxu0 0
      %480 = vmatprep.mubr.bf16.mxu0 0
      %481 = vmatmul.mubr.bf16.gmra.mxu0 %v373
      %v482 = vpop.f32.mrf.mxu0
      %v483 = vadd.f32 0.0, %v482
      %v484 = vpop.f32.mrf.mxu0
      %v485 = vpop.f32.mrf.mxu0
      %v486 = vadd.f32 0.0, %v485
      %v487 = vpop.f32.mrf.mxu0
      %488 = vmatprep.mubr.bf16.mxu0 0
      %489 = vmatmul.mubr.bf16.gmra.mxu0 %v376
      %v490 = vpop.f32.mrf.mxu0
      %v491 = vadd.f32 0.0, %v490
      %v492 = vpop.f32.mrf.mxu0
      %v493 = vpop.f32.mrf.mxu0
      %v494 = vadd.f32 0.0, %v493
      %v495 = vpop.f32.mrf.mxu0
      %496 = vmatprep.mubr.bf16.mxu0 0
      %497 = vmatmul.mubr.bf16.gmra.mxu0 %v379
      %v498 = vpop.f32.mrf.mxu0
      %v499 = vadd.f32 0.0, %v498
      %v500 = vpop.f32.mrf.mxu0
      %v501 = vpop.f32.mrf.mxu0
      %v502 = vadd.f32 0.0, %v501
      %v503 = vpop.f32.mrf.mxu0
      %504 = vmatprep.mubr.bf16.mxu0 0
      %505 = vmatmul.mubr.bf16.gmra.mxu0 %v382
      %v506 = vpop.f32.mrf.mxu0
      %v507 = vadd.f32 0.0, %v506
      %v508 = vpop.f32.mrf.mxu0
      %v509 = vpop.f32.mrf.mxu0
      %v510 = vadd.f32 0.0, %v509
      %v511 = vpop.f32.mrf.mxu0
      %512 = vmatprep.mubr.bf16.mxu0 0
      %513 = vmatmul.mubr.bf16.gmra.mxu0 %v385
      %v514 = vpop.f32.mrf.mxu0
      %v515 = vadd.f32 0.0, %v514
      %v516 = vpop.f32.mrf.mxu0
      %v517 = vpop.f32.mrf.mxu0
      %v518 = vadd.f32 0.0, %v517
      %v519 = vpop.f32.mrf.mxu0
      %520 = vmatprep.mubr.bf16.mxu0 0
      %521 = vmatmul.mubr.bf16.gmra.mxu0 %v388
      %v522 = vpop.f32.mrf.mxu0
      %v523 = vadd.f32 0.0, %v522
      %v524 = vpop.f32.mrf.mxu0
      %v525 = vpop.f32.mrf.mxu0
      %v526 = vadd.f32 0.0, %v525
      %v527 = vpop.f32.mrf.mxu0
      %528 = vmatprep.mubr.bf16.mxu0 0
      %529 = vmatmul.mubr.bf16.gmra.mxu0 %v391
      %v530 = vpop.f32.mrf.mxu0
      %v531 = vadd.f32 0.0, %v530
      %v532 = vpop.f32.mrf.mxu0
      %v533 = vpop.f32.mrf.mxu0
      %v534 = vadd.f32 0.0, %v533
      %v535 = vpop.f32.mrf.mxu0
      %536 = vmatprep.mubr.bf16.mxu0 0
      %537 = vmatmul.mubr.bf16.gmra.mxu0 %v394
      %v538 = vpop.f32.mrf.mxu0
      %v539 = vadd.f32 0.0, %v538
      %v540 = vpop.f32.mrf.mxu0
      %v541 = vpop.f32.mrf.mxu0
      %v542 = vadd.f32 0.0, %v541
      %v543 = vpop.f32.mrf.mxu0
      %544 = vmatprep.mubr.bf16.mxu0 0
      %545 = vmatmul.mubr.bf16.gmra.mxu0 %v397
      %v546 = vpop.f32.mrf.mxu0
      %v547 = vadd.f32 0.0, %v546
      %v548 = vpop.f32.mrf.mxu0
      %v549 = vpop.f32.mrf.mxu0
      %v550 = vadd.f32 0.0, %v549
      %v551 = vpop.f32.mrf.mxu0
      %552 = vmatprep.mubr.bf16.mxu0 0
      %553 = vmatmul.mubr.bf16.gmra.mxu0 %v400
      %v554 = vpop.f32.mrf.mxu0
      %v555 = vadd.f32 0.0, %v554
      %v556 = vpop.f32.mrf.mxu0
      %v557 = vpop.f32.mrf.mxu0
      %v558 = vadd.f32 0.0, %v557
      %v559 = vpop.f32.mrf.mxu0
      %560 = vmatprep.mubr.bf16.mxu0 0
      %561 = vmatmul.mubr.bf16.gmra.mxu0 %v403
      %v562 = vpop.f32.mrf.mxu0
      %v563 = vadd.f32 0.0, %v562
      %v564 = vpop.f32.mrf.mxu0
      %v565 = vpop.f32.mrf.mxu0
      %v566 = vadd.f32 0.0, %v565
      %v567 = vpop.f32.mrf.mxu0
      %568 = vmatprep.mubr.bf16.mxu0 0
      %569 = vmatmul.mubr.bf16.gmra.mxu0 %v406
      %v570 = vpop.f32.mrf.mxu0
      %v571 = vadd.f32 0.0, %v570
      %v572 = vpop.f32.mrf.mxu0
      %v573 = vpop.f32.mrf.mxu0
      %v574 = vadd.f32 0.0, %v573
      %v575 = vpop.f32.mrf.mxu0
      %576 = vmatprep.mubr.bf16.mxu0 0
      %577 = vmatmul.mubr.bf16.gmra.mxu0 %v409
      %v578 = vpop.f32.mrf.mxu0
      %v579 = vadd.f32 0.0, %v578
      %v580 = vpop.f32.mrf.mxu0
      %v581 = vpop.f32.mrf.mxu0
      %v582 = vadd.f32 0.0, %v581
      %v583 = vpop.f32.mrf.mxu0
      %584 = vmatprep.mubr.bf16.mxu0 0
      %585 = vmatmul.mubr.bf16.gmra.mxu0 %v412
      %v586 = vpop.f32.mrf.mxu0
      %v587 = vadd.f32 0.0, %v586
      %v588 = vpop.f32.mrf.mxu0
      %v589 = vpop.f32.mrf.mxu0
      %v590 = vadd.f32 0.0, %v589
      %v591 = vpop.f32.mrf.mxu0
      %592 = vmatprep.mubr.bf16.mxu0 0
      %593 = vmatmul.mubr.bf16.gmra.mxu0 %v415
      %v594 = vpop.f32.mrf.mxu0
      %v595 = vadd.f32 0.0, %v594
      %v596 = vpop.f32.mrf.mxu0
      %v597 = vpop.f32.mrf.mxu0
      %v598 = vadd.f32 0.0, %v597
      %v599 = vpop.f32.mrf.mxu0
      %600 = vmatprep.mubr.bf16.mxu0 0
      %601 = vmatmul.mubr.bf16.gmra.mxu0 %v418
      %v602 = vpop.f32.mrf.mxu0
      %v603 = vadd.f32 0.0, %v602
      %v604 = vpop.f32.mrf.mxu0
      %v605 = vpop.f32.mrf.mxu0
      %v606 = vadd.f32 0.0, %v605
      %v607 = vpop.f32.mrf.mxu0
      %608 = vmatprep.mubr.bf16.mxu0 0
      %609 = vmatmul.mubr.bf16.gmra.mxu0 %v421
      %v610 = vpop.f32.mrf.mxu0
      %v611 = vadd.f32 0.0, %v610
      %v612 = vpop.f32.mrf.mxu0
      %v613 = vpop.f32.mrf.mxu0
      %v614 = vadd.f32 0.0, %v613
      %v615 = vpop.f32.mrf.mxu0
      %616 = vmatprep.mubr.bf16.mxu0 0
      %617 = vmatmul.mubr.bf16.gmra.mxu0 %v424
      %v618 = vpop.f32.mrf.mxu0
      %v619 = vadd.f32 0.0, %v618
      %v620 = vpop.f32.mrf.mxu0
      %v621 = vpop.f32.mrf.mxu0
      %v622 = vadd.f32 0.0, %v621
      %v623 = vpop.f32.mrf.mxu0
      %624 = vmatprep.mubr.bf16.mxu0 0
      %625 = vmatmul.mubr.bf16.gmra.mxu0 %v427
      %v626 = vpop.f32.mrf.mxu0
      %v627 = vadd.f32 0.0, %v626
      %v628 = vpop.f32.mrf.mxu0
      %v629 = vpop.f32.mrf.mxu0
      %v630 = vadd.f32 0.0, %v629
      %v631 = vpop.f32.mrf.mxu0
      %632 = vmatprep.mubr.bf16.mxu0 0
      %633 = vmatmul.mubr.bf16.gmra.mxu0 %v430
      %v634 = vpop.f32.mrf.mxu0
      %v635 = vadd.f32 0.0, %v634
      %v636 = vpop.f32.mrf.mxu0
      %v637 = vpop.f32.mrf.mxu0
      %v638 = vadd.f32 0.0, %v637
      %v639 = vpop.f32.mrf.mxu0
      %640 = vmatprep.mubr.bf16.mxu0 0
      %641 = vmatmul.mubr.bf16.gmra.mxu0 %v433
      %v642 = vpop.f32.mrf.mxu0
      %v643 = vadd.f32 0.0, %v642
      %v644 = vpop.f32.mrf.mxu0
      %v645 = vpop.f32.mrf.mxu0
      %v646 = vadd.f32 0.0, %v645
      %v647 = vpop.f32.mrf.mxu0
      %648 = vmatprep.mubr.bf16.mxu0 0
      %649 = vmatmul.mubr.bf16.gmra.mxu0 %v436
      %v650 = vpop.f32.mrf.mxu0
      %v651 = vadd.f32 0.0, %v650
      %v652 = vpop.f32.mrf.mxu0
      %v653 = vpop.f32.mrf.mxu0
      %v654 = vadd.f32 0.0, %v653
      %v655 = vpop.f32.mrf.mxu0
      %656 = vmatprep.mubr.bf16.mxu0 0
      %657 = vmatmul.mubr.bf16.gmra.mxu0 %v439
      %v658 = vpop.f32.mrf.mxu0
      %v659 = vadd.f32 0.0, %v658
      %v660 = vpop.f32.mrf.mxu0
      %v661 = vpop.f32.mrf.mxu0
      %v662 = vadd.f32 0.0, %v661
      %v663 = vpop.f32.mrf.mxu0
      %664 = vmatprep.mubr.bf16.mxu0 0
      %665 = vmatmul.mubr.bf16.gmra.mxu0 %v442
      %v666 = vpop.f32.mrf.mxu0
      %v667 = vadd.f32 0.0, %v666
      %v668 = vpop.f32.mrf.mxu0
      %v669 = vpop.f32.mrf.mxu0
      %v670 = vadd.f32 0.0, %v669
      %v671 = vpop.f32.mrf.mxu0
      %672 = vdwg.mxu0
      %v673 = vpack.c.bf16 %v486, %v483
      %v674 = vpack.c.bf16 %v494, %v491
      %v675 = vpack.c.bf16 %v502, %v499
      %v676 = vpack.c.bf16 %v510, %v507
      %v677 = vpack.c.bf16 %v518, %v515
      %v678 = vpack.c.bf16 %v526, %v523
      %v679 = vpack.c.bf16 %v534, %v531
      %v680 = vpack.c.bf16 %v542, %v539
      %v681 = vpack.c.bf16 %v550, %v547
      %v682 = vpack.c.bf16 %v558, %v555
      %v683 = vpack.c.bf16 %v566, %v563
      %v684 = vpack.c.bf16 %v574, %v571
      %v685 = vpack.c.bf16 %v582, %v579
      %v686 = vpack.c.bf16 %v590, %v587
      %v687 = vpack.c.bf16 %v598, %v595
      %v688 = vpack.c.bf16 %v606, %v603
      %v689 = vpack.c.bf16 %v614, %v611
      %v690 = vpack.c.bf16 %v622, %v619
      %v691 = vpack.c.bf16 %v630, %v627
      %v692 = vpack.c.bf16 %v638, %v635
      %v693 = vpack.c.bf16 %v646, %v643
      %v694 = vpack.c.bf16 %v654, %v651
      %v695 = vpack.c.bf16 %v662, %v659
      %v696 = vpack.c.bf16 %v670, %v667
      %v721 = vunpack.c.l.b16 %v673
      %v722 = vunpack.c.h.b16 %v673
      %v723 = vunpack.c.l.b16 %v674
      %v724 = vunpack.c.h.b16 %v674
      %v725 = vunpack.c.l.b16 %v675
      %v726 = vunpack.c.h.b16 %v675
      %v727 = vunpack.c.l.b16 %v676
      %v728 = vunpack.c.h.b16 %v676
      %v729 = vunpack.c.l.b16 %v677
      %v730 = vunpack.c.h.b16 %v677
      %v731 = vunpack.c.l.b16 %v678
      %v732 = vunpack.c.h.b16 %v678
      %v733 = vunpack.c.l.b16 %v679
      %v734 = vunpack.c.h.b16 %v679
      %v735 = vunpack.c.l.b16 %v680
      %v736 = vunpack.c.h.b16 %v680
      %v737 = vunpack.c.l.b16 %v681
      %v738 = vunpack.c.h.b16 %v681
      %v739 = vunpack.c.l.b16 %v682
      %v740 = vunpack.c.h.b16 %v682
      %v741 = vunpack.c.l.b16 %v683
      %v742 = vunpack.c.h.b16 %v683
      %v743 = vunpack.c.l.b16 %v684
      %v744 = vunpack.c.h.b16 %v684
      %v745 = vunpack.c.l.b16 %v685
      %v746 = vunpack.c.h.b16 %v685
      %v747 = vunpack.c.l.b16 %v686
      %v748 = vunpack.c.h.b16 %v686
      %v749 = vunpack.c.l.b16 %v687
      %v750 = vunpack.c.h.b16 %v687
      %v751 = vunpack.c.l.b16 %v688
      %v752 = vunpack.c.h.b16 %v688
      %v753 = vunpack.c.l.b16 %v689
      %v754 = vunpack.c.h.b16 %v689
      %v755 = vunpack.c.l.b16 %v690
      %v756 = vunpack.c.h.b16 %v690
      %v757 = vunpack.c.l.b16 %v691
      %v758 = vunpack.c.h.b16 %v691
      %v759 = vunpack.c.l.b16 %v692
      %v760 = vunpack.c.h.b16 %v692
      %v761 = vunpack.c.l.b16 %v693
      %v762 = vunpack.c.h.b16 %v693
      %v763 = vunpack.c.l.b16 %v694
      %v764 = vunpack.c.h.b16 %v694
      %v765 = vunpack.c.l.b16 %v695
      %v766 = vunpack.c.h.b16 %v695
      %v767 = vunpack.c.l.b16 %v696
      %v768 = vunpack.c.h.b16 %v696
      %v769 = vpack.c.b16 %v721, %v721
      %v770 = vpack.c.b16 %v722, %v722
      %v771 = vpack.c.b16 %v723, %v723
      %v772 = vpack.c.b16 %v724, %v724
      %v773 = vpack.c.b16 %v725, %v725
      %v774 = vpack.c.b16 %v726, %v726
      %v775 = vpack.c.b16 %v727, %v727
      %v776 = vpack.c.b16 %v728, %v728
      %v777 = vpack.c.b16 %v729, %v729
      %v778 = vpack.c.b16 %v730, %v730
      %v779 = vpack.c.b16 %v731, %v731
      %v780 = vpack.c.b16 %v732, %v732
      %v781 = vpack.c.b16 %v733, %v733
      %v782 = vpack.c.b16 %v734, %v734
      %v783 = vpack.c.b16 %v735, %v735
      %v784 = vpack.c.b16 %v736, %v736
      %v785 = vpack.c.b16 %v737, %v737
      %v786 = vpack.c.b16 %v738, %v738
      %v787 = vpack.c.b16 %v739, %v739
      %v788 = vpack.c.b16 %v740, %v740
      %v789 = vpack.c.b16 %v741, %v741
      %v790 = vpack.c.b16 %v742, %v742
      %v791 = vpack.c.b16 %v743, %v743
      %v792 = vpack.c.b16 %v744, %v744
      %v793 = vpack.c.b16 %v745, %v745
      %v794 = vpack.c.b16 %v746, %v746
      %v795 = vpack.c.b16 %v747, %v747
      %v796 = vpack.c.b16 %v748, %v748
      %v797 = vpack.c.b16 %v749, %v749
      %v798 = vpack.c.b16 %v750, %v750
      %v799 = vpack.c.b16 %v751, %v751
      %v800 = vpack.c.b16 %v752, %v752
      %v801 = vpack.c.b16 %v753, %v753
      %v802 = vpack.c.b16 %v754, %v754
      %v803 = vpack.c.b16 %v755, %v755
      %v804 = vpack.c.b16 %v756, %v756
      %v805 = vpack.c.b16 %v757, %v757
      %v806 = vpack.c.b16 %v758, %v758
      %v807 = vpack.c.b16 %v759, %v759
      %v808 = vpack.c.b16 %v760, %v760
      %v809 = vpack.c.b16 %v761, %v761
      %v810 = vpack.c.b16 %v762, %v762
      %v811 = vpack.c.b16 %v763, %v763
      %v812 = vpack.c.b16 %v764, %v764
      %v813 = vpack.c.b16 %v765, %v765
      %v814 = vpack.c.b16 %v766, %v766
      %v815 = vpack.c.b16 %v767, %v767
      %v816 = vpack.c.b16 %v768, %v768
      %865 = vst [vmem:[%s177] sm:$0xf] %v769
      %866 = vst [vmem:[%s177 + $0x4] sm:$0xf] %v770
      %867 = vst [vmem:[%s177 + $0x8] sm:$0xf] %v771
      %868 = vst [vmem:[%s177 + $0xc] sm:$0xf] %v772
      %869 = vst [vmem:[%s177 + $0x10] sm:$0xf] %v773
      %870 = vst [vmem:[%s177 + $0x14] sm:$0xf] %v774
      %871 = vst [vmem:[%s177 + $0x18] sm:$0xf] %v775
      %872 = vst [vmem:[%s177 + $0x1c] sm:$0xf] %v776
      %873 = vst [vmem:[%s177 + $0x20] sm:$0xf] %v777
      %874 = vst [vmem:[%s177 + $0x24] sm:$0xf] %v778
      %875 = vst [vmem:[%s177 + $0x28] sm:$0xf] %v779
      %876 = vst [vmem:[%s177 + $0x2c] sm:$0xf] %v780
      %877 = vst [vmem:[%s177 + $0x30] sm:$0xf] %v781
      %878 = vst [vmem:[%s177 + $0x34] sm:$0xf] %v782
      %879 = vst [vmem:[%s177 + $0x38] sm:$0xf] %v783
      %880 = vst [vmem:[%s177 + $0x3c] sm:$0xf] %v784
      %881 = vst [vmem:[%s177 + $0x40] sm:$0xf] %v785
      %882 = vst [vmem:[%s177 + $0x44] sm:$0xf] %v786
      %883 = vst [vmem:[%s177 + $0x48] sm:$0xf] %v787
      %884 = vst [vmem:[%s177 + $0x4c] sm:$0xf] %v788
      %885 = vst [vmem:[%s177 + $0x50] sm:$0xf] %v789
      %886 = vst [vmem:[%s177 + $0x54] sm:$0xf] %v790
      %887 = vst [vmem:[%s177 + $0x58] sm:$0xf] %v791
      %888 = vst [vmem:[%s177 + $0x5c] sm:$0xf] %v792
      %889 = vst [vmem:[%s177 + $0x60] sm:$0xf] %v793
      %890 = vst [vmem:[%s177 + $0x64] sm:$0xf] %v794
      %891 = vst [vmem:[%s177 + $0x68] sm:$0xf] %v795
      %892 = vst [vmem:[%s177 + $0x6c] sm:$0xf] %v796
      %893 = vst [vmem:[%s177 + $0x70] sm:$0xf] %v797
      %894 = vst [vmem:[%s177 + $0x74] sm:$0xf] %v798
      %895 = vst [vmem:[%s177 + $0x78] sm:$0xf] %v799
      %896 = vst [vmem:[%s177 + $0x7c] sm:$0xf] %v800
      %897 = vst [vmem:[%s177 + $0x80] sm:$0xf] %v801
      %898 = vst [vmem:[%s177 + $0x84] sm:$0xf] %v802
      %899 = vst [vmem:[%s177 + $0x88] sm:$0xf] %v803
      %900 = vst [vmem:[%s177 + $0x8c] sm:$0xf] %v804
      %901 = vst [vmem:[%s177 + $0x90] sm:$0xf] %v805
      %902 = vst [vmem:[%s177 + $0x94] sm:$0xf] %v806
      %903 = vst [vmem:[%s177 + $0x98] sm:$0xf] %v807
      %904 = vst [vmem:[%s177 + $0x9c] sm:$0xf] %v808
      %905 = vst [vmem:[%s177 + $0xa0] sm:$0xf] %v809
      %906 = vst [vmem:[%s177 + $0xa4] sm:$0xf] %v810
      %907 = vst [vmem:[%s177 + $0xa8] sm:$0xf] %v811
      %908 = vst [vmem:[%s177 + $0xac] sm:$0xf] %v812
      %909 = vst [vmem:[%s177 + $0xb0] sm:$0xf] %v813
      %910 = vst [vmem:[%s177 + $0xb4] sm:$0xf] %v814
      %911 = vst [vmem:[%s177 + $0xb8] sm:$0xf] %v815
      %912 = vst [vmem:[%s177 + $0xbc] sm:$0xf] %v816
      %v913 = vadd.f32 %v483, %v486
      %v914 = vadd.f32 %v913, %v491
      %v915 = vadd.f32 %v914, %v494
      %v916 = vadd.f32 %v915, %v499
      %v917 = vadd.f32 %v916, %v502
      %v918 = vadd.f32 %v917, %v507
      %v919 = vadd.f32 %v918, %v510
      %v920 = vadd.f32 %v919, %v515
      %v921 = vadd.f32 %v920, %v518
      %v922 = vadd.f32 %v921, %v523
      %v923 = vadd.f32 %v922, %v526
      %v924 = vadd.f32 %v923, %v531
      %v925 = vadd.f32 %v924, %v534
      %v926 = vadd.f32 %v925, %v539
      %v927 = vadd.f32 %v926, %v542
      %v928 = vadd.f32 %v927, %v547
      %v929 = vadd.f32 %v928, %v550
      %v930 = vadd.f32 %v929, %v555
      %v931 = vadd.f32 %v930, %v558
      %v932 = vadd.f32 %v931, %v563
      %v933 = vadd.f32 %v932, %v566
      %v934 = vadd.f32 %v933, %v571
      %v935 = vadd.f32 %v934, %v574
      %v936 = vadd.f32 %v935, %v579
      %v937 = vadd.f32 %v936, %v582
      %v938 = vadd.f32 %v937, %v587
      %v939 = vadd.f32 %v938, %v590
      %v940 = vadd.f32 %v939, %v595
      %v941 = vadd.f32 %v940, %v598
      %v942 = vadd.f32 %v941, %v603
      %v943 = vadd.f32 %v942, %v606
      %v944 = vadd.f32 %v943, %v611
      %v945 = vadd.f32 %v944, %v614
      %v946 = vadd.f32 %v945, %v619
      %v947 = vadd.f32 %v946, %v622
      %v948 = vadd.f32 %v947, %v627
      %v949 = vadd.f32 %v948, %v630
      %v950 = vadd.f32 %v949, %v635
      %v951 = vadd.f32 %v950, %v638
      %v952 = vadd.f32 %v951, %v643
      %v953 = vadd.f32 %v952, %v646
      %v954 = vadd.f32 %v953, %v651
      %v955 = vadd.f32 %v954, %v654
      %v956 = vadd.f32 %v955, %v659
      %v957 = vadd.f32 %v956, %v662
      %v958 = vadd.f32 %v957, %v667
      %v959 = vadd.f32 %v958, %v670
      %v960 = vrot.slane %v959, 4
      %v961 = vadd.f32 %v959, %v960
      %v962 = vrot.slane %v961, 2
      %v963 = vadd.f32 %v961, %v962
      %v964 = vrot.slane %v963, 1
      %v965 = vadd.f32 %v963, %v964
      %966 = vst [vmem:[%s181] sm:$0x1] %v965
      %v967 = vmul.f32 %v483, %v483
      %v968 = vmul.f32 %v486, %v486
      %v969 = vmul.f32 %v491, %v491
      %v970 = vmul.f32 %v494, %v494
      %v971 = vmul.f32 %v499, %v499
      %v972 = vmul.f32 %v502, %v502
      %v973 = vmul.f32 %v507, %v507
      %v974 = vmul.f32 %v510, %v510
      %v975 = vmul.f32 %v515, %v515
      %v976 = vmul.f32 %v518, %v518
      %v977 = vmul.f32 %v523, %v523
      %v978 = vmul.f32 %v526, %v526
      %v979 = vmul.f32 %v531, %v531
      %v980 = vmul.f32 %v534, %v534
      %v981 = vmul.f32 %v539, %v539
      %v982 = vmul.f32 %v542, %v542
      %v983 = vmul.f32 %v547, %v547
      %v984 = vmul.f32 %v550, %v550
      %v985 = vmul.f32 %v555, %v555
      %v986 = vmul.f32 %v558, %v558
      %v987 = vmul.f32 %v563, %v563
      %v988 = vmul.f32 %v566, %v566
      %v989 = vmul.f32 %v571, %v571
      %v990 = vmul.f32 %v574, %v574
      %v991 = vmul.f32 %v579, %v579
      %v992 = vmul.f32 %v582, %v582
      %v993 = vmul.f32 %v587, %v587
      %v994 = vmul.f32 %v590, %v590
      %v995 = vmul.f32 %v595, %v595
      %v996 = vmul.f32 %v598, %v598
      %v997 = vmul.f32 %v603, %v603
      %v998 = vmul.f32 %v606, %v606
      %v999 = vmul.f32 %v611, %v611
      %v1000 = vmul.f32 %v614, %v614
      %v1001 = vmul.f32 %v619, %v619
      %v1002 = vmul.f32 %v622, %v622
      %v1003 = vmul.f32 %v627, %v627
      %v1004 = vmul.f32 %v630, %v630
      %v1005 = vmul.f32 %v635, %v635
      %v1006 = vmul.f32 %v638, %v638
      %v1007 = vmul.f32 %v643, %v643
      %v1008 = vmul.f32 %v646, %v646
      %v1009 = vmul.f32 %v651, %v651
      %v1010 = vmul.f32 %v654, %v654
      %v1011 = vmul.f32 %v659, %v659
      %v1012 = vmul.f32 %v662, %v662
      %v1013 = vmul.f32 %v667, %v667
      %v1014 = vmul.f32 %v670, %v670
      %v1015 = vadd.f32 %v967, %v968
      %v1016 = vadd.f32 %v1015, %v969
      %v1017 = vadd.f32 %v1016, %v970
      %v1018 = vadd.f32 %v1017, %v971
      %v1019 = vadd.f32 %v1018, %v972
      %v1020 = vadd.f32 %v1019, %v973
      %v1021 = vadd.f32 %v1020, %v974
      %v1022 = vadd.f32 %v1021, %v975
      %v1023 = vadd.f32 %v1022, %v976
      %v1024 = vadd.f32 %v1023, %v977
      %v1025 = vadd.f32 %v1024, %v978
      %v1026 = vadd.f32 %v1025, %v979
      %v1027 = vadd.f32 %v1026, %v980
      %v1028 = vadd.f32 %v1027, %v981
      %v1029 = vadd.f32 %v1028, %v982
      %v1030 = vadd.f32 %v1029, %v983
      %v1031 = vadd.f32 %v1030, %v984
      %v1032 = vadd.f32 %v1031, %v985
      %v1033 = vadd.f32 %v1032, %v986
      %v1034 = vadd.f32 %v1033, %v987
      %v1035 = vadd.f32 %v1034, %v988
      %v1036 = vadd.f32 %v1035, %v989
      %v1037 = vadd.f32 %v1036, %v990
      %v1038 = vadd.f32 %v1037, %v991
      %v1039 = vadd.f32 %v1038, %v992
      %v1040 = vadd.f32 %v1039, %v993
      %v1041 = vadd.f32 %v1040, %v994
      %v1042 = vadd.f32 %v1041, %v995
      %v1043 = vadd.f32 %v1042, %v996
      %v1044 = vadd.f32 %v1043, %v997
      %v1045 = vadd.f32 %v1044, %v998
      %v1046 = vadd.f32 %v1045, %v999
      %v1047 = vadd.f32 %v1046, %v1000
      %v1048 = vadd.f32 %v1047, %v1001
      %v1049 = vadd.f32 %v1048, %v1002
      %v1050 = vadd.f32 %v1049, %v1003
      %v1051 = vadd.f32 %v1050, %v1004
      %v1052 = vadd.f32 %v1051, %v1005
      %v1053 = vadd.f32 %v1052, %v1006
      %v1054 = vadd.f32 %v1053, %v1007
      %v1055 = vadd.f32 %v1054, %v1008
      %v1056 = vadd.f32 %v1055, %v1009
      %v1057 = vadd.f32 %v1056, %v1010
      %v1058 = vadd.f32 %v1057, %v1011
      %v1059 = vadd.f32 %v1058, %v1012
      %v1060 = vadd.f32 %v1059, %v1013
      %v1061 = vadd.f32 %v1060, %v1014
      %v1062 = vrot.slane %v1061, 4
      %v1063 = vadd.f32 %v1061, %v1062
      %v1064 = vrot.slane %v1063, 2
      %v1065 = vadd.f32 %v1063, %v1064
      %v1066 = vrot.slane %v1065, 1
      %v1067 = vadd.f32 %v1065, %v1066
      %1068 = vst [vmem:[%s181 + $0x1] sm:$0x1] %v1067
      %p1069 = scmp.lt.s32.totalorder %s15, 1
      %s1070 = scalar_select %p1069, %s15, 1
      %s1071 = smul.addr %s1070, 48
      %s1072 = smul.addr %s1071, 4
      %s1073 = scalar_lea.vmem %s2, %s1072
      %p1074 = scmp.lt.s32.totalorder %s15, 1
      %s1075 = scalar_select %p1074, %s15, 1
      %s1076 = smul.addr %s1075, 2
      %s1077 = scalar_lea.vmem %s3, %s1076
      // Predicated region
      $region29: #{encoder_block_pallas.3} parent=27 // pred_check
        %p1078 = pneg %p80
      $region30: #{encoder_block_pallas.3} parent=27 // pred_check_branch
        %1080 = sbr.rel (%p1078) target = $region32
      $region31: #{encoder_block_pallas.3} parent=27 // pred_region
        _
      $region32: #{encoder_block_pallas.3} parent=27 // pred_fallthru
        _
      // Predicated region
      $region33: #{encoder_block_pallas.3} parent=27 // pred_check
        %p1081 = pneg %p106
      $region34: #{encoder_block_pallas.3} parent=27 // pred_check_branch
        %1083 = sbr.rel (%p1081) target = $region36
      $region35: #{encoder_block_pallas.3} parent=27 // pred_region
        _
      $region36: #{encoder_block_pallas.3} parent=27 // pred_fallthru
        _
    $region28: #{encoder_block_pallas.3} parent=5 // pred_fallthru
      _
    %p1084 = scmp.le.s32.totalorder 2, %s10
    // Predicated region
    $region37: #{encoder_block_pallas.3} parent=5 // pred_check
      %p1085 = pneg %p1084
    $region38: #{encoder_block_pallas.3} parent=5 // pred_check_branch
      %1087 = sbr.rel (%p1085) target = $region40
    $region39: #{encoder_block_pallas.3} parent=5 // pred_region
      %s1088 = ssub.s32 %s10, 2
      // Predicated region
      $region41: #{encoder_block_pallas.3} parent=39 // pred_check
        %p1089 = pneg %p86
      $region42: #{encoder_block_pallas.3} parent=39 // pred_check_branch
        %1091 = sbr.rel (%p1089) target = $region44
      $region43: #{encoder_block_pallas.3} parent=39 // pred_region
        %p1092 = scmp.lt.s32.totalorder %s16, 1
        %s1093 = scalar_select %p1092, %s16, 1
        %s1094 = smul.addr %s1093, 48
        %s1095 = smul.addr %s1094, 4
        %s1096 = scalar_lea.vmem %s2, %s1095
      $region44: #{encoder_block_pallas.3} parent=39 // pred_fallthru
        _
      // Predicated region
      $region45: #{encoder_block_pallas.3} parent=39 // pred_check
        %p1097 = pneg %p112
      $region46: #{encoder_block_pallas.3} parent=39 // pred_check_branch
        %1099 = sbr.rel (%p1097) target = $region48
      $region47: #{encoder_block_pallas.3} parent=39 // pred_region
        %p1100 = scmp.lt.s32.totalorder %s16, 1
        %s1101 = scalar_select %p1100, %s16, 1
        %s1102 = smul.addr %s1101, 2
        %s1103 = scalar_lea.vmem %s3, %s1102
      $region48: #{encoder_block_pallas.3} parent=39 // pred_fallthru
        _
    $region40: #{encoder_block_pallas.3} parent=5 // pred_fallthru
      _
  $region6: #{encoder_block_pallas.3} parent=0 // loop_footer
    %s14 = sadd.s32 1, %s10
  $region7: #{encoder_block_pallas.3} parent=0 // loop_footer_branch
    %9 = sbr.rel target = $region3
  $region8: #{encoder_block_pallas.3} parent=0 // loop_exit
    _

// kernel: encoder_block_pallas.4
$region0: #{encoder_block_pallas.4}
  #allocation0 [shape = 'u32[]', space=smem, size = 0x4, offset = 0x4, fixed_abs, tag = 'smem constant byte address 0x4 - core index']
  #allocation1 [shape = 'u32[144,128]{1,0:T(1,128)}', space=vmem, size = 0x12000, scoped, tag = 'internal scratch']
  #allocation2 [shape = 'bf16[448,128]{1,0:T(8,128)(2,1)}', space=vmem, size = 0x1c000, scoped, tag = 'scratch operand']
  %s0 = inlined_call_operand.vmem [shape: bf16[2,384,128], index: 0, kind: input, shape index: {}]
  %s1 = inlined_call_operand.vmem [shape: f32[1,128], index: 1, kind: input, shape index: {}]
  %s2 = inlined_call_operand.vmem [shape: f32[1,128], index: 2, kind: input, shape index: {}]
  %s3 = inlined_call_operand.vmem [shape: bf16[9,128,128], index: 3, kind: input, shape index: {}]
  %s4 = inlined_call_operand.vmem [shape: bf16[2,384,128], index: 4, kind: output, shape index: {0}]
  %s5 = inlined_call_operand.vmem [shape: f32[2,2,128], index: 5, kind: output, shape index: {1}]
  %6 = xla_tuple %s4, %s5
  %s7 = sld [smem:[#allocation0]]
  $region57: #{encoder_block_pallas.4} parent=0
    _
  %s9 = ssub.s32 1, %s7
  %s10 = scalar_select 0, %s9, %s7
  loop: start=0, step=1, limit=4
  $region2: #{encoder_block_pallas.4} parent=0 // loop_pre_header
    _
  $region3: #{encoder_block_pallas.4} parent=0 // loop_header
    %s12 = sphi 0, %s16
    %p13 = scmp.ge.s32.totalorder %s12, 4
    %s22 = sphi 0, %s24
    %s25 = sphi 0, %s22
    %s26 = sphi 0, %s25
    %s42 = sphi 0, %s26
    %s46 = sphi 0, %s46
    %s48 = sphi 0, %s46
    %s49 = sphi 0, %s48
    %s63 = sphi 0, %s49
    %s67 = sphi 0, %s67
    %s69 = sphi 0, %s67
    %s70 = sphi 0, %s69
    %s84 = sphi 0, %s70
    %s88 = sphi 0, %s88
    %s90 = sphi 0, %s88
    %s91 = sphi 0, %s90
    %s105 = sphi 0, %s91
    %s111 = sphi 0, %s113
    %s114 = sphi 0, %s111
    %s115 = sphi 0, %s114
    %s131 = sphi 0, %s115
    %s137 = sphi 0, %s139
    %s140 = sphi 0, %s137
    %s141 = sphi 0, %s140
    %s157 = sphi 0, %s141
  $region4: #{encoder_block_pallas.4} parent=0 // loop_header_branch
    %15 = sbr.rel (%p13) target = $region8
  $region5: #{encoder_block_pallas.4} parent=0 // loop_body
    %s17 = ssub.s32 %s12, 1
    %s18 = ssub.s32 %s12, 2
    %s19 = sadd.s32 %s12, 1
    %s20 = ssub.s32 %s12, %s19
    %p21 = scmp.eq.s32.totalorder %s20, 0
    %s23 = sadd.s32 %s22, 1
    %s24 = scalar_select %p21, %s22, %s23
    %p27 = pneg %p21
    %p28 = scmp.eq.s32.totalorder %s12, 1
    %p29 = por %p27, %p28
    %p30 = scmp.ne.s32.totalorder %s22, %s25
    %p31 = scmp.eq.s32.totalorder %s12, 0
    %p32 = por %p30, %p31
    %p33 = scmp.ne.s32.totalorder %s22, %s25
    %p34 = scmp.eq.s32.totalorder %s17, 1
    %p35 = por %p33, %p34
    %p36 = scmp.ne.s32.totalorder %s25, %s26
    %p37 = scmp.eq.s32.totalorder %s17, 0
    %p38 = por %p36, %p37
    %p39 = scmp.ne.s32.totalorder %s25, %s26
    %p40 = scmp.eq.s32.totalorder %s18, 1
    %p41 = por %p39, %p40
    %p43 = scmp.ne.s32.totalorder %s26, %s42
    %p44 = scmp.eq.s32.totalorder %s18, 0
    %p45 = por %p43, %p44
    %s47 = sadd.s32 %s46, 1
    %p50 = scmp.eq.s32.totalorder %s12, 1
    %p51 = scmp.ne.s32.totalorder %s46, %s48
    %p52 = scmp.eq.s32.totalorder %s12, 0
    %p53 = por %p51, %p52
    %p54 = scmp.ne.s32.totalorder %s46, %s48
    %p55 = scmp.eq.s32.totalorder %s17, 1
    %p56 = por %p54, %p55
    %p57 = scmp.ne.s32.totalorder %s48, %s49
    %p58 = scmp.eq.s32.totalorder %s17, 0
    %p59 = por %p57, %p58
    %p60 = scmp.ne.s32.totalorder %s48, %s49
    %p61 = scmp.eq.s32.totalorder %s18, 1
    %p62 = por %p60, %p61
    %p64 = scmp.ne.s32.totalorder %s49, %s63
    %p65 = scmp.eq.s32.totalorder %s18, 0
    %p66 = por %p64, %p65
    %s68 = sadd.s32 %s67, 1
    %p71 = scmp.eq.s32.totalorder %s12, 1
    %p72 = scmp.ne.s32.totalorder %s67, %s69
    %p73 = scmp.eq.s32.totalorder %s12, 0
    %p74 = por %p72, %p73
    %p75 = scmp.ne.s32.totalorder %s67, %s69
    %p76 = scmp.eq.s32.totalorder %s17, 1
    %p77 = por %p75, %p76
    %p78 = scmp.ne.s32.totalorder %s69, %s70
    %p79 = scmp.eq.s32.totalorder %s17, 0
    %p80 = por %p78, %p79
    %p81 = scmp.ne.s32.totalorder %s69, %s70
    %p82 = scmp.eq.s32.totalorder %s18, 1
    %p83 = por %p81, %p82
    %p85 = scmp.ne.s32.totalorder %s70, %s84
    %p86 = scmp.eq.s32.totalorder %s18, 0
    %p87 = por %p85, %p86
    %s89 = sadd.s32 %s88, 1
    %p92 = scmp.eq.s32.totalorder %s12, 1
    %p93 = scmp.ne.s32.totalorder %s88, %s90
    %p94 = scmp.eq.s32.totalorder %s12, 0
    %p95 = por %p93, %p94
    %p96 = scmp.ne.s32.totalorder %s88, %s90
    %p97 = scmp.eq.s32.totalorder %s17, 1
    %p98 = por %p96, %p97
    %p99 = scmp.ne.s32.totalorder %s90, %s91
    %p100 = scmp.eq.s32.totalorder %s17, 0
    %p101 = por %p99, %p100
    %p102 = scmp.ne.s32.totalorder %s90, %s91
    %p103 = scmp.eq.s32.totalorder %s18, 1
    %p104 = por %p102, %p103
    %p106 = scmp.ne.s32.totalorder %s91, %s105
    %p107 = scmp.eq.s32.totalorder %s18, 0
    %p108 = por %p106, %p107
    %s109 = ssub.s32 %s12, %s19
    %p110 = scmp.eq.s32.totalorder %s109, 0
    %s112 = sadd.s32 %s111, 1
    %s113 = scalar_select %p110, %s111, %s112
    %p116 = pneg %p110
    %p117 = scmp.eq.s32.totalorder %s12, 1
    %p118 = por %p116, %p117
    %p119 = scmp.ne.s32.totalorder %s111, %s114
    %p120 = scmp.eq.s32.totalorder %s12, 0
    %p121 = por %p119, %p120
    %p122 = scmp.ne.s32.totalorder %s111, %s114
    %p123 = scmp.eq.s32.totalorder %s17, 1
    %p124 = por %p122, %p123
    %p125 = scmp.ne.s32.totalorder %s114, %s115
    %p126 = scmp.eq.s32.totalorder %s17, 0
    %p127 = por %p125, %p126
    %p128 = scmp.ne.s32.totalorder %s114, %s115
    %p129 = scmp.eq.s32.totalorder %s18, 1
    %p130 = por %p128, %p129
    %p132 = scmp.ne.s32.totalorder %s115, %s131
    %p133 = scmp.eq.s32.totalorder %s18, 0
    %p134 = por %p132, %p133
    %s135 = ssub.s32 %s12, %s19
    %p136 = scmp.eq.s32.totalorder %s135, 0
    %s138 = sadd.s32 %s137, 1
    %s139 = scalar_select %p136, %s137, %s138
    %p142 = pneg %p136
    %p143 = scmp.eq.s32.totalorder %s12, 1
    %p144 = por %p142, %p143
    %p145 = scmp.ne.s32.totalorder %s137, %s140
    %p146 = scmp.eq.s32.totalorder %s12, 0
    %p147 = por %p145, %p146
    %p148 = scmp.ne.s32.totalorder %s137, %s140
    %p149 = scmp.eq.s32.totalorder %s17, 1
    %p150 = por %p148, %p149
    %p151 = scmp.ne.s32.totalorder %s140, %s141
    %p152 = scmp.eq.s32.totalorder %s17, 0
    %p153 = por %p151, %p152
    %p154 = scmp.ne.s32.totalorder %s140, %s141
    %p155 = scmp.eq.s32.totalorder %s18, 1
    %p156 = por %p154, %p155
    %p158 = scmp.ne.s32.totalorder %s141, %s157
    %p159 = scmp.eq.s32.totalorder %s18, 0
    %p160 = por %p158, %p159
    %p161 = scmp.le.s32.totalorder 1, %s12
    %p162 = scmp.lt.s32.totalorder %s12, 3
    %p163 = pnand %p161, %p162
    %p164 = pneg %p163
    // Predicated region
    $region9: #{encoder_block_pallas.4} parent=5 // pred_check
      _
    $region10: #{encoder_block_pallas.4} parent=5 // pred_check_branch
      %166 = sbr.rel (%p163) target = $region12
    $region11: #{encoder_block_pallas.4} parent=5 // pred_region
      %s167 = ssub.s32 %s12, 1
      // Predicated region
      $region13: #{encoder_block_pallas.4} parent=11 // pred_check
        %p168 = pneg %p59
      $region14: #{encoder_block_pallas.4} parent=11 // pred_check_branch
        %170 = sbr.rel (%p168) target = $region16
      $region15: #{encoder_block_pallas.4} parent=11 // pred_region
        _
      $region16: #{encoder_block_pallas.4} parent=11 // pred_fallthru
        _
      // Predicated region
      $region17: #{encoder_block_pallas.4} parent=11 // pred_check
        %p171 = pneg %p80
      $region18: #{encoder_block_pallas.4} parent=11 // pred_check_branch
        %173 = sbr.rel (%p171) target = $region20
      $region19: #{encoder_block_pallas.4} parent=11 // pred_region
        _
      $region20: #{encoder_block_pallas.4} parent=11 // pred_fallthru
        _
      // Predicated region
      $region21: #{encoder_block_pallas.4} parent=11 // pred_check
        %p174 = pneg %p101
      $region22: #{encoder_block_pallas.4} parent=11 // pred_check_branch
        %176 = sbr.rel (%p174) target = $region24
      $region23: #{encoder_block_pallas.4} parent=11 // pred_region
        _
      $region24: #{encoder_block_pallas.4} parent=11 // pred_fallthru
        _
    $region12: #{encoder_block_pallas.4} parent=5 // pred_fallthru
      _
    %p177 = scmp.lt.s32.totalorder %s12, 2
    // Predicated region
    $region25: #{encoder_block_pallas.4} parent=5 // pred_check
      %p178 = pneg %p177
    $region26: #{encoder_block_pallas.4} parent=5 // pred_check_branch
      %180 = sbr.rel (%p178) target = $region28
    $region27: #{encoder_block_pallas.4} parent=5 // pred_region
      // Predicated region
      $region29: #{encoder_block_pallas.4} parent=27 // pred_check
        %p181 = pneg %p32
      $region30: #{encoder_block_pallas.4} parent=27 // pred_check_branch
        %183 = sbr.rel (%p181) target = $region32
      $region31: #{encoder_block_pallas.4} parent=27 // pred_region
        %p184 = scmp.lt.s32.totalorder %s12, 1
        %s185 = scalar_select %p184, %s12, 1
        %s186 = smul.addr %s185, 48
        %s187 = smul.addr %s186, 4
        %s188 = scalar_lea.vmem %s0, %s187
      $region32: #{encoder_block_pallas.4} parent=27 // pred_fallthru
        _
    $region28: #{encoder_block_pallas.4} parent=5 // pred_fallthru
      _
    %p189 = scmp.le.s32.totalorder 1, %s12
    %p190 = scmp.lt.s32.totalorder %s12, 3
    %p191 = pnand %p189, %p190
    %p192 = pneg %p191
    // Predicated region
    $region33: #{encoder_block_pallas.4} parent=5 // pred_check
      _
    $region34: #{encoder_block_pallas.4} parent=5 // pred_check_branch
      %194 = sbr.rel (%p191) target = $region36
    $region35: #{encoder_block_pallas.4} parent=5 // pred_region
      %s195 = ssub.s32 %s12, 1
      %p196 = scmp.lt.s32.totalorder %s17, 1
      %s197 = scalar_select %p196, %s17, 1
      %s198 = smul.addr %s197, 48
      %s199 = smul.addr %s198, 4
      %s200 = scalar_lea.vmem %s0, %s199
      %p201 = pneg %p38
      %p202 = pneg %p35
      %p203 = pneg %p59
      %p204 = pneg %p56
      %p205 = pneg %p80
      %p206 = pneg %p77
      %p207 = pneg %p101
      %p208 = pneg %p98
      %p209 = pneg %p127
      %p210 = pneg %p124
      %p211 = scmp.lt.s32.totalorder %s17, 1
      %s212 = scalar_select %p211, %s17, 1
      %s213 = smul.addr %s212, 48
      %s214 = smul.addr %s213, 4
      %s215 = scalar_lea.vmem %s4, %s214
      %p216 = pneg %p153
      %p217 = pneg %p150
      %p218 = scmp.lt.s32.totalorder %s17, 1
      %s219 = scalar_select %p218, %s17, 1
      %s220 = smul.addr %s219, 2
      %s221 = scalar_lea.vmem %s5, %s220
      %p222 = scmp.lt.s32.totalorder %s17, 1
      %s223 = scalar_select %p222, %s17, 1
      %s224 = smul.addr %s223, 48
      %s225 = smul.addr %s224, 4
      %s226 = scalar_lea.vmem %s0, %s225
      %p227 = scmp.lt.s32.totalorder %s17, 1
      %s228 = scalar_select %p227, %s17, 1
      %s229 = smul.addr %s228, 48
      %s230 = smul.addr %s229, 4
      %s231 = scalar_lea.vmem %s4, %s230
      %p232 = scmp.lt.s32.totalorder %s17, 1
      %s233 = scalar_select %p232, %s17, 1
      %s234 = smul.addr %s233, 2
      %s235 = scalar_lea.vmem %s5, %s234
      %v237 = vlaneseq
      %v238 = vshrl.u32 %v237, 7
      %v239 = vadd.s32 %v238, 8
      %v240 = vadd.s32 %v238, 16
      %v241 = vadd.s32 %v238, 24
      %v242 = vadd.s32 %v238, 32
      %v243 = vadd.s32 %v238, 40
      %v244 = vadd.s32 %v238, 48
      %v245 = vadd.s32 %v238, 56
      %v246 = vadd.s32 %v238, 64
      %v247 = vadd.s32 %v238, 72
      %v248 = vadd.s32 %v238, 80
      %v249 = vadd.s32 %v238, 88
      %v250 = vadd.s32 %v238, 96
      %v251 = vadd.s32 %v238, 104
      %v252 = vadd.s32 %v238, 112
      %v253 = vadd.s32 %v238, 120
      %v254 = vadd.s32 %v238, 128
      %v255 = vadd.s32 %v238, 136
      %v256 = vadd.s32 %v238, 144
      %v257 = vadd.s32 %v238, 152
      %v258 = vadd.s32 %v238, 160
      %v259 = vadd.s32 %v238, 168
      %v260 = vadd.s32 %v238, 176
      %v261 = vadd.s32 %v238, 184
      %v262 = vadd.s32 %v238, 192
      %v263 = vadd.s32 %v238, 200
      %v264 = vadd.s32 %v238, 208
      %v265 = vadd.s32 %v238, 216
      %v266 = vadd.s32 %v238, 224
      %v267 = vadd.s32 %v238, 232
      %v268 = vadd.s32 %v238, 240
      %v269 = vadd.s32 %v238, 248
      %v270 = vadd.s32 %v238, 256
      %v271 = vadd.s32 %v238, 264
      %v272 = vadd.s32 %v238, 272
      %v273 = vadd.s32 %v238, 280
      %v274 = vadd.s32 %v238, 288
      %v275 = vadd.s32 %v238, 296
      %v276 = vadd.s32 %v238, 304
      %v277 = vadd.s32 %v238, 312
      %v278 = vadd.s32 %v238, 320
      %v279 = vadd.s32 %v238, 328
      %v280 = vadd.s32 %v238, 336
      %v281 = vadd.s32 %v238, 344
      %v282 = vadd.s32 %v238, 352
      %v283 = vadd.s32 %v238, 360
      %v284 = vadd.s32 %v238, 368
      %v285 = vadd.s32 %v238, 376
      %vm286 = vcmp.lt.s32.totalorder %v238, 0
      %v287 = vsub.s32 0, %v238
      %v288 = vsel %vm286, %v287, %v238
      %v289 = vmul.u32.u64.compose %v288, 2863311531
      %v290 = vextract.low.u32 %v289
      %v291 = vextract.high.u32 %v289
      %v292 = vshrl.u32 %v291, 4
      %v293 = vmul.u32 %v292, 24
      %v294 = vsub.s32 %v288, %v293
      %v295 = vsub.s32 0, %v294
      %v296 = vsel %vm286, %v295, %v294
      %vm297 = vcmp.lt.s32.totalorder %v239, 0
      %v298 = vsub.s32 0, %v239
      %v299 = vsel %vm297, %v298, %v239
      %v300 = vmul.u32.u64.compose %v299, 2863311531
      %v301 = vextract.low.u32 %v300
      %v302 = vextract.high.u32 %v300
      %v303 = vshrl.u32 %v302, 4
      %v304 = vmul.u32 %v303, 24
      %v305 = vsub.s32 %v299, %v304
      %v306 = vsub.s32 0, %v305
      %v307 = vsel %vm297, %v306, %v305
      %vm308 = vcmp.lt.s32.totalorder %v240, 0
      %v309 = vsub.s32 0, %v240
      %v310 = vsel %vm308, %v309, %v240
      %v311 = vmul.u32.u64.compose %v310, 2863311531
      %v312 = vextract.low.u32 %v311
      %v313 = vextract.high.u32 %v311
      %v314 = vshrl.u32 %v313, 4
      %v315 = vmul.u32 %v314, 24
      %v316 = vsub.s32 %v310, %v315
      %v317 = vsub.s32 0, %v316
      %v318 = vsel %vm308, %v317, %v316
      %vm319 = vcmp.lt.s32.totalorder %v241, 0
      %v320 = vsub.s32 0, %v241
      %v321 = vsel %vm319, %v320, %v241
      %v322 = vmul.u32.u64.compose %v321, 2863311531
      %v323 = vextract.low.u32 %v322
      %v324 = vextract.high.u32 %v322
      %v325 = vshrl.u32 %v324, 4
      %v326 = vmul.u32 %v325, 24
      %v327 = vsub.s32 %v321, %v326
      %v328 = vsub.s32 0, %v327
      %v329 = vsel %vm319, %v328, %v327
      %vm330 = vcmp.lt.s32.totalorder %v242, 0
      %v331 = vsub.s32 0, %v242
      %v332 = vsel %vm330, %v331, %v242
      %v333 = vmul.u32.u64.compose %v332, 2863311531
      %v334 = vextract.low.u32 %v333
      %v335 = vextract.high.u32 %v333
      %v336 = vshrl.u32 %v335, 4
      %v337 = vmul.u32 %v336, 24
      %v338 = vsub.s32 %v332, %v337
      %v339 = vsub.s32 0, %v338
      %v340 = vsel %vm330, %v339, %v338
      %vm341 = vcmp.lt.s32.totalorder %v243, 0
      %v342 = vsub.s32 0, %v243
      %v343 = vsel %vm341, %v342, %v243
      %v344 = vmul.u32.u64.compose %v343, 2863311531
      %v345 = vextract.low.u32 %v344
      %v346 = vextract.high.u32 %v344
      %v347 = vshrl.u32 %v346, 4
      %v348 = vmul.u32 %v347, 24
      %v349 = vsub.s32 %v343, %v348
      %v350 = vsub.s32 0, %v349
      %v351 = vsel %vm341, %v350, %v349
      %vm352 = vcmp.lt.s32.totalorder %v244, 0
      %v353 = vsub.s32 0, %v244
      %v354 = vsel %vm352, %v353, %v244
      %v355 = vmul.u32.u64.compose %v354, 2863311531
      %v356 = vextract.low.u32 %v355
      %v357 = vextract.high.u32 %v355
      %v358 = vshrl.u32 %v357, 4
      %v359 = vmul.u32 %v358, 24
      %v360 = vsub.s32 %v354, %v359
      %v361 = vsub.s32 0, %v360
      %v362 = vsel %vm352, %v361, %v360
      %vm363 = vcmp.lt.s32.totalorder %v245, 0
      %v364 = vsub.s32 0, %v245
      %v365 = vsel %vm363, %v364, %v245
      %v366 = vmul.u32.u64.compose %v365, 2863311531
      %v367 = vextract.low.u32 %v366
      %v368 = vextract.high.u32 %v366
      %v369 = vshrl.u32 %v368, 4
      %v370 = vmul.u32 %v369, 24
      %v371 = vsub.s32 %v365, %v370
      %v372 = vsub.s32 0, %v371
      %v373 = vsel %vm363, %v372, %v371
      %vm374 = vcmp.lt.s32.totalorder %v246, 0
      %v375 = vsub.s32 0, %v246
      %v376 = vsel %vm374, %v375, %v246
      %v377 = vmul.u32.u64.compose %v376, 2863311531
      %v378 = vextract.low.u32 %v377
      %v379 = vextract.high.u32 %v377
      %v380 = vshrl.u32 %v379, 4
      %v381 = vmul.u32 %v380, 24
      %v382 = vsub.s32 %v376, %v381
      %v383 = vsub.s32 0, %v382
      %v384 = vsel %vm374, %v383, %v382
      %vm385 = vcmp.lt.s32.totalorder %v247, 0
      %v386 = vsub.s32 0, %v247
      %v387 = vsel %vm385, %v386, %v247
      %v388 = vmul.u32.u64.compose %v387, 2863311531
      %v389 = vextract.low.u32 %v388
      %v390 = vextract.high.u32 %v388
      %v391 = vshrl.u32 %v390, 4
      %v392 = vmul.u32 %v391, 24
      %v393 = vsub.s32 %v387, %v392
      %v394 = vsub.s32 0, %v393
      %v395 = vsel %vm385, %v394, %v393
      %vm396 = vcmp.lt.s32.totalorder %v248, 0
      %v397 = vsub.s32 0, %v248
      %v398 = vsel %vm396, %v397, %v248
      %v399 = vmul.u32.u64.compose %v398, 2863311531
      %v400 = vextract.low.u32 %v399
      %v401 = vextract.high.u32 %v399
      %v402 = vshrl.u32 %v401, 4
      %v403 = vmul.u32 %v402, 24
      %v404 = vsub.s32 %v398, %v403
      %v405 = vsub.s32 0, %v404
      %v406 = vsel %vm396, %v405, %v404
      %vm407 = vcmp.lt.s32.totalorder %v249, 0
      %v408 = vsub.s32 0, %v249
      %v409 = vsel %vm407, %v408, %v249
      %v410 = vmul.u32.u64.compose %v409, 2863311531
      %v411 = vextract.low.u32 %v410
      %v412 = vextract.high.u32 %v410
      %v413 = vshrl.u32 %v412, 4
      %v414 = vmul.u32 %v413, 24
      %v415 = vsub.s32 %v409, %v414
      %v416 = vsub.s32 0, %v415
      %v417 = vsel %vm407, %v416, %v415
      %vm418 = vcmp.lt.s32.totalorder %v250, 0
      %v419 = vsub.s32 0, %v250
      %v420 = vsel %vm418, %v419, %v250
      %v421 = vmul.u32.u64.compose %v420, 2863311531
      %v422 = vextract.low.u32 %v421
      %v423 = vextract.high.u32 %v421
      %v424 = vshrl.u32 %v423, 4
      %v425 = vmul.u32 %v424, 24
      %v426 = vsub.s32 %v420, %v425
      %v427 = vsub.s32 0, %v426
      %v428 = vsel %vm418, %v427, %v426
      %vm429 = vcmp.lt.s32.totalorder %v251, 0
      %v430 = vsub.s32 0, %v251
      %v431 = vsel %vm429, %v430, %v251
      %v432 = vmul.u32.u64.compose %v431, 2863311531
      %v433 = vextract.low.u32 %v432
      %v434 = vextract.high.u32 %v432
      %v435 = vshrl.u32 %v434, 4
      %v436 = vmul.u32 %v435, 24
      %v437 = vsub.s32 %v431, %v436
      %v438 = vsub.s32 0, %v437
      %v439 = vsel %vm429, %v438, %v437
      %vm440 = vcmp.lt.s32.totalorder %v252, 0
      %v441 = vsub.s32 0, %v252
      %v442 = vsel %vm440, %v441, %v252
      %v443 = vmul.u32.u64.compose %v442, 2863311531
      %v444 = vextract.low.u32 %v443
      %v445 = vextract.high.u32 %v443
      %v446 = vshrl.u32 %v445, 4
      %v447 = vmul.u32 %v446, 24
      %v448 = vsub.s32 %v442, %v447
      %v449 = vsub.s32 0, %v448
      %v450 = vsel %vm440, %v449, %v448
      %vm451 = vcmp.lt.s32.totalorder %v253, 0
      %v452 = vsub.s32 0, %v253
      %v453 = vsel %vm451, %v452, %v253
      %v454 = vmul.u32.u64.compose %v453, 2863311531
      %v455 = vextract.low.u32 %v454
      %v456 = vextract.high.u32 %v454
      %v457 = vshrl.u32 %v456, 4
      %v458 = vmul.u32 %v457, 24
      %v459 = vsub.s32 %v453, %v458
      %v460 = vsub.s32 0, %v459
      %v461 = vsel %vm451, %v460, %v459
      %vm462 = vcmp.lt.s32.totalorder %v254, 0
      %v463 = vsub.s32 0, %v254
      %v464 = vsel %vm462, %v463, %v254
      %v465 = vmul.u32.u64.compose %v464, 2863311531
      %v466 = vextract.low.u32 %v465
      %v467 = vextract.high.u32 %v465
      %v468 = vshrl.u32 %v467, 4
      %v469 = vmul.u32 %v468, 24
      %v470 = vsub.s32 %v464, %v469
      %v471 = vsub.s32 0, %v470
      %v472 = vsel %vm462, %v471, %v470
      %vm473 = vcmp.lt.s32.totalorder %v255, 0
      %v474 = vsub.s32 0, %v255
      %v475 = vsel %vm473, %v474, %v255
      %v476 = vmul.u32.u64.compose %v475, 2863311531
      %v477 = vextract.low.u32 %v476
      %v478 = vextract.high.u32 %v476
      %v479 = vshrl.u32 %v478, 4
      %v480 = vmul.u32 %v479, 24
      %v481 = vsub.s32 %v475, %v480
      %v482 = vsub.s32 0, %v481
      %v483 = vsel %vm473, %v482, %v481
      %vm484 = vcmp.lt.s32.totalorder %v256, 0
      %v485 = vsub.s32 0, %v256
      %v486 = vsel %vm484, %v485, %v256
      %v487 = vmul.u32.u64.compose %v486, 2863311531
      %v488 = vextract.low.u32 %v487
      %v489 = vextract.high.u32 %v487
      %v490 = vshrl.u32 %v489, 4
      %v491 = vmul.u32 %v490, 24
      %v492 = vsub.s32 %v486, %v491
      %v493 = vsub.s32 0, %v492
      %v494 = vsel %vm484, %v493, %v492
      %vm495 = vcmp.lt.s32.totalorder %v257, 0
      %v496 = vsub.s32 0, %v257
      %v497 = vsel %vm495, %v496, %v257
      %v498 = vmul.u32.u64.compose %v497, 2863311531
      %v499 = vextract.low.u32 %v498
      %v500 = vextract.high.u32 %v498
      %v501 = vshrl.u32 %v500, 4
      %v502 = vmul.u32 %v501, 24
      %v503 = vsub.s32 %v497, %v502
      %v504 = vsub.s32 0, %v503
      %v505 = vsel %vm495, %v504, %v503
      %vm506 = vcmp.lt.s32.totalorder %v258, 0
      %v507 = vsub.s32 0, %v258
      %v508 = vsel %vm506, %v507, %v258
      %v509 = vmul.u32.u64.compose %v508, 2863311531
      %v510 = vextract.low.u32 %v509
      %v511 = vextract.high.u32 %v509
      %v512 = vshrl.u32 %v511, 4
      %v513 = vmul.u32 %v512, 24
      %v514 = vsub.s32 %v508, %v513
      %v515 = vsub.s32 0, %v514
      %v516 = vsel %vm506, %v515, %v514
      %vm517 = vcmp.lt.s32.totalorder %v259, 0
      %v518 = vsub.s32 0, %v259
      %v519 = vsel %vm517, %v518, %v259
      %v520 = vmul.u32.u64.compose %v519, 2863311531
      %v521 = vextract.low.u32 %v520
      %v522 = vextract.high.u32 %v520
      %v523 = vshrl.u32 %v522, 4
      %v524 = vmul.u32 %v523, 24
      %v525 = vsub.s32 %v519, %v524
      %v526 = vsub.s32 0, %v525
      %v527 = vsel %vm517, %v526, %v525
      %vm528 = vcmp.lt.s32.totalorder %v260, 0
      %v529 = vsub.s32 0, %v260
      %v530 = vsel %vm528, %v529, %v260
      %v531 = vmul.u32.u64.compose %v530, 2863311531
      %v532 = vextract.low.u32 %v531
      %v533 = vextract.high.u32 %v531
      %v534 = vshrl.u32 %v533, 4
      %v535 = vmul.u32 %v534, 24
      %v536 = vsub.s32 %v530, %v535
      %v537 = vsub.s32 0, %v536
      %v538 = vsel %vm528, %v537, %v536
      %vm539 = vcmp.lt.s32.totalorder %v261, 0
      %v540 = vsub.s32 0, %v261
      %v541 = vsel %vm539, %v540, %v261
      %v542 = vmul.u32.u64.compose %v541, 2863311531
      %v543 = vextract.low.u32 %v542
      %v544 = vextract.high.u32 %v542
      %v545 = vshrl.u32 %v544, 4
      %v546 = vmul.u32 %v545, 24
      %v547 = vsub.s32 %v541, %v546
      %v548 = vsub.s32 0, %v547
      %v549 = vsel %vm539, %v548, %v547
      %vm550 = vcmp.lt.s32.totalorder %v262, 0
      %v551 = vsub.s32 0, %v262
      %v552 = vsel %vm550, %v551, %v262
      %v553 = vmul.u32.u64.compose %v552, 2863311531
      %v554 = vextract.low.u32 %v553
      %v555 = vextract.high.u32 %v553
      %v556 = vshrl.u32 %v555, 4
      %v557 = vmul.u32 %v556, 24
      %v558 = vsub.s32 %v552, %v557
      %v559 = vsub.s32 0, %v558
      %v560 = vsel %vm550, %v559, %v558
      %vm561 = vcmp.lt.s32.totalorder %v263, 0
      %v562 = vsub.s32 0, %v263
      %v563 = vsel %vm561, %v562, %v263
      %v564 = vmul.u32.u64.compose %v563, 2863311531
      %v565 = vextract.low.u32 %v564
      %v566 = vextract.high.u32 %v564
      %v567 = vshrl.u32 %v566, 4
      %v568 = vmul.u32 %v567, 24
      %v569 = vsub.s32 %v563, %v568
      %v570 = vsub.s32 0, %v569
      %v571 = vsel %vm561, %v570, %v569
      %vm572 = vcmp.lt.s32.totalorder %v264, 0
      %v573 = vsub.s32 0, %v264
      %v574 = vsel %vm572, %v573, %v264
      %v575 = vmul.u32.u64.compose %v574, 2863311531
      %v576 = vextract.low.u32 %v575
      %v577 = vextract.high.u32 %v575
      %v578 = vshrl.u32 %v577, 4
      %v579 = vmul.u32 %v578, 24
      %v580 = vsub.s32 %v574, %v579
      %v581 = vsub.s32 0, %v580
      %v582 = vsel %vm572, %v581, %v580
      %vm583 = vcmp.lt.s32.totalorder %v265, 0
      %v584 = vsub.s32 0, %v265
      %v585 = vsel %vm583, %v584, %v265
      %v586 = vmul.u32.u64.compose %v585, 2863311531
      %v587 = vextract.low.u32 %v586
      %v588 = vextract.high.u32 %v586
      %v589 = vshrl.u32 %v588, 4
      %v590 = vmul.u32 %v589, 24
      %v591 = vsub.s32 %v585, %v590
      %v592 = vsub.s32 0, %v591
      %v593 = vsel %vm583, %v592, %v591
      %vm594 = vcmp.lt.s32.totalorder %v266, 0
      %v595 = vsub.s32 0, %v266
      %v596 = vsel %vm594, %v595, %v266
      %v597 = vmul.u32.u64.compose %v596, 2863311531
      %v598 = vextract.low.u32 %v597
      %v599 = vextract.high.u32 %v597
      %v600 = vshrl.u32 %v599, 4
      %v601 = vmul.u32 %v600, 24
      %v602 = vsub.s32 %v596, %v601
      %v603 = vsub.s32 0, %v602
      %v604 = vsel %vm594, %v603, %v602
      %vm605 = vcmp.lt.s32.totalorder %v267, 0
      %v606 = vsub.s32 0, %v267
      %v607 = vsel %vm605, %v606, %v267
      %v608 = vmul.u32.u64.compose %v607, 2863311531
      %v609 = vextract.low.u32 %v608
      %v610 = vextract.high.u32 %v608
      %v611 = vshrl.u32 %v610, 4
      %v612 = vmul.u32 %v611, 24
      %v613 = vsub.s32 %v607, %v612
      %v614 = vsub.s32 0, %v613
      %v615 = vsel %vm605, %v614, %v613
      %vm616 = vcmp.lt.s32.totalorder %v268, 0
      %v617 = vsub.s32 0, %v268
      %v618 = vsel %vm616, %v617, %v268
      %v619 = vmul.u32.u64.compose %v618, 2863311531
      %v620 = vextract.low.u32 %v619
      %v621 = vextract.high.u32 %v619
      %v622 = vshrl.u32 %v621, 4
      %v623 = vmul.u32 %v622, 24
      %v624 = vsub.s32 %v618, %v623
      %v625 = vsub.s32 0, %v624
      %v626 = vsel %vm616, %v625, %v624
      %vm627 = vcmp.lt.s32.totalorder %v269, 0
      %v628 = vsub.s32 0, %v269
      %v629 = vsel %vm627, %v628, %v269
      %v630 = vmul.u32.u64.compose %v629, 2863311531
      %v631 = vextract.low.u32 %v630
      %v632 = vextract.high.u32 %v630
      %v633 = vshrl.u32 %v632, 4
      %v634 = vmul.u32 %v633, 24
      %v635 = vsub.s32 %v629, %v634
      %v636 = vsub.s32 0, %v635
      %v637 = vsel %vm627, %v636, %v635
      %vm638 = vcmp.lt.s32.totalorder %v270, 0
      %v639 = vsub.s32 0, %v270
      %v640 = vsel %vm638, %v639, %v270
      %v641 = vmul.u32.u64.compose %v640, 2863311531
      %v642 = vextract.low.u32 %v641
      %v643 = vextract.high.u32 %v641
      %v644 = vshrl.u32 %v643, 4
      %v645 = vmul.u32 %v644, 24
      %v646 = vsub.s32 %v640, %v645
      %v647 = vsub.s32 0, %v646
      %v648 = vsel %vm638, %v647, %v646
      %vm649 = vcmp.lt.s32.totalorder %v271, 0
      %v650 = vsub.s32 0, %v271
      %v651 = vsel %vm649, %v650, %v271
      %v652 = vmul.u32.u64.compose %v651, 2863311531
      %v653 = vextract.low.u32 %v652
      %v654 = vextract.high.u32 %v652
      %v655 = vshrl.u32 %v654, 4
      %v656 = vmul.u32 %v655, 24
      %v657 = vsub.s32 %v651, %v656
      %v658 = vsub.s32 0, %v657
      %v659 = vsel %vm649, %v658, %v657
      %vm660 = vcmp.lt.s32.totalorder %v272, 0
      %v661 = vsub.s32 0, %v272
      %v662 = vsel %vm660, %v661, %v272
      %v663 = vmul.u32.u64.compose %v662, 2863311531
      %v664 = vextract.low.u32 %v663
      %v665 = vextract.high.u32 %v663
      %v666 = vshrl.u32 %v665, 4
      %v667 = vmul.u32 %v666, 24
      %v668 = vsub.s32 %v662, %v667
      %v669 = vsub.s32 0, %v668
      %v670 = vsel %vm660, %v669, %v668
      %vm671 = vcmp.lt.s32.totalorder %v273, 0
      %v672 = vsub.s32 0, %v273
      %v673 = vsel %vm671, %v672, %v273
      %v674 = vmul.u32.u64.compose %v673, 2863311531
      %v675 = vextract.low.u32 %v674
      %v676 = vextract.high.u32 %v674
      %v677 = vshrl.u32 %v676, 4
      %v678 = vmul.u32 %v677, 24
      %v679 = vsub.s32 %v673, %v678
      %v680 = vsub.s32 0, %v679
      %v681 = vsel %vm671, %v680, %v679
      %vm682 = vcmp.lt.s32.totalorder %v274, 0
      %v683 = vsub.s32 0, %v274
      %v684 = vsel %vm682, %v683, %v274
      %v685 = vmul.u32.u64.compose %v684, 2863311531
      %v686 = vextract.low.u32 %v685
      %v687 = vextract.high.u32 %v685
      %v688 = vshrl.u32 %v687, 4
      %v689 = vmul.u32 %v688, 24
      %v690 = vsub.s32 %v684, %v689
      %v691 = vsub.s32 0, %v690
      %v692 = vsel %vm682, %v691, %v690
      %vm693 = vcmp.lt.s32.totalorder %v275, 0
      %v694 = vsub.s32 0, %v275
      %v695 = vsel %vm693, %v694, %v275
      %v696 = vmul.u32.u64.compose %v695, 2863311531
      %v697 = vextract.low.u32 %v696
      %v698 = vextract.high.u32 %v696
      %v699 = vshrl.u32 %v698, 4
      %v700 = vmul.u32 %v699, 24
      %v701 = vsub.s32 %v695, %v700
      %v702 = vsub.s32 0, %v701
      %v703 = vsel %vm693, %v702, %v701
      %vm704 = vcmp.lt.s32.totalorder %v276, 0
      %v705 = vsub.s32 0, %v276
      %v706 = vsel %vm704, %v705, %v276
      %v707 = vmul.u32.u64.compose %v706, 2863311531
      %v708 = vextract.low.u32 %v707
      %v709 = vextract.high.u32 %v707
      %v710 = vshrl.u32 %v709, 4
      %v711 = vmul.u32 %v710, 24
      %v712 = vsub.s32 %v706, %v711
      %v713 = vsub.s32 0, %v712
      %v714 = vsel %vm704, %v713, %v712
      %vm715 = vcmp.lt.s32.totalorder %v277, 0
      %v716 = vsub.s32 0, %v277
      %v717 = vsel %vm715, %v716, %v277
      %v718 = vmul.u32.u64.compose %v717, 2863311531
      %v719 = vextract.low.u32 %v718
      %v720 = vextract.high.u32 %v718
      %v721 = vshrl.u32 %v720, 4
      %v722 = vmul.u32 %v721, 24
      %v723 = vsub.s32 %v717, %v722
      %v724 = vsub.s32 0, %v723
      %v725 = vsel %vm715, %v724, %v723
      %vm726 = vcmp.lt.s32.totalorder %v278, 0
      %v727 = vsub.s32 0, %v278
      %v728 = vsel %vm726, %v727, %v278
      %v729 = vmul.u32.u64.compose %v728, 2863311531
      %v730 = vextract.low.u32 %v729
      %v731 = vextract.high.u32 %v729
      %v732 = vshrl.u32 %v731, 4
      %v733 = vmul.u32 %v732, 24
      %v734 = vsub.s32 %v728, %v733
      %v735 = vsub.s32 0, %v734
      %v736 = vsel %vm726, %v735, %v734
      %vm737 = vcmp.lt.s32.totalorder %v279, 0
      %v738 = vsub.s32 0, %v279
      %v739 = vsel %vm737, %v738, %v279
      %v740 = vmul.u32.u64.compose %v739, 2863311531
      %v741 = vextract.low.u32 %v740
      %v742 = vextract.high.u32 %v740
      %v743 = vshrl.u32 %v742, 4
      %v744 = vmul.u32 %v743, 24
      %v745 = vsub.s32 %v739, %v744
      %v746 = vsub.s32 0, %v745
      %v747 = vsel %vm737, %v746, %v745
      %vm748 = vcmp.lt.s32.totalorder %v280, 0
      %v749 = vsub.s32 0, %v280
      %v750 = vsel %vm748, %v749, %v280
      %v751 = vmul.u32.u64.compose %v750, 2863311531
      %v752 = vextract.low.u32 %v751
      %v753 = vextract.high.u32 %v751
      %v754 = vshrl.u32 %v753, 4
      %v755 = vmul.u32 %v754, 24
      %v756 = vsub.s32 %v750, %v755
      %v757 = vsub.s32 0, %v756
      %v758 = vsel %vm748, %v757, %v756
      %vm759 = vcmp.lt.s32.totalorder %v281, 0
      %v760 = vsub.s32 0, %v281
      %v761 = vsel %vm759, %v760, %v281
      %v762 = vmul.u32.u64.compose %v761, 2863311531
      %v763 = vextract.low.u32 %v762
      %v764 = vextract.high.u32 %v762
      %v765 = vshrl.u32 %v764, 4
      %v766 = vmul.u32 %v765, 24
      %v767 = vsub.s32 %v761, %v766
      %v768 = vsub.s32 0, %v767
      %v769 = vsel %vm759, %v768, %v767
      %vm770 = vcmp.lt.s32.totalorder %v282, 0
      %v771 = vsub.s32 0, %v282
      %v772 = vsel %vm770, %v771, %v282
      %v773 = vmul.u32.u64.compose %v772, 2863311531
      %v774 = vextract.low.u32 %v773
      %v775 = vextract.high.u32 %v773
      %v776 = vshrl.u32 %v775, 4
      %v777 = vmul.u32 %v776, 24
      %v778 = vsub.s32 %v772, %v777
      %v779 = vsub.s32 0, %v778
      %v780 = vsel %vm770, %v779, %v778
      %vm781 = vcmp.lt.s32.totalorder %v283, 0
      %v782 = vsub.s32 0, %v283
      %v783 = vsel %vm781, %v782, %v283
      %v784 = vmul.u32.u64.compose %v783, 2863311531
      %v785 = vextract.low.u32 %v784
      %v786 = vextract.high.u32 %v784
      %v787 = vshrl.u32 %v786, 4
      %v788 = vmul.u32 %v787, 24
      %v789 = vsub.s32 %v783, %v788
      %v790 = vsub.s32 0, %v789
      %v791 = vsel %vm781, %v790, %v789
      %vm792 = vcmp.lt.s32.totalorder %v284, 0
      %v793 = vsub.s32 0, %v284
      %v794 = vsel %vm792, %v793, %v284
      %v795 = vmul.u32.u64.compose %v794, 2863311531
      %v796 = vextract.low.u32 %v795
      %v797 = vextract.high.u32 %v795
      %v798 = vshrl.u32 %v797, 4
      %v799 = vmul.u32 %v798, 24
      %v800 = vsub.s32 %v794, %v799
      %v801 = vsub.s32 0, %v800
      %v802 = vsel %vm792, %v801, %v800
      %vm803 = vcmp.lt.s32.totalorder %v285, 0
      %v804 = vsub.s32 0, %v285
      %v805 = vsel %vm803, %v804, %v285
      %v806 = vmul.u32.u64.compose %v805, 2863311531
      %v807 = vextract.low.u32 %v806
      %v808 = vextract.high.u32 %v806
      %v809 = vshrl.u32 %v808, 4
      %v810 = vmul.u32 %v809, 24
      %v811 = vsub.s32 %v805, %v810
      %v812 = vsub.s32 0, %v811
      %v813 = vsel %vm803, %v812, %v811
      %vm814 = vcmp.ne.s32.totalorder %v296, 0
      %vm815 = vcmp.ne.s32.totalorder %v307, 0
      %vm816 = vcmp.ne.s32.totalorder %v318, 0
      %vm817 = vcmp.ne.s32.totalorder %v329, 0
      %vm818 = vcmp.ne.s32.totalorder %v340, 0
      %vm819 = vcmp.ne.s32.totalorder %v351, 0
      %vm820 = vcmp.ne.s32.totalorder %v362, 0
      %vm821 = vcmp.ne.s32.totalorder %v373, 0
      %vm822 = vcmp.ne.s32.totalorder %v384, 0
      %vm823 = vcmp.ne.s32.totalorder %v395, 0
      %vm824 = vcmp.ne.s32.totalorder %v406, 0
      %vm825 = vcmp.ne.s32.totalorder %v417, 0
      %vm826 = vcmp.ne.s32.totalorder %v428, 0
      %vm827 = vcmp.ne.s32.totalorder %v439, 0
      %vm828 = vcmp.ne.s32.totalorder %v450, 0
      %vm829 = vcmp.ne.s32.totalorder %v461, 0
      %vm830 = vcmp.ne.s32.totalorder %v472, 0
      %vm831 = vcmp.ne.s32.totalorder %v483, 0
      %vm832 = vcmp.ne.s32.totalorder %v494, 0
      %vm833 = vcmp.ne.s32.totalorder %v505, 0
      %vm834 = vcmp.ne.s32.totalorder %v516, 0
      %vm835 = vcmp.ne.s32.totalorder %v527, 0
      %vm836 = vcmp.ne.s32.totalorder %v538, 0
      %vm837 = vcmp.ne.s32.totalorder %v549, 0
      %vm838 = vcmp.ne.s32.totalorder %v560, 0
      %vm839 = vcmp.ne.s32.totalorder %v571, 0
      %vm840 = vcmp.ne.s32.totalorder %v582, 0
      %vm841 = vcmp.ne.s32.totalorder %v593, 0
      %vm842 = vcmp.ne.s32.totalorder %v604, 0
      %vm843 = vcmp.ne.s32.totalorder %v615, 0
      %vm844 = vcmp.ne.s32.totalorder %v626, 0
      %vm845 = vcmp.ne.s32.totalorder %v637, 0
      %vm846 = vcmp.ne.s32.totalorder %v648, 0
      %vm847 = vcmp.ne.s32.totalorder %v659, 0
      %vm848 = vcmp.ne.s32.totalorder %v670, 0
      %vm849 = vcmp.ne.s32.totalorder %v681, 0
      %vm850 = vcmp.ne.s32.totalorder %v692, 0
      %vm851 = vcmp.ne.s32.totalorder %v703, 0
      %vm852 = vcmp.ne.s32.totalorder %v714, 0
      %vm853 = vcmp.ne.s32.totalorder %v725, 0
      %vm854 = vcmp.ne.s32.totalorder %v736, 0
      %vm855 = vcmp.ne.s32.totalorder %v747, 0
      %vm856 = vcmp.ne.s32.totalorder %v758, 0
      %vm857 = vcmp.ne.s32.totalorder %v769, 0
      %vm858 = vcmp.ne.s32.totalorder %v780, 0
      %vm859 = vcmp.ne.s32.totalorder %v791, 0
      %vm860 = vcmp.ne.s32.totalorder %v802, 0
      %vm861 = vcmp.ne.s32.totalorder %v813, 0
      %vm862 = vcmp.lt.s32.totalorder %v296, 0
      %vm863 = vcmp.lt.s32.totalorder %v307, 0
      %vm864 = vcmp.lt.s32.totalorder %v318, 0
      %vm865 = vcmp.lt.s32.totalorder %v329, 0
      %vm866 = vcmp.lt.s32.totalorder %v340, 0
      %vm867 = vcmp.lt.s32.totalorder %v351, 0
      %vm868 = vcmp.lt.s32.totalorder %v362, 0
      %vm869 = vcmp.lt.s32.totalorder %v373, 0
      %vm870 = vcmp.lt.s32.totalorder %v384, 0
      %vm871 = vcmp.lt.s32.totalorder %v395, 0
      %vm872 = vcmp.lt.s32.totalorder %v406, 0
      %vm873 = vcmp.lt.s32.totalorder %v417, 0
      %vm874 = vcmp.lt.s32.totalorder %v428, 0
      %vm875 = vcmp.lt.s32.totalorder %v439, 0
      %vm876 = vcmp.lt.s32.totalorder %v450, 0
      %vm877 = vcmp.lt.s32.totalorder %v461, 0
      %vm878 = vcmp.lt.s32.totalorder %v472, 0
      %vm879 = vcmp.lt.s32.totalorder %v483, 0
      %vm880 = vcmp.lt.s32.totalorder %v494, 0
      %vm881 = vcmp.lt.s32.totalorder %v505, 0
      %vm882 = vcmp.lt.s32.totalorder %v516, 0
      %vm883 = vcmp.lt.s32.totalorder %v527, 0
      %vm884 = vcmp.lt.s32.totalorder %v538, 0
      %vm885 = vcmp.lt.s32.totalorder %v549, 0
      %vm886 = vcmp.lt.s32.totalorder %v560, 0
      %vm887 = vcmp.lt.s32.totalorder %v571, 0
      %vm888 = vcmp.lt.s32.totalorder %v582, 0
      %vm889 = vcmp.lt.s32.totalorder %v593, 0
      %vm890 = vcmp.lt.s32.totalorder %v604, 0
      %vm891 = vcmp.lt.s32.totalorder %v615, 0
      %vm892 = vcmp.lt.s32.totalorder %v626, 0
      %vm893 = vcmp.lt.s32.totalorder %v637, 0
      %vm894 = vcmp.lt.s32.totalorder %v648, 0
      %vm895 = vcmp.lt.s32.totalorder %v659, 0
      %vm896 = vcmp.lt.s32.totalorder %v670, 0
      %vm897 = vcmp.lt.s32.totalorder %v681, 0
      %vm898 = vcmp.lt.s32.totalorder %v692, 0
      %vm899 = vcmp.lt.s32.totalorder %v703, 0
      %vm900 = vcmp.lt.s32.totalorder %v714, 0
      %vm901 = vcmp.lt.s32.totalorder %v725, 0
      %vm902 = vcmp.lt.s32.totalorder %v736, 0
      %vm903 = vcmp.lt.s32.totalorder %v747, 0
      %vm904 = vcmp.lt.s32.totalorder %v758, 0
      %vm905 = vcmp.lt.s32.totalorder %v769, 0
      %vm906 = vcmp.lt.s32.totalorder %v780, 0
      %vm907 = vcmp.lt.s32.totalorder %v791, 0
      %vm908 = vcmp.lt.s32.totalorder %v802, 0
      %vm909 = vcmp.lt.s32.totalorder %v813, 0
      %vm910 = vmand %vm862, %vm814
      %vm911 = vmand %vm863, %vm815
      %vm912 = vmand %vm864, %vm816
      %vm913 = vmand %vm865, %vm817
      %vm914 = vmand %vm866, %vm818
      %vm915 = vmand %vm867, %vm819
      %vm916 = vmand %vm868, %vm820
      %vm917 = vmand %vm869, %vm821
      %vm918 = vmand %vm870, %vm822
      %vm919 = vmand %vm871, %vm823
      %vm920 = vmand %vm872, %vm824
      %vm921 = vmand %vm873, %vm825
      %vm922 = vmand %vm874, %vm826
      %vm923 = vmand %vm875, %vm827
      %vm924 = vmand %vm876, %vm828
      %vm925 = vmand %vm877, %vm829
      %vm926 = vmand %vm878, %vm830
      %vm927 = vmand %vm879, %vm831
      %vm928 = vmand %vm880, %vm832
      %vm929 = vmand %vm881, %vm833
      %vm930 = vmand %vm882, %vm834
      %vm931 = vmand %vm883, %vm835
      %vm932 = vmand %vm884, %vm836
      %vm933 = vmand %vm885, %vm837
      %vm934 = vmand %vm886, %vm838
      %vm935 = vmand %vm887, %vm839
      %vm936 = vmand %vm888, %vm840
      %vm937 = vmand %vm889, %vm841
      %vm938 = vmand %vm890, %vm842
      %vm939 = vmand %vm891, %vm843
      %vm940 = vmand %vm892, %vm844
      %vm941 = vmand %vm893, %vm845
      %vm942 = vmand %vm894, %vm846
      %vm943 = vmand %vm895, %vm847
      %vm944 = vmand %vm896, %vm848
      %vm945 = vmand %vm897, %vm849
      %vm946 = vmand %vm898, %vm850
      %vm947 = vmand %vm899, %vm851
      %vm948 = vmand %vm900, %vm852
      %vm949 = vmand %vm901, %vm853
      %vm950 = vmand %vm902, %vm854
      %vm951 = vmand %vm903, %vm855
      %vm952 = vmand %vm904, %vm856
      %vm953 = vmand %vm905, %vm857
      %vm954 = vmand %vm906, %vm858
      %vm955 = vmand %vm907, %vm859
      %vm956 = vmand %vm908, %vm860
      %vm957 = vmand %vm909, %vm861
      %v958 = vadd.s32 %v296, 24
      %v959 = vadd.s32 %v307, 24
      %v960 = vadd.s32 %v318, 24
      %v961 = vadd.s32 %v329, 24
      %v962 = vadd.s32 %v340, 24
      %v963 = vadd.s32 %v351, 24
      %v964 = vadd.s32 %v362, 24
      %v965 = vadd.s32 %v373, 24
      %v966 = vadd.s32 %v384, 24
      %v967 = vadd.s32 %v395, 24
      %v968 = vadd.s32 %v406, 24
      %v969 = vadd.s32 %v417, 24
      %v970 = vadd.s32 %v428, 24
      %v971 = vadd.s32 %v439, 24
      %v972 = vadd.s32 %v450, 24
      %v973 = vadd.s32 %v461, 24
      %v974 = vadd.s32 %v472, 24
      %v975 = vadd.s32 %v483, 24
      %v976 = vadd.s32 %v494, 24
      %v977 = vadd.s32 %v505, 24
      %v978 = vadd.s32 %v516, 24
      %v979 = vadd.s32 %v527, 24
      %v980 = vadd.s32 %v538, 24
      %v981 = vadd.s32 %v549, 24
      %v982 = vadd.s32 %v560, 24
      %v983 = vadd.s32 %v571, 24
      %v984 = vadd.s32 %v582, 24
      %v985 = vadd.s32 %v593, 24
      %v986 = vadd.s32 %v604, 24
      %v987 = vadd.s32 %v615, 24
      %v988 = vadd.s32 %v626, 24
      %v989 = vadd.s32 %v637, 24
      %v990 = vadd.s32 %v648, 24
      %v991 = vadd.s32 %v659, 24
      %v992 = vadd.s32 %v670, 24
      %v993 = vadd.s32 %v681, 24
      %v994 = vadd.s32 %v692, 24
      %v995 = vadd.s32 %v703, 24
      %v996 = vadd.s32 %v714, 24
      %v997 = vadd.s32 %v725, 24
      %v998 = vadd.s32 %v736, 24
      %v999 = vadd.s32 %v747, 24
      %v1000 = vadd.s32 %v758, 24
      %v1001 = vadd.s32 %v769, 24
      %v1002 = vadd.s32 %v780, 24
      %v1003 = vadd.s32 %v791, 24
      %v1004 = vadd.s32 %v802, 24
      %v1005 = vadd.s32 %v813, 24
      %v1006 = vsel %vm910, %v958, %v296
      %v1007 = vsel %vm911, %v959, %v307
      %v1008 = vsel %vm912, %v960, %v318
      %v1009 = vsel %vm913, %v961, %v329
      %v1010 = vsel %vm914, %v962, %v340
      %v1011 = vsel %vm915, %v963, %v351
      %v1012 = vsel %vm916, %v964, %v362
      %v1013 = vsel %vm917, %v965, %v373
      %v1014 = vsel %vm918, %v966, %v384
      %v1015 = vsel %vm919, %v967, %v395
      %v1016 = vsel %vm920, %v968, %v406
      %v1017 = vsel %vm921, %v969, %v417
      %v1018 = vsel %vm922, %v970, %v428
      %v1019 = vsel %vm923, %v971, %v439
      %v1020 = vsel %vm924, %v972, %v450
      %v1021 = vsel %vm925, %v973, %v461
      %v1022 = vsel %vm926, %v974, %v472
      %v1023 = vsel %vm927, %v975, %v483
      %v1024 = vsel %vm928, %v976, %v494
      %v1025 = vsel %vm929, %v977, %v505
      %v1026 = vsel %vm930, %v978, %v516
      %v1027 = vsel %vm931, %v979, %v527
      %v1028 = vsel %vm932, %v980, %v538
      %v1029 = vsel %vm933, %v981, %v549
      %v1030 = vsel %vm934, %v982, %v560
      %v1031 = vsel %vm935, %v983, %v571
      %v1032 = vsel %vm936, %v984, %v582
      %v1033 = vsel %vm937, %v985, %v593
      %v1034 = vsel %vm938, %v986, %v604
      %v1035 = vsel %vm939, %v987, %v615
      %v1036 = vsel %vm940, %v988, %v626
      %v1037 = vsel %vm941, %v989, %v637
      %v1038 = vsel %vm942, %v990, %v648
      %v1039 = vsel %vm943, %v991, %v659
      %v1040 = vsel %vm944, %v992, %v670
      %v1041 = vsel %vm945, %v993, %v681
      %v1042 = vsel %vm946, %v994, %v692
      %v1043 = vsel %vm947, %v995, %v703
      %v1044 = vsel %vm948, %v996, %v714
      %v1045 = vsel %vm949, %v997, %v725
      %v1046 = vsel %vm950, %v998, %v736
      %v1047 = vsel %vm951, %v999, %v747
      %v1048 = vsel %vm952, %v1000, %v758
      %v1049 = vsel %vm953, %v1001, %v769
      %v1050 = vsel %vm954, %v1002, %v780
      %v1051 = vsel %vm955, %v1003, %v791
      %v1052 = vsel %vm956, %v1004, %v802
      %v1053 = vsel %vm957, %v1005, %v813
      %vm1054 = vcmp.lt.s32.totalorder %v1006, 16
      %vm1055 = vcmp.lt.s32.totalorder %v1007, 16
      %vm1056 = vcmp.lt.s32.totalorder %v1008, 16
      %vm1057 = vcmp.lt.s32.totalorder %v1009, 16
      %vm1058 = vcmp.lt.s32.totalorder %v1010, 16
      %vm1059 = vcmp.lt.s32.totalorder %v1011, 16
      %vm1060 = vcmp.lt.s32.totalorder %v1012, 16
      %vm1061 = vcmp.lt.s32.totalorder %v1013, 16
      %vm1062 = vcmp.lt.s32.totalorder %v1014, 16
      %vm1063 = vcmp.lt.s32.totalorder %v1015, 16
      %vm1064 = vcmp.lt.s32.totalorder %v1016, 16
      %vm1065 = vcmp.lt.s32.totalorder %v1017, 16
      %vm1066 = vcmp.lt.s32.totalorder %v1018, 16
      %vm1067 = vcmp.lt.s32.totalorder %v1019, 16
      %vm1068 = vcmp.lt.s32.totalorder %v1020, 16
      %vm1069 = vcmp.lt.s32.totalorder %v1021, 16
      %vm1070 = vcmp.lt.s32.totalorder %v1022, 16
      %vm1071 = vcmp.lt.s32.totalorder %v1023, 16
      %vm1072 = vcmp.lt.s32.totalorder %v1024, 16
      %vm1073 = vcmp.lt.s32.totalorder %v1025, 16
      %vm1074 = vcmp.lt.s32.totalorder %v1026, 16
      %vm1075 = vcmp.lt.s32.totalorder %v1027, 16
      %vm1076 = vcmp.lt.s32.totalorder %v1028, 16
      %vm1077 = vcmp.lt.s32.totalorder %v1029, 16
      %vm1078 = vcmp.lt.s32.totalorder %v1030, 16
      %vm1079 = vcmp.lt.s32.totalorder %v1031, 16
      %vm1080 = vcmp.lt.s32.totalorder %v1032, 16
      %vm1081 = vcmp.lt.s32.totalorder %v1033, 16
      %vm1082 = vcmp.lt.s32.totalorder %v1034, 16
      %vm1083 = vcmp.lt.s32.totalorder %v1035, 16
      %vm1084 = vcmp.lt.s32.totalorder %v1036, 16
      %vm1085 = vcmp.lt.s32.totalorder %v1037, 16
      %vm1086 = vcmp.lt.s32.totalorder %v1038, 16
      %vm1087 = vcmp.lt.s32.totalorder %v1039, 16
      %vm1088 = vcmp.lt.s32.totalorder %v1040, 16
      %vm1089 = vcmp.lt.s32.totalorder %v1041, 16
      %vm1090 = vcmp.lt.s32.totalorder %v1042, 16
      %vm1091 = vcmp.lt.s32.totalorder %v1043, 16
      %vm1092 = vcmp.lt.s32.totalorder %v1044, 16
      %vm1093 = vcmp.lt.s32.totalorder %v1045, 16
      %vm1094 = vcmp.lt.s32.totalorder %v1046, 16
      %vm1095 = vcmp.lt.s32.totalorder %v1047, 16
      %vm1096 = vcmp.lt.s32.totalorder %v1048, 16
      %vm1097 = vcmp.lt.s32.totalorder %v1049, 16
      %vm1098 = vcmp.lt.s32.totalorder %v1050, 16
      %vm1099 = vcmp.lt.s32.totalorder %v1051, 16
      %vm1100 = vcmp.lt.s32.totalorder %v1052, 16
      %vm1101 = vcmp.lt.s32.totalorder %v1053, 16
      %v1102 = vld [vmem:[%s226] sm:$0xf]
      %v1103 = vld [vmem:[%s226 + $0x4] sm:$0xf]
      %v1104 = vld [vmem:[%s226 + $0x8] sm:$0xf]
      %v1105 = vld [vmem:[%s226 + $0xc] sm:$0xf]
      %v1106 = vld [vmem:[%s226 + $0x10] sm:$0xf]
      %v1107 = vld [vmem:[%s226 + $0x14] sm:$0xf]
      %v1108 = vld [vmem:[%s226 + $0x18] sm:$0xf]
      %v1109 = vld [vmem:[%s226 + $0x1c] sm:$0xf]
      %v1110 = vld [vmem:[%s226 + $0x20] sm:$0xf]
      %v1111 = vld [vmem:[%s226 + $0x24] sm:$0xf]
      %v1112 = vld [vmem:[%s226 + $0x28] sm:$0xf]
      %v1113 = vld [vmem:[%s226 + $0x2c] sm:$0xf]
      %v1114 = vld [vmem:[%s226 + $0x30] sm:$0xf]
      %v1115 = vld [vmem:[%s226 + $0x34] sm:$0xf]
      %v1116 = vld [vmem:[%s226 + $0x38] sm:$0xf]
      %v1117 = vld [vmem:[%s226 + $0x3c] sm:$0xf]
      %v1118 = vld [vmem:[%s226 + $0x40] sm:$0xf]
      %v1119 = vld [vmem:[%s226 + $0x44] sm:$0xf]
      %v1120 = vld [vmem:[%s226 + $0x48] sm:$0xf]
      %v1121 = vld [vmem:[%s226 + $0x4c] sm:$0xf]
      %v1122 = vld [vmem:[%s226 + $0x50] sm:$0xf]
      %v1123 = vld [vmem:[%s226 + $0x54] sm:$0xf]
      %v1124 = vld [vmem:[%s226 + $0x58] sm:$0xf]
      %v1125 = vld [vmem:[%s226 + $0x5c] sm:$0xf]
      %v1126 = vld [vmem:[%s226 + $0x60] sm:$0xf]
      %v1127 = vld [vmem:[%s226 + $0x64] sm:$0xf]
      %v1128 = vld [vmem:[%s226 + $0x68] sm:$0xf]
      %v1129 = vld [vmem:[%s226 + $0x6c] sm:$0xf]
      %v1130 = vld [vmem:[%s226 + $0x70] sm:$0xf]
      %v1131 = vld [vmem:[%s226 + $0x74] sm:$0xf]
      %v1132 = vld [vmem:[%s226 + $0x78] sm:$0xf]
      %v1133 = vld [vmem:[%s226 + $0x7c] sm:$0xf]
      %v1134 = vld [vmem:[%s226 + $0x80] sm:$0xf]
      %v1135 = vld [vmem:[%s226 + $0x84] sm:$0xf]
      %v1136 = vld [vmem:[%s226 + $0x88] sm:$0xf]
      %v1137 = vld [vmem:[%s226 + $0x8c] sm:$0xf]
      %v1138 = vld [vmem:[%s226 + $0x90] sm:$0xf]
      %v1139 = vld [vmem:[%s226 + $0x94] sm:$0xf]
      %v1140 = vld [vmem:[%s226 + $0x98] sm:$0xf]
      %v1141 = vld [vmem:[%s226 + $0x9c] sm:$0xf]
      %v1142 = vld [vmem:[%s226 + $0xa0] sm:$0xf]
      %v1143 = vld [vmem:[%s226 + $0xa4] sm:$0xf]
      %v1144 = vld [vmem:[%s226 + $0xa8] sm:$0xf]
      %v1145 = vld [vmem:[%s226 + $0xac] sm:$0xf]
      %v1146 = vld [vmem:[%s226 + $0xb0] sm:$0xf]
      %v1147 = vld [vmem:[%s226 + $0xb4] sm:$0xf]
      %v1148 = vld [vmem:[%s226 + $0xb8] sm:$0xf]
      %v1149 = vld [vmem:[%s226 + $0xbc] sm:$0xf]
      %v1150 = vunpack.c.l.bf16 %v1102
      %v1151 = vunpack.c.l.bf16 %v1103
      %v1152 = vunpack.c.l.bf16 %v1104
      %v1153 = vunpack.c.l.bf16 %v1105
      %v1154 = vunpack.c.l.bf16 %v1106
      %v1155 = vunpack.c.l.bf16 %v1107
      %v1156 = vunpack.c.l.bf16 %v1108
      %v1157 = vunpack.c.l.bf16 %v1109
      %v1158 = vunpack.c.l.bf16 %v1110
      %v1159 = vunpack.c.l.bf16 %v1111
      %v1160 = vunpack.c.l.bf16 %v1112
      %v1161 = vunpack.c.l.bf16 %v1113
      %v1162 = vunpack.c.l.bf16 %v1114
      %v1163 = vunpack.c.l.bf16 %v1115
      %v1164 = vunpack.c.l.bf16 %v1116
      %v1165 = vunpack.c.l.bf16 %v1117
      %v1166 = vunpack.c.l.bf16 %v1118
      %v1167 = vunpack.c.l.bf16 %v1119
      %v1168 = vunpack.c.l.bf16 %v1120
      %v1169 = vunpack.c.l.bf16 %v1121
      %v1170 = vunpack.c.l.bf16 %v1122
      %v1171 = vunpack.c.l.bf16 %v1123
      %v1172 = vunpack.c.l.bf16 %v1124
      %v1173 = vunpack.c.l.bf16 %v1125
      %v1174 = vunpack.c.l.bf16 %v1126
      %v1175 = vunpack.c.l.bf16 %v1127
      %v1176 = vunpack.c.l.bf16 %v1128
      %v1177 = vunpack.c.l.bf16 %v1129
      %v1178 = vunpack.c.l.bf16 %v1130
      %v1179 = vunpack.c.l.bf16 %v1131
      %v1180 = vunpack.c.l.bf16 %v1132
      %v1181 = vunpack.c.l.bf16 %v1133
      %v1182 = vunpack.c.l.bf16 %v1134
      %v1183 = vunpack.c.l.bf16 %v1135
      %v1184 = vunpack.c.l.bf16 %v1136
      %v1185 = vunpack.c.l.bf16 %v1137
      %v1186 = vunpack.c.l.bf16 %v1138
      %v1187 = vunpack.c.l.bf16 %v1139
      %v1188 = vunpack.c.l.bf16 %v1140
      %v1189 = vunpack.c.l.bf16 %v1141
      %v1190 = vunpack.c.l.bf16 %v1142
      %v1191 = vunpack.c.l.bf16 %v1143
      %v1192 = vunpack.c.l.bf16 %v1144
      %v1193 = vunpack.c.l.bf16 %v1145
      %v1194 = vunpack.c.l.bf16 %v1146
      %v1195 = vunpack.c.l.bf16 %v1147
      %v1196 = vunpack.c.l.bf16 %v1148
      %v1197 = vunpack.c.l.bf16 %v1149
      %v1198 = vld [vmem:[%s1] sm:$0x1]
      %v1200 = vlaneseq
      %v1201 = vshrl.u32 %v1200, 7
      %v1202 = vsub.s32 0, %v1201
      %v1203 = vrot.slane %v1198, %v1202
      %v1205 = vmul.f32 %v1150, %v1203
      %v1206 = vmul.f32 %v1151, %v1203
      %v1207 = vmul.f32 %v1152, %v1203
      %v1208 = vmul.f32 %v1153, %v1203
      %v1209 = vmul.f32 %v1154, %v1203
      %v1210 = vmul.f32 %v1155, %v1203
      %v1211 = vmul.f32 %v1156, %v1203
      %v1212 = vmul.f32 %v1157, %v1203
      %v1213 = vmul.f32 %v1158, %v1203
      %v1214 = vmul.f32 %v1159, %v1203
      %v1215 = vmul.f32 %v1160, %v1203
      %v1216 = vmul.f32 %v1161, %v1203
      %v1217 = vmul.f32 %v1162, %v1203
      %v1218 = vmul.f32 %v1163, %v1203
      %v1219 = vmul.f32 %v1164, %v1203
      %v1220 = vmul.f32 %v1165, %v1203
      %v1221 = vmul.f32 %v1166, %v1203
      %v1222 = vmul.f32 %v1167, %v1203
      %v1223 = vmul.f32 %v1168, %v1203
      %v1224 = vmul.f32 %v1169, %v1203
      %v1225 = vmul.f32 %v1170, %v1203
      %v1226 = vmul.f32 %v1171, %v1203
      %v1227 = vmul.f32 %v1172, %v1203
      %v1228 = vmul.f32 %v1173, %v1203
      %v1229 = vmul.f32 %v1174, %v1203
      %v1230 = vmul.f32 %v1175, %v1203
      %v1231 = vmul.f32 %v1176, %v1203
      %v1232 = vmul.f32 %v1177, %v1203
      %v1233 = vmul.f32 %v1178, %v1203
      %v1234 = vmul.f32 %v1179, %v1203
      %v1235 = vmul.f32 %v1180, %v1203
      %v1236 = vmul.f32 %v1181, %v1203
      %v1237 = vmul.f32 %v1182, %v1203
      %v1238 = vmul.f32 %v1183, %v1203
      %v1239 = vmul.f32 %v1184, %v1203
      %v1240 = vmul.f32 %v1185, %v1203
      %v1241 = vmul.f32 %v1186, %v1203
      %v1242 = vmul.f32 %v1187, %v1203
      %v1243 = vmul.f32 %v1188, %v1203
      %v1244 = vmul.f32 %v1189, %v1203
      %v1245 = vmul.f32 %v1190, %v1203
      %v1246 = vmul.f32 %v1191, %v1203
      %v1247 = vmul.f32 %v1192, %v1203
      %v1248 = vmul.f32 %v1193, %v1203
      %v1249 = vmul.f32 %v1194, %v1203
      %v1250 = vmul.f32 %v1195, %v1203
      %v1251 = vmul.f32 %v1196, %v1203
      %v1252 = vmul.f32 %v1197, %v1203
      %v1253 = vld [vmem:[%s2] sm:$0x1]
      %v1255 = vlaneseq
      %v1256 = vshrl.u32 %v1255, 7
      %v1257 = vsub.s32 0, %v1256
      %v1258 = vrot.slane %v1253, %v1257
      %v1260 = vadd.f32 %v1205, %v1258
      %v1261 = vadd.f32 %v1206, %v1258
      %v1262 = vadd.f32 %v1207, %v1258
      %v1263 = vadd.f32 %v1208, %v1258
      %v1264 = vadd.f32 %v1209, %v1258
      %v1265 = vadd.f32 %v1210, %v1258
      %v1266 = vadd.f32 %v1211, %v1258
      %v1267 = vadd.f32 %v1212, %v1258
      %v1268 = vadd.f32 %v1213, %v1258
      %v1269 = vadd.f32 %v1214, %v1258
      %v1270 = vadd.f32 %v1215, %v1258
      %v1271 = vadd.f32 %v1216, %v1258
      %v1272 = vadd.f32 %v1217, %v1258
      %v1273 = vadd.f32 %v1218, %v1258
      %v1274 = vadd.f32 %v1219, %v1258
      %v1275 = vadd.f32 %v1220, %v1258
      %v1276 = vadd.f32 %v1221, %v1258
      %v1277 = vadd.f32 %v1222, %v1258
      %v1278 = vadd.f32 %v1223, %v1258
      %v1279 = vadd.f32 %v1224, %v1258
      %v1280 = vadd.f32 %v1225, %v1258
      %v1281 = vadd.f32 %v1226, %v1258
      %v1282 = vadd.f32 %v1227, %v1258
      %v1283 = vadd.f32 %v1228, %v1258
      %v1284 = vadd.f32 %v1229, %v1258
      %v1285 = vadd.f32 %v1230, %v1258
      %v1286 = vadd.f32 %v1231, %v1258
      %v1287 = vadd.f32 %v1232, %v1258
      %v1288 = vadd.f32 %v1233, %v1258
      %v1289 = vadd.f32 %v1234, %v1258
      %v1290 = vadd.f32 %v1235, %v1258
      %v1291 = vadd.f32 %v1236, %v1258
      %v1292 = vadd.f32 %v1237, %v1258
      %v1293 = vadd.f32 %v1238, %v1258
      %v1294 = vadd.f32 %v1239, %v1258
      %v1295 = vadd.f32 %v1240, %v1258
      %v1296 = vadd.f32 %v1241, %v1258
      %v1297 = vadd.f32 %v1242, %v1258
      %v1298 = vadd.f32 %v1243, %v1258
      %v1299 = vadd.f32 %v1244, %v1258
      %v1300 = vadd.f32 %v1245, %v1258
      %v1301 = vadd.f32 %v1246, %v1258
      %v1302 = vadd.f32 %v1247, %v1258
      %v1303 = vadd.f32 %v1248, %v1258
      %v1304 = vadd.f32 %v1249, %v1258
      %v1305 = vadd.f32 %v1250, %v1258
      %v1306 = vadd.f32 %v1251, %v1258
      %v1307 = vadd.f32 %v1252, %v1258
      %v1308 = vmax.f32 %v1260, 0.0
      %v1309 = vmax.f32 %v1261, 0.0
      %v1310 = vmax.f32 %v1262, 0.0
      %v1311 = vmax.f32 %v1263, 0.0
      %v1312 = vmax.f32 %v1264, 0.0
      %v1313 = vmax.f32 %v1265, 0.0
      %v1314 = vmax.f32 %v1266, 0.0
      %v1315 = vmax.f32 %v1267, 0.0
      %v1316 = vmax.f32 %v1268, 0.0
      %v1317 = vmax.f32 %v1269, 0.0
      %v1318 = vmax.f32 %v1270, 0.0
      %v1319 = vmax.f32 %v1271, 0.0
      %v1320 = vmax.f32 %v1272, 0.0
      %v1321 = vmax.f32 %v1273, 0.0
      %v1322 = vmax.f32 %v1274, 0.0
      %v1323 = vmax.f32 %v1275, 0.0
      %v1324 = vmax.f32 %v1276, 0.0
      %v1325 = vmax.f32 %v1277, 0.0
      %v1326 = vmax.f32 %v1278, 0.0
      %v1327 = vmax.f32 %v1279, 0.0
      %v1328 = vmax.f32 %v1280, 0.0
      %v1329 = vmax.f32 %v1281, 0.0
      %v1330 = vmax.f32 %v1282, 0.0
      %v1331 = vmax.f32 %v1283, 0.0
      %v1332 = vmax.f32 %v1284, 0.0
      %v1333 = vmax.f32 %v1285, 0.0
      %v1334 = vmax.f32 %v1286, 0.0
      %v1335 = vmax.f32 %v1287, 0.0
      %v1336 = vmax.f32 %v1288, 0.0
      %v1337 = vmax.f32 %v1289, 0.0
      %v1338 = vmax.f32 %v1290, 0.0
      %v1339 = vmax.f32 %v1291, 0.0
      %v1340 = vmax.f32 %v1292, 0.0
      %v1341 = vmax.f32 %v1293, 0.0
      %v1342 = vmax.f32 %v1294, 0.0
      %v1343 = vmax.f32 %v1295, 0.0
      %v1344 = vmax.f32 %v1296, 0.0
      %v1345 = vmax.f32 %v1297, 0.0
      %v1346 = vmax.f32 %v1298, 0.0
      %v1347 = vmax.f32 %v1299, 0.0
      %v1348 = vmax.f32 %v1300, 0.0
      %v1349 = vmax.f32 %v1301, 0.0
      %v1350 = vmax.f32 %v1302, 0.0
      %v1351 = vmax.f32 %v1303, 0.0
      %v1352 = vmax.f32 %v1304, 0.0
      %v1353 = vmax.f32 %v1305, 0.0
      %v1354 = vmax.f32 %v1306, 0.0
      %v1355 = vmax.f32 %v1307, 0.0
      %v1356 = vsel %vm1054, 1, 0
      %v1357 = vsel %vm1055, 1, 0
      %v1358 = vsel %vm1056, 1, 0
      %v1359 = vsel %vm1057, 1, 0
      %v1360 = vsel %vm1058, 1, 0
      %v1361 = vsel %vm1059, 1, 0
      %v1362 = vsel %vm1060, 1, 0
      %v1363 = vsel %vm1061, 1, 0
      %v1364 = vsel %vm1062, 1, 0
      %v1365 = vsel %vm1063, 1, 0
      %v1366 = vsel %vm1064, 1, 0
      %v1367 = vsel %vm1065, 1, 0
      %v1368 = vsel %vm1066, 1, 0
      %v1369 = vsel %vm1067, 1, 0
      %v1370 = vsel %vm1068, 1, 0
      %v1371 = vsel %vm1069, 1, 0
      %v1372 = vsel %vm1070, 1, 0
      %v1373 = vsel %vm1071, 1, 0
      %v1374 = vsel %vm1072, 1, 0
      %v1375 = vsel %vm1073, 1, 0
      %v1376 = vsel %vm1074, 1, 0
      %v1377 = vsel %vm1075, 1, 0
      %v1378 = vsel %vm1076, 1, 0
      %v1379 = vsel %vm1077, 1, 0
      %v1380 = vsel %vm1078, 1, 0
      %v1381 = vsel %vm1079, 1, 0
      %v1382 = vsel %vm1080, 1, 0
      %v1383 = vsel %vm1081, 1, 0
      %v1384 = vsel %vm1082, 1, 0
      %v1385 = vsel %vm1083, 1, 0
      %v1386 = vsel %vm1084, 1, 0
      %v1387 = vsel %vm1085, 1, 0
      %v1388 = vsel %vm1086, 1, 0
      %v1389 = vsel %vm1087, 1, 0
      %v1390 = vsel %vm1088, 1, 0
      %v1391 = vsel %vm1089, 1, 0
      %v1392 = vsel %vm1090, 1, 0
      %v1393 = vsel %vm1091, 1, 0
      %v1394 = vsel %vm1092, 1, 0
      %v1395 = vsel %vm1093, 1, 0
      %v1396 = vsel %vm1094, 1, 0
      %v1397 = vsel %vm1095, 1, 0
      %v1398 = vsel %vm1096, 1, 0
      %v1399 = vsel %vm1097, 1, 0
      %v1400 = vsel %vm1098, 1, 0
      %v1401 = vsel %vm1099, 1, 0
      %v1402 = vsel %vm1100, 1, 0
      %v1403 = vsel %vm1101, 1, 0
      %vm1404 = vcmp.eq.s32.totalorder %v1356, 1
      %vm1405 = vcmp.eq.s32.totalorder %v1357, 1
      %vm1406 = vcmp.eq.s32.totalorder %v1358, 1
      %vm1407 = vcmp.eq.s32.totalorder %v1359, 1
      %vm1408 = vcmp.eq.s32.totalorder %v1360, 1
      %vm1409 = vcmp.eq.s32.totalorder %v1361, 1
      %vm1410 = vcmp.eq.s32.totalorder %v1362, 1
      %vm1411 = vcmp.eq.s32.totalorder %v1363, 1
      %vm1412 = vcmp.eq.s32.totalorder %v1364, 1
      %vm1413 = vcmp.eq.s32.totalorder %v1365, 1
      %vm1414 = vcmp.eq.s32.totalorder %v1366, 1
      %vm1415 = vcmp.eq.s32.totalorder %v1367, 1
      %vm1416 = vcmp.eq.s32.totalorder %v1368, 1
      %vm1417 = vcmp.eq.s32.totalorder %v1369, 1
      %vm1418 = vcmp.eq.s32.totalorder %v1370, 1
      %vm1419 = vcmp.eq.s32.totalorder %v1371, 1
      %vm1420 = vcmp.eq.s32.totalorder %v1372, 1
      %vm1421 = vcmp.eq.s32.totalorder %v1373, 1
      %vm1422 = vcmp.eq.s32.totalorder %v1374, 1
      %vm1423 = vcmp.eq.s32.totalorder %v1375, 1
      %vm1424 = vcmp.eq.s32.totalorder %v1376, 1
      %vm1425 = vcmp.eq.s32.totalorder %v1377, 1
      %vm1426 = vcmp.eq.s32.totalorder %v1378, 1
      %vm1427 = vcmp.eq.s32.totalorder %v1379, 1
      %vm1428 = vcmp.eq.s32.totalorder %v1380, 1
      %vm1429 = vcmp.eq.s32.totalorder %v1381, 1
      %vm1430 = vcmp.eq.s32.totalorder %v1382, 1
      %vm1431 = vcmp.eq.s32.totalorder %v1383, 1
      %vm1432 = vcmp.eq.s32.totalorder %v1384, 1
      %vm1433 = vcmp.eq.s32.totalorder %v1385, 1
      %vm1434 = vcmp.eq.s32.totalorder %v1386, 1
      %vm1435 = vcmp.eq.s32.totalorder %v1387, 1
      %vm1436 = vcmp.eq.s32.totalorder %v1388, 1
      %vm1437 = vcmp.eq.s32.totalorder %v1389, 1
      %vm1438 = vcmp.eq.s32.totalorder %v1390, 1
      %vm1439 = vcmp.eq.s32.totalorder %v1391, 1
      %vm1440 = vcmp.eq.s32.totalorder %v1392, 1
      %vm1441 = vcmp.eq.s32.totalorder %v1393, 1
      %vm1442 = vcmp.eq.s32.totalorder %v1394, 1
      %vm1443 = vcmp.eq.s32.totalorder %v1395, 1
      %vm1444 = vcmp.eq.s32.totalorder %v1396, 1
      %vm1445 = vcmp.eq.s32.totalorder %v1397, 1
      %vm1446 = vcmp.eq.s32.totalorder %v1398, 1
      %vm1447 = vcmp.eq.s32.totalorder %v1399, 1
      %vm1448 = vcmp.eq.s32.totalorder %v1400, 1
      %vm1449 = vcmp.eq.s32.totalorder %v1401, 1
      %vm1450 = vcmp.eq.s32.totalorder %v1402, 1
      %vm1451 = vcmp.eq.s32.totalorder %v1403, 1
      %v1452 = vsel %vm1404, %v1308, 0.0
      %v1453 = vsel %vm1405, %v1309, 0.0
      %v1454 = vsel %vm1406, %v1310, 0.0
      %v1455 = vsel %vm1407, %v1311, 0.0
      %v1456 = vsel %vm1408, %v1312, 0.0
      %v1457 = vsel %vm1409, %v1313, 0.0
      %v1458 = vsel %vm1410, %v1314, 0.0
      %v1459 = vsel %vm1411, %v1315, 0.0
      %v1460 = vsel %vm1412, %v1316, 0.0
      %v1461 = vsel %vm1413, %v1317, 0.0
      %v1462 = vsel %vm1414, %v1318, 0.0
      %v1463 = vsel %vm1415, %v1319, 0.0
      %v1464 = vsel %vm1416, %v1320, 0.0
      %v1465 = vsel %vm1417, %v1321, 0.0
      %v1466 = vsel %vm1418, %v1322, 0.0
      %v1467 = vsel %vm1419, %v1323, 0.0
      %v1468 = vsel %vm1420, %v1324, 0.0
      %v1469 = vsel %vm1421, %v1325, 0.0
      %v1470 = vsel %vm1422, %v1326, 0.0
      %v1471 = vsel %vm1423, %v1327, 0.0
      %v1472 = vsel %vm1424, %v1328, 0.0
      %v1473 = vsel %vm1425, %v1329, 0.0
      %v1474 = vsel %vm1426, %v1330, 0.0
      %v1475 = vsel %vm1427, %v1331, 0.0
      %v1476 = vsel %vm1428, %v1332, 0.0
      %v1477 = vsel %vm1429, %v1333, 0.0
      %v1478 = vsel %vm1430, %v1334, 0.0
      %v1479 = vsel %vm1431, %v1335, 0.0
      %v1480 = vsel %vm1432, %v1336, 0.0
      %v1481 = vsel %vm1433, %v1337, 0.0
      %v1482 = vsel %vm1434, %v1338, 0.0
      %v1483 = vsel %vm1435, %v1339, 0.0
      %v1484 = vsel %vm1436, %v1340, 0.0
      %v1485 = vsel %vm1437, %v1341, 0.0
      %v1486 = vsel %vm1438, %v1342, 0.0
      %v1487 = vsel %vm1439, %v1343, 0.0
      %v1488 = vsel %vm1440, %v1344, 0.0
      %v1489 = vsel %vm1441, %v1345, 0.0
      %v1490 = vsel %vm1442, %v1346, 0.0
      %v1491 = vsel %vm1443, %v1347, 0.0
      %v1492 = vsel %vm1444, %v1348, 0.0
      %v1493 = vsel %vm1445, %v1349, 0.0
      %v1494 = vsel %vm1446, %v1350, 0.0
      %v1495 = vsel %vm1447, %v1351, 0.0
      %v1496 = vsel %vm1448, %v1352, 0.0
      %v1497 = vsel %vm1449, %v1353, 0.0
      %v1498 = vsel %vm1450, %v1354, 0.0
      %v1499 = vsel %vm1451, %v1355, 0.0
      %1500 = vst [vmem:[#allocation2] sm:$0xf] 0
      %1501 = vst [vmem:[#allocation2 + $0x4] sm:$0xf] 0
      %1502 = vst [vmem:[#allocation2 + $0x8] sm:$0xf] 0
      %1503 = vst [vmem:[#allocation2 + $0xc] sm:$0xf] 0
      %1504 = vst [vmem:[#allocation2 + $0xd0] sm:$0xf] 0
      %1505 = vst [vmem:[#allocation2 + $0xd4] sm:$0xf] 0
      %1506 = vst [vmem:[#allocation2 + $0xd8] sm:$0xf] 0
      %1507 = vst [vmem:[#allocation2 + $0xdc] sm:$0xf] 0
      %v1508 = vpack.c.bf16 %v1453, %v1452
      %v1509 = vpack.c.bf16 %v1455, %v1454
      %v1510 = vpack.c.bf16 %v1457, %v1456
      %v1511 = vpack.c.bf16 %v1459, %v1458
      %v1512 = vpack.c.bf16 %v1461, %v1460
      %v1513 = vpack.c.bf16 %v1463, %v1462
      %v1514 = vpack.c.bf16 %v1465, %v1464
      %v1515 = vpack.c.bf16 %v1467, %v1466
      %v1516 = vpack.c.bf16 %v1469, %v1468
      %v1517 = vpack.c.bf16 %v1471, %v1470
      %v1518 = vpack.c.bf16 %v1473, %v1472
      %v1519 = vpack.c.bf16 %v1475, %v1474
      %v1520 = vpack.c.bf16 %v1477, %v1476
      %v1521 = vpack.c.bf16 %v1479, %v1478
      %v1522 = vpack.c.bf16 %v1481, %v1480
      %v1523 = vpack.c.bf16 %v1483, %v1482
      %v1524 = vpack.c.bf16 %v1485, %v1484
      %v1525 = vpack.c.bf16 %v1487, %v1486
      %v1526 = vpack.c.bf16 %v1489, %v1488
      %v1527 = vpack.c.bf16 %v1491, %v1490
      %v1528 = vpack.c.bf16 %v1493, %v1492
      %v1529 = vpack.c.bf16 %v1495, %v1494
      %v1530 = vpack.c.bf16 %v1497, %v1496
      %v1531 = vpack.c.bf16 %v1499, %v1498
      %v1556 = vunpack.c.l.b16 %v1508
      %v1557 = vunpack.c.h.b16 %v1508
      %v1558 = vunpack.c.l.b16 %v1509
      %v1559 = vunpack.c.h.b16 %v1509
      %v1560 = vunpack.c.l.b16 %v1510
      %v1561 = vunpack.c.h.b16 %v1510
      %v1562 = vunpack.c.l.b16 %v1511
      %v1563 = vunpack.c.h.b16 %v1511
      %v1564 = vunpack.c.l.b16 %v1512
      %v1565 = vunpack.c.h.b16 %v1512
      %v1566 = vunpack.c.l.b16 %v1513
      %v1567 = vunpack.c.h.b16 %v1513
      %v1568 = vunpack.c.l.b16 %v1514
      %v1569 = vunpack.c.h.b16 %v1514
      %v1570 = vunpack.c.l.b16 %v1515
      %v1571 = vunpack.c.h.b16 %v1515
      %v1572 = vunpack.c.l.b16 %v1516
      %v1573 = vunpack.c.h.b16 %v1516
      %v1574 = vunpack.c.l.b16 %v1517
      %v1575 = vunpack.c.h.b16 %v1517
      %v1576 = vunpack.c.l.b16 %v1518
      %v1577 = vunpack.c.h.b16 %v1518
      %v1578 = vunpack.c.l.b16 %v1519
      %v1579 = vunpack.c.h.b16 %v1519
      %v1580 = vunpack.c.l.b16 %v1520
      %v1581 = vunpack.c.h.b16 %v1520
      %v1582 = vunpack.c.l.b16 %v1521
      %v1583 = vunpack.c.h.b16 %v1521
      %v1584 = vunpack.c.l.b16 %v1522
      %v1585 = vunpack.c.h.b16 %v1522
      %v1586 = vunpack.c.l.b16 %v1523
      %v1587 = vunpack.c.h.b16 %v1523
      %v1588 = vunpack.c.l.b16 %v1524
      %v1589 = vunpack.c.h.b16 %v1524
      %v1590 = vunpack.c.l.b16 %v1525
      %v1591 = vunpack.c.h.b16 %v1525
      %v1592 = vunpack.c.l.b16 %v1526
      %v1593 = vunpack.c.h.b16 %v1526
      %v1594 = vunpack.c.l.b16 %v1527
      %v1595 = vunpack.c.h.b16 %v1527
      %v1596 = vunpack.c.l.b16 %v1528
      %v1597 = vunpack.c.h.b16 %v1528
      %v1598 = vunpack.c.l.b16 %v1529
      %v1599 = vunpack.c.h.b16 %v1529
      %v1600 = vunpack.c.l.b16 %v1530
      %v1601 = vunpack.c.h.b16 %v1530
      %v1602 = vunpack.c.l.b16 %v1531
      %v1603 = vunpack.c.h.b16 %v1531
      %v1604 = vpack.c.b16 %v1556, %v1556
      %v1605 = vpack.c.b16 %v1557, %v1557
      %v1606 = vpack.c.b16 %v1558, %v1558
      %v1607 = vpack.c.b16 %v1559, %v1559
      %v1608 = vpack.c.b16 %v1560, %v1560
      %v1609 = vpack.c.b16 %v1561, %v1561
      %v1610 = vpack.c.b16 %v1562, %v1562
      %v1611 = vpack.c.b16 %v1563, %v1563
      %v1612 = vpack.c.b16 %v1564, %v1564
      %v1613 = vpack.c.b16 %v1565, %v1565
      %v1614 = vpack.c.b16 %v1566, %v1566
      %v1615 = vpack.c.b16 %v1567, %v1567
      %v1616 = vpack.c.b16 %v1568, %v1568
      %v1617 = vpack.c.b16 %v1569, %v1569
      %v1618 = vpack.c.b16 %v1570, %v1570
      %v1619 = vpack.c.b16 %v1571, %v1571
      %v1620 = vpack.c.b16 %v1572, %v1572
      %v1621 = vpack.c.b16 %v1573, %v1573
      %v1622 = vpack.c.b16 %v1574, %v1574
      %v1623 = vpack.c.b16 %v1575, %v1575
      %v1624 = vpack.c.b16 %v1576, %v1576
      %v1625 = vpack.c.b16 %v1577, %v1577
      %v1626 = vpack.c.b16 %v1578, %v1578
      %v1627 = vpack.c.b16 %v1579, %v1579
      %v1628 = vpack.c.b16 %v1580, %v1580
      %v1629 = vpack.c.b16 %v1581, %v1581
      %v1630 = vpack.c.b16 %v1582, %v1582
      %v1631 = vpack.c.b16 %v1583, %v1583
      %v1632 = vpack.c.b16 %v1584, %v1584
      %v1633 = vpack.c.b16 %v1585, %v1585
      %v1634 = vpack.c.b16 %v1586, %v1586
      %v1635 = vpack.c.b16 %v1587, %v1587
      %v1636 = vpack.c.b16 %v1588, %v1588
      %v1637 = vpack.c.b16 %v1589, %v1589
      %v1638 = vpack.c.b16 %v1590, %v1590
      %v1639 = vpack.c.b16 %v1591, %v1591
      %v1640 = vpack.c.b16 %v1592, %v1592
      %v1641 = vpack.c.b16 %v1593, %v1593
      %v1642 = vpack.c.b16 %v1594, %v1594
      %v1643 = vpack.c.b16 %v1595, %v1595
      %v1644 = vpack.c.b16 %v1596, %v1596
      %v1645 = vpack.c.b16 %v1597, %v1597
      %v1646 = vpack.c.b16 %v1598, %v1598
      %v1647 = vpack.c.b16 %v1599, %v1599
      %v1648 = vpack.c.b16 %v1600, %v1600
      %v1649 = vpack.c.b16 %v1601, %v1601
      %v1650 = vpack.c.b16 %v1602, %v1602
      %v1651 = vpack.c.b16 %v1603, %v1603
      %1700 = vst [vmem:[#allocation2 + $0x10] sm:$0xf] %v1604
      %1701 = vst [vmem:[#allocation2 + $0x14] sm:$0xf] %v1605
      %1702 = vst [vmem:[#allocation2 + $0x18] sm:$0xf] %v1606
      %1703 = vst [vmem:[#allocation2 + $0x1c] sm:$0xf] %v1607
      %1704 = vst [vmem:[#allocation2 + $0x20] sm:$0xf] %v1608
      %1705 = vst [vmem:[#allocation2 + $0x24] sm:$0xf] %v1609
      %1706 = vst [vmem:[#allocation2 + $0x28] sm:$0xf] %v1610
      %1707 = vst [vmem:[#allocation2 + $0x2c] sm:$0xf] %v1611
      %1708 = vst [vmem:[#allocation2 + $0x30] sm:$0xf] %v1612
      %1709 = vst [vmem:[#allocation2 + $0x34] sm:$0xf] %v1613
      %1710 = vst [vmem:[#allocation2 + $0x38] sm:$0xf] %v1614
      %1711 = vst [vmem:[#allocation2 + $0x3c] sm:$0xf] %v1615
      %1712 = vst [vmem:[#allocation2 + $0x40] sm:$0xf] %v1616
      %1713 = vst [vmem:[#allocation2 + $0x44] sm:$0xf] %v1617
      %1714 = vst [vmem:[#allocation2 + $0x48] sm:$0xf] %v1618
      %1715 = vst [vmem:[#allocation2 + $0x4c] sm:$0xf] %v1619
      %1716 = vst [vmem:[#allocation2 + $0x50] sm:$0xf] %v1620
      %1717 = vst [vmem:[#allocation2 + $0x54] sm:$0xf] %v1621
      %1718 = vst [vmem:[#allocation2 + $0x58] sm:$0xf] %v1622
      %1719 = vst [vmem:[#allocation2 + $0x5c] sm:$0xf] %v1623
      %1720 = vst [vmem:[#allocation2 + $0x60] sm:$0xf] %v1624
      %1721 = vst [vmem:[#allocation2 + $0x64] sm:$0xf] %v1625
      %1722 = vst [vmem:[#allocation2 + $0x68] sm:$0xf] %v1626
      %1723 = vst [vmem:[#allocation2 + $0x6c] sm:$0xf] %v1627
      %1724 = vst [vmem:[#allocation2 + $0x70] sm:$0xf] %v1628
      %1725 = vst [vmem:[#allocation2 + $0x74] sm:$0xf] %v1629
      %1726 = vst [vmem:[#allocation2 + $0x78] sm:$0xf] %v1630
      %1727 = vst [vmem:[#allocation2 + $0x7c] sm:$0xf] %v1631
      %1728 = vst [vmem:[#allocation2 + $0x80] sm:$0xf] %v1632
      %1729 = vst [vmem:[#allocation2 + $0x84] sm:$0xf] %v1633
      %1730 = vst [vmem:[#allocation2 + $0x88] sm:$0xf] %v1634
      %1731 = vst [vmem:[#allocation2 + $0x8c] sm:$0xf] %v1635
      %1732 = vst [vmem:[#allocation2 + $0x90] sm:$0xf] %v1636
      %1733 = vst [vmem:[#allocation2 + $0x94] sm:$0xf] %v1637
      %1734 = vst [vmem:[#allocation2 + $0x98] sm:$0xf] %v1638
      %1735 = vst [vmem:[#allocation2 + $0x9c] sm:$0xf] %v1639
      %1736 = vst [vmem:[#allocation2 + $0xa0] sm:$0xf] %v1640
      %1737 = vst [vmem:[#allocation2 + $0xa4] sm:$0xf] %v1641
      %1738 = vst [vmem:[#allocation2 + $0xa8] sm:$0xf] %v1642
      %1739 = vst [vmem:[#allocation2 + $0xac] sm:$0xf] %v1643
      %1740 = vst [vmem:[#allocation2 + $0xb0] sm:$0xf] %v1644
      %1741 = vst [vmem:[#allocation2 + $0xb4] sm:$0xf] %v1645
      %1742 = vst [vmem:[#allocation2 + $0xb8] sm:$0xf] %v1646
      %1743 = vst [vmem:[#allocation2 + $0xbc] sm:$0xf] %v1647
      %1744 = vst [vmem:[#allocation2 + $0xc0] sm:$0xf] %v1648
      %1745 = vst [vmem:[#allocation2 + $0xc4] sm:$0xf] %v1649
      %1746 = vst [vmem:[#allocation2 + $0xc8] sm:$0xf] %v1650
      %1747 = vst [vmem:[#allocation2 + $0xcc] sm:$0xf] %v1651
      %v1748 = vld [vmem:[#allocation2] sm:$0x8]
      %v1749 = vld [vmem:[#allocation2 + $0x4] sm:$0xf]
      %v1750 = vld [vmem:[#allocation2 + $0x8] sm:$0xf]
      %v1751 = vld [vmem:[#allocation2 + $0xc] sm:$0xf]
      %v1752 = vld [vmem:[#allocation2 + $0x10] sm:$0xf]
      %v1753 = vld [vmem:[#allocation2 + $0x14] sm:$0xf]
      %v1754 = vld [vmem:[#allocation2 + $0x18] sm:$0xf]
      %v1755 = vld [vmem:[#allocation2 + $0x1c] sm:$0xf]
      %v1756 = vld [vmem:[#allocation2 + $0x20] sm:$0xf]
      %v1757 = vld [vmem:[#allocation2 + $0x24] sm:$0xf]
      %v1758 = vld [vmem:[#allocation2 + $0x28] sm:$0xf]
      %v1759 = vld [vmem:[#allocation2 + $0x2c] sm:$0xf]
      %v1760 = vld [vmem:[#allocation2 + $0x30] sm:$0xf]
      %v1761 = vld [vmem:[#allocation2 + $0x34] sm:$0xf]
      %v1762 = vld [vmem:[#allocation2 + $0x38] sm:$0xf]
      %v1763 = vld [vmem:[#allocation2 + $0x3c] sm:$0xf]
      %v1764 = vld [vmem:[#allocation2 + $0x40] sm:$0xf]
      %v1765 = vld [vmem:[#allocation2 + $0x44] sm:$0xf]
      %v1766 = vld [vmem:[#allocation2 + $0x48] sm:$0xf]
      %v1767 = vld [vmem:[#allocation2 + $0x4c] sm:$0xf]
      %v1768 = vld [vmem:[#allocation2 + $0x50] sm:$0xf]
      %v1769 = vld [vmem:[#allocation2 + $0x54] sm:$0xf]
      %v1770 = vld [vmem:[#allocation2 + $0x58] sm:$0xf]
      %v1771 = vld [vmem:[#allocation2 + $0x5c] sm:$0xf]
      %v1772 = vld [vmem:[#allocation2 + $0x60] sm:$0xf]
      %v1773 = vld [vmem:[#allocation2 + $0x64] sm:$0xf]
      %v1774 = vld [vmem:[#allocation2 + $0x68] sm:$0xf]
      %v1775 = vld [vmem:[#allocation2 + $0x6c] sm:$0xf]
      %v1776 = vld [vmem:[#allocation2 + $0x70] sm:$0xf]
      %v1777 = vld [vmem:[#allocation2 + $0x74] sm:$0xf]
      %v1778 = vld [vmem:[#allocation2 + $0x78] sm:$0xf]
      %v1779 = vld [vmem:[#allocation2 + $0x7c] sm:$0xf]
      %v1780 = vld [vmem:[#allocation2 + $0x80] sm:$0xf]
      %v1781 = vld [vmem:[#allocation2 + $0x84] sm:$0xf]
      %v1782 = vld [vmem:[#allocation2 + $0x88] sm:$0xf]
      %v1783 = vld [vmem:[#allocation2 + $0x8c] sm:$0xf]
      %v1784 = vld [vmem:[#allocation2 + $0x90] sm:$0xf]
      %v1785 = vld [vmem:[#allocation2 + $0x94] sm:$0xf]
      %v1786 = vld [vmem:[#allocation2 + $0x98] sm:$0xf]
      %v1787 = vld [vmem:[#allocation2 + $0x9c] sm:$0xf]
      %v1788 = vld [vmem:[#allocation2 + $0xa0] sm:$0xf]
      %v1789 = vld [vmem:[#allocation2 + $0xa4] sm:$0xf]
      %v1790 = vld [vmem:[#allocation2 + $0xa8] sm:$0xf]
      %v1791 = vld [vmem:[#allocation2 + $0xac] sm:$0xf]
      %v1792 = vld [vmem:[#allocation2 + $0xb0] sm:$0xf]
      %v1793 = vld [vmem:[#allocation2 + $0xb4] sm:$0xf]
      %v1794 = vld [vmem:[#allocation2 + $0xb8] sm:$0xf]
      %v1795 = vld [vmem:[#allocation2 + $0xbc] sm:$0xf]
      %v1796 = vld [vmem:[#allocation2 + $0xc0] sm:$0xf]
      %v1797 = vld [vmem:[%s3] sm:$0xf]
      %v1798 = vld [vmem:[%s3 + $0x4] sm:$0xf]
      %v1799 = vld [vmem:[%s3 + $0x8] sm:$0xf]
      %v1800 = vld [vmem:[%s3 + $0xc] sm:$0xf]
      %v1801 = vld [vmem:[%s3 + $0x10] sm:$0xf]
      %v1802 = vld [vmem:[%s3 + $0x14] sm:$0xf]
      %v1803 = vld [vmem:[%s3 + $0x18] sm:$0xf]
      %v1804 = vld [vmem:[%s3 + $0x1c] sm:$0xf]
      %v1805 = vld [vmem:[%s3 + $0x20] sm:$0xf]
      %v1806 = vld [vmem:[%s3 + $0x24] sm:$0xf]
      %v1807 = vld [vmem:[%s3 + $0x28] sm:$0xf]
      %v1808 = vld [vmem:[%s3 + $0x2c] sm:$0xf]
      %v1809 = vld [vmem:[%s3 + $0x30] sm:$0xf]
      %v1810 = vld [vmem:[%s3 + $0x34] sm:$0xf]
      %v1811 = vld [vmem:[%s3 + $0x38] sm:$0xf]
      %v1812 = vld [vmem:[%s3 + $0x3c] sm:$0xf]
      %s1813 = scalar_lea.vmem %s3, 64
      %v1814 = vld [vmem:[%s1813] sm:$0xf]
      %v1815 = vld [vmem:[%s1813 + $0x4] sm:$0xf]
      %v1816 = vld [vmem:[%s1813 + $0x8] sm:$0xf]
      %v1817 = vld [vmem:[%s1813 + $0xc] sm:$0xf]
      %v1818 = vld [vmem:[%s1813 + $0x10] sm:$0xf]
      %v1819 = vld [vmem:[%s1813 + $0x14] sm:$0xf]
      %v1820 = vld [vmem:[%s1813 + $0x18] sm:$0xf]
      %v1821 = vld [vmem:[%s1813 + $0x1c] sm:$0xf]
      %v1822 = vld [vmem:[%s1813 + $0x20] sm:$0xf]
      %v1823 = vld [vmem:[%s1813 + $0x24] sm:$0xf]
      %v1824 = vld [vmem:[%s1813 + $0x28] sm:$0xf]
      %v1825 = vld [vmem:[%s1813 + $0x2c] sm:$0xf]
      %v1826 = vld [vmem:[%s1813 + $0x30] sm:$0xf]
      %v1827 = vld [vmem:[%s1813 + $0x34] sm:$0xf]
      %v1828 = vld [vmem:[%s1813 + $0x38] sm:$0xf]
      %v1829 = vld [vmem:[%s1813 + $0x3c] sm:$0xf]
      %v1878 = vunpack.c.l.b16 %v1749
      %v1879 = vunpack.c.l.b16 %v1750
      %v1880 = vunpack.c.l.b16 %v1751
      %v1881 = vunpack.c.l.b16 %v1752
      %v1882 = vunpack.c.l.b16 %v1753
      %v1883 = vunpack.c.l.b16 %v1754
      %v1884 = vunpack.c.l.b16 %v1755
      %v1885 = vunpack.c.l.b16 %v1756
      %v1886 = vunpack.c.l.b16 %v1757
      %v1887 = vunpack.c.l.b16 %v1758
      %v1888 = vunpack.c.l.b16 %v1759
      %v1889 = vunpack.c.l.b16 %v1760
      %v1890 = vunpack.c.l.b16 %v1761
      %v1891 = vunpack.c.l.b16 %v1762
      %v1892 = vunpack.c.l.b16 %v1763
      %v1893 = vunpack.c.l.b16 %v1764
      %v1894 = vunpack.c.l.b16 %v1765
      %v1895 = vunpack.c.l.b16 %v1766
      %v1896 = vunpack.c.l.b16 %v1767
      %v1897 = vunpack.c.l.b16 %v1768
      %v1898 = vunpack.c.l.b16 %v1769
      %v1899 = vunpack.c.l.b16 %v1770
      %v1900 = vunpack.c.l.b16 %v1771
      %v1901 = vunpack.c.l.b16 %v1772
      %v1902 = vunpack.c.l.b16 %v1773
      %v1903 = vunpack.c.l.b16 %v1774
      %v1904 = vunpack.c.l.b16 %v1775
      %v1905 = vunpack.c.l.b16 %v1776
      %v1906 = vunpack.c.l.b16 %v1777
      %v1907 = vunpack.c.l.b16 %v1778
      %v1908 = vunpack.c.l.b16 %v1779
      %v1909 = vunpack.c.l.b16 %v1780
      %v1910 = vunpack.c.l.b16 %v1781
      %v1911 = vunpack.c.l.b16 %v1782
      %v1912 = vunpack.c.l.b16 %v1783
      %v1913 = vunpack.c.l.b16 %v1784
      %v1914 = vunpack.c.l.b16 %v1785
      %v1915 = vunpack.c.l.b16 %v1786
      %v1916 = vunpack.c.l.b16 %v1787
      %v1917 = vunpack.c.l.b16 %v1788
      %v1918 = vunpack.c.l.b16 %v1789
      %v1919 = vunpack.c.l.b16 %v1790
      %v1920 = vunpack.c.l.b16 %v1791
      %v1921 = vunpack.c.l.b16 %v1792
      %v1922 = vunpack.c.l.b16 %v1793
      %v1923 = vunpack.c.l.b16 %v1794
      %v1924 = vunpack.c.l.b16 %v1795
      %v1925 = vunpack.c.l.b16 %v1796
      %v1926 = vpack.c.b16 %v1879, %v1878
      %v1927 = vpack.c.b16 %v1881, %v1880
      %v1928 = vpack.c.b16 %v1883, %v1882
      %v1929 = vpack.c.b16 %v1885, %v1884
      %v1930 = vpack.c.b16 %v1887, %v1886
      %v1931 = vpack.c.b16 %v1889, %v1888
      %v1932 = vpack.c.b16 %v1891, %v1890
      %v1933 = vpack.c.b16 %v1893, %v1892
      %v1934 = vpack.c.b16 %v1895, %v1894
      %v1935 = vpack.c.b16 %v1897, %v1896
      %v1936 = vpack.c.b16 %v1899, %v1898
      %v1937 = vpack.c.b16 %v1901, %v1900
      %v1938 = vpack.c.b16 %v1903, %v1902
      %v1939 = vpack.c.b16 %v1905, %v1904
      %v1940 = vpack.c.b16 %v1907, %v1906
      %v1941 = vpack.c.b16 %v1909, %v1908
      %v1942 = vpack.c.b16 %v1911, %v1910
      %v1943 = vpack.c.b16 %v1913, %v1912
      %v1944 = vpack.c.b16 %v1915, %v1914
      %v1945 = vpack.c.b16 %v1917, %v1916
      %v1946 = vpack.c.b16 %v1919, %v1918
      %v1947 = vpack.c.b16 %v1921, %v1920
      %v1948 = vpack.c.b16 %v1923, %v1922
      %v1949 = vpack.c.b16 %v1925, %v1924
      %v1990 = vunpack.c.l.b16 %v1814
      %v1991 = vunpack.c.l.b16 %v1815
      %v1992 = vunpack.c.l.b16 %v1816
      %v1993 = vunpack.c.l.b16 %v1817
      %v1994 = vunpack.c.l.b16 %v1818
      %v1995 = vunpack.c.l.b16 %v1819
      %v1996 = vunpack.c.l.b16 %v1820
      %v1997 = vunpack.c.l.b16 %v1821
      %v1998 = vunpack.c.l.b16 %v1822
      %v1999 = vunpack.c.l.b16 %v1823
      %v2000 = vunpack.c.l.b16 %v1824
      %v2001 = vunpack.c.l.b16 %v1825
      %v2002 = vunpack.c.l.b16 %v1826
      %v2003 = vunpack.c.l.b16 %v1827
      %v2004 = vunpack.c.l.b16 %v1828
      %v2005 = vunpack.c.l.b16 %v1829
      %v2006 = vpack.c.b16 %v1991, %v1990
      %v2007 = vpack.c.b16 %v1993, %v1992
      %v2008 = vpack.c.b16 %v1995, %v1994
      %v2009 = vpack.c.b16 %v1997, %v1996
      %v2010 = vpack.c.b16 %v1999, %v1998
      %v2011 = vpack.c.b16 %v2001, %v2000
      %v2012 = vpack.c.b16 %v2003, %v2002
      %v2013 = vpack.c.b16 %v2005, %v2004
      %2022 = vmatprep.subr.bf16.mxu0 0
      %2023 = vmatpush1.bf16.msra.mxu0 %v2013
      %2024 = vmatprep.subr.bf16.mxu0 0
      %2025 = vmatpush1.bf16.msra.mxu0 %v2012
      %2026 = vmatprep.subr.bf16.mxu0 0
      %2027 = vmatpush1.bf16.msra.mxu0 %v2011
      %2028 = vmatprep.subr.bf16.mxu0 0
      %2029 = vmatpush1.bf16.msra.mxu0 %v2010
      %2030 = vmatprep.subr.bf16.mxu0 0
      %2031 = vmatpush1.bf16.msra.mxu0 %v2009
      %2032 = vmatprep.subr.bf16.mxu0 0
      %2033 = vmatpush1.bf16.msra.mxu0 %v2008
      %2034 = vmatprep.subr.bf16.mxu0 0
      %2035 = vmatpush1.bf16.msra.mxu0 %v2007
      %2036 = vmatprep.subr.bf16.mxu0 0
      %2037 = vmatpush1.bf16.msra.mxu0 %v2006
      %2038 = vmatprep.subr.bf16.mxu0 0
      %2039 = vmatpush2.bf16.msra.mxu0 0
      %2040 = vmatprep.subr.bf16.mxu0 0
      %2041 = vmatpush2.bf16.msra.mxu0 0
      %2042 = vmatprep.subr.bf16.mxu0 0
      %2043 = vmatpush2.bf16.msra.mxu0 0
      %2044 = vmatprep.subr.bf16.mxu0 0
      %2045 = vmatpush2.bf16.msra.mxu0 0
      %2046 = vmatprep.subr.bf16.mxu0 0
      %2047 = vmatpush2.bf16.msra.mxu0 0
      %2048 = vmatprep.subr.bf16.mxu0 0
      %2049 = vmatpush2.bf16.msra.mxu0 0
      %2050 = vmatprep.subr.bf16.mxu0 0
      %2051 = vmatpush2.bf16.msra.mxu0 0
      %2052 = vmatprep.subr.bf16.mxu0 0
      %2053 = vmatpush2.bf16.msra.mxu0 0
      %2054 = vmatprep.mubr.bf16.mxu0 0
      %2055 = vmatmul.mubr.bf16.gmra.mxu0 %v1926
      %v2056 = vpop.f32.mrf.mxu0
      %v2057 = vadd.f32 0.0, %v2056
      %v2058 = vpop.f32.mrf.mxu0
      %v2059 = vpop.f32.mrf.mxu0
      %v2060 = vadd.f32 0.0, %v2059
      %v2061 = vpop.f32.mrf.mxu0
      %2062 = vmatprep.mubr.bf16.mxu0 0
      %2063 = vmatmul.mubr.bf16.gmra.mxu0 %v1927
      %v2064 = vpop.f32.mrf.mxu0
      %v2065 = vadd.f32 0.0, %v2064
      %v2066 = vpop.f32.mrf.mxu0
      %v2067 = vpop.f32.mrf.mxu0
      %v2068 = vadd.f32 0.0, %v2067
      %v2069 = vpop.f32.mrf.mxu0
      %2070 = vmatprep.mubr.bf16.mxu0 0
      %2071 = vmatmul.mubr.bf16.gmra.mxu0 %v1928
      %v2072 = vpop.f32.mrf.mxu0
      %v2073 = vadd.f32 0.0, %v2072
      %v2074 = vpop.f32.mrf.mxu0
      %v2075 = vpop.f32.mrf.mxu0
      %v2076 = vadd.f32 0.0, %v2075
      %v2077 = vpop.f32.mrf.mxu0
      %2078 = vmatprep.mubr.bf16.mxu0 0
      %2079 = vmatmul.mubr.bf16.gmra.mxu0 %v1929
      %v2080 = vpop.f32.mrf.mxu0
      %v2081 = vadd.f32 0.0, %v2080
      %v2082 = vpop.f32.mrf.mxu0
      %v2083 = vpop.f32.mrf.mxu0
      %v2084 = vadd.f32 0.0, %v2083
      %v2085 = vpop.f32.mrf.mxu0
      %2086 = vmatprep.mubr.bf16.mxu0 0
      %2087 = vmatmul.mubr.bf16.gmra.mxu0 %v1930
      %v2088 = vpop.f32.mrf.mxu0
      %v2089 = vadd.f32 0.0, %v2088
      %v2090 = vpop.f32.mrf.mxu0
      %v2091 = vpop.f32.mrf.mxu0
      %v2092 = vadd.f32 0.0, %v2091
      %v2093 = vpop.f32.mrf.mxu0
      %2094 = vmatprep.mubr.bf16.mxu0 0
      %2095 = vmatmul.mubr.bf16.gmra.mxu0 %v1931
      %v2096 = vpop.f32.mrf.mxu0
      %v2097 = vadd.f32 0.0, %v2096
      %v2098 = vpop.f32.mrf.mxu0
      %v2099 = vpop.f32.mrf.mxu0
      %v2100 = vadd.f32 0.0, %v2099
      %v2101 = vpop.f32.mrf.mxu0
      %2102 = vmatprep.mubr.bf16.mxu0 0
      %2103 = vmatmul.mubr.bf16.gmra.mxu0 %v1932
      %v2104 = vpop.f32.mrf.mxu0
      %v2105 = vadd.f32 0.0, %v2104
      %v2106 = vpop.f32.mrf.mxu0
      %v2107 = vpop.f32.mrf.mxu0
      %v2108 = vadd.f32 0.0, %v2107
      %v2109 = vpop.f32.mrf.mxu0
      %2110 = vmatprep.mubr.bf16.mxu0 0
      %2111 = vmatmul.mubr.bf16.gmra.mxu0 %v1933
      %v2112 = vpop.f32.mrf.mxu0
      %v2113 = vadd.f32 0.0, %v2112
      %v2114 = vpop.f32.mrf.mxu0
      %v2115 = vpop.f32.mrf.mxu0
      %v2116 = vadd.f32 0.0, %v2115
      %v2117 = vpop.f32.mrf.mxu0
      %2118 = vmatprep.mubr.bf16.mxu0 0
      %2119 = vmatmul.mubr.bf16.gmra.mxu0 %v1934
      %v2120 = vpop.f32.mrf.mxu0
      %v2121 = vadd.f32 0.0, %v2120
      %v2122 = vpop.f32.mrf.mxu0
      %v2123 = vpop.f32.mrf.mxu0
      %v2124 = vadd.f32 0.0, %v2123
      %v2125 = vpop.f32.mrf.mxu0
      %2126 = vmatprep.mubr.bf16.mxu0 0
      %2127 = vmatmul.mubr.bf16.gmra.mxu0 %v1935
      %v2128 = vpop.f32.mrf.mxu0
      %v2129 = vadd.f32 0.0, %v2128
      %v2130 = vpop.f32.mrf.mxu0
      %v2131 = vpop.f32.mrf.mxu0
      %v2132 = vadd.f32 0.0, %v2131
      %v2133 = vpop.f32.mrf.mxu0
      %2134 = vmatprep.mubr.bf16.mxu0 0
      %2135 = vmatmul.mubr.bf16.gmra.mxu0 %v1936
      %v2136 = vpop.f32.mrf.mxu0
      %v2137 = vadd.f32 0.0, %v2136
      %v2138 = vpop.f32.mrf.mxu0
      %v2139 = vpop.f32.mrf.mxu0
      %v2140 = vadd.f32 0.0, %v2139
      %v2141 = vpop.f32.mrf.mxu0
      %2142 = vmatprep.mubr.bf16.mxu0 0
      %2143 = vmatmul.mubr.bf16.gmra.mxu0 %v1937
      %v2144 = vpop.f32.mrf.mxu0
      %v2145 = vadd.f32 0.0, %v2144
      %v2146 = vpop.f32.mrf.mxu0
      %v2147 = vpop.f32.mrf.mxu0
      %v2148 = vadd.f32 0.0, %v2147
      %v2149 = vpop.f32.mrf.mxu0
      %2150 = vmatprep.mubr.bf16.mxu0 0
      %2151 = vmatmul.mubr.bf16.gmra.mxu0 %v1938
      %v2152 = vpop.f32.mrf.mxu0
      %v2153 = vadd.f32 0.0, %v2152
      %v2154 = vpop.f32.mrf.mxu0
      %v2155 = vpop.f32.mrf.mxu0
      %v2156 = vadd.f32 0.0, %v2155
      %v2157 = vpop.f32.mrf.mxu0
      %2158 = vmatprep.mubr.bf16.mxu0 0
      %2159 = vmatmul.mubr.bf16.gmra.mxu0 %v1939
      %v2160 = vpop.f32.mrf.mxu0
      %v2161 = vadd.f32 0.0, %v2160
      %v2162 = vpop.f32.mrf.mxu0
      %v2163 = vpop.f32.mrf.mxu0
      %v2164 = vadd.f32 0.0, %v2163
      %v2165 = vpop.f32.mrf.mxu0
      %2166 = vmatprep.mubr.bf16.mxu0 0
      %2167 = vmatmul.mubr.bf16.gmra.mxu0 %v1940
      %v2168 = vpop.f32.mrf.mxu0
      %v2169 = vadd.f32 0.0, %v2168
      %v2170 = vpop.f32.mrf.mxu0
      %v2171 = vpop.f32.mrf.mxu0
      %v2172 = vadd.f32 0.0, %v2171
      %v2173 = vpop.f32.mrf.mxu0
      %2174 = vmatprep.mubr.bf16.mxu0 0
      %2175 = vmatmul.mubr.bf16.gmra.mxu0 %v1941
      %v2176 = vpop.f32.mrf.mxu0
      %v2177 = vadd.f32 0.0, %v2176
      %v2178 = vpop.f32.mrf.mxu0
      %v2179 = vpop.f32.mrf.mxu0
      %v2180 = vadd.f32 0.0, %v2179
      %v2181 = vpop.f32.mrf.mxu0
      %2182 = vmatprep.mubr.bf16.mxu0 0
      %2183 = vmatmul.mubr.bf16.gmra.mxu0 %v1942
      %v2184 = vpop.f32.mrf.mxu0
      %v2185 = vadd.f32 0.0, %v2184
      %v2186 = vpop.f32.mrf.mxu0
      %v2187 = vpop.f32.mrf.mxu0
      %v2188 = vadd.f32 0.0, %v2187
      %v2189 = vpop.f32.mrf.mxu0
      %2190 = vmatprep.mubr.bf16.mxu0 0
      %2191 = vmatmul.mubr.bf16.gmra.mxu0 %v1943
      %v2192 = vpop.f32.mrf.mxu0
      %v2193 = vadd.f32 0.0, %v2192
      %v2194 = vpop.f32.mrf.mxu0
      %v2195 = vpop.f32.mrf.mxu0
      %v2196 = vadd.f32 0.0, %v2195
      %v2197 = vpop.f32.mrf.mxu0
      %2198 = vmatprep.mubr.bf16.mxu0 0
      %2199 = vmatmul.mubr.bf16.gmra.mxu0 %v1944
      %v2200 = vpop.f32.mrf.mxu0
      %v2201 = vadd.f32 0.0, %v2200
      %v2202 = vpop.f32.mrf.mxu0
      %v2203 = vpop.f32.mrf.mxu0
      %v2204 = vadd.f32 0.0, %v2203
      %v2205 = vpop.f32.mrf.mxu0
      %2206 = vmatprep.mubr.bf16.mxu0 0
      %2207 = vmatmul.mubr.bf16.gmra.mxu0 %v1945
      %v2208 = vpop.f32.mrf.mxu0
      %v2209 = vadd.f32 0.0, %v2208
      %v2210 = vpop.f32.mrf.mxu0
      %v2211 = vpop.f32.mrf.mxu0
      %v2212 = vadd.f32 0.0, %v2211
      %v2213 = vpop.f32.mrf.mxu0
      %2214 = vmatprep.mubr.bf16.mxu0 0
      %2215 = vmatmul.mubr.bf16.gmra.mxu0 %v1946
      %v2216 = vpop.f32.mrf.mxu0
      %v2217 = vadd.f32 0.0, %v2216
      %v2218 = vpop.f32.mrf.mxu0
      %v2219 = vpop.f32.mrf.mxu0
      %v2220 = vadd.f32 0.0, %v2219
      %v2221 = vpop.f32.mrf.mxu0
      %2222 = vmatprep.mubr.bf16.mxu0 0
      %2223 = vmatmul.mubr.bf16.gmra.mxu0 %v1947
      %v2224 = vpop.f32.mrf.mxu0
      %v2225 = vadd.f32 0.0, %v2224
      %v2226 = vpop.f32.mrf.mxu0
      %v2227 = vpop.f32.mrf.mxu0
      %v2228 = vadd.f32 0.0, %v2227
      %v2229 = vpop.f32.mrf.mxu0
      %2230 = vmatprep.mubr.bf16.mxu0 0
      %2231 = vmatmul.mubr.bf16.gmra.mxu0 %v1948
      %v2232 = vpop.f32.mrf.mxu0
      %v2233 = vadd.f32 0.0, %v2232
      %v2234 = vpop.f32.mrf.mxu0
      %v2235 = vpop.f32.mrf.mxu0
      %v2236 = vadd.f32 0.0, %v2235
      %v2237 = vpop.f32.mrf.mxu0
      %2238 = vmatprep.mubr.bf16.mxu0 0
      %2239 = vmatmul.mubr.bf16.gmra.mxu0 %v1949
      %v2240 = vpop.f32.mrf.mxu0
      %v2241 = vadd.f32 0.0, %v2240
      %v2242 = vpop.f32.mrf.mxu0
      %v2243 = vpop.f32.mrf.mxu0
      %v2244 = vadd.f32 0.0, %v2243
      %v2245 = vpop.f32.mrf.mxu0
      %2246 = vdwg.mxu0
      %v2248 = vunpack.c.l.b16 %v1748
      %v2249 = vpack.c.b16 %v1878, %v2248
      %v2250 = vpack.c.b16 %v1880, %v1879
      %v2251 = vpack.c.b16 %v1882, %v1881
      %v2252 = vpack.c.b16 %v1884, %v1883
      %v2253 = vpack.c.b16 %v1886, %v1885
      %v2254 = vpack.c.b16 %v1888, %v1887
      %v2255 = vpack.c.b16 %v1890, %v1889
      %v2256 = vpack.c.b16 %v1892, %v1891
      %v2257 = vpack.c.b16 %v1894, %v1893
      %v2258 = vpack.c.b16 %v1896, %v1895
      %v2259 = vpack.c.b16 %v1898, %v1897
      %v2260 = vpack.c.b16 %v1900, %v1899
      %v2261 = vpack.c.b16 %v1902, %v1901
      %v2262 = vpack.c.b16 %v1904, %v1903
      %v2263 = vpack.c.b16 %v1906, %v1905
      %v2264 = vpack.c.b16 %v1908, %v1907
      %v2265 = vpack.c.b16 %v1910, %v1909
      %v2266 = vpack.c.b16 %v1912, %v1911
      %v2267 = vpack.c.b16 %v1914, %v1913
      %v2268 = vpack.c.b16 %v1916, %v1915
      %v2269 = vpack.c.b16 %v1918, %v1917
      %v2270 = vpack.c.b16 %v1920, %v1919
      %v2271 = vpack.c.b16 %v1922, %v1921
      %v2272 = vpack.c.b16 %v1924, %v1923
      %v2273 = vpack.c.b16 %v1925, %v1925
      %vm2274 = vsmask.f32 4352
      %v2276 = vshrl.u32 %v2249, 16
      %v2278 = vrot.slane %v2276, 3
      %v2279 = vshll.u32 %v2249, 16
      %v2281 = vrot.slane %v2279, 4
      %v2282 = vor.u32 %v2278, %v2281
      %v2284 = vshrl.u32 %v2250, 16
      %v2286 = vrot.slane %v2284, 3
      %v2287 = vshll.u32 %v2250, 16
      %v2289 = vrot.slane %v2287, 4
      %v2290 = vor.u32 %v2286, %v2289
      %v2291 = vsel %vm2274, %v2282, %v2290
      %v2293 = vshrl.u32 %v2251, 16
      %v2295 = vrot.slane %v2293, 3
      %v2296 = vshll.u32 %v2251, 16
      %v2298 = vrot.slane %v2296, 4
      %v2299 = vor.u32 %v2295, %v2298
      %v2300 = vsel %vm2274, %v2290, %v2299
      %v2302 = vshrl.u32 %v2252, 16
      %v2304 = vrot.slane %v2302, 3
      %v2305 = vshll.u32 %v2252, 16
      %v2307 = vrot.slane %v2305, 4
      %v2308 = vor.u32 %v2304, %v2307
      %v2309 = vsel %vm2274, %v2299, %v2308
      %v2311 = vshrl.u32 %v2253, 16
      %v2313 = vrot.slane %v2311, 3
      %v2314 = vshll.u32 %v2253, 16
      %v2316 = vrot.slane %v2314, 4
      %v2317 = vor.u32 %v2313, %v2316
      %v2318 = vsel %vm2274, %v2308, %v2317
      %v2320 = vshrl.u32 %v2254, 16
      %v2322 = vrot.slane %v2320, 3
      %v2323 = vshll.u32 %v2254, 16
      %v2325 = vrot.slane %v2323, 4
      %v2326 = vor.u32 %v2322, %v2325
      %v2327 = vsel %vm2274, %v2317, %v2326
      %v2329 = vshrl.u32 %v2255, 16
      %v2331 = vrot.slane %v2329, 3
      %v2332 = vshll.u32 %v2255, 16
      %v2334 = vrot.slane %v2332, 4
      %v2335 = vor.u32 %v2331, %v2334
      %v2336 = vsel %vm2274, %v2326, %v2335
      %v2338 = vshrl.u32 %v2256, 16
      %v2340 = vrot.slane %v2338, 3
      %v2341 = vshll.u32 %v2256, 16
      %v2343 = vrot.slane %v2341, 4
      %v2344 = vor.u32 %v2340, %v2343
      %v2345 = vsel %vm2274, %v2335, %v2344
      %v2347 = vshrl.u32 %v2257, 16
      %v2349 = vrot.slane %v2347, 3
      %v2350 = vshll.u32 %v2257, 16
      %v2352 = vrot.slane %v2350, 4
      %v2353 = vor.u32 %v2349, %v2352
      %v2354 = vsel %vm2274, %v2344, %v2353
      %v2356 = vshrl.u32 %v2258, 16
      %v2358 = vrot.slane %v2356, 3
      %v2359 = vshll.u32 %v2258, 16
      %v2361 = vrot.slane %v2359, 4
      %v2362 = vor.u32 %v2358, %v2361
      %v2363 = vsel %vm2274, %v2353, %v2362
      %v2365 = vshrl.u32 %v2259, 16
      %v2367 = vrot.slane %v2365, 3
      %v2368 = vshll.u32 %v2259, 16
      %v2370 = vrot.slane %v2368, 4
      %v2371 = vor.u32 %v2367, %v2370
      %v2372 = vsel %vm2274, %v2362, %v2371
      %v2374 = vshrl.u32 %v2260, 16
      %v2376 = vrot.slane %v2374, 3
      %v2377 = vshll.u32 %v2260, 16
      %v2379 = vrot.slane %v2377, 4
      %v2380 = vor.u32 %v2376, %v2379
      %v2381 = vsel %vm2274, %v2371, %v2380
      %v2383 = vshrl.u32 %v2261, 16
      %v2385 = vrot.slane %v2383, 3
      %v2386 = vshll.u32 %v2261, 16
      %v2388 = vrot.slane %v2386, 4
      %v2389 = vor.u32 %v2385, %v2388
      %v2390 = vsel %vm2274, %v2380, %v2389
      %v2392 = vshrl.u32 %v2262, 16
      %v2394 = vrot.slane %v2392, 3
      %v2395 = vshll.u32 %v2262, 16
      %v2397 = vrot.slane %v2395, 4
      %v2398 = vor.u32 %v2394, %v2397
      %v2399 = vsel %vm2274, %v2389, %v2398
      %v2401 = vshrl.u32 %v2263, 16
      %v2403 = vrot.slane %v2401, 3
      %v2404 = vshll.u32 %v2263, 16
      %v2406 = vrot.slane %v2404, 4
      %v2407 = vor.u32 %v2403, %v2406
      %v2408 = vsel %vm2274, %v2398, %v2407
      %v2410 = vshrl.u32 %v2264, 16
      %v2412 = vrot.slane %v2410, 3
      %v2413 = vshll.u32 %v2264, 16
      %v2415 = vrot.slane %v2413, 4
      %v2416 = vor.u32 %v2412, %v2415
      %v2417 = vsel %vm2274, %v2407, %v2416
      %v2419 = vshrl.u32 %v2265, 16
      %v2421 = vrot.slane %v2419, 3
      %v2422 = vshll.u32 %v2265, 16
      %v2424 = vrot.slane %v2422, 4
      %v2425 = vor.u32 %v2421, %v2424
      %v2426 = vsel %vm2274, %v2416, %v2425
      %v2428 = vshrl.u32 %v2266, 16
      %v2430 = vrot.slane %v2428, 3
      %v2431 = vshll.u32 %v2266, 16
      %v2433 = vrot.slane %v2431, 4
      %v2434 = vor.u32 %v2430, %v2433
      %v2435 = vsel %vm2274, %v2425, %v2434
      %v2437 = vshrl.u32 %v2267, 16
      %v2439 = vrot.slane %v2437, 3
      %v2440 = vshll.u32 %v2267, 16
      %v2442 = vrot.slane %v2440, 4
      %v2443 = vor.u32 %v2439, %v2442
      %v2444 = vsel %vm2274, %v2434, %v2443
      %v2446 = vshrl.u32 %v2268, 16
      %v2448 = vrot.slane %v2446, 3
      %v2449 = vshll.u32 %v2268, 16
      %v2451 = vrot.slane %v2449, 4
      %v2452 = vor.u32 %v2448, %v2451
      %v2453 = vsel %vm2274, %v2443, %v2452
      %v2455 = vshrl.u32 %v2269, 16
      %v2457 = vrot.slane %v2455, 3
      %v2458 = vshll.u32 %v2269, 16
      %v2460 = vrot.slane %v2458, 4
      %v2461 = vor.u32 %v2457, %v2460
      %v2462 = vsel %vm2274, %v2452, %v2461
      %v2464 = vshrl.u32 %v2270, 16
      %v2466 = vrot.slane %v2464, 3
      %v2467 = vshll.u32 %v2270, 16
      %v2469 = vrot.slane %v2467, 4
      %v2470 = vor.u32 %v2466, %v2469
      %v2471 = vsel %vm2274, %v2461, %v2470
      %v2473 = vshrl.u32 %v2271, 16
      %v2475 = vrot.slane %v2473, 3
      %v2476 = vshll.u32 %v2271, 16
      %v2478 = vrot.slane %v2476, 4
      %v2479 = vor.u32 %v2475, %v2478
      %v2480 = vsel %vm2274, %v2470, %v2479
      %v2482 = vshrl.u32 %v2272, 16
      %v2484 = vrot.slane %v2482, 3
      %v2485 = vshll.u32 %v2272, 16
      %v2487 = vrot.slane %v2485, 4
      %v2488 = vor.u32 %v2484, %v2487
      %v2489 = vsel %vm2274, %v2479, %v2488
      %v2491 = vshrl.u32 %v2273, 16
      %v2493 = vrot.slane %v2491, 3
      %v2494 = vshll.u32 %v2273, 16
      %v2496 = vrot.slane %v2494, 4
      %v2497 = vor.u32 %v2493, %v2496
      %v2498 = vsel %vm2274, %v2488, %v2497
      %v2539 = vunpack.c.l.b16 %v1797
      %v2540 = vunpack.c.l.b16 %v1798
      %v2541 = vunpack.c.l.b16 %v1799
      %v2542 = vunpack.c.l.b16 %v1800
      %v2543 = vunpack.c.l.b16 %v1801
      %v2544 = vunpack.c.l.b16 %v1802
      %v2545 = vunpack.c.l.b16 %v1803
      %v2546 = vunpack.c.l.b16 %v1804
      %v2547 = vunpack.c.l.b16 %v1805
      %v2548 = vunpack.c.l.b16 %v1806
      %v2549 = vunpack.c.l.b16 %v1807
      %v2550 = vunpack.c.l.b16 %v1808
      %v2551 = vunpack.c.l.b16 %v1809
      %v2552 = vunpack.c.l.b16 %v1810
      %v2553 = vunpack.c.l.b16 %v1811
      %v2554 = vunpack.c.l.b16 %v1812
      %v2555 = vpack.c.b16 %v2540, %v2539
      %v2556 = vpack.c.b16 %v2542, %v2541
      %v2557 = vpack.c.b16 %v2544, %v2543
      %v2558 = vpack.c.b16 %v2546, %v2545
      %v2559 = vpack.c.b16 %v2548, %v2547
      %v2560 = vpack.c.b16 %v2550, %v2549
      %v2561 = vpack.c.b16 %v2552, %v2551
      %v2562 = vpack.c.b16 %v2554, %v2553
      %2571 = vmatprep.subr.bf16.mxu0 0
      %2572 = vmatpush1.bf16.msra.mxu0 %v2562
      %2573 = vmatprep.subr.bf16.mxu0 0
      %2574 = vmatpush1.bf16.msra.mxu0 %v2561
      %2575 = vmatprep.subr.bf16.mxu0 0
      %2576 = vmatpush1.bf16.msra.mxu0 %v2560
      %2577 = vmatprep.subr.bf16.mxu0 0
      %2578 = vmatpush1.bf16.msra.mxu0 %v2559
      %2579 = vmatprep.subr.bf16.mxu0 0
      %2580 = vmatpush1.bf16.msra.mxu0 %v2558
      %2581 = vmatprep.subr.bf16.mxu0 0
      %2582 = vmatpush1.bf16.msra.mxu0 %v2557
      %2583 = vmatprep.subr.bf16.mxu0 0
      %2584 = vmatpush1.bf16.msra.mxu0 %v2556
      %2585 = vmatprep.subr.bf16.mxu0 0
      %2586 = vmatpush1.bf16.msra.mxu0 %v2555
      %2587 = vmatprep.subr.bf16.mxu0 0
      %2588 = vmatpush2.bf16.msra.mxu0 0
      %2589 = vmatprep.subr.bf16.mxu0 0
      %2590 = vmatpush2.bf16.msra.mxu0 0
      %2591 = vmatprep.subr.bf16.mxu0 0
      %2592 = vmatpush2.bf16.msra.mxu0 0
      %2593 = vmatprep.subr.bf16.mxu0 0
      %2594 = vmatpush2.bf16.msra.mxu0 0
      %2595 = vmatprep.subr.bf16.mxu0 0
      %2596 = vmatpush2.bf16.msra.mxu0 0
      %2597 = vmatprep.subr.bf16.mxu0 0
      %2598 = vmatpush2.bf16.msra.mxu0 0
      %2599 = vmatprep.subr.bf16.mxu0 0
      %2600 = vmatpush2.bf16.msra.mxu0 0
      %2601 = vmatprep.subr.bf16.mxu0 0
      %2602 = vmatpush2.bf16.msra.mxu0 0
      %2603 = vmatprep.mubr.bf16.mxu0 0
      %2604 = vmatmul.mubr.bf16.gmra.mxu0 %v2291
      %v2605 = vpop.f32.mrf.mxu0
      %v2606 = vadd.f32 %v2057, %v2605
      %v2607 = vpop.f32.mrf.mxu0
      %v2608 = vpop.f32.mrf.mxu0
      %v2609 = vadd.f32 %v2060, %v2608
      %v2610 = vpop.f32.mrf.mxu0
      %2611 = vmatprep.mubr.bf16.mxu0 0
      %2612 = vmatmul.mubr.bf16.gmra.mxu0 %v2300
      %v2613 = vpop.f32.mrf.mxu0
      %v2614 = vadd.f32 %v2065, %v2613
      %v2615 = vpop.f32.mrf.mxu0
      %v2616 = vpop.f32.mrf.mxu0
      %v2617 = vadd.f32 %v2068, %v2616
      %v2618 = vpop.f32.mrf.mxu0
      %2619 = vmatprep.mubr.bf16.mxu0 0
      %2620 = vmatmul.mubr.bf16.gmra.mxu0 %v2309
      %v2621 = vpop.f32.mrf.mxu0
      %v2622 = vadd.f32 %v2073, %v2621
      %v2623 = vpop.f32.mrf.mxu0
      %v2624 = vpop.f32.mrf.mxu0
      %v2625 = vadd.f32 %v2076, %v2624
      %v2626 = vpop.f32.mrf.mxu0
      %2627 = vmatprep.mubr.bf16.mxu0 0
      %2628 = vmatmul.mubr.bf16.gmra.mxu0 %v2318
      %v2629 = vpop.f32.mrf.mxu0
      %v2630 = vadd.f32 %v2081, %v2629
      %v2631 = vpop.f32.mrf.mxu0
      %v2632 = vpop.f32.mrf.mxu0
      %v2633 = vadd.f32 %v2084, %v2632
      %v2634 = vpop.f32.mrf.mxu0
      %2635 = vmatprep.mubr.bf16.mxu0 0
      %2636 = vmatmul.mubr.bf16.gmra.mxu0 %v2327
      %v2637 = vpop.f32.mrf.mxu0
      %v2638 = vadd.f32 %v2089, %v2637
      %v2639 = vpop.f32.mrf.mxu0
      %v2640 = vpop.f32.mrf.mxu0
      %v2641 = vadd.f32 %v2092, %v2640
      %v2642 = vpop.f32.mrf.mxu0
      %2643 = vmatprep.mubr.bf16.mxu0 0
      %2644 = vmatmul.mubr.bf16.gmra.mxu0 %v2336
      %v2645 = vpop.f32.mrf.mxu0
      %v2646 = vadd.f32 %v2097, %v2645
      %v2647 = vpop.f32.mrf.mxu0
      %v2648 = vpop.f32.mrf.mxu0
      %v2649 = vadd.f32 %v2100, %v2648
      %v2650 = vpop.f32.mrf.mxu0
      %2651 = vmatprep.mubr.bf16.mxu0 0
      %2652 = vmatmul.mubr.bf16.gmra.mxu0 %v2345
      %v2653 = vpop.f32.mrf.mxu0
      %v2654 = vadd.f32 %v2105, %v2653
      %v2655 = vpop.f32.mrf.mxu0
      %v2656 = vpop.f32.mrf.mxu0
      %v2657 = vadd.f32 %v2108, %v2656
      %v2658 = vpop.f32.mrf.mxu0
      %2659 = vmatprep.mubr.bf16.mxu0 0
      %2660 = vmatmul.mubr.bf16.gmra.mxu0 %v2354
      %v2661 = vpop.f32.mrf.mxu0
      %v2662 = vadd.f32 %v2113, %v2661
      %v2663 = vpop.f32.mrf.mxu0
      %v2664 = vpop.f32.mrf.mxu0
      %v2665 = vadd.f32 %v2116, %v2664
      %v2666 = vpop.f32.mrf.mxu0
      %2667 = vmatprep.mubr.bf16.mxu0 0
      %2668 = vmatmul.mubr.bf16.gmra.mxu0 %v2363
      %v2669 = vpop.f32.mrf.mxu0
      %v2670 = vadd.f32 %v2121, %v2669
      %v2671 = vpop.f32.mrf.mxu0
      %v2672 = vpop.f32.mrf.mxu0
      %v2673 = vadd.f32 %v2124, %v2672
      %v2674 = vpop.f32.mrf.mxu0
      %2675 = vmatprep.mubr.bf16.mxu0 0
      %2676 = vmatmul.mubr.bf16.gmra.mxu0 %v2372
      %v2677 = vpop.f32.mrf.mxu0
      %v2678 = vadd.f32 %v2129, %v2677
      %v2679 = vpop.f32.mrf.mxu0
      %v2680 = vpop.f32.mrf.mxu0
      %v2681 = vadd.f32 %v2132, %v2680
      %v2682 = vpop.f32.mrf.mxu0
      %2683 = vmatprep.mubr.bf16.mxu0 0
      %2684 = vmatmul.mubr.bf16.gmra.mxu0 %v2381
      %v2685 = vpop.f32.mrf.mxu0
      %v2686 = vadd.f32 %v2137, %v2685
      %v2687 = vpop.f32.mrf.mxu0
      %v2688 = vpop.f32.mrf.mxu0
      %v2689 = vadd.f32 %v2140, %v2688
      %v2690 = vpop.f32.mrf.mxu0
      %2691 = vmatprep.mubr.bf16.mxu0 0
      %2692 = vmatmul.mubr.bf16.gmra.mxu0 %v2390
      %v2693 = vpop.f32.mrf.mxu0
      %v2694 = vadd.f32 %v2145, %v2693
      %v2695 = vpop.f32.mrf.mxu0
      %v2696 = vpop.f32.mrf.mxu0
      %v2697 = vadd.f32 %v2148, %v2696
      %v2698 = vpop.f32.mrf.mxu0
      %2699 = vmatprep.mubr.bf16.mxu0 0
      %2700 = vmatmul.mubr.bf16.gmra.mxu0 %v2399
      %v2701 = vpop.f32.mrf.mxu0
      %v2702 = vadd.f32 %v2153, %v2701
      %v2703 = vpop.f32.mrf.mxu0
      %v2704 = vpop.f32.mrf.mxu0
      %v2705 = vadd.f32 %v2156, %v2704
      %v2706 = vpop.f32.mrf.mxu0
      %2707 = vmatprep.mubr.bf16.mxu0 0
      %2708 = vmatmul.mubr.bf16.gmra.mxu0 %v2408
      %v2709 = vpop.f32.mrf.mxu0
      %v2710 = vadd.f32 %v2161, %v2709
      %v2711 = vpop.f32.mrf.mxu0
      %v2712 = vpop.f32.mrf.mxu0
      %v2713 = vadd.f32 %v2164, %v2712
      %v2714 = vpop.f32.mrf.mxu0
      %2715 = vmatprep.mubr.bf16.mxu0 0
      %2716 = vmatmul.mubr.bf16.gmra.mxu0 %v2417
      %v2717 = vpop.f32.mrf.mxu0
      %v2718 = vadd.f32 %v2169, %v2717
      %v2719 = vpop.f32.mrf.mxu0
      %v2720 = vpop.f32.mrf.mxu0
      %v2721 = vadd.f32 %v2172, %v2720
      %v2722 = vpop.f32.mrf.mxu0
      %2723 = vmatprep.mubr.bf16.mxu0 0
      %2724 = vmatmul.mubr.bf16.gmra.mxu0 %v2426
      %v2725 = vpop.f32.mrf.mxu0
      %v2726 = vadd.f32 %v2177, %v2725
      %v2727 = vpop.f32.mrf.mxu0
      %v2728 = vpop.f32.mrf.mxu0
      %v2729 = vadd.f32 %v2180, %v2728
      %v2730 = vpop.f32.mrf.mxu0
      %2731 = vmatprep.mubr.bf16.mxu0 0
      %2732 = vmatmul.mubr.bf16.gmra.mxu0 %v2435
      %v2733 = vpop.f32.mrf.mxu0
      %v2734 = vadd.f32 %v2185, %v2733
      %v2735 = vpop.f32.mrf.mxu0
      %v2736 = vpop.f32.mrf.mxu0
      %v2737 = vadd.f32 %v2188, %v2736
      %v2738 = vpop.f32.mrf.mxu0
      %2739 = vmatprep.mubr.bf16.mxu0 0
      %2740 = vmatmul.mubr.bf16.gmra.mxu0 %v2444
      %v2741 = vpop.f32.mrf.mxu0
      %v2742 = vadd.f32 %v2193, %v2741
      %v2743 = vpop.f32.mrf.mxu0
      %v2744 = vpop.f32.mrf.mxu0
      %v2745 = vadd.f32 %v2196, %v2744
      %v2746 = vpop.f32.mrf.mxu0
      %2747 = vmatprep.mubr.bf16.mxu0 0
      %2748 = vmatmul.mubr.bf16.gmra.mxu0 %v2453
      %v2749 = vpop.f32.mrf.mxu0
      %v2750 = vadd.f32 %v2201, %v2749
      %v2751 = vpop.f32.mrf.mxu0
      %v2752 = vpop.f32.mrf.mxu0
      %v2753 = vadd.f32 %v2204, %v2752
      %v2754 = vpop.f32.mrf.mxu0
      %2755 = vmatprep.mubr.bf16.mxu0 0
      %2756 = vmatmul.mubr.bf16.gmra.mxu0 %v2462
      %v2757 = vpop.f32.mrf.mxu0
      %v2758 = vadd.f32 %v2209, %v2757
      %v2759 = vpop.f32.mrf.mxu0
      %v2760 = vpop.f32.mrf.mxu0
      %v2761 = vadd.f32 %v2212, %v2760
      %v2762 = vpop.f32.mrf.mxu0
      %2763 = vmatprep.mubr.bf16.mxu0 0
      %2764 = vmatmul.mubr.bf16.gmra.mxu0 %v2471
      %v2765 = vpop.f32.mrf.mxu0
      %v2766 = vadd.f32 %v2217, %v2765
      %v2767 = vpop.f32.mrf.mxu0
      %v2768 = vpop.f32.mrf.mxu0
      %v2769 = vadd.f32 %v2220, %v2768
      %v2770 = vpop.f32.mrf.mxu0
      %2771 = vmatprep.mubr.bf16.mxu0 0
      %2772 = vmatmul.mubr.bf16.gmra.mxu0 %v2480
      %v2773 = vpop.f32.mrf.mxu0
      %v2774 = vadd.f32 %v2225, %v2773
      %v2775 = vpop.f32.mrf.mxu0
      %v2776 = vpop.f32.mrf.mxu0
      %v2777 = vadd.f32 %v2228, %v2776
      %v2778 = vpop.f32.mrf.mxu0
      %2779 = vmatprep.mubr.bf16.mxu0 0
      %2780 = vmatmul.mubr.bf16.gmra.mxu0 %v2489
      %v2781 = vpop.f32.mrf.mxu0
      %v2782 = vadd.f32 %v2233, %v2781
      %v2783 = vpop.f32.mrf.mxu0
      %v2784 = vpop.f32.mrf.mxu0
      %v2785 = vadd.f32 %v2236, %v2784
      %v2786 = vpop.f32.mrf.mxu0
      %2787 = vmatprep.mubr.bf16.mxu0 0
      %2788 = vmatmul.mubr.bf16.gmra.mxu0 %v2498
      %v2789 = vpop.f32.mrf.mxu0
      %v2790 = vadd.f32 %v2241, %v2789
      %v2791 = vpop.f32.mrf.mxu0
      %v2792 = vpop.f32.mrf.mxu0
      %v2793 = vadd.f32 %v2244, %v2792
      %v2794 = vpop.f32.mrf.mxu0
      %2795 = vdwg.mxu0
      %v2796 = vld [vmem:[#allocation2 + $0x4] sm:$0xf]
      %v2797 = vld [vmem:[#allocation2 + $0x8] sm:$0xf]
      %v2798 = vld [vmem:[#allocation2 + $0xc] sm:$0xf]
      %v2799 = vld [vmem:[#allocation2 + $0x10] sm:$0xf]
      %v2800 = vld [vmem:[#allocation2 + $0x14] sm:$0xf]
      %v2801 = vld [vmem:[#allocation2 + $0x18] sm:$0xf]
      %v2802 = vld [vmem:[#allocation2 + $0x1c] sm:$0xf]
      %v2803 = vld [vmem:[#allocation2 + $0x20] sm:$0xf]
      %v2804 = vld [vmem:[#allocation2 + $0x24] sm:$0xf]
      %v2805 = vld [vmem:[#allocation2 + $0x28] sm:$0xf]
      %v2806 = vld [vmem:[#allocation2 + $0x2c] sm:$0xf]
      %v2807 = vld [vmem:[#allocation2 + $0x30] sm:$0xf]
      %v2808 = vld [vmem:[#allocation2 + $0x34] sm:$0xf]
      %v2809 = vld [vmem:[#allocation2 + $0x38] sm:$0xf]
      %v2810 = vld [vmem:[#allocation2 + $0x3c] sm:$0xf]
      %v2811 = vld [vmem:[#allocation2 + $0x40] sm:$0xf]
      %v2812 = vld [vmem:[#allocation2 + $0x44] sm:$0xf]
      %v2813 = vld [vmem:[#allocation2 + $0x48] sm:$0xf]
      %v2814 = vld [vmem:[#allocation2 + $0x4c] sm:$0xf]
      %v2815 = vld [vmem:[#allocation2 + $0x50] sm:$0xf]
      %v2816 = vld [vmem:[#allocation2 + $0x54] sm:$0xf]
      %v2817 = vld [vmem:[#allocation2 + $0x58] sm:$0xf]
      %v2818 = vld [vmem:[#allocation2 + $0x5c] sm:$0xf]
      %v2819 = vld [vmem:[#allocation2 + $0x60] sm:$0xf]
      %v2820 = vld [vmem:[#allocation2 + $0x64] sm:$0xf]
      %v2821 = vld [vmem:[#allocation2 + $0x68] sm:$0xf]
      %v2822 = vld [vmem:[#allocation2 + $0x6c] sm:$0xf]
      %v2823 = vld [vmem:[#allocation2 + $0x70] sm:$0xf]
      %v2824 = vld [vmem:[#allocation2 + $0x74] sm:$0xf]
      %v2825 = vld [vmem:[#allocation2 + $0x78] sm:$0xf]
      %v2826 = vld [vmem:[#allocation2 + $0x7c] sm:$0xf]
      %v2827 = vld [vmem:[#allocation2 + $0x80] sm:$0xf]
      %v2828 = vld [vmem:[#allocation2 + $0x84] sm:$0xf]
      %v2829 = vld [vmem:[#allocation2 + $0x88] sm:$0xf]
      %v2830 = vld [vmem:[#allocation2 + $0x8c] sm:$0xf]
      %v2831 = vld [vmem:[#allocation2 + $0x90] sm:$0xf]
      %v2832 = vld [vmem:[#allocation2 + $0x94] sm:$0xf]
      %v2833 = vld [vmem:[#allocation2 + $0x98] sm:$0xf]
      %v2834 = vld [vmem:[#allocation2 + $0x9c] sm:$0xf]
      %v2835 = vld [vmem:[#allocation2 + $0xa0] sm:$0xf]
      %v2836 = vld [vmem:[#allocation2 + $0xa4] sm:$0xf]
      %v2837 = vld [vmem:[#allocation2 + $0xa8] sm:$0xf]
      %v2838 = vld [vmem:[#allocation2 + $0xac] sm:$0xf]
      %v2839 = vld [vmem:[#allocation2 + $0xb0] sm:$0xf]
      %v2840 = vld [vmem:[#allocation2 + $0xb4] sm:$0xf]
      %v2841 = vld [vmem:[#allocation2 + $0xb8] sm:$0xf]
      %v2842 = vld [vmem:[#allocation2 + $0xbc] sm:$0xf]
      %v2843 = vld [vmem:[#allocation2 + $0xc0] sm:$0xf]
      %v2844 = vld [vmem:[#allocation2 + $0xc4] sm:$0x1]
      %s2845 = scalar_lea.vmem %s3, 128
      %v2846 = vld [vmem:[%s2845] sm:$0xf]
      %v2847 = vld [vmem:[%s2845 + $0x4] sm:$0xf]
      %v2848 = vld [vmem:[%s2845 + $0x8] sm:$0xf]
      %v2849 = vld [vmem:[%s2845 + $0xc] sm:$0xf]
      %v2850 = vld [vmem:[%s2845 + $0x10] sm:$0xf]
      %v2851 = vld [vmem:[%s2845 + $0x14] sm:$0xf]
      %v2852 = vld [vmem:[%s2845 + $0x18] sm:$0xf]
      %v2853 = vld [vmem:[%s2845 + $0x1c] sm:$0xf]
      %v2854 = vld [vmem:[%s2845 + $0x20] sm:$0xf]
      %v2855 = vld [vmem:[%s2845 + $0x24] sm:$0xf]
      %v2856 = vld [vmem:[%s2845 + $0x28] sm:$0xf]
      %v2857 = vld [vmem:[%s2845 + $0x2c] sm:$0xf]
      %v2858 = vld [vmem:[%s2845 + $0x30] sm:$0xf]
      %v2859 = vld [vmem:[%s2845 + $0x34] sm:$0xf]
      %v2860 = vld [vmem:[%s2845 + $0x38] sm:$0xf]
      %v2861 = vld [vmem:[%s2845 + $0x3c] sm:$0xf]
      %v2911 = vunpack.c.l.b16 %v2796
      %v2912 = vunpack.c.l.b16 %v2797
      %v2913 = vunpack.c.l.b16 %v2798
      %v2914 = vunpack.c.l.b16 %v2799
      %v2915 = vunpack.c.l.b16 %v2800
      %v2916 = vunpack.c.l.b16 %v2801
      %v2917 = vunpack.c.l.b16 %v2802
      %v2918 = vunpack.c.l.b16 %v2803
      %v2919 = vunpack.c.l.b16 %v2804
      %v2920 = vunpack.c.l.b16 %v2805
      %v2921 = vunpack.c.l.b16 %v2806
      %v2922 = vunpack.c.l.b16 %v2807
      %v2923 = vunpack.c.l.b16 %v2808
      %v2924 = vunpack.c.l.b16 %v2809
      %v2925 = vunpack.c.l.b16 %v2810
      %v2926 = vunpack.c.l.b16 %v2811
      %v2927 = vunpack.c.l.b16 %v2812
      %v2928 = vunpack.c.l.b16 %v2813
      %v2929 = vunpack.c.l.b16 %v2814
      %v2930 = vunpack.c.l.b16 %v2815
      %v2931 = vunpack.c.l.b16 %v2816
      %v2932 = vunpack.c.l.b16 %v2817
      %v2933 = vunpack.c.l.b16 %v2818
      %v2934 = vunpack.c.l.b16 %v2819
      %v2935 = vunpack.c.l.b16 %v2820
      %v2936 = vunpack.c.l.b16 %v2821
      %v2937 = vunpack.c.l.b16 %v2822
      %v2938 = vunpack.c.l.b16 %v2823
      %v2939 = vunpack.c.l.b16 %v2824
      %v2940 = vunpack.c.l.b16 %v2825
      %v2941 = vunpack.c.l.b16 %v2826
      %v2942 = vunpack.c.l.b16 %v2827
      %v2943 = vunpack.c.l.b16 %v2828
      %v2944 = vunpack.c.l.b16 %v2829
      %v2945 = vunpack.c.l.b16 %v2830
      %v2946 = vunpack.c.l.b16 %v2831
      %v2947 = vunpack.c.l.b16 %v2832
      %v2948 = vunpack.c.l.b16 %v2833
      %v2949 = vunpack.c.l.b16 %v2834
      %v2950 = vunpack.c.l.b16 %v2835
      %v2951 = vunpack.c.l.b16 %v2836
      %v2952 = vunpack.c.l.b16 %v2837
      %v2953 = vunpack.c.l.b16 %v2838
      %v2954 = vunpack.c.l.b16 %v2839
      %v2955 = vunpack.c.l.b16 %v2840
      %v2956 = vunpack.c.l.b16 %v2841
      %v2957 = vunpack.c.l.b16 %v2842
      %v2958 = vunpack.c.l.b16 %v2843
      %v2959 = vunpack.c.l.b16 %v2844
      %v2960 = vpack.c.b16 %v2912, %v2911
      %v2961 = vpack.c.b16 %v2914, %v2913
      %v2962 = vpack.c.b16 %v2916, %v2915
      %v2963 = vpack.c.b16 %v2918, %v2917
      %v2964 = vpack.c.b16 %v2920, %v2919
      %v2965 = vpack.c.b16 %v2922, %v2921
      %v2966 = vpack.c.b16 %v2924, %v2923
      %v2967 = vpack.c.b16 %v2926, %v2925
      %v2968 = vpack.c.b16 %v2928, %v2927
      %v2969 = vpack.c.b16 %v2930, %v2929
      %v2970 = vpack.c.b16 %v2932, %v2931
      %v2971 = vpack.c.b16 %v2934, %v2933
      %v2972 = vpack.c.b16 %v2936, %v2935
      %v2973 = vpack.c.b16 %v2938, %v2937
      %v2974 = vpack.c.b16 %v2940, %v2939
      %v2975 = vpack.c.b16 %v2942, %v2941
      %v2976 = vpack.c.b16 %v2944, %v2943
      %v2977 = vpack.c.b16 %v2946, %v2945
      %v2978 = vpack.c.b16 %v2948, %v2947
      %v2979 = vpack.c.b16 %v2950, %v2949
      %v2980 = vpack.c.b16 %v2952, %v2951
      %v2981 = vpack.c.b16 %v2954, %v2953
      %v2982 = vpack.c.b16 %v2956, %v2955
      %v2983 = vpack.c.b16 %v2958, %v2957
      %v2984 = vpack.c.b16 %v2959, %v2959
      %vm2985 = vsmask.f32 7424
      %v2987 = vshrl.u32 %v2960, 16
      %v2989 = vshll.u32 %v2960, 16
      %v2991 = vrot.slane %v2989, 1
      %v2992 = vor.u32 %v2987, %v2991
      %v2994 = vshll.u32 %v2961, 16
      %v2996 = vrot.slane %v2994, 1
      %v2997 = vsel %vm2985, %v2992, %v2996
      %v2998 = vshrl.u32 %v2961, 16
      %v3000 = vor.u32 %v2998, %v2996
      %v3002 = vshll.u32 %v2962, 16
      %v3004 = vrot.slane %v3002, 1
      %v3005 = vsel %vm2985, %v3000, %v3004
      %v3006 = vshrl.u32 %v2962, 16
      %v3008 = vor.u32 %v3006, %v3004
      %v3010 = vshll.u32 %v2963, 16
      %v3012 = vrot.slane %v3010, 1
      %v3013 = vsel %vm2985, %v3008, %v3012
      %v3014 = vshrl.u32 %v2963, 16
      %v3016 = vor.u32 %v3014, %v3012
      %v3018 = vshll.u32 %v2964, 16
      %v3020 = vrot.slane %v3018, 1
      %v3021 = vsel %vm2985, %v3016, %v3020
      %v3022 = vshrl.u32 %v2964, 16
      %v3024 = vor.u32 %v3022, %v3020
      %v3026 = vshll.u32 %v2965, 16
      %v3028 = vrot.slane %v3026, 1
      %v3029 = vsel %vm2985, %v3024, %v3028
      %v3030 = vshrl.u32 %v2965, 16
      %v3032 = vor.u32 %v3030, %v3028
      %v3034 = vshll.u32 %v2966, 16
      %v3036 = vrot.slane %v3034, 1
      %v3037 = vsel %vm2985, %v3032, %v3036
      %v3038 = vshrl.u32 %v2966, 16
      %v3040 = vor.u32 %v3038, %v3036
      %v3042 = vshll.u32 %v2967, 16
      %v3044 = vrot.slane %v3042, 1
      %v3045 = vsel %vm2985, %v3040, %v3044
      %v3046 = vshrl.u32 %v2967, 16
      %v3048 = vor.u32 %v3046, %v3044
      %v3050 = vshll.u32 %v2968, 16
      %v3052 = vrot.slane %v3050, 1
      %v3053 = vsel %vm2985, %v3048, %v3052
      %v3054 = vshrl.u32 %v2968, 16
      %v3056 = vor.u32 %v3054, %v3052
      %v3058 = vshll.u32 %v2969, 16
      %v3060 = vrot.slane %v3058, 1
      %v3061 = vsel %vm2985, %v3056, %v3060
      %v3062 = vshrl.u32 %v2969, 16
      %v3064 = vor.u32 %v3062, %v3060
      %v3066 = vshll.u32 %v2970, 16
      %v3068 = vrot.slane %v3066, 1
      %v3069 = vsel %vm2985, %v3064, %v3068
      %v3070 = vshrl.u32 %v2970, 16
      %v3072 = vor.u32 %v3070, %v3068
      %v3074 = vshll.u32 %v2971, 16
      %v3076 = vrot.slane %v3074, 1
      %v3077 = vsel %vm2985, %v3072, %v3076
      %v3078 = vshrl.u32 %v2971, 16
      %v3080 = vor.u32 %v3078, %v3076
      %v3082 = vshll.u32 %v2972, 16
      %v3084 = vrot.slane %v3082, 1
      %v3085 = vsel %vm2985, %v3080, %v3084
      %v3086 = vshrl.u32 %v2972, 16
      %v3088 = vor.u32 %v3086, %v3084
      %v3090 = vshll.u32 %v2973, 16
      %v3092 = vrot.slane %v3090, 1
      %v3093 = vsel %vm2985, %v3088, %v3092
      %v3094 = vshrl.u32 %v2973, 16
      %v3096 = vor.u32 %v3094, %v3092
      %v3098 = vshll.u32 %v2974, 16
      %v3100 = vrot.slane %v3098, 1
      %v3101 = vsel %vm2985, %v3096, %v3100
      %v3102 = vshrl.u32 %v2974, 16
      %v3104 = vor.u32 %v3102, %v3100
      %v3106 = vshll.u32 %v2975, 16
      %v3108 = vrot.slane %v3106, 1
      %v3109 = vsel %vm2985, %v3104, %v3108
      %v3110 = vshrl.u32 %v2975, 16
      %v3112 = vor.u32 %v3110, %v3108
      %v3114 = vshll.u32 %v2976, 16
      %v3116 = vrot.slane %v3114, 1
      %v3117 = vsel %vm2985, %v3112, %v3116
      %v3118 = vshrl.u32 %v2976, 16
      %v3120 = vor.u32 %v3118, %v3116
      %v3122 = vshll.u32 %v2977, 16
      %v3124 = vrot.slane %v3122, 1
      %v3125 = vsel %vm2985, %v3120, %v3124
      %v3126 = vshrl.u32 %v2977, 16
      %v3128 = vor.u32 %v3126, %v3124
      %v3130 = vshll.u32 %v2978, 16
      %v3132 = vrot.slane %v3130, 1
      %v3133 = vsel %vm2985, %v3128, %v3132
      %v3134 = vshrl.u32 %v2978, 16
      %v3136 = vor.u32 %v3134, %v3132
      %v3138 = vshll.u32 %v2979, 16
      %v3140 = vrot.slane %v3138, 1
      %v3141 = vsel %vm2985, %v3136, %v3140
      %v3142 = vshrl.u32 %v2979, 16
      %v3144 = vor.u32 %v3142, %v3140
      %v3146 = vshll.u32 %v2980, 16
      %v3148 = vrot.slane %v3146, 1
      %v3149 = vsel %vm2985, %v3144, %v3148
      %v3150 = vshrl.u32 %v2980, 16
      %v3152 = vor.u32 %v3150, %v3148
      %v3154 = vshll.u32 %v2981, 16
      %v3156 = vrot.slane %v3154, 1
      %v3157 = vsel %vm2985, %v3152, %v3156
      %v3158 = vshrl.u32 %v2981, 16
      %v3160 = vor.u32 %v3158, %v3156
      %v3162 = vshll.u32 %v2982, 16
      %v3164 = vrot.slane %v3162, 1
      %v3165 = vsel %vm2985, %v3160, %v3164
      %v3166 = vshrl.u32 %v2982, 16
      %v3168 = vor.u32 %v3166, %v3164
      %v3170 = vshll.u32 %v2983, 16
      %v3172 = vrot.slane %v3170, 1
      %v3173 = vsel %vm2985, %v3168, %v3172
      %v3174 = vshrl.u32 %v2983, 16
      %v3176 = vor.u32 %v3174, %v3172
      %v3178 = vshll.u32 %v2984, 16
      %v3180 = vrot.slane %v3178, 1
      %v3181 = vsel %vm2985, %v3176, %v3180
      %v3222 = vunpack.c.l.b16 %v2846
      %v3223 = vunpack.c.l.b16 %v2847
      %v3224 = vunpack.c.l.b16 %v2848
      %v3225 = vunpack.c.l.b16 %v2849
      %v3226 = vunpack.c.l.b16 %v2850
      %v3227 = vunpack.c.l.b16 %v2851
      %v3228 = vunpack.c.l.b16 %v2852
      %v3229 = vunpack.c.l.b16 %v2853
      %v3230 = vunpack.c.l.b16 %v2854
      %v3231 = vunpack.c.l.b16 %v2855
      %v3232 = vunpack.c.l.b16 %v2856
      %v3233 = vunpack.c.l.b16 %v2857
      %v3234 = vunpack.c.l.b16 %v2858
      %v3235 = vunpack.c.l.b16 %v2859
      %v3236 = vunpack.c.l.b16 %v2860
      %v3237 = vunpack.c.l.b16 %v2861
      %v3238 = vpack.c.b16 %v3223, %v3222
      %v3239 = vpack.c.b16 %v3225, %v3224
      %v3240 = vpack.c.b16 %v3227, %v3226
      %v3241 = vpack.c.b16 %v3229, %v3228
      %v3242 = vpack.c.b16 %v3231, %v3230
      %v3243 = vpack.c.b16 %v3233, %v3232
      %v3244 = vpack.c.b16 %v3235, %v3234
      %v3245 = vpack.c.b16 %v3237, %v3236
      %3254 = vmatprep.subr.bf16.mxu0 0
      %3255 = vmatpush1.bf16.msra.mxu0 %v3245
      %3256 = vmatprep.subr.bf16.mxu0 0
      %3257 = vmatpush1.bf16.msra.mxu0 %v3244
      %3258 = vmatprep.subr.bf16.mxu0 0
      %3259 = vmatpush1.bf16.msra.mxu0 %v3243
      %3260 = vmatprep.subr.bf16.mxu0 0
      %3261 = vmatpush1.bf16.msra.mxu0 %v3242
      %3262 = vmatprep.subr.bf16.mxu0 0
      %3263 = vmatpush1.bf16.msra.mxu0 %v3241
      %3264 = vmatprep.subr.bf16.mxu0 0
      %3265 = vmatpush1.bf16.msra.mxu0 %v3240
      %3266 = vmatprep.subr.bf16.mxu0 0
      %3267 = vmatpush1.bf16.msra.mxu0 %v3239
      %3268 = vmatprep.subr.bf16.mxu0 0
      %3269 = vmatpush1.bf16.msra.mxu0 %v3238
      %3270 = vmatprep.subr.bf16.mxu0 0
      %3271 = vmatpush2.bf16.msra.mxu0 0
      %3272 = vmatprep.subr.bf16.mxu0 0
      %3273 = vmatpush2.bf16.msra.mxu0 0
      %3274 = vmatprep.subr.bf16.mxu0 0
      %3275 = vmatpush2.bf16.msra.mxu0 0
      %3276 = vmatprep.subr.bf16.mxu0 0
      %3277 = vmatpush2.bf16.msra.mxu0 0
      %3278 = vmatprep.subr.bf16.mxu0 0
      %3279 = vmatpush2.bf16.msra.mxu0 0
      %3280 = vmatprep.subr.bf16.mxu0 0
      %3281 = vmatpush2.bf16.msra.mxu0 0
      %3282 = vmatprep.subr.bf16.mxu0 0
      %3283 = vmatpush2.bf16.msra.mxu0 0
      %3284 = vmatprep.subr.bf16.mxu0 0
      %3285 = vmatpush2.bf16.msra.mxu0 0
      %3286 = vmatprep.mubr.bf16.mxu0 0
      %3287 = vmatmul.mubr.bf16.gmra.mxu0 %v2997
      %v3288 = vpop.f32.mrf.mxu0
      %v3289 = vadd.f32 0.0, %v3288
      %v3290 = vpop.f32.mrf.mxu0
      %v3291 = vpop.f32.mrf.mxu0
      %v3292 = vadd.f32 0.0, %v3291
      %v3293 = vpop.f32.mrf.mxu0
      %3294 = vmatprep.mubr.bf16.mxu0 0
      %3295 = vmatmul.mubr.bf16.gmra.mxu0 %v3005
      %v3296 = vpop.f32.mrf.mxu0
      %v3297 = vadd.f32 0.0, %v3296
      %v3298 = vpop.f32.mrf.mxu0
      %v3299 = vpop.f32.mrf.mxu0
      %v3300 = vadd.f32 0.0, %v3299
      %v3301 = vpop.f32.mrf.mxu0
      %3302 = vmatprep.mubr.bf16.mxu0 0
      %3303 = vmatmul.mubr.bf16.gmra.mxu0 %v3013
      %v3304 = vpop.f32.mrf.mxu0
      %v3305 = vadd.f32 0.0, %v3304
      %v3306 = vpop.f32.mrf.mxu0
      %v3307 = vpop.f32.mrf.mxu0
      %v3308 = vadd.f32 0.0, %v3307
      %v3309 = vpop.f32.mrf.mxu0
      %3310 = vmatprep.mubr.bf16.mxu0 0
      %3311 = vmatmul.mubr.bf16.gmra.mxu0 %v3021
      %v3312 = vpop.f32.mrf.mxu0
      %v3313 = vadd.f32 0.0, %v3312
      %v3314 = vpop.f32.mrf.mxu0
      %v3315 = vpop.f32.mrf.mxu0
      %v3316 = vadd.f32 0.0, %v3315
      %v3317 = vpop.f32.mrf.mxu0
      %3318 = vmatprep.mubr.bf16.mxu0 0
      %3319 = vmatmul.mubr.bf16.gmra.mxu0 %v3029
      %v3320 = vpop.f32.mrf.mxu0
      %v3321 = vadd.f32 0.0, %v3320
      %v3322 = vpop.f32.mrf.mxu0
      %v3323 = vpop.f32.mrf.mxu0
      %v3324 = vadd.f32 0.0, %v3323
      %v3325 = vpop.f32.mrf.mxu0
      %3326 = vmatprep.mubr.bf16.mxu0 0
      %3327 = vmatmul.mubr.bf16.gmra.mxu0 %v3037
      %v3328 = vpop.f32.mrf.mxu0
      %v3329 = vadd.f32 0.0, %v3328
      %v3330 = vpop.f32.mrf.mxu0
      %v3331 = vpop.f32.mrf.mxu0
      %v3332 = vadd.f32 0.0, %v3331
      %v3333 = vpop.f32.mrf.mxu0
      %3334 = vmatprep.mubr.bf16.mxu0 0
      %3335 = vmatmul.mubr.bf16.gmra.mxu0 %v3045
      %v3336 = vpop.f32.mrf.mxu0
      %v3337 = vadd.f32 0.0, %v3336
      %v3338 = vpop.f32.mrf.mxu0
      %v3339 = vpop.f32.mrf.mxu0
      %v3340 = vadd.f32 0.0, %v3339
      %v3341 = vpop.f32.mrf.mxu0
      %3342 = vmatprep.mubr.bf16.mxu0 0
      %3343 = vmatmul.mubr.bf16.gmra.mxu0 %v3053
      %v3344 = vpop.f32.mrf.mxu0
      %v3345 = vadd.f32 0.0, %v3344
      %v3346 = vpop.f32.mrf.mxu0
      %v3347 = vpop.f32.mrf.mxu0
      %v3348 = vadd.f32 0.0, %v3347
      %v3349 = vpop.f32.mrf.mxu0
      %3350 = vmatprep.mubr.bf16.mxu0 0
      %3351 = vmatmul.mubr.bf16.gmra.mxu0 %v3061
      %v3352 = vpop.f32.mrf.mxu0
      %v3353 = vadd.f32 0.0, %v3352
      %v3354 = vpop.f32.mrf.mxu0
      %v3355 = vpop.f32.mrf.mxu0
      %v3356 = vadd.f32 0.0, %v3355
      %v3357 = vpop.f32.mrf.mxu0
      %3358 = vmatprep.mubr.bf16.mxu0 0
      %3359 = vmatmul.mubr.bf16.gmra.mxu0 %v3069
      %v3360 = vpop.f32.mrf.mxu0
      %v3361 = vadd.f32 0.0, %v3360
      %v3362 = vpop.f32.mrf.mxu0
      %v3363 = vpop.f32.mrf.mxu0
      %v3364 = vadd.f32 0.0, %v3363
      %v3365 = vpop.f32.mrf.mxu0
      %3366 = vmatprep.mubr.bf16.mxu0 0
      %3367 = vmatmul.mubr.bf16.gmra.mxu0 %v3077
      %v3368 = vpop.f32.mrf.mxu0
      %v3369 = vadd.f32 0.0, %v3368
      %v3370 = vpop.f32.mrf.mxu0
      %v3371 = vpop.f32.mrf.mxu0
      %v3372 = vadd.f32 0.0, %v3371
      %v3373 = vpop.f32.mrf.mxu0
      %3374 = vmatprep.mubr.bf16.mxu0 0
      %3375 = vmatmul.mubr.bf16.gmra.mxu0 %v3085
      %v3376 = vpop.f32.mrf.mxu0
      %v3377 = vadd.f32 0.0, %v3376
      %v3378 = vpop.f32.mrf.mxu0
      %v3379 = vpop.f32.mrf.mxu0
      %v3380 = vadd.f32 0.0, %v3379
      %v3381 = vpop.f32.mrf.mxu0
      %3382 = vmatprep.mubr.bf16.mxu0 0
      %3383 = vmatmul.mubr.bf16.gmra.mxu0 %v3093
      %v3384 = vpop.f32.mrf.mxu0
      %v3385 = vadd.f32 0.0, %v3384
      %v3386 = vpop.f32.mrf.mxu0
      %v3387 = vpop.f32.mrf.mxu0
      %v3388 = vadd.f32 0.0, %v3387
      %v3389 = vpop.f32.mrf.mxu0
      %3390 = vmatprep.mubr.bf16.mxu0 0
      %3391 = vmatmul.mubr.bf16.gmra.mxu0 %v3101
      %v3392 = vpop.f32.mrf.mxu0
      %v3393 = vadd.f32 0.0, %v3392
      %v3394 = vpop.f32.mrf.mxu0
      %v3395 = vpop.f32.mrf.mxu0
      %v3396 = vadd.f32 0.0, %v3395
      %v3397 = vpop.f32.mrf.mxu0
      %3398 = vmatprep.mubr.bf16.mxu0 0
      %3399 = vmatmul.mubr.bf16.gmra.mxu0 %v3109
      %v3400 = vpop.f32.mrf.mxu0
      %v3401 = vadd.f32 0.0, %v3400
      %v3402 = vpop.f32.mrf.mxu0
      %v3403 = vpop.f32.mrf.mxu0
      %v3404 = vadd.f32 0.0, %v3403
      %v3405 = vpop.f32.mrf.mxu0
      %3406 = vmatprep.mubr.bf16.mxu0 0
      %3407 = vmatmul.mubr.bf16.gmra.mxu0 %v3117
      %v3408 = vpop.f32.mrf.mxu0
      %v3409 = vadd.f32 0.0, %v3408
      %v3410 = vpop.f32.mrf.mxu0
      %v3411 = vpop.f32.mrf.mxu0
      %v3412 = vadd.f32 0.0, %v3411
      %v3413 = vpop.f32.mrf.mxu0
      %3414 = vmatprep.mubr.bf16.mxu0 0
      %3415 = vmatmul.mubr.bf16.gmra.mxu0 %v3125
      %v3416 = vpop.f32.mrf.mxu0
      %v3417 = vadd.f32 0.0, %v3416
      %v3418 = vpop.f32.mrf.mxu0
      %v3419 = vpop.f32.mrf.mxu0
      %v3420 = vadd.f32 0.0, %v3419
      %v3421 = vpop.f32.mrf.mxu0
      %3422 = vmatprep.mubr.bf16.mxu0 0
      %3423 = vmatmul.mubr.bf16.gmra.mxu0 %v3133
      %v3424 = vpop.f32.mrf.mxu0
      %v3425 = vadd.f32 0.0, %v3424
      %v3426 = vpop.f32.mrf.mxu0
      %v3427 = vpop.f32.mrf.mxu0
      %v3428 = vadd.f32 0.0, %v3427
      %v3429 = vpop.f32.mrf.mxu0
      %3430 = vmatprep.mubr.bf16.mxu0 0
      %3431 = vmatmul.mubr.bf16.gmra.mxu0 %v3141
      %v3432 = vpop.f32.mrf.mxu0
      %v3433 = vadd.f32 0.0, %v3432
      %v3434 = vpop.f32.mrf.mxu0
      %v3435 = vpop.f32.mrf.mxu0
      %v3436 = vadd.f32 0.0, %v3435
      %v3437 = vpop.f32.mrf.mxu0
      %3438 = vmatprep.mubr.bf16.mxu0 0
      %3439 = vmatmul.mubr.bf16.gmra.mxu0 %v3149
      %v3440 = vpop.f32.mrf.mxu0
      %v3441 = vadd.f32 0.0, %v3440
      %v3442 = vpop.f32.mrf.mxu0
      %v3443 = vpop.f32.mrf.mxu0
      %v3444 = vadd.f32 0.0, %v3443
      %v3445 = vpop.f32.mrf.mxu0
      %3446 = vmatprep.mubr.bf16.mxu0 0
      %3447 = vmatmul.mubr.bf16.gmra.mxu0 %v3157
      %v3448 = vpop.f32.mrf.mxu0
      %v3449 = vadd.f32 0.0, %v3448
      %v3450 = vpop.f32.mrf.mxu0
      %v3451 = vpop.f32.mrf.mxu0
      %v3452 = vadd.f32 0.0, %v3451
      %v3453 = vpop.f32.mrf.mxu0
      %3454 = vmatprep.mubr.bf16.mxu0 0
      %3455 = vmatmul.mubr.bf16.gmra.mxu0 %v3165
      %v3456 = vpop.f32.mrf.mxu0
      %v3457 = vadd.f32 0.0, %v3456
      %v3458 = vpop.f32.mrf.mxu0
      %v3459 = vpop.f32.mrf.mxu0
      %v3460 = vadd.f32 0.0, %v3459
      %v3461 = vpop.f32.mrf.mxu0
      %3462 = vmatprep.mubr.bf16.mxu0 0
      %3463 = vmatmul.mubr.bf16.gmra.mxu0 %v3173
      %v3464 = vpop.f32.mrf.mxu0
      %v3465 = vadd.f32 0.0, %v3464
      %v3466 = vpop.f32.mrf.mxu0
      %v3467 = vpop.f32.mrf.mxu0
      %v3468 = vadd.f32 0.0, %v3467
      %v3469 = vpop.f32.mrf.mxu0
      %3470 = vmatprep.mubr.bf16.mxu0 0
      %3471 = vmatmul.mubr.bf16.gmra.mxu0 %v3181
      %v3472 = vpop.f32.mrf.mxu0
      %v3473 = vadd.f32 0.0, %v3472
      %v3474 = vpop.f32.mrf.mxu0
      %v3475 = vpop.f32.mrf.mxu0
      %v3476 = vadd.f32 0.0, %v3475
      %v3477 = vpop.f32.mrf.mxu0
      %3478 = vdwg.mxu0
      %v3479 = vadd.f32 %v2606, %v3289
      %v3480 = vadd.f32 %v2609, %v3292
      %v3481 = vadd.f32 %v2614, %v3297
      %v3482 = vadd.f32 %v2617, %v3300
      %v3483 = vadd.f32 %v2622, %v3305
      %v3484 = vadd.f32 %v2625, %v3308
      %v3485 = vadd.f32 %v2630, %v3313
      %v3486 = vadd.f32 %v2633, %v3316
      %v3487 = vadd.f32 %v2638, %v3321
      %v3488 = vadd.f32 %v2641, %v3324
      %v3489 = vadd.f32 %v2646, %v3329
      %v3490 = vadd.f32 %v2649, %v3332
      %v3491 = vadd.f32 %v2654, %v3337
      %v3492 = vadd.f32 %v2657, %v3340
      %v3493 = vadd.f32 %v2662, %v3345
      %v3494 = vadd.f32 %v2665, %v3348
      %v3495 = vadd.f32 %v2670, %v3353
      %v3496 = vadd.f32 %v2673, %v3356
      %v3497 = vadd.f32 %v2678, %v3361
      %v3498 = vadd.f32 %v2681, %v3364
      %v3499 = vadd.f32 %v2686, %v3369
      %v3500 = vadd.f32 %v2689, %v3372
      %v3501 = vadd.f32 %v2694, %v3377
      %v3502 = vadd.f32 %v2697, %v3380
      %v3503 = vadd.f32 %v2702, %v3385
      %v3504 = vadd.f32 %v2705, %v3388
      %v3505 = vadd.f32 %v2710, %v3393
      %v3506 = vadd.f32 %v2713, %v3396
      %v3507 = vadd.f32 %v2718, %v3401
      %v3508 = vadd.f32 %v2721, %v3404
      %v3509 = vadd.f32 %v2726, %v3409
      %v3510 = vadd.f32 %v2729, %v3412
      %v3511 = vadd.f32 %v2734, %v3417
      %v3512 = vadd.f32 %v2737, %v3420
      %v3513 = vadd.f32 %v2742, %v3425
      %v3514 = vadd.f32 %v2745, %v3428
      %v3515 = vadd.f32 %v2750, %v3433
      %v3516 = vadd.f32 %v2753, %v3436
      %v3517 = vadd.f32 %v2758, %v3441
      %v3518 = vadd.f32 %v2761, %v3444
      %v3519 = vadd.f32 %v2766, %v3449
      %v3520 = vadd.f32 %v2769, %v3452
      %v3521 = vadd.f32 %v2774, %v3457
      %v3522 = vadd.f32 %v2777, %v3460
      %v3523 = vadd.f32 %v2782, %v3465
      %v3524 = vadd.f32 %v2785, %v3468
      %v3525 = vadd.f32 %v2790, %v3473
      %v3526 = vadd.f32 %v2793, %v3476
      %v3527 = vld [vmem:[#allocation2 + $0xc] sm:$0x8]
      %v3528 = vld [vmem:[#allocation2 + $0x10] sm:$0xf]
      %v3529 = vld [vmem:[#allocation2 + $0x14] sm:$0xf]
      %v3530 = vld [vmem:[#allocation2 + $0x18] sm:$0xf]
      %v3531 = vld [vmem:[#allocation2 + $0x1c] sm:$0xf]
      %v3532 = vld [vmem:[#allocation2 + $0x20] sm:$0xf]
      %v3533 = vld [vmem:[#allocation2 + $0x24] sm:$0xf]
      %v3534 = vld [vmem:[#allocation2 + $0x28] sm:$0xf]
      %v3535 = vld [vmem:[#allocation2 + $0x2c] sm:$0xf]
      %v3536 = vld [vmem:[#allocation2 + $0x30] sm:$0xf]
      %v3537 = vld [vmem:[#allocation2 + $0x34] sm:$0xf]
      %v3538 = vld [vmem:[#allocation2 + $0x38] sm:$0xf]
      %v3539 = vld [vmem:[#allocation2 + $0x3c] sm:$0xf]
      %v3540 = vld [vmem:[#allocation2 + $0x40] sm:$0xf]
      %v3541 = vld [vmem:[#allocation2 + $0x44] sm:$0xf]
      %v3542 = vld [vmem:[#allocation2 + $0x48] sm:$0xf]
      %v3543 = vld [vmem:[#allocation2 + $0x4c] sm:$0xf]
      %v3544 = vld [vmem:[#allocation2 + $0x50] sm:$0xf]
      %v3545 = vld [vmem:[#allocation2 + $0x54] sm:$0xf]
      %v3546 = vld [vmem:[#allocation2 + $0x58] sm:$0xf]
      %v3547 = vld [vmem:[#allocation2 + $0x5c] sm:$0xf]
      %v3548 = vld [vmem:[#allocation2 + $0x60] sm:$0xf]
      %v3549 = vld [vmem:[#allocation2 + $0x64] sm:$0xf]
      %v3550 = vld [vmem:[#allocation2 + $0x68] sm:$0xf]
      %v3551 = vld [vmem:[#allocation2 + $0x6c] sm:$0xf]
      %v3552 = vld [vmem:[#allocation2 + $0x70] sm:$0xf]
      %v3553 = vld [vmem:[#allocation2 + $0x74] sm:$0xf]
      %v3554 = vld [vmem:[#allocation2 + $0x78] sm:$0xf]
      %v3555 = vld [vmem:[#allocation2 + $0x7c] sm:$0xf]
      %v3556 = vld [vmem:[#allocation2 + $0x80] sm:$0xf]
      %v3557 = vld [vmem:[#allocation2 + $0x84] sm:$0xf]
      %v3558 = vld [vmem:[#allocation2 + $0x88] sm:$0xf]
      %v3559 = vld [vmem:[#allocation2 + $0x8c] sm:$0xf]
      %v3560 = vld [vmem:[#allocation2 + $0x90] sm:$0xf]
      %v3561 = vld [vmem:[#allocation2 + $0x94] sm:$0xf]
      %v3562 = vld [vmem:[#allocation2 + $0x98] sm:$0xf]
      %v3563 = vld [vmem:[#allocation2 + $0x9c] sm:$0xf]
      %v3564 = vld [vmem:[#allocation2 + $0xa0] sm:$0xf]
      %v3565 = vld [vmem:[#allocation2 + $0xa4] sm:$0xf]
      %v3566 = vld [vmem:[#allocation2 + $0xa8] sm:$0xf]
      %v3567 = vld [vmem:[#allocation2 + $0xac] sm:$0xf]
      %v3568 = vld [vmem:[#allocation2 + $0xb0] sm:$0xf]
      %v3569 = vld [vmem:[#allocation2 + $0xb4] sm:$0xf]
      %v3570 = vld [vmem:[#allocation2 + $0xb8] sm:$0xf]
      %v3571 = vld [vmem:[#allocation2 + $0xbc] sm:$0xf]
      %v3572 = vld [vmem:[#allocation2 + $0xc0] sm:$0xf]
      %v3573 = vld [vmem:[#allocation2 + $0xc4] sm:$0xf]
      %v3574 = vld [vmem:[#allocation2 + $0xc8] sm:$0xf]
      %v3575 = vld [vmem:[#allocation2 + $0xcc] sm:$0xf]
      %s3576 = scalar_lea.vmem %s3, 192
      %v3577 = vld [vmem:[%s3576] sm:$0xf]
      %v3578 = vld [vmem:[%s3576 + $0x4] sm:$0xf]
      %v3579 = vld [vmem:[%s3576 + $0x8] sm:$0xf]
      %v3580 = vld [vmem:[%s3576 + $0xc] sm:$0xf]
      %v3581 = vld [vmem:[%s3576 + $0x10] sm:$0xf]
      %v3582 = vld [vmem:[%s3576 + $0x14] sm:$0xf]
      %v3583 = vld [vmem:[%s3576 + $0x18] sm:$0xf]
      %v3584 = vld [vmem:[%s3576 + $0x1c] sm:$0xf]
      %v3585 = vld [vmem:[%s3576 + $0x20] sm:$0xf]
      %v3586 = vld [vmem:[%s3576 + $0x24] sm:$0xf]
      %v3587 = vld [vmem:[%s3576 + $0x28] sm:$0xf]
      %v3588 = vld [vmem:[%s3576 + $0x2c] sm:$0xf]
      %v3589 = vld [vmem:[%s3576 + $0x30] sm:$0xf]
      %v3590 = vld [vmem:[%s3576 + $0x34] sm:$0xf]
      %v3591 = vld [vmem:[%s3576 + $0x38] sm:$0xf]
      %v3592 = vld [vmem:[%s3576 + $0x3c] sm:$0xf]
      %v3642 = vunpack.c.l.b16 %v3527
      %v3643 = vunpack.c.l.b16 %v3528
      %v3644 = vunpack.c.l.b16 %v3529
      %v3645 = vunpack.c.l.b16 %v3530
      %v3646 = vunpack.c.l.b16 %v3531
      %v3647 = vunpack.c.l.b16 %v3532
      %v3648 = vunpack.c.l.b16 %v3533
      %v3649 = vunpack.c.l.b16 %v3534
      %v3650 = vunpack.c.l.b16 %v3535
      %v3651 = vunpack.c.l.b16 %v3536
      %v3652 = vunpack.c.l.b16 %v3537
      %v3653 = vunpack.c.l.b16 %v3538
      %v3654 = vunpack.c.l.b16 %v3539
      %v3655 = vunpack.c.l.b16 %v3540
      %v3656 = vunpack.c.l.b16 %v3541
      %v3657 = vunpack.c.l.b16 %v3542
      %v3658 = vunpack.c.l.b16 %v3543
      %v3659 = vunpack.c.l.b16 %v3544
      %v3660 = vunpack.c.l.b16 %v3545
      %v3661 = vunpack.c.l.b16 %v3546
      %v3662 = vunpack.c.l.b16 %v3547
      %v3663 = vunpack.c.l.b16 %v3548
      %v3664 = vunpack.c.l.b16 %v3549
      %v3665 = vunpack.c.l.b16 %v3550
      %v3666 = vunpack.c.l.b16 %v3551
      %v3667 = vunpack.c.l.b16 %v3552
      %v3668 = vunpack.c.l.b16 %v3553
      %v3669 = vunpack.c.l.b16 %v3554
      %v3670 = vunpack.c.l.b16 %v3555
      %v3671 = vunpack.c.l.b16 %v3556
      %v3672 = vunpack.c.l.b16 %v3557
      %v3673 = vunpack.c.l.b16 %v3558
      %v3674 = vunpack.c.l.b16 %v3559
      %v3675 = vunpack.c.l.b16 %v3560
      %v3676 = vunpack.c.l.b16 %v3561
      %v3677 = vunpack.c.l.b16 %v3562
      %v3678 = vunpack.c.l.b16 %v3563
      %v3679 = vunpack.c.l.b16 %v3564
      %v3680 = vunpack.c.l.b16 %v3565
      %v3681 = vunpack.c.l.b16 %v3566
      %v3682 = vunpack.c.l.b16 %v3567
      %v3683 = vunpack.c.l.b16 %v3568
      %v3684 = vunpack.c.l.b16 %v3569
      %v3685 = vunpack.c.l.b16 %v3570
      %v3686 = vunpack.c.l.b16 %v3571
      %v3687 = vunpack.c.l.b16 %v3572
      %v3688 = vunpack.c.l.b16 %v3573
      %v3689 = vunpack.c.l.b16 %v3574
      %v3690 = vunpack.c.l.b16 %v3575
      %v3691 = vpack.c.b16 %v3643, %v3642
      %v3692 = vpack.c.b16 %v3645, %v3644
      %v3693 = vpack.c.b16 %v3647, %v3646
      %v3694 = vpack.c.b16 %v3649, %v3648
      %v3695 = vpack.c.b16 %v3651, %v3650
      %v3696 = vpack.c.b16 %v3653, %v3652
      %v3697 = vpack.c.b16 %v3655, %v3654
      %v3698 = vpack.c.b16 %v3657, %v3656
      %v3699 = vpack.c.b16 %v3659, %v3658
      %v3700 = vpack.c.b16 %v3661, %v3660
      %v3701 = vpack.c.b16 %v3663, %v3662
      %v3702 = vpack.c.b16 %v3665, %v3664
      %v3703 = vpack.c.b16 %v3667, %v3666
      %v3704 = vpack.c.b16 %v3669, %v3668
      %v3705 = vpack.c.b16 %v3671, %v3670
      %v3706 = vpack.c.b16 %v3673, %v3672
      %v3707 = vpack.c.b16 %v3675, %v3674
      %v3708 = vpack.c.b16 %v3677, %v3676
      %v3709 = vpack.c.b16 %v3679, %v3678
      %v3710 = vpack.c.b16 %v3681, %v3680
      %v3711 = vpack.c.b16 %v3683, %v3682
      %v3712 = vpack.c.b16 %v3685, %v3684
      %v3713 = vpack.c.b16 %v3687, %v3686
      %v3714 = vpack.c.b16 %v3689, %v3688
      %v3715 = vpack.c.b16 %v3690, %v3690
      %v3717 = vshrl.u32 %v3691, 16
      %v3719 = vrot.slane %v3717, 3
      %v3720 = vshll.u32 %v3691, 16
      %v3722 = vrot.slane %v3720, 4
      %v3723 = vor.u32 %v3719, %v3722
      %v3725 = vshrl.u32 %v3692, 16
      %v3727 = vrot.slane %v3725, 3
      %v3728 = vshll.u32 %v3692, 16
      %v3730 = vrot.slane %v3728, 4
      %v3731 = vor.u32 %v3727, %v3730
      %v3732 = vsel %vm2274, %v3723, %v3731
      %v3734 = vshrl.u32 %v3693, 16
      %v3736 = vrot.slane %v3734, 3
      %v3737 = vshll.u32 %v3693, 16
      %v3739 = vrot.slane %v3737, 4
      %v3740 = vor.u32 %v3736, %v3739
      %v3741 = vsel %vm2274, %v3731, %v3740
      %v3743 = vshrl.u32 %v3694, 16
      %v3745 = vrot.slane %v3743, 3
      %v3746 = vshll.u32 %v3694, 16
      %v3748 = vrot.slane %v3746, 4
      %v3749 = vor.u32 %v3745, %v3748
      %v3750 = vsel %vm2274, %v3740, %v3749
      %v3752 = vshrl.u32 %v3695, 16
      %v3754 = vrot.slane %v3752, 3
      %v3755 = vshll.u32 %v3695, 16
      %v3757 = vrot.slane %v3755, 4
      %v3758 = vor.u32 %v3754, %v3757
      %v3759 = vsel %vm2274, %v3749, %v3758
      %v3761 = vshrl.u32 %v3696, 16
      %v3763 = vrot.slane %v3761, 3
      %v3764 = vshll.u32 %v3696, 16
      %v3766 = vrot.slane %v3764, 4
      %v3767 = vor.u32 %v3763, %v3766
      %v3768 = vsel %vm2274, %v3758, %v3767
      %v3770 = vshrl.u32 %v3697, 16
      %v3772 = vrot.slane %v3770, 3
      %v3773 = vshll.u32 %v3697, 16
      %v3775 = vrot.slane %v3773, 4
      %v3776 = vor.u32 %v3772, %v3775
      %v3777 = vsel %vm2274, %v3767, %v3776
      %v3779 = vshrl.u32 %v3698, 16
      %v3781 = vrot.slane %v3779, 3
      %v3782 = vshll.u32 %v3698, 16
      %v3784 = vrot.slane %v3782, 4
      %v3785 = vor.u32 %v3781, %v3784
      %v3786 = vsel %vm2274, %v3776, %v3785
      %v3788 = vshrl.u32 %v3699, 16
      %v3790 = vrot.slane %v3788, 3
      %v3791 = vshll.u32 %v3699, 16
      %v3793 = vrot.slane %v3791, 4
      %v3794 = vor.u32 %v3790, %v3793
      %v3795 = vsel %vm2274, %v3785, %v3794
      %v3797 = vshrl.u32 %v3700, 16
      %v3799 = vrot.slane %v3797, 3
      %v3800 = vshll.u32 %v3700, 16
      %v3802 = vrot.slane %v3800, 4
      %v3803 = vor.u32 %v3799, %v3802
      %v3804 = vsel %vm2274, %v3794, %v3803
      %v3806 = vshrl.u32 %v3701, 16
      %v3808 = vrot.slane %v3806, 3
      %v3809 = vshll.u32 %v3701, 16
      %v3811 = vrot.slane %v3809, 4
      %v3812 = vor.u32 %v3808, %v3811
      %v3813 = vsel %vm2274, %v3803, %v3812
      %v3815 = vshrl.u32 %v3702, 16
      %v3817 = vrot.slane %v3815, 3
      %v3818 = vshll.u32 %v3702, 16
      %v3820 = vrot.slane %v3818, 4
      %v3821 = vor.u32 %v3817, %v3820
      %v3822 = vsel %vm2274, %v3812, %v3821
      %v3824 = vshrl.u32 %v3703, 16
      %v3826 = vrot.slane %v3824, 3
      %v3827 = vshll.u32 %v3703, 16
      %v3829 = vrot.slane %v3827, 4
      %v3830 = vor.u32 %v3826, %v3829
      %v3831 = vsel %vm2274, %v3821, %v3830
      %v3833 = vshrl.u32 %v3704, 16
      %v3835 = vrot.slane %v3833, 3
      %v3836 = vshll.u32 %v3704, 16
      %v3838 = vrot.slane %v3836, 4
      %v3839 = vor.u32 %v3835, %v3838
      %v3840 = vsel %vm2274, %v3830, %v3839
      %v3842 = vshrl.u32 %v3705, 16
      %v3844 = vrot.slane %v3842, 3
      %v3845 = vshll.u32 %v3705, 16
      %v3847 = vrot.slane %v3845, 4
      %v3848 = vor.u32 %v3844, %v3847
      %v3849 = vsel %vm2274, %v3839, %v3848
      %v3851 = vshrl.u32 %v3706, 16
      %v3853 = vrot.slane %v3851, 3
      %v3854 = vshll.u32 %v3706, 16
      %v3856 = vrot.slane %v3854, 4
      %v3857 = vor.u32 %v3853, %v3856
      %v3858 = vsel %vm2274, %v3848, %v3857
      %v3860 = vshrl.u32 %v3707, 16
      %v3862 = vrot.slane %v3860, 3
      %v3863 = vshll.u32 %v3707, 16
      %v3865 = vrot.slane %v3863, 4
      %v3866 = vor.u32 %v3862, %v3865
      %v3867 = vsel %vm2274, %v3857, %v3866
      %v3869 = vshrl.u32 %v3708, 16
      %v3871 = vrot.slane %v3869, 3
      %v3872 = vshll.u32 %v3708, 16
      %v3874 = vrot.slane %v3872, 4
      %v3875 = vor.u32 %v3871, %v3874
      %v3876 = vsel %vm2274, %v3866, %v3875
      %v3878 = vshrl.u32 %v3709, 16
      %v3880 = vrot.slane %v3878, 3
      %v3881 = vshll.u32 %v3709, 16
      %v3883 = vrot.slane %v3881, 4
      %v3884 = vor.u32 %v3880, %v3883
      %v3885 = vsel %vm2274, %v3875, %v3884
      %v3887 = vshrl.u32 %v3710, 16
      %v3889 = vrot.slane %v3887, 3
      %v3890 = vshll.u32 %v3710, 16
      %v3892 = vrot.slane %v3890, 4
      %v3893 = vor.u32 %v3889, %v3892
      %v3894 = vsel %vm2274, %v3884, %v3893
      %v3896 = vshrl.u32 %v3711, 16
      %v3898 = vrot.slane %v3896, 3
      %v3899 = vshll.u32 %v3711, 16
      %v3901 = vrot.slane %v3899, 4
      %v3902 = vor.u32 %v3898, %v3901
      %v3903 = vsel %vm2274, %v3893, %v3902
      %v3905 = vshrl.u32 %v3712, 16
      %v3907 = vrot.slane %v3905, 3
      %v3908 = vshll.u32 %v3712, 16
      %v3910 = vrot.slane %v3908, 4
      %v3911 = vor.u32 %v3907, %v3910
      %v3912 = vsel %vm2274, %v3902, %v3911
      %v3914 = vshrl.u32 %v3713, 16
      %v3916 = vrot.slane %v3914, 3
      %v3917 = vshll.u32 %v3713, 16
      %v3919 = vrot.slane %v3917, 4
      %v3920 = vor.u32 %v3916, %v3919
      %v3921 = vsel %vm2274, %v3911, %v3920
      %v3923 = vshrl.u32 %v3714, 16
      %v3925 = vrot.slane %v3923, 3
      %v3926 = vshll.u32 %v3714, 16
      %v3928 = vrot.slane %v3926, 4
      %v3929 = vor.u32 %v3925, %v3928
      %v3930 = vsel %vm2274, %v3920, %v3929
      %v3932 = vshrl.u32 %v3715, 16
      %v3934 = vrot.slane %v3932, 3
      %v3935 = vshll.u32 %v3715, 16
      %v3937 = vrot.slane %v3935, 4
      %v3938 = vor.u32 %v3934, %v3937
      %v3939 = vsel %vm2274, %v3929, %v3938
      %v3980 = vunpack.c.l.b16 %v3577
      %v3981 = vunpack.c.l.b16 %v3578
      %v3982 = vunpack.c.l.b16 %v3579
      %v3983 = vunpack.c.l.b16 %v3580
      %v3984 = vunpack.c.l.b16 %v3581
      %v3985 = vunpack.c.l.b16 %v3582
      %v3986 = vunpack.c.l.b16 %v3583
      %v3987 = vunpack.c.l.b16 %v3584
      %v3988 = vunpack.c.l.b16 %v3585
      %v3989 = vunpack.c.l.b16 %v3586
      %v3990 = vunpack.c.l.b16 %v3587
      %v3991 = vunpack.c.l.b16 %v3588
      %v3992 = vunpack.c.l.b16 %v3589
      %v3993 = vunpack.c.l.b16 %v3590
      %v3994 = vunpack.c.l.b16 %v3591
      %v3995 = vunpack.c.l.b16 %v3592
      %v3996 = vpack.c.b16 %v3981, %v3980
      %v3997 = vpack.c.b16 %v3983, %v3982
      %v3998 = vpack.c.b16 %v3985, %v3984
      %v3999 = vpack.c.b16 %v3987, %v3986
      %v4000 = vpack.c.b16 %v3989, %v3988
      %v4001 = vpack.c.b16 %v3991, %v3990
      %v4002 = vpack.c.b16 %v3993, %v3992
      %v4003 = vpack.c.b16 %v3995, %v3994
      %4012 = vmatprep.subr.bf16.mxu0 0
      %4013 = vmatpush1.bf16.msra.mxu0 %v4003
      %4014 = vmatprep.subr.bf16.mxu0 0
      %4015 = vmatpush1.bf16.msra.mxu0 %v4002
      %4016 = vmatprep.subr.bf16.mxu0 0
      %4017 = vmatpush1.bf16.msra.mxu0 %v4001
      %4018 = vmatprep.subr.bf16.mxu0 0
      %4019 = vmatpush1.bf16.msra.mxu0 %v4000
      %4020 = vmatprep.subr.bf16.mxu0 0
      %4021 = vmatpush1.bf16.msra.mxu0 %v3999
      %4022 = vmatprep.subr.bf16.mxu0 0
      %4023 = vmatpush1.bf16.msra.mxu0 %v3998
      %4024 = vmatprep.subr.bf16.mxu0 0
      %4025 = vmatpush1.bf16.msra.mxu0 %v3997
      %4026 = vmatprep.subr.bf16.mxu0 0
      %4027 = vmatpush1.bf16.msra.mxu0 %v3996
      %4028 = vmatprep.subr.bf16.mxu0 0
      %4029 = vmatpush2.bf16.msra.mxu0 0
      %4030 = vmatprep.subr.bf16.mxu0 0
      %4031 = vmatpush2.bf16.msra.mxu0 0
      %4032 = vmatprep.subr.bf16.mxu0 0
      %4033 = vmatpush2.bf16.msra.mxu0 0
      %4034 = vmatprep.subr.bf16.mxu0 0
      %4035 = vmatpush2.bf16.msra.mxu0 0
      %4036 = vmatprep.subr.bf16.mxu0 0
      %4037 = vmatpush2.bf16.msra.mxu0 0
      %4038 = vmatprep.subr.bf16.mxu0 0
      %4039 = vmatpush2.bf16.msra.mxu0 0
      %4040 = vmatprep.subr.bf16.mxu0 0
      %4041 = vmatpush2.bf16.msra.mxu0 0
      %4042 = vmatprep.subr.bf16.mxu0 0
      %4043 = vmatpush2.bf16.msra.mxu0 0
      %4044 = vmatprep.mubr.bf16.mxu0 0
      %4045 = vmatmul.mubr.bf16.gmra.mxu0 %v3732
      %v4046 = vpop.f32.mrf.mxu0
      %v4047 = vadd.f32 0.0, %v4046
      %v4048 = vpop.f32.mrf.mxu0
      %v4049 = vpop.f32.mrf.mxu0
      %v4050 = vadd.f32 0.0, %v4049
      %v4051 = vpop.f32.mrf.mxu0
      %4052 = vmatprep.mubr.bf16.mxu0 0
      %4053 = vmatmul.mubr.bf16.gmra.mxu0 %v3741
      %v4054 = vpop.f32.mrf.mxu0
      %v4055 = vadd.f32 0.0, %v4054
      %v4056 = vpop.f32.mrf.mxu0
      %v4057 = vpop.f32.mrf.mxu0
      %v4058 = vadd.f32 0.0, %v4057
      %v4059 = vpop.f32.mrf.mxu0
      %4060 = vmatprep.mubr.bf16.mxu0 0
      %4061 = vmatmul.mubr.bf16.gmra.mxu0 %v3750
      %v4062 = vpop.f32.mrf.mxu0
      %v4063 = vadd.f32 0.0, %v4062
      %v4064 = vpop.f32.mrf.mxu0
      %v4065 = vpop.f32.mrf.mxu0
      %v4066 = vadd.f32 0.0, %v4065
      %v4067 = vpop.f32.mrf.mxu0
      %4068 = vmatprep.mubr.bf16.mxu0 0
      %4069 = vmatmul.mubr.bf16.gmra.mxu0 %v3759
      %v4070 = vpop.f32.mrf.mxu0
      %v4071 = vadd.f32 0.0, %v4070
      %v4072 = vpop.f32.mrf.mxu0
      %v4073 = vpop.f32.mrf.mxu0
      %v4074 = vadd.f32 0.0, %v4073
      %v4075 = vpop.f32.mrf.mxu0
      %4076 = vmatprep.mubr.bf16.mxu0 0
      %4077 = vmatmul.mubr.bf16.gmra.mxu0 %v3768
      %v4078 = vpop.f32.mrf.mxu0
      %v4079 = vadd.f32 0.0, %v4078
      %v4080 = vpop.f32.mrf.mxu0
      %v4081 = vpop.f32.mrf.mxu0
      %v4082 = vadd.f32 0.0, %v4081
      %v4083 = vpop.f32.mrf.mxu0
      %4084 = vmatprep.mubr.bf16.mxu0 0
      %4085 = vmatmul.mubr.bf16.gmra.mxu0 %v3777
      %v4086 = vpop.f32.mrf.mxu0
      %v4087 = vadd.f32 0.0, %v4086
      %v4088 = vpop.f32.mrf.mxu0
      %v4089 = vpop.f32.mrf.mxu0
      %v4090 = vadd.f32 0.0, %v4089
      %v4091 = vpop.f32.mrf.mxu0
      %4092 = vmatprep.mubr.bf16.mxu0 0
      %4093 = vmatmul.mubr.bf16.gmra.mxu0 %v3786
      %v4094 = vpop.f32.mrf.mxu0
      %v4095 = vadd.f32 0.0, %v4094
      %v4096 = vpop.f32.mrf.mxu0
      %v4097 = vpop.f32.mrf.mxu0
      %v4098 = vadd.f32 0.0, %v4097
      %v4099 = vpop.f32.mrf.mxu0
      %4100 = vmatprep.mubr.bf16.mxu0 0
      %4101 = vmatmul.mubr.bf16.gmra.mxu0 %v3795
      %v4102 = vpop.f32.mrf.mxu0
      %v4103 = vadd.f32 0.0, %v4102
      %v4104 = vpop.f32.mrf.mxu0
      %v4105 = vpop.f32.mrf.mxu0
      %v4106 = vadd.f32 0.0, %v4105
      %v4107 = vpop.f32.mrf.mxu0
      %4108 = vmatprep.mubr.bf16.mxu0 0
      %4109 = vmatmul.mubr.bf16.gmra.mxu0 %v3804
      %v4110 = vpop.f32.mrf.mxu0
      %v4111 = vadd.f32 0.0, %v4110
      %v4112 = vpop.f32.mrf.mxu0
      %v4113 = vpop.f32.mrf.mxu0
      %v4114 = vadd.f32 0.0, %v4113
      %v4115 = vpop.f32.mrf.mxu0
      %4116 = vmatprep.mubr.bf16.mxu0 0
      %4117 = vmatmul.mubr.bf16.gmra.mxu0 %v3813
      %v4118 = vpop.f32.mrf.mxu0
      %v4119 = vadd.f32 0.0, %v4118
      %v4120 = vpop.f32.mrf.mxu0
      %v4121 = vpop.f32.mrf.mxu0
      %v4122 = vadd.f32 0.0, %v4121
      %v4123 = vpop.f32.mrf.mxu0
      %4124 = vmatprep.mubr.bf16.mxu0 0
      %4125 = vmatmul.mubr.bf16.gmra.mxu0 %v3822
      %v4126 = vpop.f32.mrf.mxu0
      %v4127 = vadd.f32 0.0, %v4126
      %v4128 = vpop.f32.mrf.mxu0
      %v4129 = vpop.f32.mrf.mxu0
      %v4130 = vadd.f32 0.0, %v4129
      %v4131 = vpop.f32.mrf.mxu0
      %4132 = vmatprep.mubr.bf16.mxu0 0
      %4133 = vmatmul.mubr.bf16.gmra.mxu0 %v3831
      %v4134 = vpop.f32.mrf.mxu0
      %v4135 = vadd.f32 0.0, %v4134
      %v4136 = vpop.f32.mrf.mxu0
      %v4137 = vpop.f32.mrf.mxu0
      %v4138 = vadd.f32 0.0, %v4137
      %v4139 = vpop.f32.mrf.mxu0
      %4140 = vmatprep.mubr.bf16.mxu0 0
      %4141 = vmatmul.mubr.bf16.gmra.mxu0 %v3840
      %v4142 = vpop.f32.mrf.mxu0
      %v4143 = vadd.f32 0.0, %v4142
      %v4144 = vpop.f32.mrf.mxu0
      %v4145 = vpop.f32.mrf.mxu0
      %v4146 = vadd.f32 0.0, %v4145
      %v4147 = vpop.f32.mrf.mxu0
      %4148 = vmatprep.mubr.bf16.mxu0 0
      %4149 = vmatmul.mubr.bf16.gmra.mxu0 %v3849
      %v4150 = vpop.f32.mrf.mxu0
      %v4151 = vadd.f32 0.0, %v4150
      %v4152 = vpop.f32.mrf.mxu0
      %v4153 = vpop.f32.mrf.mxu0
      %v4154 = vadd.f32 0.0, %v4153
      %v4155 = vpop.f32.mrf.mxu0
      %4156 = vmatprep.mubr.bf16.mxu0 0
      %4157 = vmatmul.mubr.bf16.gmra.mxu0 %v3858
      %v4158 = vpop.f32.mrf.mxu0
      %v4159 = vadd.f32 0.0, %v4158
      %v4160 = vpop.f32.mrf.mxu0
      %v4161 = vpop.f32.mrf.mxu0
      %v4162 = vadd.f32 0.0, %v4161
      %v4163 = vpop.f32.mrf.mxu0
      %4164 = vmatprep.mubr.bf16.mxu0 0
      %4165 = vmatmul.mubr.bf16.gmra.mxu0 %v3867
      %v4166 = vpop.f32.mrf.mxu0
      %v4167 = vadd.f32 0.0, %v4166
      %v4168 = vpop.f32.mrf.mxu0
      %v4169 = vpop.f32.mrf.mxu0
      %v4170 = vadd.f32 0.0, %v4169
      %v4171 = vpop.f32.mrf.mxu0
      %4172 = vmatprep.mubr.bf16.mxu0 0
      %4173 = vmatmul.mubr.bf16.gmra.mxu0 %v3876
      %v4174 = vpop.f32.mrf.mxu0
      %v4175 = vadd.f32 0.0, %v4174
      %v4176 = vpop.f32.mrf.mxu0
      %v4177 = vpop.f32.mrf.mxu0
      %v4178 = vadd.f32 0.0, %v4177
      %v4179 = vpop.f32.mrf.mxu0
      %4180 = vmatprep.mubr.bf16.mxu0 0
      %4181 = vmatmul.mubr.bf16.gmra.mxu0 %v3885
      %v4182 = vpop.f32.mrf.mxu0
      %v4183 = vadd.f32 0.0, %v4182
      %v4184 = vpop.f32.mrf.mxu0
      %v4185 = vpop.f32.mrf.mxu0
      %v4186 = vadd.f32 0.0, %v4185
      %v4187 = vpop.f32.mrf.mxu0
      %4188 = vmatprep.mubr.bf16.mxu0 0
      %4189 = vmatmul.mubr.bf16.gmra.mxu0 %v3894
      %v4190 = vpop.f32.mrf.mxu0
      %v4191 = vadd.f32 0.0, %v4190
      %v4192 = vpop.f32.mrf.mxu0
      %v4193 = vpop.f32.mrf.mxu0
      %v4194 = vadd.f32 0.0, %v4193
      %v4195 = vpop.f32.mrf.mxu0
      %4196 = vmatprep.mubr.bf16.mxu0 0
      %4197 = vmatmul.mubr.bf16.gmra.mxu0 %v3903
      %v4198 = vpop.f32.mrf.mxu0
      %v4199 = vadd.f32 0.0, %v4198
      %v4200 = vpop.f32.mrf.mxu0
      %v4201 = vpop.f32.mrf.mxu0
      %v4202 = vadd.f32 0.0, %v4201
      %v4203 = vpop.f32.mrf.mxu0
      %4204 = vmatprep.mubr.bf16.mxu0 0
      %4205 = vmatmul.mubr.bf16.gmra.mxu0 %v3912
      %v4206 = vpop.f32.mrf.mxu0
      %v4207 = vadd.f32 0.0, %v4206
      %v4208 = vpop.f32.mrf.mxu0
      %v4209 = vpop.f32.mrf.mxu0
      %v4210 = vadd.f32 0.0, %v4209
      %v4211 = vpop.f32.mrf.mxu0
      %4212 = vmatprep.mubr.bf16.mxu0 0
      %4213 = vmatmul.mubr.bf16.gmra.mxu0 %v3921
      %v4214 = vpop.f32.mrf.mxu0
      %v4215 = vadd.f32 0.0, %v4214
      %v4216 = vpop.f32.mrf.mxu0
      %v4217 = vpop.f32.mrf.mxu0
      %v4218 = vadd.f32 0.0, %v4217
      %v4219 = vpop.f32.mrf.mxu0
      %4220 = vmatprep.mubr.bf16.mxu0 0
      %4221 = vmatmul.mubr.bf16.gmra.mxu0 %v3930
      %v4222 = vpop.f32.mrf.mxu0
      %v4223 = vadd.f32 0.0, %v4222
      %v4224 = vpop.f32.mrf.mxu0
      %v4225 = vpop.f32.mrf.mxu0
      %v4226 = vadd.f32 0.0, %v4225
      %v4227 = vpop.f32.mrf.mxu0
      %4228 = vmatprep.mubr.bf16.mxu0 0
      %4229 = vmatmul.mubr.bf16.gmra.mxu0 %v3939
      %v4230 = vpop.f32.mrf.mxu0
      %v4231 = vadd.f32 0.0, %v4230
      %v4232 = vpop.f32.mrf.mxu0
      %v4233 = vpop.f32.mrf.mxu0
      %v4234 = vadd.f32 0.0, %v4233
      %v4235 = vpop.f32.mrf.mxu0
      %4236 = vdwg.mxu0
      %v4237 = vadd.f32 %v3479, %v4047
      %v4238 = vadd.f32 %v3480, %v4050
      %v4239 = vadd.f32 %v3481, %v4055
      %v4240 = vadd.f32 %v3482, %v4058
      %v4241 = vadd.f32 %v3483, %v4063
      %v4242 = vadd.f32 %v3484, %v4066
      %v4243 = vadd.f32 %v3485, %v4071
      %v4244 = vadd.f32 %v3486, %v4074
      %v4245 = vadd.f32 %v3487, %v4079
      %v4246 = vadd.f32 %v3488, %v4082
      %v4247 = vadd.f32 %v3489, %v4087
      %v4248 = vadd.f32 %v3490, %v4090
      %v4249 = vadd.f32 %v3491, %v4095
      %v4250 = vadd.f32 %v3492, %v4098
      %v4251 = vadd.f32 %v3493, %v4103
      %v4252 = vadd.f32 %v3494, %v4106
      %v4253 = vadd.f32 %v3495, %v4111
      %v4254 = vadd.f32 %v3496, %v4114
      %v4255 = vadd.f32 %v3497, %v4119
      %v4256 = vadd.f32 %v3498, %v4122
      %v4257 = vadd.f32 %v3499, %v4127
      %v4258 = vadd.f32 %v3500, %v4130
      %v4259 = vadd.f32 %v3501, %v4135
      %v4260 = vadd.f32 %v3502, %v4138
      %v4261 = vadd.f32 %v3503, %v4143
      %v4262 = vadd.f32 %v3504, %v4146
      %v4263 = vadd.f32 %v3505, %v4151
      %v4264 = vadd.f32 %v3506, %v4154
      %v4265 = vadd.f32 %v3507, %v4159
      %v4266 = vadd.f32 %v3508, %v4162
      %v4267 = vadd.f32 %v3509, %v4167
      %v4268 = vadd.f32 %v3510, %v4170
      %v4269 = vadd.f32 %v3511, %v4175
      %v4270 = vadd.f32 %v3512, %v4178
      %v4271 = vadd.f32 %v3513, %v4183
      %v4272 = vadd.f32 %v3514, %v4186
      %v4273 = vadd.f32 %v3515, %v4191
      %v4274 = vadd.f32 %v3516, %v4194
      %v4275 = vadd.f32 %v3517, %v4199
      %v4276 = vadd.f32 %v3518, %v4202
      %v4277 = vadd.f32 %v3519, %v4207
      %v4278 = vadd.f32 %v3520, %v4210
      %v4279 = vadd.f32 %v3521, %v4215
      %v4280 = vadd.f32 %v3522, %v4218
      %v4281 = vadd.f32 %v3523, %v4223
      %v4282 = vadd.f32 %v3524, %v4226
      %v4283 = vadd.f32 %v3525, %v4231
      %v4284 = vadd.f32 %v3526, %v4234
      %s4285 = scalar_lea.vmem %s3, 256
      %v4286 = vld [vmem:[%s4285] sm:$0xf]
      %v4287 = vld [vmem:[%s4285 + $0x4] sm:$0xf]
      %v4288 = vld [vmem:[%s4285 + $0x8] sm:$0xf]
      %v4289 = vld [vmem:[%s4285 + $0xc] sm:$0xf]
      %v4290 = vld [vmem:[%s4285 + $0x10] sm:$0xf]
      %v4291 = vld [vmem:[%s4285 + $0x14] sm:$0xf]
      %v4292 = vld [vmem:[%s4285 + $0x18] sm:$0xf]
      %v4293 = vld [vmem:[%s4285 + $0x1c] sm:$0xf]
      %v4294 = vld [vmem:[%s4285 + $0x20] sm:$0xf]
      %v4295 = vld [vmem:[%s4285 + $0x24] sm:$0xf]
      %v4296 = vld [vmem:[%s4285 + $0x28] sm:$0xf]
      %v4297 = vld [vmem:[%s4285 + $0x2c] sm:$0xf]
      %v4298 = vld [vmem:[%s4285 + $0x30] sm:$0xf]
      %v4299 = vld [vmem:[%s4285 + $0x34] sm:$0xf]
      %v4300 = vld [vmem:[%s4285 + $0x38] sm:$0xf]
      %v4301 = vld [vmem:[%s4285 + $0x3c] sm:$0xf]
      %v4302 = vpack.c.b16 %v3644, %v3643
      %v4303 = vpack.c.b16 %v3646, %v3645
      %v4304 = vpack.c.b16 %v3648, %v3647
      %v4305 = vpack.c.b16 %v3650, %v3649
      %v4306 = vpack.c.b16 %v3652, %v3651
      %v4307 = vpack.c.b16 %v3654, %v3653
      %v4308 = vpack.c.b16 %v3656, %v3655
      %v4309 = vpack.c.b16 %v3658, %v3657
      %v4310 = vpack.c.b16 %v3660, %v3659
      %v4311 = vpack.c.b16 %v3662, %v3661
      %v4312 = vpack.c.b16 %v3664, %v3663
      %v4313 = vpack.c.b16 %v3666, %v3665
      %v4314 = vpack.c.b16 %v3668, %v3667
      %v4315 = vpack.c.b16 %v3670, %v3669
      %v4316 = vpack.c.b16 %v3672, %v3671
      %v4317 = vpack.c.b16 %v3674, %v3673
      %v4318 = vpack.c.b16 %v3676, %v3675
      %v4319 = vpack.c.b16 %v3678, %v3677
      %v4320 = vpack.c.b16 %v3680, %v3679
      %v4321 = vpack.c.b16 %v3682, %v3681
      %v4322 = vpack.c.b16 %v3684, %v3683
      %v4323 = vpack.c.b16 %v3686, %v3685
      %v4324 = vpack.c.b16 %v3688, %v3687
      %v4325 = vpack.c.b16 %v3690, %v3689
      %v4366 = vunpack.c.l.b16 %v4286
      %v4367 = vunpack.c.l.b16 %v4287
      %v4368 = vunpack.c.l.b16 %v4288
      %v4369 = vunpack.c.l.b16 %v4289
      %v4370 = vunpack.c.l.b16 %v4290
      %v4371 = vunpack.c.l.b16 %v4291
      %v4372 = vunpack.c.l.b16 %v4292
      %v4373 = vunpack.c.l.b16 %v4293
      %v4374 = vunpack.c.l.b16 %v4294
      %v4375 = vunpack.c.l.b16 %v4295
      %v4376 = vunpack.c.l.b16 %v4296
      %v4377 = vunpack.c.l.b16 %v4297
      %v4378 = vunpack.c.l.b16 %v4298
      %v4379 = vunpack.c.l.b16 %v4299
      %v4380 = vunpack.c.l.b16 %v4300
      %v4381 = vunpack.c.l.b16 %v4301
      %v4382 = vpack.c.b16 %v4367, %v4366
      %v4383 = vpack.c.b16 %v4369, %v4368
      %v4384 = vpack.c.b16 %v4371, %v4370
      %v4385 = vpack.c.b16 %v4373, %v4372
      %v4386 = vpack.c.b16 %v4375, %v4374
      %v4387 = vpack.c.b16 %v4377, %v4376
      %v4388 = vpack.c.b16 %v4379, %v4378
      %v4389 = vpack.c.b16 %v4381, %v4380
      %4398 = vmatprep.subr.bf16.mxu0 0
      %4399 = vmatpush1.bf16.msra.mxu0 %v4389
      %4400 = vmatprep.subr.bf16.mxu0 0
      %4401 = vmatpush1.bf16.msra.mxu0 %v4388
      %4402 = vmatprep.subr.bf16.mxu0 0
      %4403 = vmatpush1.bf16.msra.mxu0 %v4387
      %4404 = vmatprep.subr.bf16.mxu0 0
      %4405 = vmatpush1.bf16.msra.mxu0 %v4386
      %4406 = vmatprep.subr.bf16.mxu0 0
      %4407 = vmatpush1.bf16.msra.mxu0 %v4385
      %4408 = vmatprep.subr.bf16.mxu0 0
      %4409 = vmatpush1.bf16.msra.mxu0 %v4384
      %4410 = vmatprep.subr.bf16.mxu0 0
      %4411 = vmatpush1.bf16.msra.mxu0 %v4383
      %4412 = vmatprep.subr.bf16.mxu0 0
      %4413 = vmatpush1.bf16.msra.mxu0 %v4382
      %4414 = vmatprep.subr.bf16.mxu0 0
      %4415 = vmatpush2.bf16.msra.mxu0 0
      %4416 = vmatprep.subr.bf16.mxu0 0
      %4417 = vmatpush2.bf16.msra.mxu0 0
      %4418 = vmatprep.subr.bf16.mxu0 0
      %4419 = vmatpush2.bf16.msra.mxu0 0
      %4420 = vmatprep.subr.bf16.mxu0 0
      %4421 = vmatpush2.bf16.msra.mxu0 0
      %4422 = vmatprep.subr.bf16.mxu0 0
      %4423 = vmatpush2.bf16.msra.mxu0 0
      %4424 = vmatprep.subr.bf16.mxu0 0
      %4425 = vmatpush2.bf16.msra.mxu0 0
      %4426 = vmatprep.subr.bf16.mxu0 0
      %4427 = vmatpush2.bf16.msra.mxu0 0
      %4428 = vmatprep.subr.bf16.mxu0 0
      %4429 = vmatpush2.bf16.msra.mxu0 0
      %4430 = vmatprep.mubr.bf16.mxu0 0
      %4431 = vmatmul.mubr.bf16.gmra.mxu0 %v4302
      %v4432 = vpop.f32.mrf.mxu0
      %v4433 = vadd.f32 0.0, %v4432
      %v4434 = vpop.f32.mrf.mxu0
      %v4435 = vpop.f32.mrf.mxu0
      %v4436 = vadd.f32 0.0, %v4435
      %v4437 = vpop.f32.mrf.mxu0
      %4438 = vmatprep.mubr.bf16.mxu0 0
      %4439 = vmatmul.mubr.bf16.gmra.mxu0 %v4303
      %v4440 = vpop.f32.mrf.mxu0
      %v4441 = vadd.f32 0.0, %v4440
      %v4442 = vpop.f32.mrf.mxu0
      %v4443 = vpop.f32.mrf.mxu0
      %v4444 = vadd.f32 0.0, %v4443
      %v4445 = vpop.f32.mrf.mxu0
      %4446 = vmatprep.mubr.bf16.mxu0 0
      %4447 = vmatmul.mubr.bf16.gmra.mxu0 %v4304
      %v4448 = vpop.f32.mrf.mxu0
      %v4449 = vadd.f32 0.0, %v4448
      %v4450 = vpop.f32.mrf.mxu0
      %v4451 = vpop.f32.mrf.mxu0
      %v4452 = vadd.f32 0.0, %v4451
      %v4453 = vpop.f32.mrf.mxu0
      %4454 = vmatprep.mubr.bf16.mxu0 0
      %4455 = vmatmul.mubr.bf16.gmra.mxu0 %v4305
      %v4456 = vpop.f32.mrf.mxu0
      %v4457 = vadd.f32 0.0, %v4456
      %v4458 = vpop.f32.mrf.mxu0
      %v4459 = vpop.f32.mrf.mxu0
      %v4460 = vadd.f32 0.0, %v4459
      %v4461 = vpop.f32.mrf.mxu0
      %4462 = vmatprep.mubr.bf16.mxu0 0
      %4463 = vmatmul.mubr.bf16.gmra.mxu0 %v4306
      %v4464 = vpop.f32.mrf.mxu0
      %v4465 = vadd.f32 0.0, %v4464
      %v4466 = vpop.f32.mrf.mxu0
      %v4467 = vpop.f32.mrf.mxu0
      %v4468 = vadd.f32 0.0, %v4467
      %v4469 = vpop.f32.mrf.mxu0
      %4470 = vmatprep.mubr.bf16.mxu0 0
      %4471 = vmatmul.mubr.bf16.gmra.mxu0 %v4307
      %v4472 = vpop.f32.mrf.mxu0
      %v4473 = vadd.f32 0.0, %v4472
      %v4474 = vpop.f32.mrf.mxu0
      %v4475 = vpop.f32.mrf.mxu0
      %v4476 = vadd.f32 0.0, %v4475
      %v4477 = vpop.f32.mrf.mxu0
      %4478 = vmatprep.mubr.bf16.mxu0 0
      %4479 = vmatmul.mubr.bf16.gmra.mxu0 %v4308
      %v4480 = vpop.f32.mrf.mxu0
      %v4481 = vadd.f32 0.0, %v4480
      %v4482 = vpop.f32.mrf.mxu0
      %v4483 = vpop.f32.mrf.mxu0
      %v4484 = vadd.f32 0.0, %v4483
      %v4485 = vpop.f32.mrf.mxu0
      %4486 = vmatprep.mubr.bf16.mxu0 0
      %4487 = vmatmul.mubr.bf16.gmra.mxu0 %v4309
      %v4488 = vpop.f32.mrf.mxu0
      %v4489 = vadd.f32 0.0, %v4488
      %v4490 = vpop.f32.mrf.mxu0
      %v4491 = vpop.f32.mrf.mxu0
      %v4492 = vadd.f32 0.0, %v4491
      %v4493 = vpop.f32.mrf.mxu0
      %4494 = vmatprep.mubr.bf16.mxu0 0
      %4495 = vmatmul.mubr.bf16.gmra.mxu0 %v4310
      %v4496 = vpop.f32.mrf.mxu0
      %v4497 = vadd.f32 0.0, %v4496
      %v4498 = vpop.f32.mrf.mxu0
      %v4499 = vpop.f32.mrf.mxu0
      %v4500 = vadd.f32 0.0, %v4499
      %v4501 = vpop.f32.mrf.mxu0
      %4502 = vmatprep.mubr.bf16.mxu0 0
      %4503 = vmatmul.mubr.bf16.gmra.mxu0 %v4311
      %v4504 = vpop.f32.mrf.mxu0
      %v4505 = vadd.f32 0.0, %v4504
      %v4506 = vpop.f32.mrf.mxu0
      %v4507 = vpop.f32.mrf.mxu0
      %v4508 = vadd.f32 0.0, %v4507
      %v4509 = vpop.f32.mrf.mxu0
      %4510 = vmatprep.mubr.bf16.mxu0 0
      %4511 = vmatmul.mubr.bf16.gmra.mxu0 %v4312
      %v4512 = vpop.f32.mrf.mxu0
      %v4513 = vadd.f32 0.0, %v4512
      %v4514 = vpop.f32.mrf.mxu0
      %v4515 = vpop.f32.mrf.mxu0
      %v4516 = vadd.f32 0.0, %v4515
      %v4517 = vpop.f32.mrf.mxu0
      %4518 = vmatprep.mubr.bf16.mxu0 0
      %4519 = vmatmul.mubr.bf16.gmra.mxu0 %v4313
      %v4520 = vpop.f32.mrf.mxu0
      %v4521 = vadd.f32 0.0, %v4520
      %v4522 = vpop.f32.mrf.mxu0
      %v4523 = vpop.f32.mrf.mxu0
      %v4524 = vadd.f32 0.0, %v4523
      %v4525 = vpop.f32.mrf.mxu0
      %4526 = vmatprep.mubr.bf16.mxu0 0
      %4527 = vmatmul.mubr.bf16.gmra.mxu0 %v4314
      %v4528 = vpop.f32.mrf.mxu0
      %v4529 = vadd.f32 0.0, %v4528
      %v4530 = vpop.f32.mrf.mxu0
      %v4531 = vpop.f32.mrf.mxu0
      %v4532 = vadd.f32 0.0, %v4531
      %v4533 = vpop.f32.mrf.mxu0
      %4534 = vmatprep.mubr.bf16.mxu0 0
      %4535 = vmatmul.mubr.bf16.gmra.mxu0 %v4315
      %v4536 = vpop.f32.mrf.mxu0
      %v4537 = vadd.f32 0.0, %v4536
      %v4538 = vpop.f32.mrf.mxu0
      %v4539 = vpop.f32.mrf.mxu0
      %v4540 = vadd.f32 0.0, %v4539
      %v4541 = vpop.f32.mrf.mxu0
      %4542 = vmatprep.mubr.bf16.mxu0 0
      %4543 = vmatmul.mubr.bf16.gmra.mxu0 %v4316
      %v4544 = vpop.f32.mrf.mxu0
      %v4545 = vadd.f32 0.0, %v4544
      %v4546 = vpop.f32.mrf.mxu0
      %v4547 = vpop.f32.mrf.mxu0
      %v4548 = vadd.f32 0.0, %v4547
      %v4549 = vpop.f32.mrf.mxu0
      %4550 = vmatprep.mubr.bf16.mxu0 0
      %4551 = vmatmul.mubr.bf16.gmra.mxu0 %v4317
      %v4552 = vpop.f32.mrf.mxu0
      %v4553 = vadd.f32 0.0, %v4552
      %v4554 = vpop.f32.mrf.mxu0
      %v4555 = vpop.f32.mrf.mxu0
      %v4556 = vadd.f32 0.0, %v4555
      %v4557 = vpop.f32.mrf.mxu0
      %4558 = vmatprep.mubr.bf16.mxu0 0
      %4559 = vmatmul.mubr.bf16.gmra.mxu0 %v4318
      %v4560 = vpop.f32.mrf.mxu0
      %v4561 = vadd.f32 0.0, %v4560
      %v4562 = vpop.f32.mrf.mxu0
      %v4563 = vpop.f32.mrf.mxu0
      %v4564 = vadd.f32 0.0, %v4563
      %v4565 = vpop.f32.mrf.mxu0
      %4566 = vmatprep.mubr.bf16.mxu0 0
      %4567 = vmatmul.mubr.bf16.gmra.mxu0 %v4319
      %v4568 = vpop.f32.mrf.mxu0
      %v4569 = vadd.f32 0.0, %v4568
      %v4570 = vpop.f32.mrf.mxu0
      %v4571 = vpop.f32.mrf.mxu0
      %v4572 = vadd.f32 0.0, %v4571
      %v4573 = vpop.f32.mrf.mxu0
      %4574 = vmatprep.mubr.bf16.mxu0 0
      %4575 = vmatmul.mubr.bf16.gmra.mxu0 %v4320
      %v4576 = vpop.f32.mrf.mxu0
      %v4577 = vadd.f32 0.0, %v4576
      %v4578 = vpop.f32.mrf.mxu0
      %v4579 = vpop.f32.mrf.mxu0
      %v4580 = vadd.f32 0.0, %v4579
      %v4581 = vpop.f32.mrf.mxu0
      %4582 = vmatprep.mubr.bf16.mxu0 0
      %4583 = vmatmul.mubr.bf16.gmra.mxu0 %v4321
      %v4584 = vpop.f32.mrf.mxu0
      %v4585 = vadd.f32 0.0, %v4584
      %v4586 = vpop.f32.mrf.mxu0
      %v4587 = vpop.f32.mrf.mxu0
      %v4588 = vadd.f32 0.0, %v4587
      %v4589 = vpop.f32.mrf.mxu0
      %4590 = vmatprep.mubr.bf16.mxu0 0
      %4591 = vmatmul.mubr.bf16.gmra.mxu0 %v4322
      %v4592 = vpop.f32.mrf.mxu0
      %v4593 = vadd.f32 0.0, %v4592
      %v4594 = vpop.f32.mrf.mxu0
      %v4595 = vpop.f32.mrf.mxu0
      %v4596 = vadd.f32 0.0, %v4595
      %v4597 = vpop.f32.mrf.mxu0
      %4598 = vmatprep.mubr.bf16.mxu0 0
      %4599 = vmatmul.mubr.bf16.gmra.mxu0 %v4323
      %v4600 = vpop.f32.mrf.mxu0
      %v4601 = vadd.f32 0.0, %v4600
      %v4602 = vpop.f32.mrf.mxu0
      %v4603 = vpop.f32.mrf.mxu0
      %v4604 = vadd.f32 0.0, %v4603
      %v4605 = vpop.f32.mrf.mxu0
      %4606 = vmatprep.mubr.bf16.mxu0 0
      %4607 = vmatmul.mubr.bf16.gmra.mxu0 %v4324
      %v4608 = vpop.f32.mrf.mxu0
      %v4609 = vadd.f32 0.0, %v4608
      %v4610 = vpop.f32.mrf.mxu0
      %v4611 = vpop.f32.mrf.mxu0
      %v4612 = vadd.f32 0.0, %v4611
      %v4613 = vpop.f32.mrf.mxu0
      %4614 = vmatprep.mubr.bf16.mxu0 0
      %4615 = vmatmul.mubr.bf16.gmra.mxu0 %v4325
      %v4616 = vpop.f32.mrf.mxu0
      %v4617 = vadd.f32 0.0, %v4616
      %v4618 = vpop.f32.mrf.mxu0
      %v4619 = vpop.f32.mrf.mxu0
      %v4620 = vadd.f32 0.0, %v4619
      %v4621 = vpop.f32.mrf.mxu0
      %4622 = vdwg.mxu0
      %v4623 = vadd.f32 %v4237, %v4433
      %v4624 = vadd.f32 %v4238, %v4436
      %v4625 = vadd.f32 %v4239, %v4441
      %v4626 = vadd.f32 %v4240, %v4444
      %v4627 = vadd.f32 %v4241, %v4449
      %v4628 = vadd.f32 %v4242, %v4452
      %v4629 = vadd.f32 %v4243, %v4457
      %v4630 = vadd.f32 %v4244, %v4460
      %v4631 = vadd.f32 %v4245, %v4465
      %v4632 = vadd.f32 %v4246, %v4468
      %v4633 = vadd.f32 %v4247, %v4473
      %v4634 = vadd.f32 %v4248, %v4476
      %v4635 = vadd.f32 %v4249, %v4481
      %v4636 = vadd.f32 %v4250, %v4484
      %v4637 = vadd.f32 %v4251, %v4489
      %v4638 = vadd.f32 %v4252, %v4492
      %v4639 = vadd.f32 %v4253, %v4497
      %v4640 = vadd.f32 %v4254, %v4500
      %v4641 = vadd.f32 %v4255, %v4505
      %v4642 = vadd.f32 %v4256, %v4508
      %v4643 = vadd.f32 %v4257, %v4513
      %v4644 = vadd.f32 %v4258, %v4516
      %v4645 = vadd.f32 %v4259, %v4521
      %v4646 = vadd.f32 %v4260, %v4524
      %v4647 = vadd.f32 %v4261, %v4529
      %v4648 = vadd.f32 %v4262, %v4532
      %v4649 = vadd.f32 %v4263, %v4537
      %v4650 = vadd.f32 %v4264, %v4540
      %v4651 = vadd.f32 %v4265, %v4545
      %v4652 = vadd.f32 %v4266, %v4548
      %v4653 = vadd.f32 %v4267, %v4553
      %v4654 = vadd.f32 %v4268, %v4556
      %v4655 = vadd.f32 %v4269, %v4561
      %v4656 = vadd.f32 %v4270, %v4564
      %v4657 = vadd.f32 %v4271, %v4569
      %v4658 = vadd.f32 %v4272, %v4572
      %v4659 = vadd.f32 %v4273, %v4577
      %v4660 = vadd.f32 %v4274, %v4580
      %v4661 = vadd.f32 %v4275, %v4585
      %v4662 = vadd.f32 %v4276, %v4588
      %v4663 = vadd.f32 %v4277, %v4593
      %v4664 = vadd.f32 %v4278, %v4596
      %v4665 = vadd.f32 %v4279, %v4601
      %v4666 = vadd.f32 %v4280, %v4604
      %v4667 = vadd.f32 %v4281, %v4609
      %v4668 = vadd.f32 %v4282, %v4612
      %v4669 = vadd.f32 %v4283, %v4617
      %v4670 = vadd.f32 %v4284, %v4620
      %v4671 = vld [vmem:[#allocation2 + $0x10] sm:$0xf]
      %v4672 = vld [vmem:[#allocation2 + $0x14] sm:$0xf]
      %v4673 = vld [vmem:[#allocation2 + $0x18] sm:$0xf]
      %v4674 = vld [vmem:[#allocation2 + $0x1c] sm:$0xf]
      %v4675 = vld [vmem:[#allocation2 + $0x20] sm:$0xf]
      %v4676 = vld [vmem:[#allocation2 + $0x24] sm:$0xf]
      %v4677 = vld [vmem:[#allocation2 + $0x28] sm:$0xf]
      %v4678 = vld [vmem:[#allocation2 + $0x2c] sm:$0xf]
      %v4679 = vld [vmem:[#allocation2 + $0x30] sm:$0xf]
      %v4680 = vld [vmem:[#allocation2 + $0x34] sm:$0xf]
      %v4681 = vld [vmem:[#allocation2 + $0x38] sm:$0xf]
      %v4682 = vld [vmem:[#allocation2 + $0x3c] sm:$0xf]
      %v4683 = vld [vmem:[#allocation2 + $0x40] sm:$0xf]
      %v4684 = vld [vmem:[#allocation2 + $0x44] sm:$0xf]
      %v4685 = vld [vmem:[#allocation2 + $0x48] sm:$0xf]
      %v4686 = vld [vmem:[#allocation2 + $0x4c] sm:$0xf]
      %v4687 = vld [vmem:[#allocation2 + $0x50] sm:$0xf]
      %v4688 = vld [vmem:[#allocation2 + $0x54] sm:$0xf]
      %v4689 = vld [vmem:[#allocation2 + $0x58] sm:$0xf]
      %v4690 = vld [vmem:[#allocation2 + $0x5c] sm:$0xf]
      %v4691 = vld [vmem:[#allocation2 + $0x60] sm:$0xf]
      %v4692 = vld [vmem:[#allocation2 + $0x64] sm:$0xf]
      %v4693 = vld [vmem:[#allocation2 + $0x68] sm:$0xf]
      %v4694 = vld [vmem:[#allocation2 + $0x6c] sm:$0xf]
      %v4695 = vld [vmem:[#allocation2 + $0x70] sm:$0xf]
      %v4696 = vld [vmem:[#allocation2 + $0x74] sm:$0xf]
      %v4697 = vld [vmem:[#allocation2 + $0x78] sm:$0xf]
      %v4698 = vld [vmem:[#allocation2 + $0x7c] sm:$0xf]
      %v4699 = vld [vmem:[#allocation2 + $0x80] sm:$0xf]
      %v4700 = vld [vmem:[#allocation2 + $0x84] sm:$0xf]
      %v4701 = vld [vmem:[#allocation2 + $0x88] sm:$0xf]
      %v4702 = vld [vmem:[#allocation2 + $0x8c] sm:$0xf]
      %v4703 = vld [vmem:[#allocation2 + $0x90] sm:$0xf]
      %v4704 = vld [vmem:[#allocation2 + $0x94] sm:$0xf]
      %v4705 = vld [vmem:[#allocation2 + $0x98] sm:$0xf]
      %v4706 = vld [vmem:[#allocation2 + $0x9c] sm:$0xf]
      %v4707 = vld [vmem:[#allocation2 + $0xa0] sm:$0xf]
      %v4708 = vld [vmem:[#allocation2 + $0xa4] sm:$0xf]
      %v4709 = vld [vmem:[#allocation2 + $0xa8] sm:$0xf]
      %v4710 = vld [vmem:[#allocation2 + $0xac] sm:$0xf]
      %v4711 = vld [vmem:[#allocation2 + $0xb0] sm:$0xf]
      %v4712 = vld [vmem:[#allocation2 + $0xb4] sm:$0xf]
      %v4713 = vld [vmem:[#allocation2 + $0xb8] sm:$0xf]
      %v4714 = vld [vmem:[#allocation2 + $0xbc] sm:$0xf]
      %v4715 = vld [vmem:[#allocation2 + $0xc0] sm:$0xf]
      %v4716 = vld [vmem:[#allocation2 + $0xc4] sm:$0xf]
      %v4717 = vld [vmem:[#allocation2 + $0xc8] sm:$0xf]
      %v4718 = vld [vmem:[#allocation2 + $0xcc] sm:$0xf]
      %v4719 = vld [vmem:[#allocation2 + $0xd0] sm:$0x1]
      %s4720 = scalar_lea.vmem %s3, 320
      %v4721 = vld [vmem:[%s4720] sm:$0xf]
      %v4722 = vld [vmem:[%s4720 + $0x4] sm:$0xf]
      %v4723 = vld [vmem:[%s4720 + $0x8] sm:$0xf]
      %v4724 = vld [vmem:[%s4720 + $0xc] sm:$0xf]
      %v4725 = vld [vmem:[%s4720 + $0x10] sm:$0xf]
      %v4726 = vld [vmem:[%s4720 + $0x14] sm:$0xf]
      %v4727 = vld [vmem:[%s4720 + $0x18] sm:$0xf]
      %v4728 = vld [vmem:[%s4720 + $0x1c] sm:$0xf]
      %v4729 = vld [vmem:[%s4720 + $0x20] sm:$0xf]
      %v4730 = vld [vmem:[%s4720 + $0x24] sm:$0xf]
      %v4731 = vld [vmem:[%s4720 + $0x28] sm:$0xf]
      %v4732 = vld [vmem:[%s4720 + $0x2c] sm:$0xf]
      %v4733 = vld [vmem:[%s4720 + $0x30] sm:$0xf]
      %v4734 = vld [vmem:[%s4720 + $0x34] sm:$0xf]
      %v4735 = vld [vmem:[%s4720 + $0x38] sm:$0xf]
      %v4736 = vld [vmem:[%s4720 + $0x3c] sm:$0xf]
      %v4786 = vunpack.c.l.b16 %v4671
      %v4787 = vunpack.c.l.b16 %v4672
      %v4788 = vunpack.c.l.b16 %v4673
      %v4789 = vunpack.c.l.b16 %v4674
      %v4790 = vunpack.c.l.b16 %v4675
      %v4791 = vunpack.c.l.b16 %v4676
      %v4792 = vunpack.c.l.b16 %v4677
      %v4793 = vunpack.c.l.b16 %v4678
      %v4794 = vunpack.c.l.b16 %v4679
      %v4795 = vunpack.c.l.b16 %v4680
      %v4796 = vunpack.c.l.b16 %v4681
      %v4797 = vunpack.c.l.b16 %v4682
      %v4798 = vunpack.c.l.b16 %v4683
      %v4799 = vunpack.c.l.b16 %v4684
      %v4800 = vunpack.c.l.b16 %v4685
      %v4801 = vunpack.c.l.b16 %v4686
      %v4802 = vunpack.c.l.b16 %v4687
      %v4803 = vunpack.c.l.b16 %v4688
      %v4804 = vunpack.c.l.b16 %v4689
      %v4805 = vunpack.c.l.b16 %v4690
      %v4806 = vunpack.c.l.b16 %v4691
      %v4807 = vunpack.c.l.b16 %v4692
      %v4808 = vunpack.c.l.b16 %v4693
      %v4809 = vunpack.c.l.b16 %v4694
      %v4810 = vunpack.c.l.b16 %v4695
      %v4811 = vunpack.c.l.b16 %v4696
      %v4812 = vunpack.c.l.b16 %v4697
      %v4813 = vunpack.c.l.b16 %v4698
      %v4814 = vunpack.c.l.b16 %v4699
      %v4815 = vunpack.c.l.b16 %v4700
      %v4816 = vunpack.c.l.b16 %v4701
      %v4817 = vunpack.c.l.b16 %v4702
      %v4818 = vunpack.c.l.b16 %v4703
      %v4819 = vunpack.c.l.b16 %v4704
      %v4820 = vunpack.c.l.b16 %v4705
      %v4821 = vunpack.c.l.b16 %v4706
      %v4822 = vunpack.c.l.b16 %v4707
      %v4823 = vunpack.c.l.b16 %v4708
      %v4824 = vunpack.c.l.b16 %v4709
      %v4825 = vunpack.c.l.b16 %v4710
      %v4826 = vunpack.c.l.b16 %v4711
      %v4827 = vunpack.c.l.b16 %v4712
      %v4828 = vunpack.c.l.b16 %v4713
      %v4829 = vunpack.c.l.b16 %v4714
      %v4830 = vunpack.c.l.b16 %v4715
      %v4831 = vunpack.c.l.b16 %v4716
      %v4832 = vunpack.c.l.b16 %v4717
      %v4833 = vunpack.c.l.b16 %v4718
      %v4834 = vunpack.c.l.b16 %v4719
      %v4835 = vpack.c.b16 %v4787, %v4786
      %v4836 = vpack.c.b16 %v4789, %v4788
      %v4837 = vpack.c.b16 %v4791, %v4790
      %v4838 = vpack.c.b16 %v4793, %v4792
      %v4839 = vpack.c.b16 %v4795, %v4794
      %v4840 = vpack.c.b16 %v4797, %v4796
      %v4841 = vpack.c.b16 %v4799, %v4798
      %v4842 = vpack.c.b16 %v4801, %v4800
      %v4843 = vpack.c.b16 %v4803, %v4802
      %v4844 = vpack.c.b16 %v4805, %v4804
      %v4845 = vpack.c.b16 %v4807, %v4806
      %v4846 = vpack.c.b16 %v4809, %v4808
      %v4847 = vpack.c.b16 %v4811, %v4810
      %v4848 = vpack.c.b16 %v4813, %v4812
      %v4849 = vpack.c.b16 %v4815, %v4814
      %v4850 = vpack.c.b16 %v4817, %v4816
      %v4851 = vpack.c.b16 %v4819, %v4818
      %v4852 = vpack.c.b16 %v4821, %v4820
      %v4853 = vpack.c.b16 %v4823, %v4822
      %v4854 = vpack.c.b16 %v4825, %v4824
      %v4855 = vpack.c.b16 %v4827, %v4826
      %v4856 = vpack.c.b16 %v4829, %v4828
      %v4857 = vpack.c.b16 %v4831, %v4830
      %v4858 = vpack.c.b16 %v4833, %v4832
      %v4859 = vpack.c.b16 %v4834, %v4834
      %v4861 = vshrl.u32 %v4835, 16
      %v4863 = vshll.u32 %v4835, 16
      %v4865 = vrot.slane %v4863, 1
      %v4866 = vor.u32 %v4861, %v4865
      %v4868 = vshll.u32 %v4836, 16
      %v4870 = vrot.slane %v4868, 1
      %v4871 = vsel %vm2985, %v4866, %v4870
      %v4872 = vshrl.u32 %v4836, 16
      %v4874 = vor.u32 %v4872, %v4870
      %v4876 = vshll.u32 %v4837, 16
      %v4878 = vrot.slane %v4876, 1
      %v4879 = vsel %vm2985, %v4874, %v4878
      %v4880 = vshrl.u32 %v4837, 16
      %v4882 = vor.u32 %v4880, %v4878
      %v4884 = vshll.u32 %v4838, 16
      %v4886 = vrot.slane %v4884, 1
      %v4887 = vsel %vm2985, %v4882, %v4886
      %v4888 = vshrl.u32 %v4838, 16
      %v4890 = vor.u32 %v4888, %v4886
      %v4892 = vshll.u32 %v4839, 16
      %v4894 = vrot.slane %v4892, 1
      %v4895 = vsel %vm2985, %v4890, %v4894
      %v4896 = vshrl.u32 %v4839, 16
      %v4898 = vor.u32 %v4896, %v4894
      %v4900 = vshll.u32 %v4840, 16
      %v4902 = vrot.slane %v4900, 1
      %v4903 = vsel %vm2985, %v4898, %v4902
      %v4904 = vshrl.u32 %v4840, 16
      %v4906 = vor.u32 %v4904, %v4902
      %v4908 = vshll.u32 %v4841, 16
      %v4910 = vrot.slane %v4908, 1
      %v4911 = vsel %vm2985, %v4906, %v4910
      %v4912 = vshrl.u32 %v4841, 16
      %v4914 = vor.u32 %v4912, %v4910
      %v4916 = vshll.u32 %v4842, 16
      %v4918 = vrot.slane %v4916, 1
      %v4919 = vsel %vm2985, %v4914, %v4918
      %v4920 = vshrl.u32 %v4842, 16
      %v4922 = vor.u32 %v4920, %v4918
      %v4924 = vshll.u32 %v4843, 16
      %v4926 = vrot.slane %v4924, 1
      %v4927 = vsel %vm2985, %v4922, %v4926
      %v4928 = vshrl.u32 %v4843, 16
      %v4930 = vor.u32 %v4928, %v4926
      %v4932 = vshll.u32 %v4844, 16
      %v4934 = vrot.slane %v4932, 1
      %v4935 = vsel %vm2985, %v4930, %v4934
      %v4936 = vshrl.u32 %v4844, 16
      %v4938 = vor.u32 %v4936, %v4934
      %v4940 = vshll.u32 %v4845, 16
      %v4942 = vrot.slane %v4940, 1
      %v4943 = vsel %vm2985, %v4938, %v4942
      %v4944 = vshrl.u32 %v4845, 16
      %v4946 = vor.u32 %v4944, %v4942
      %v4948 = vshll.u32 %v4846, 16
      %v4950 = vrot.slane %v4948, 1
      %v4951 = vsel %vm2985, %v4946, %v4950
      %v4952 = vshrl.u32 %v4846, 16
      %v4954 = vor.u32 %v4952, %v4950
      %v4956 = vshll.u32 %v4847, 16
      %v4958 = vrot.slane %v4956, 1
      %v4959 = vsel %vm2985, %v4954, %v4958
      %v4960 = vshrl.u32 %v4847, 16
      %v4962 = vor.u32 %v4960, %v4958
      %v4964 = vshll.u32 %v4848, 16
      %v4966 = vrot.slane %v4964, 1
      %v4967 = vsel %vm2985, %v4962, %v4966
      %v4968 = vshrl.u32 %v4848, 16
      %v4970 = vor.u32 %v4968, %v4966
      %v4972 = vshll.u32 %v4849, 16
      %v4974 = vrot.slane %v4972, 1
      %v4975 = vsel %vm2985, %v4970, %v4974
      %v4976 = vshrl.u32 %v4849, 16
      %v4978 = vor.u32 %v4976, %v4974
      %v4980 = vshll.u32 %v4850, 16
      %v4982 = vrot.slane %v4980, 1
      %v4983 = vsel %vm2985, %v4978, %v4982
      %v4984 = vshrl.u32 %v4850, 16
      %v4986 = vor.u32 %v4984, %v4982
      %v4988 = vshll.u32 %v4851, 16
      %v4990 = vrot.slane %v4988, 1
      %v4991 = vsel %vm2985, %v4986, %v4990
      %v4992 = vshrl.u32 %v4851, 16
      %v4994 = vor.u32 %v4992, %v4990
      %v4996 = vshll.u32 %v4852, 16
      %v4998 = vrot.slane %v4996, 1
      %v4999 = vsel %vm2985, %v4994, %v4998
      %v5000 = vshrl.u32 %v4852, 16
      %v5002 = vor.u32 %v5000, %v4998
      %v5004 = vshll.u32 %v4853, 16
      %v5006 = vrot.slane %v5004, 1
      %v5007 = vsel %vm2985, %v5002, %v5006
      %v5008 = vshrl.u32 %v4853, 16
      %v5010 = vor.u32 %v5008, %v5006
      %v5012 = vshll.u32 %v4854, 16
      %v5014 = vrot.slane %v5012, 1
      %v5015 = vsel %vm2985, %v5010, %v5014
      %v5016 = vshrl.u32 %v4854, 16
      %v5018 = vor.u32 %v5016, %v5014
      %v5020 = vshll.u32 %v4855, 16
      %v5022 = vrot.slane %v5020, 1
      %v5023 = vsel %vm2985, %v5018, %v5022
      %v5024 = vshrl.u32 %v4855, 16
      %v5026 = vor.u32 %v5024, %v5022
      %v5028 = vshll.u32 %v4856, 16
      %v5030 = vrot.slane %v5028, 1
      %v5031 = vsel %vm2985, %v5026, %v5030
      %v5032 = vshrl.u32 %v4856, 16
      %v5034 = vor.u32 %v5032, %v5030
      %v5036 = vshll.u32 %v4857, 16
      %v5038 = vrot.slane %v5036, 1
      %v5039 = vsel %vm2985, %v5034, %v5038
      %v5040 = vshrl.u32 %v4857, 16
      %v5042 = vor.u32 %v5040, %v5038
      %v5044 = vshll.u32 %v4858, 16
      %v5046 = vrot.slane %v5044, 1
      %v5047 = vsel %vm2985, %v5042, %v5046
      %v5048 = vshrl.u32 %v4858, 16
      %v5050 = vor.u32 %v5048, %v5046
      %v5052 = vshll.u32 %v4859, 16
      %v5054 = vrot.slane %v5052, 1
      %v5055 = vsel %vm2985, %v5050, %v5054
      %v5096 = vunpack.c.l.b16 %v4721
      %v5097 = vunpack.c.l.b16 %v4722
      %v5098 = vunpack.c.l.b16 %v4723
      %v5099 = vunpack.c.l.b16 %v4724
      %v5100 = vunpack.c.l.b16 %v4725
      %v5101 = vunpack.c.l.b16 %v4726
      %v5102 = vunpack.c.l.b16 %v4727
      %v5103 = vunpack.c.l.b16 %v4728
      %v5104 = vunpack.c.l.b16 %v4729
      %v5105 = vunpack.c.l.b16 %v4730
      %v5106 = vunpack.c.l.b16 %v4731
      %v5107 = vunpack.c.l.b16 %v4732
      %v5108 = vunpack.c.l.b16 %v4733
      %v5109 = vunpack.c.l.b16 %v4734
      %v5110 = vunpack.c.l.b16 %v4735
      %v5111 = vunpack.c.l.b16 %v4736
      %v5112 = vpack.c.b16 %v5097, %v5096
      %v5113 = vpack.c.b16 %v5099, %v5098
      %v5114 = vpack.c.b16 %v5101, %v5100
      %v5115 = vpack.c.b16 %v5103, %v5102
      %v5116 = vpack.c.b16 %v5105, %v5104
      %v5117 = vpack.c.b16 %v5107, %v5106
      %v5118 = vpack.c.b16 %v5109, %v5108
      %v5119 = vpack.c.b16 %v5111, %v5110
      %5128 = vmatprep.subr.bf16.mxu0 0
      %5129 = vmatpush1.bf16.msra.mxu0 %v5119
      %5130 = vmatprep.subr.bf16.mxu0 0
      %5131 = vmatpush1.bf16.msra.mxu0 %v5118
      %5132 = vmatprep.subr.bf16.mxu0 0
      %5133 = vmatpush1.bf16.msra.mxu0 %v5117
      %5134 = vmatprep.subr.bf16.mxu0 0
      %5135 = vmatpush1.bf16.msra.mxu0 %v5116
      %5136 = vmatprep.subr.bf16.mxu0 0
      %5137 = vmatpush1.bf16.msra.mxu0 %v5115
      %5138 = vmatprep.subr.bf16.mxu0 0
      %5139 = vmatpush1.bf16.msra.mxu0 %v5114
      %5140 = vmatprep.subr.bf16.mxu0 0
      %5141 = vmatpush1.bf16.msra.mxu0 %v5113
      %5142 = vmatprep.subr.bf16.mxu0 0
      %5143 = vmatpush1.bf16.msra.mxu0 %v5112
      %5144 = vmatprep.subr.bf16.mxu0 0
      %5145 = vmatpush2.bf16.msra.mxu0 0
      %5146 = vmatprep.subr.bf16.mxu0 0
      %5147 = vmatpush2.bf16.msra.mxu0 0
      %5148 = vmatprep.subr.bf16.mxu0 0
      %5149 = vmatpush2.bf16.msra.mxu0 0
      %5150 = vmatprep.subr.bf16.mxu0 0
      %5151 = vmatpush2.bf16.msra.mxu0 0
      %5152 = vmatprep.subr.bf16.mxu0 0
      %5153 = vmatpush2.bf16.msra.mxu0 0
      %5154 = vmatprep.subr.bf16.mxu0 0
      %5155 = vmatpush2.bf16.msra.mxu0 0
      %5156 = vmatprep.subr.bf16.mxu0 0
      %5157 = vmatpush2.bf16.msra.mxu0 0
      %5158 = vmatprep.subr.bf16.mxu0 0
      %5159 = vmatpush2.bf16.msra.mxu0 0
      %5160 = vmatprep.mubr.bf16.mxu0 0
      %5161 = vmatmul.mubr.bf16.gmra.mxu0 %v4871
      %v5162 = vpop.f32.mrf.mxu0
      %v5163 = vadd.f32 0.0, %v5162
      %v5164 = vpop.f32.mrf.mxu0
      %v5165 = vpop.f32.mrf.mxu0
      %v5166 = vadd.f32 0.0, %v5165
      %v5167 = vpop.f32.mrf.mxu0
      %5168 = vmatprep.mubr.bf16.mxu0 0
      %5169 = vmatmul.mubr.bf16.gmra.mxu0 %v4879
      %v5170 = vpop.f32.mrf.mxu0
      %v5171 = vadd.f32 0.0, %v5170
      %v5172 = vpop.f32.mrf.mxu0
      %v5173 = vpop.f32.mrf.mxu0
      %v5174 = vadd.f32 0.0, %v5173
      %v5175 = vpop.f32.mrf.mxu0
      %5176 = vmatprep.mubr.bf16.mxu0 0
      %5177 = vmatmul.mubr.bf16.gmra.mxu0 %v4887
      %v5178 = vpop.f32.mrf.mxu0
      %v5179 = vadd.f32 0.0, %v5178
      %v5180 = vpop.f32.mrf.mxu0
      %v5181 = vpop.f32.mrf.mxu0
      %v5182 = vadd.f32 0.0, %v5181
      %v5183 = vpop.f32.mrf.mxu0
      %5184 = vmatprep.mubr.bf16.mxu0 0
      %5185 = vmatmul.mubr.bf16.gmra.mxu0 %v4895
      %v5186 = vpop.f32.mrf.mxu0
      %v5187 = vadd.f32 0.0, %v5186
      %v5188 = vpop.f32.mrf.mxu0
      %v5189 = vpop.f32.mrf.mxu0
      %v5190 = vadd.f32 0.0, %v5189
      %v5191 = vpop.f32.mrf.mxu0
      %5192 = vmatprep.mubr.bf16.mxu0 0
      %5193 = vmatmul.mubr.bf16.gmra.mxu0 %v4903
      %v5194 = vpop.f32.mrf.mxu0
      %v5195 = vadd.f32 0.0, %v5194
      %v5196 = vpop.f32.mrf.mxu0
      %v5197 = vpop.f32.mrf.mxu0
      %v5198 = vadd.f32 0.0, %v5197
      %v5199 = vpop.f32.mrf.mxu0
      %5200 = vmatprep.mubr.bf16.mxu0 0
      %5201 = vmatmul.mubr.bf16.gmra.mxu0 %v4911
      %v5202 = vpop.f32.mrf.mxu0
      %v5203 = vadd.f32 0.0, %v5202
      %v5204 = vpop.f32.mrf.mxu0
      %v5205 = vpop.f32.mrf.mxu0
      %v5206 = vadd.f32 0.0, %v5205
      %v5207 = vpop.f32.mrf.mxu0
      %5208 = vmatprep.mubr.bf16.mxu0 0
      %5209 = vmatmul.mubr.bf16.gmra.mxu0 %v4919
      %v5210 = vpop.f32.mrf.mxu0
      %v5211 = vadd.f32 0.0, %v5210
      %v5212 = vpop.f32.mrf.mxu0
      %v5213 = vpop.f32.mrf.mxu0
      %v5214 = vadd.f32 0.0, %v5213
      %v5215 = vpop.f32.mrf.mxu0
      %5216 = vmatprep.mubr.bf16.mxu0 0
      %5217 = vmatmul.mubr.bf16.gmra.mxu0 %v4927
      %v5218 = vpop.f32.mrf.mxu0
      %v5219 = vadd.f32 0.0, %v5218
      %v5220 = vpop.f32.mrf.mxu0
      %v5221 = vpop.f32.mrf.mxu0
      %v5222 = vadd.f32 0.0, %v5221
      %v5223 = vpop.f32.mrf.mxu0
      %5224 = vmatprep.mubr.bf16.mxu0 0
      %5225 = vmatmul.mubr.bf16.gmra.mxu0 %v4935
      %v5226 = vpop.f32.mrf.mxu0
      %v5227 = vadd.f32 0.0, %v5226
      %v5228 = vpop.f32.mrf.mxu0
      %v5229 = vpop.f32.mrf.mxu0
      %v5230 = vadd.f32 0.0, %v5229
      %v5231 = vpop.f32.mrf.mxu0
      %5232 = vmatprep.mubr.bf16.mxu0 0
      %5233 = vmatmul.mubr.bf16.gmra.mxu0 %v4943
      %v5234 = vpop.f32.mrf.mxu0
      %v5235 = vadd.f32 0.0, %v5234
      %v5236 = vpop.f32.mrf.mxu0
      %v5237 = vpop.f32.mrf.mxu0
      %v5238 = vadd.f32 0.0, %v5237
      %v5239 = vpop.f32.mrf.mxu0
      %5240 = vmatprep.mubr.bf16.mxu0 0
      %5241 = vmatmul.mubr.bf16.gmra.mxu0 %v4951
      %v5242 = vpop.f32.mrf.mxu0
      %v5243 = vadd.f32 0.0, %v5242
      %v5244 = vpop.f32.mrf.mxu0
      %v5245 = vpop.f32.mrf.mxu0
      %v5246 = vadd.f32 0.0, %v5245
      %v5247 = vpop.f32.mrf.mxu0
      %5248 = vmatprep.mubr.bf16.mxu0 0
      %5249 = vmatmul.mubr.bf16.gmra.mxu0 %v4959
      %v5250 = vpop.f32.mrf.mxu0
      %v5251 = vadd.f32 0.0, %v5250
      %v5252 = vpop.f32.mrf.mxu0
      %v5253 = vpop.f32.mrf.mxu0
      %v5254 = vadd.f32 0.0, %v5253
      %v5255 = vpop.f32.mrf.mxu0
      %5256 = vmatprep.mubr.bf16.mxu0 0
      %5257 = vmatmul.mubr.bf16.gmra.mxu0 %v4967
      %v5258 = vpop.f32.mrf.mxu0
      %v5259 = vadd.f32 0.0, %v5258
      %v5260 = vpop.f32.mrf.mxu0
      %v5261 = vpop.f32.mrf.mxu0
      %v5262 = vadd.f32 0.0, %v5261
      %v5263 = vpop.f32.mrf.mxu0
      %5264 = vmatprep.mubr.bf16.mxu0 0
      %5265 = vmatmul.mubr.bf16.gmra.mxu0 %v4975
      %v5266 = vpop.f32.mrf.mxu0
      %v5267 = vadd.f32 0.0, %v5266
      %v5268 = vpop.f32.mrf.mxu0
      %v5269 = vpop.f32.mrf.mxu0
      %v5270 = vadd.f32 0.0, %v5269
      %v5271 = vpop.f32.mrf.mxu0
      %5272 = vmatprep.mubr.bf16.mxu0 0
      %5273 = vmatmul.mubr.bf16.gmra.mxu0 %v4983
      %v5274 = vpop.f32.mrf.mxu0
      %v5275 = vadd.f32 0.0, %v5274
      %v5276 = vpop.f32.mrf.mxu0
      %v5277 = vpop.f32.mrf.mxu0
      %v5278 = vadd.f32 0.0, %v5277
      %v5279 = vpop.f32.mrf.mxu0
      %5280 = vmatprep.mubr.bf16.mxu0 0
      %5281 = vmatmul.mubr.bf16.gmra.mxu0 %v4991
      %v5282 = vpop.f32.mrf.mxu0
      %v5283 = vadd.f32 0.0, %v5282
      %v5284 = vpop.f32.mrf.mxu0
      %v5285 = vpop.f32.mrf.mxu0
      %v5286 = vadd.f32 0.0, %v5285
      %v5287 = vpop.f32.mrf.mxu0
      %5288 = vmatprep.mubr.bf16.mxu0 0
      %5289 = vmatmul.mubr.bf16.gmra.mxu0 %v4999
      %v5290 = vpop.f32.mrf.mxu0
      %v5291 = vadd.f32 0.0, %v5290
      %v5292 = vpop.f32.mrf.mxu0
      %v5293 = vpop.f32.mrf.mxu0
      %v5294 = vadd.f32 0.0, %v5293
      %v5295 = vpop.f32.mrf.mxu0
      %5296 = vmatprep.mubr.bf16.mxu0 0
      %5297 = vmatmul.mubr.bf16.gmra.mxu0 %v5007
      %v5298 = vpop.f32.mrf.mxu0
      %v5299 = vadd.f32 0.0, %v5298
      %v5300 = vpop.f32.mrf.mxu0
      %v5301 = vpop.f32.mrf.mxu0
      %v5302 = vadd.f32 0.0, %v5301
      %v5303 = vpop.f32.mrf.mxu0
      %5304 = vmatprep.mubr.bf16.mxu0 0
      %5305 = vmatmul.mubr.bf16.gmra.mxu0 %v5015
      %v5306 = vpop.f32.mrf.mxu0
      %v5307 = vadd.f32 0.0, %v5306
      %v5308 = vpop.f32.mrf.mxu0
      %v5309 = vpop.f32.mrf.mxu0
      %v5310 = vadd.f32 0.0, %v5309
      %v5311 = vpop.f32.mrf.mxu0
      %5312 = vmatprep.mubr.bf16.mxu0 0
      %5313 = vmatmul.mubr.bf16.gmra.mxu0 %v5023
      %v5314 = vpop.f32.mrf.mxu0
      %v5315 = vadd.f32 0.0, %v5314
      %v5316 = vpop.f32.mrf.mxu0
      %v5317 = vpop.f32.mrf.mxu0
      %v5318 = vadd.f32 0.0, %v5317
      %v5319 = vpop.f32.mrf.mxu0
      %5320 = vmatprep.mubr.bf16.mxu0 0
      %5321 = vmatmul.mubr.bf16.gmra.mxu0 %v5031
      %v5322 = vpop.f32.mrf.mxu0
      %v5323 = vadd.f32 0.0, %v5322
      %v5324 = vpop.f32.mrf.mxu0
      %v5325 = vpop.f32.mrf.mxu0
      %v5326 = vadd.f32 0.0, %v5325
      %v5327 = vpop.f32.mrf.mxu0
      %5328 = vmatprep.mubr.bf16.mxu0 0
      %5329 = vmatmul.mubr.bf16.gmra.mxu0 %v5039
      %v5330 = vpop.f32.mrf.mxu0
      %v5331 = vadd.f32 0.0, %v5330
      %v5332 = vpop.f32.mrf.mxu0
      %v5333 = vpop.f32.mrf.mxu0
      %v5334 = vadd.f32 0.0, %v5333
      %v5335 = vpop.f32.mrf.mxu0
      %5336 = vmatprep.mubr.bf16.mxu0 0
      %5337 = vmatmul.mubr.bf16.gmra.mxu0 %v5047
      %v5338 = vpop.f32.mrf.mxu0
      %v5339 = vadd.f32 0.0, %v5338
      %v5340 = vpop.f32.mrf.mxu0
      %v5341 = vpop.f32.mrf.mxu0
      %v5342 = vadd.f32 0.0, %v5341
      %v5343 = vpop.f32.mrf.mxu0
      %5344 = vmatprep.mubr.bf16.mxu0 0
      %5345 = vmatmul.mubr.bf16.gmra.mxu0 %v5055
      %v5346 = vpop.f32.mrf.mxu0
      %v5347 = vadd.f32 0.0, %v5346
      %v5348 = vpop.f32.mrf.mxu0
      %v5349 = vpop.f32.mrf.mxu0
      %v5350 = vadd.f32 0.0, %v5349
      %v5351 = vpop.f32.mrf.mxu0
      %5352 = vdwg.mxu0
      %v5353 = vadd.f32 %v4623, %v5163
      %v5354 = vadd.f32 %v4624, %v5166
      %v5355 = vadd.f32 %v4625, %v5171
      %v5356 = vadd.f32 %v4626, %v5174
      %v5357 = vadd.f32 %v4627, %v5179
      %v5358 = vadd.f32 %v4628, %v5182
      %v5359 = vadd.f32 %v4629, %v5187
      %v5360 = vadd.f32 %v4630, %v5190
      %v5361 = vadd.f32 %v4631, %v5195
      %v5362 = vadd.f32 %v4632, %v5198
      %v5363 = vadd.f32 %v4633, %v5203
      %v5364 = vadd.f32 %v4634, %v5206
      %v5365 = vadd.f32 %v4635, %v5211
      %v5366 = vadd.f32 %v4636, %v5214
      %v5367 = vadd.f32 %v4637, %v5219
      %v5368 = vadd.f32 %v4638, %v5222
      %v5369 = vadd.f32 %v4639, %v5227
      %v5370 = vadd.f32 %v4640, %v5230
      %v5371 = vadd.f32 %v4641, %v5235
      %v5372 = vadd.f32 %v4642, %v5238
      %v5373 = vadd.f32 %v4643, %v5243
      %v5374 = vadd.f32 %v4644, %v5246
      %v5375 = vadd.f32 %v4645, %v5251
      %v5376 = vadd.f32 %v4646, %v5254
      %v5377 = vadd.f32 %v4647, %v5259
      %v5378 = vadd.f32 %v4648, %v5262
      %v5379 = vadd.f32 %v4649, %v5267
      %v5380 = vadd.f32 %v4650, %v5270
      %v5381 = vadd.f32 %v4651, %v5275
      %v5382 = vadd.f32 %v4652, %v5278
      %v5383 = vadd.f32 %v4653, %v5283
      %v5384 = vadd.f32 %v4654, %v5286
      %v5385 = vadd.f32 %v4655, %v5291
      %v5386 = vadd.f32 %v4656, %v5294
      %v5387 = vadd.f32 %v4657, %v5299
      %v5388 = vadd.f32 %v4658, %v5302
      %v5389 = vadd.f32 %v4659, %v5307
      %v5390 = vadd.f32 %v4660, %v5310
      %v5391 = vadd.f32 %v4661, %v5315
      %v5392 = vadd.f32 %v4662, %v5318
      %v5393 = vadd.f32 %v4663, %v5323
      %v5394 = vadd.f32 %v4664, %v5326
      %v5395 = vadd.f32 %v4665, %v5331
      %v5396 = vadd.f32 %v4666, %v5334
      %v5397 = vadd.f32 %v4667, %v5339
      %v5398 = vadd.f32 %v4668, %v5342
      %v5399 = vadd.f32 %v4669, %v5347
      %v5400 = vadd.f32 %v4670, %v5350
      %v5401 = vld [vmem:[#allocation2 + $0x18] sm:$0x8]
      %v5402 = vld [vmem:[#allocation2 + $0x1c] sm:$0xf]
      %v5403 = vld [vmem:[#allocation2 + $0x20] sm:$0xf]
      %v5404 = vld [vmem:[#allocation2 + $0x24] sm:$0xf]
      %v5405 = vld [vmem:[#allocation2 + $0x28] sm:$0xf]
      %v5406 = vld [vmem:[#allocation2 + $0x2c] sm:$0xf]
      %v5407 = vld [vmem:[#allocation2 + $0x30] sm:$0xf]
      %v5408 = vld [vmem:[#allocation2 + $0x34] sm:$0xf]
      %v5409 = vld [vmem:[#allocation2 + $0x38] sm:$0xf]
      %v5410 = vld [vmem:[#allocation2 + $0x3c] sm:$0xf]
      %v5411 = vld [vmem:[#allocation2 + $0x40] sm:$0xf]
      %v5412 = vld [vmem:[#allocation2 + $0x44] sm:$0xf]
      %v5413 = vld [vmem:[#allocation2 + $0x48] sm:$0xf]
      %v5414 = vld [vmem:[#allocation2 + $0x4c] sm:$0xf]
      %v5415 = vld [vmem:[#allocation2 + $0x50] sm:$0xf]
      %v5416 = vld [vmem:[#allocation2 + $0x54] sm:$0xf]
      %v5417 = vld [vmem:[#allocation2 + $0x58] sm:$0xf]
      %v5418 = vld [vmem:[#allocation2 + $0x5c] sm:$0xf]
      %v5419 = vld [vmem:[#allocation2 + $0x60] sm:$0xf]
      %v5420 = vld [vmem:[#allocation2 + $0x64] sm:$0xf]
      %v5421 = vld [vmem:[#allocation2 + $0x68] sm:$0xf]
      %v5422 = vld [vmem:[#allocation2 + $0x6c] sm:$0xf]
      %v5423 = vld [vmem:[#allocation2 + $0x70] sm:$0xf]
      %v5424 = vld [vmem:[#allocation2 + $0x74] sm:$0xf]
      %v5425 = vld [vmem:[#allocation2 + $0x78] sm:$0xf]
      %v5426 = vld [vmem:[#allocation2 + $0x7c] sm:$0xf]
      %v5427 = vld [vmem:[#allocation2 + $0x80] sm:$0xf]
      %v5428 = vld [vmem:[#allocation2 + $0x84] sm:$0xf]
      %v5429 = vld [vmem:[#allocation2 + $0x88] sm:$0xf]
      %v5430 = vld [vmem:[#allocation2 + $0x8c] sm:$0xf]
      %v5431 = vld [vmem:[#allocation2 + $0x90] sm:$0xf]
      %v5432 = vld [vmem:[#allocation2 + $0x94] sm:$0xf]
      %v5433 = vld [vmem:[#allocation2 + $0x98] sm:$0xf]
      %v5434 = vld [vmem:[#allocation2 + $0x9c] sm:$0xf]
      %v5435 = vld [vmem:[#allocation2 + $0xa0] sm:$0xf]
      %v5436 = vld [vmem:[#allocation2 + $0xa4] sm:$0xf]
      %v5437 = vld [vmem:[#allocation2 + $0xa8] sm:$0xf]
      %v5438 = vld [vmem:[#allocation2 + $0xac] sm:$0xf]
      %v5439 = vld [vmem:[#allocation2 + $0xb0] sm:$0xf]
      %v5440 = vld [vmem:[#allocation2 + $0xb4] sm:$0xf]
      %v5441 = vld [vmem:[#allocation2 + $0xb8] sm:$0xf]
      %v5442 = vld [vmem:[#allocation2 + $0xbc] sm:$0xf]
      %v5443 = vld [vmem:[#allocation2 + $0xc0] sm:$0xf]
      %v5444 = vld [vmem:[#allocation2 + $0xc4] sm:$0xf]
      %v5445 = vld [vmem:[#allocation2 + $0xc8] sm:$0xf]
      %v5446 = vld [vmem:[#allocation2 + $0xcc] sm:$0xf]
      %v5447 = vld [vmem:[#allocation2 + $0xd0] sm:$0xf]
      %v5448 = vld [vmem:[#allocation2 + $0xd4] sm:$0xf]
      %v5449 = vld [vmem:[#allocation2 + $0xd8] sm:$0xf]
      %s5450 = scalar_lea.vmem %s3, 384
      %v5451 = vld [vmem:[%s5450] sm:$0xf]
      %v5452 = vld [vmem:[%s5450 + $0x4] sm:$0xf]
      %v5453 = vld [vmem:[%s5450 + $0x8] sm:$0xf]
      %v5454 = vld [vmem:[%s5450 + $0xc] sm:$0xf]
      %v5455 = vld [vmem:[%s5450 + $0x10] sm:$0xf]
      %v5456 = vld [vmem:[%s5450 + $0x14] sm:$0xf]
      %v5457 = vld [vmem:[%s5450 + $0x18] sm:$0xf]
      %v5458 = vld [vmem:[%s5450 + $0x1c] sm:$0xf]
      %v5459 = vld [vmem:[%s5450 + $0x20] sm:$0xf]
      %v5460 = vld [vmem:[%s5450 + $0x24] sm:$0xf]
      %v5461 = vld [vmem:[%s5450 + $0x28] sm:$0xf]
      %v5462 = vld [vmem:[%s5450 + $0x2c] sm:$0xf]
      %v5463 = vld [vmem:[%s5450 + $0x30] sm:$0xf]
      %v5464 = vld [vmem:[%s5450 + $0x34] sm:$0xf]
      %v5465 = vld [vmem:[%s5450 + $0x38] sm:$0xf]
      %v5466 = vld [vmem:[%s5450 + $0x3c] sm:$0xf]
      %v5516 = vunpack.c.l.b16 %v5401
      %v5517 = vunpack.c.l.b16 %v5402
      %v5518 = vunpack.c.l.b16 %v5403
      %v5519 = vunpack.c.l.b16 %v5404
      %v5520 = vunpack.c.l.b16 %v5405
      %v5521 = vunpack.c.l.b16 %v5406
      %v5522 = vunpack.c.l.b16 %v5407
      %v5523 = vunpack.c.l.b16 %v5408
      %v5524 = vunpack.c.l.b16 %v5409
      %v5525 = vunpack.c.l.b16 %v5410
      %v5526 = vunpack.c.l.b16 %v5411
      %v5527 = vunpack.c.l.b16 %v5412
      %v5528 = vunpack.c.l.b16 %v5413
      %v5529 = vunpack.c.l.b16 %v5414
      %v5530 = vunpack.c.l.b16 %v5415
      %v5531 = vunpack.c.l.b16 %v5416
      %v5532 = vunpack.c.l.b16 %v5417
      %v5533 = vunpack.c.l.b16 %v5418
      %v5534 = vunpack.c.l.b16 %v5419
      %v5535 = vunpack.c.l.b16 %v5420
      %v5536 = vunpack.c.l.b16 %v5421
      %v5537 = vunpack.c.l.b16 %v5422
      %v5538 = vunpack.c.l.b16 %v5423
      %v5539 = vunpack.c.l.b16 %v5424
      %v5540 = vunpack.c.l.b16 %v5425
      %v5541 = vunpack.c.l.b16 %v5426
      %v5542 = vunpack.c.l.b16 %v5427
      %v5543 = vunpack.c.l.b16 %v5428
      %v5544 = vunpack.c.l.b16 %v5429
      %v5545 = vunpack.c.l.b16 %v5430
      %v5546 = vunpack.c.l.b16 %v5431
      %v5547 = vunpack.c.l.b16 %v5432
      %v5548 = vunpack.c.l.b16 %v5433
      %v5549 = vunpack.c.l.b16 %v5434
      %v5550 = vunpack.c.l.b16 %v5435
      %v5551 = vunpack.c.l.b16 %v5436
      %v5552 = vunpack.c.l.b16 %v5437
      %v5553 = vunpack.c.l.b16 %v5438
      %v5554 = vunpack.c.l.b16 %v5439
      %v5555 = vunpack.c.l.b16 %v5440
      %v5556 = vunpack.c.l.b16 %v5441
      %v5557 = vunpack.c.l.b16 %v5442
      %v5558 = vunpack.c.l.b16 %v5443
      %v5559 = vunpack.c.l.b16 %v5444
      %v5560 = vunpack.c.l.b16 %v5445
      %v5561 = vunpack.c.l.b16 %v5446
      %v5562 = vunpack.c.l.b16 %v5447
      %v5563 = vunpack.c.l.b16 %v5448
      %v5564 = vunpack.c.l.b16 %v5449
      %v5565 = vpack.c.b16 %v5517, %v5516
      %v5566 = vpack.c.b16 %v5519, %v5518
      %v5567 = vpack.c.b16 %v5521, %v5520
      %v5568 = vpack.c.b16 %v5523, %v5522
      %v5569 = vpack.c.b16 %v5525, %v5524
      %v5570 = vpack.c.b16 %v5527, %v5526
      %v5571 = vpack.c.b16 %v5529, %v5528
      %v5572 = vpack.c.b16 %v5531, %v5530
      %v5573 = vpack.c.b16 %v5533, %v5532
      %v5574 = vpack.c.b16 %v5535, %v5534
      %v5575 = vpack.c.b16 %v5537, %v5536
      %v5576 = vpack.c.b16 %v5539, %v5538
      %v5577 = vpack.c.b16 %v5541, %v5540
      %v5578 = vpack.c.b16 %v5543, %v5542
      %v5579 = vpack.c.b16 %v5545, %v5544
      %v5580 = vpack.c.b16 %v5547, %v5546
      %v5581 = vpack.c.b16 %v5549, %v5548
      %v5582 = vpack.c.b16 %v5551, %v5550
      %v5583 = vpack.c.b16 %v5553, %v5552
      %v5584 = vpack.c.b16 %v5555, %v5554
      %v5585 = vpack.c.b16 %v5557, %v5556
      %v5586 = vpack.c.b16 %v5559, %v5558
      %v5587 = vpack.c.b16 %v5561, %v5560
      %v5588 = vpack.c.b16 %v5563, %v5562
      %v5589 = vpack.c.b16 %v5564, %v5564
      %v5591 = vshrl.u32 %v5565, 16
      %v5593 = vrot.slane %v5591, 3
      %v5594 = vshll.u32 %v5565, 16
      %v5596 = vrot.slane %v5594, 4
      %v5597 = vor.u32 %v5593, %v5596
      %v5599 = vshrl.u32 %v5566, 16
      %v5601 = vrot.slane %v5599, 3
      %v5602 = vshll.u32 %v5566, 16
      %v5604 = vrot.slane %v5602, 4
      %v5605 = vor.u32 %v5601, %v5604
      %v5606 = vsel %vm2274, %v5597, %v5605
      %v5608 = vshrl.u32 %v5567, 16
      %v5610 = vrot.slane %v5608, 3
      %v5611 = vshll.u32 %v5567, 16
      %v5613 = vrot.slane %v5611, 4
      %v5614 = vor.u32 %v5610, %v5613
      %v5615 = vsel %vm2274, %v5605, %v5614
      %v5617 = vshrl.u32 %v5568, 16
      %v5619 = vrot.slane %v5617, 3
      %v5620 = vshll.u32 %v5568, 16
      %v5622 = vrot.slane %v5620, 4
      %v5623 = vor.u32 %v5619, %v5622
      %v5624 = vsel %vm2274, %v5614, %v5623
      %v5626 = vshrl.u32 %v5569, 16
      %v5628 = vrot.slane %v5626, 3
      %v5629 = vshll.u32 %v5569, 16
      %v5631 = vrot.slane %v5629, 4
      %v5632 = vor.u32 %v5628, %v5631
      %v5633 = vsel %vm2274, %v5623, %v5632
      %v5635 = vshrl.u32 %v5570, 16
      %v5637 = vrot.slane %v5635, 3
      %v5638 = vshll.u32 %v5570, 16
      %v5640 = vrot.slane %v5638, 4
      %v5641 = vor.u32 %v5637, %v5640
      %v5642 = vsel %vm2274, %v5632, %v5641
      %v5644 = vshrl.u32 %v5571, 16
      %v5646 = vrot.slane %v5644, 3
      %v5647 = vshll.u32 %v5571, 16
      %v5649 = vrot.slane %v5647, 4
      %v5650 = vor.u32 %v5646, %v5649
      %v5651 = vsel %vm2274, %v5641, %v5650
      %v5653 = vshrl.u32 %v5572, 16
      %v5655 = vrot.slane %v5653, 3
      %v5656 = vshll.u32 %v5572, 16
      %v5658 = vrot.slane %v5656, 4
      %v5659 = vor.u32 %v5655, %v5658
      %v5660 = vsel %vm2274, %v5650, %v5659
      %v5662 = vshrl.u32 %v5573, 16
      %v5664 = vrot.slane %v5662, 3
      %v5665 = vshll.u32 %v5573, 16
      %v5667 = vrot.slane %v5665, 4
      %v5668 = vor.u32 %v5664, %v5667
      %v5669 = vsel %vm2274, %v5659, %v5668
      %v5671 = vshrl.u32 %v5574, 16
      %v5673 = vrot.slane %v5671, 3
      %v5674 = vshll.u32 %v5574, 16
      %v5676 = vrot.slane %v5674, 4
      %v5677 = vor.u32 %v5673, %v5676
      %v5678 = vsel %vm2274, %v5668, %v5677
      %v5680 = vshrl.u32 %v5575, 16
      %v5682 = vrot.slane %v5680, 3
      %v5683 = vshll.u32 %v5575, 16
      %v5685 = vrot.slane %v5683, 4
      %v5686 = vor.u32 %v5682, %v5685
      %v5687 = vsel %vm2274, %v5677, %v5686
      %v5689 = vshrl.u32 %v5576, 16
      %v5691 = vrot.slane %v5689, 3
      %v5692 = vshll.u32 %v5576, 16
      %v5694 = vrot.slane %v5692, 4
      %v5695 = vor.u32 %v5691, %v5694
      %v5696 = vsel %vm2274, %v5686, %v5695
      %v5698 = vshrl.u32 %v5577, 16
      %v5700 = vrot.slane %v5698, 3
      %v5701 = vshll.u32 %v5577, 16
      %v5703 = vrot.slane %v5701, 4
      %v5704 = vor.u32 %v5700, %v5703
      %v5705 = vsel %vm2274, %v5695, %v5704
      %v5707 = vshrl.u32 %v5578, 16
      %v5709 = vrot.slane %v5707, 3
      %v5710 = vshll.u32 %v5578, 16
      %v5712 = vrot.slane %v5710, 4
      %v5713 = vor.u32 %v5709, %v5712
      %v5714 = vsel %vm2274, %v5704, %v5713
      %v5716 = vshrl.u32 %v5579, 16
      %v5718 = vrot.slane %v5716, 3
      %v5719 = vshll.u32 %v5579, 16
      %v5721 = vrot.slane %v5719, 4
      %v5722 = vor.u32 %v5718, %v5721
      %v5723 = vsel %vm2274, %v5713, %v5722
      %v5725 = vshrl.u32 %v5580, 16
      %v5727 = vrot.slane %v5725, 3
      %v5728 = vshll.u32 %v5580, 16
      %v5730 = vrot.slane %v5728, 4
      %v5731 = vor.u32 %v5727, %v5730
      %v5732 = vsel %vm2274, %v5722, %v5731
      %v5734 = vshrl.u32 %v5581, 16
      %v5736 = vrot.slane %v5734, 3
      %v5737 = vshll.u32 %v5581, 16
      %v5739 = vrot.slane %v5737, 4
      %v5740 = vor.u32 %v5736, %v5739
      %v5741 = vsel %vm2274, %v5731, %v5740
      %v5743 = vshrl.u32 %v5582, 16
      %v5745 = vrot.slane %v5743, 3
      %v5746 = vshll.u32 %v5582, 16
      %v5748 = vrot.slane %v5746, 4
      %v5749 = vor.u32 %v5745, %v5748
      %v5750 = vsel %vm2274, %v5740, %v5749
      %v5752 = vshrl.u32 %v5583, 16
      %v5754 = vrot.slane %v5752, 3
      %v5755 = vshll.u32 %v5583, 16
      %v5757 = vrot.slane %v5755, 4
      %v5758 = vor.u32 %v5754, %v5757
      %v5759 = vsel %vm2274, %v5749, %v5758
      %v5761 = vshrl.u32 %v5584, 16
      %v5763 = vrot.slane %v5761, 3
      %v5764 = vshll.u32 %v5584, 16
      %v5766 = vrot.slane %v5764, 4
      %v5767 = vor.u32 %v5763, %v5766
      %v5768 = vsel %vm2274, %v5758, %v5767
      %v5770 = vshrl.u32 %v5585, 16
      %v5772 = vrot.slane %v5770, 3
      %v5773 = vshll.u32 %v5585, 16
      %v5775 = vrot.slane %v5773, 4
      %v5776 = vor.u32 %v5772, %v5775
      %v5777 = vsel %vm2274, %v5767, %v5776
      %v5779 = vshrl.u32 %v5586, 16
      %v5781 = vrot.slane %v5779, 3
      %v5782 = vshll.u32 %v5586, 16
      %v5784 = vrot.slane %v5782, 4
      %v5785 = vor.u32 %v5781, %v5784
      %v5786 = vsel %vm2274, %v5776, %v5785
      %v5788 = vshrl.u32 %v5587, 16
      %v5790 = vrot.slane %v5788, 3
      %v5791 = vshll.u32 %v5587, 16
      %v5793 = vrot.slane %v5791, 4
      %v5794 = vor.u32 %v5790, %v5793
      %v5795 = vsel %vm2274, %v5785, %v5794
      %v5797 = vshrl.u32 %v5588, 16
      %v5799 = vrot.slane %v5797, 3
      %v5800 = vshll.u32 %v5588, 16
      %v5802 = vrot.slane %v5800, 4
      %v5803 = vor.u32 %v5799, %v5802
      %v5804 = vsel %vm2274, %v5794, %v5803
      %v5806 = vshrl.u32 %v5589, 16
      %v5808 = vrot.slane %v5806, 3
      %v5809 = vshll.u32 %v5589, 16
      %v5811 = vrot.slane %v5809, 4
      %v5812 = vor.u32 %v5808, %v5811
      %v5813 = vsel %vm2274, %v5803, %v5812
      %v5854 = vunpack.c.l.b16 %v5451
      %v5855 = vunpack.c.l.b16 %v5452
      %v5856 = vunpack.c.l.b16 %v5453
      %v5857 = vunpack.c.l.b16 %v5454
      %v5858 = vunpack.c.l.b16 %v5455
      %v5859 = vunpack.c.l.b16 %v5456
      %v5860 = vunpack.c.l.b16 %v5457
      %v5861 = vunpack.c.l.b16 %v5458
      %v5862 = vunpack.c.l.b16 %v5459
      %v5863 = vunpack.c.l.b16 %v5460
      %v5864 = vunpack.c.l.b16 %v5461
      %v5865 = vunpack.c.l.b16 %v5462
      %v5866 = vunpack.c.l.b16 %v5463
      %v5867 = vunpack.c.l.b16 %v5464
      %v5868 = vunpack.c.l.b16 %v5465
      %v5869 = vunpack.c.l.b16 %v5466
      %v5870 = vpack.c.b16 %v5855, %v5854
      %v5871 = vpack.c.b16 %v5857, %v5856
      %v5872 = vpack.c.b16 %v5859, %v5858
      %v5873 = vpack.c.b16 %v5861, %v5860
      %v5874 = vpack.c.b16 %v5863, %v5862
      %v5875 = vpack.c.b16 %v5865, %v5864
      %v5876 = vpack.c.b16 %v5867, %v5866
      %v5877 = vpack.c.b16 %v5869, %v5868
      %5886 = vmatprep.subr.bf16.mxu0 0
      %5887 = vmatpush1.bf16.msra.mxu0 %v5877
      %5888 = vmatprep.subr.bf16.mxu0 0
      %5889 = vmatpush1.bf16.msra.mxu0 %v5876
      %5890 = vmatprep.subr.bf16.mxu0 0
      %5891 = vmatpush1.bf16.msra.mxu0 %v5875
      %5892 = vmatprep.subr.bf16.mxu0 0
      %5893 = vmatpush1.bf16.msra.mxu0 %v5874
      %5894 = vmatprep.subr.bf16.mxu0 0
      %5895 = vmatpush1.bf16.msra.mxu0 %v5873
      %5896 = vmatprep.subr.bf16.mxu0 0
      %5897 = vmatpush1.bf16.msra.mxu0 %v5872
      %5898 = vmatprep.subr.bf16.mxu0 0
      %5899 = vmatpush1.bf16.msra.mxu0 %v5871
      %5900 = vmatprep.subr.bf16.mxu0 0
      %5901 = vmatpush1.bf16.msra.mxu0 %v5870
      %5902 = vmatprep.subr.bf16.mxu0 0
      %5903 = vmatpush2.bf16.msra.mxu0 0
      %5904 = vmatprep.subr.bf16.mxu0 0
      %5905 = vmatpush2.bf16.msra.mxu0 0
      %5906 = vmatprep.subr.bf16.mxu0 0
      %5907 = vmatpush2.bf16.msra.mxu0 0
      %5908 = vmatprep.subr.bf16.mxu0 0
      %5909 = vmatpush2.bf16.msra.mxu0 0
      %5910 = vmatprep.subr.bf16.mxu0 0
      %5911 = vmatpush2.bf16.msra.mxu0 0
      %5912 = vmatprep.subr.bf16.mxu0 0
      %5913 = vmatpush2.bf16.msra.mxu0 0
      %5914 = vmatprep.subr.bf16.mxu0 0
      %5915 = vmatpush2.bf16.msra.mxu0 0
      %5916 = vmatprep.subr.bf16.mxu0 0
      %5917 = vmatpush2.bf16.msra.mxu0 0
      %5918 = vmatprep.mubr.bf16.mxu0 0
      %5919 = vmatmul.mubr.bf16.gmra.mxu0 %v5606
      %v5920 = vpop.f32.mrf.mxu0
      %v5921 = vadd.f32 0.0, %v5920
      %v5922 = vpop.f32.mrf.mxu0
      %v5923 = vpop.f32.mrf.mxu0
      %v5924 = vadd.f32 0.0, %v5923
      %v5925 = vpop.f32.mrf.mxu0
      %5926 = vmatprep.mubr.bf16.mxu0 0
      %5927 = vmatmul.mubr.bf16.gmra.mxu0 %v5615
      %v5928 = vpop.f32.mrf.mxu0
      %v5929 = vadd.f32 0.0, %v5928
      %v5930 = vpop.f32.mrf.mxu0
      %v5931 = vpop.f32.mrf.mxu0
      %v5932 = vadd.f32 0.0, %v5931
      %v5933 = vpop.f32.mrf.mxu0
      %5934 = vmatprep.mubr.bf16.mxu0 0
      %5935 = vmatmul.mubr.bf16.gmra.mxu0 %v5624
      %v5936 = vpop.f32.mrf.mxu0
      %v5937 = vadd.f32 0.0, %v5936
      %v5938 = vpop.f32.mrf.mxu0
      %v5939 = vpop.f32.mrf.mxu0
      %v5940 = vadd.f32 0.0, %v5939
      %v5941 = vpop.f32.mrf.mxu0
      %5942 = vmatprep.mubr.bf16.mxu0 0
      %5943 = vmatmul.mubr.bf16.gmra.mxu0 %v5633
      %v5944 = vpop.f32.mrf.mxu0
      %v5945 = vadd.f32 0.0, %v5944
      %v5946 = vpop.f32.mrf.mxu0
      %v5947 = vpop.f32.mrf.mxu0
      %v5948 = vadd.f32 0.0, %v5947
      %v5949 = vpop.f32.mrf.mxu0
      %5950 = vmatprep.mubr.bf16.mxu0 0
      %5951 = vmatmul.mubr.bf16.gmra.mxu0 %v5642
      %v5952 = vpop.f32.mrf.mxu0
      %v5953 = vadd.f32 0.0, %v5952
      %v5954 = vpop.f32.mrf.mxu0
      %v5955 = vpop.f32.mrf.mxu0
      %v5956 = vadd.f32 0.0, %v5955
      %v5957 = vpop.f32.mrf.mxu0
      %5958 = vmatprep.mubr.bf16.mxu0 0
      %5959 = vmatmul.mubr.bf16.gmra.mxu0 %v5651
      %v5960 = vpop.f32.mrf.mxu0
      %v5961 = vadd.f32 0.0, %v5960
      %v5962 = vpop.f32.mrf.mxu0
      %v5963 = vpop.f32.mrf.mxu0
      %v5964 = vadd.f32 0.0, %v5963
      %v5965 = vpop.f32.mrf.mxu0
      %5966 = vmatprep.mubr.bf16.mxu0 0
      %5967 = vmatmul.mubr.bf16.gmra.mxu0 %v5660
      %v5968 = vpop.f32.mrf.mxu0
      %v5969 = vadd.f32 0.0, %v5968
      %v5970 = vpop.f32.mrf.mxu0
      %v5971 = vpop.f32.mrf.mxu0
      %v5972 = vadd.f32 0.0, %v5971
      %v5973 = vpop.f32.mrf.mxu0
      %5974 = vmatprep.mubr.bf16.mxu0 0
      %5975 = vmatmul.mubr.bf16.gmra.mxu0 %v5669
      %v5976 = vpop.f32.mrf.mxu0
      %v5977 = vadd.f32 0.0, %v5976
      %v5978 = vpop.f32.mrf.mxu0
      %v5979 = vpop.f32.mrf.mxu0
      %v5980 = vadd.f32 0.0, %v5979
      %v5981 = vpop.f32.mrf.mxu0
      %5982 = vmatprep.mubr.bf16.mxu0 0
      %5983 = vmatmul.mubr.bf16.gmra.mxu0 %v5678
      %v5984 = vpop.f32.mrf.mxu0
      %v5985 = vadd.f32 0.0, %v5984
      %v5986 = vpop.f32.mrf.mxu0
      %v5987 = vpop.f32.mrf.mxu0
      %v5988 = vadd.f32 0.0, %v5987
      %v5989 = vpop.f32.mrf.mxu0
      %5990 = vmatprep.mubr.bf16.mxu0 0
      %5991 = vmatmul.mubr.bf16.gmra.mxu0 %v5687
      %v5992 = vpop.f32.mrf.mxu0
      %v5993 = vadd.f32 0.0, %v5992
      %v5994 = vpop.f32.mrf.mxu0
      %v5995 = vpop.f32.mrf.mxu0
      %v5996 = vadd.f32 0.0, %v5995
      %v5997 = vpop.f32.mrf.mxu0
      %5998 = vmatprep.mubr.bf16.mxu0 0
      %5999 = vmatmul.mubr.bf16.gmra.mxu0 %v5696
      %v6000 = vpop.f32.mrf.mxu0
      %v6001 = vadd.f32 0.0, %v6000
      %v6002 = vpop.f32.mrf.mxu0
      %v6003 = vpop.f32.mrf.mxu0
      %v6004 = vadd.f32 0.0, %v6003
      %v6005 = vpop.f32.mrf.mxu0
      %6006 = vmatprep.mubr.bf16.mxu0 0
      %6007 = vmatmul.mubr.bf16.gmra.mxu0 %v5705
      %v6008 = vpop.f32.mrf.mxu0
      %v6009 = vadd.f32 0.0, %v6008
      %v6010 = vpop.f32.mrf.mxu0
      %v6011 = vpop.f32.mrf.mxu0
      %v6012 = vadd.f32 0.0, %v6011
      %v6013 = vpop.f32.mrf.mxu0
      %6014 = vmatprep.mubr.bf16.mxu0 0
      %6015 = vmatmul.mubr.bf16.gmra.mxu0 %v5714
      %v6016 = vpop.f32.mrf.mxu0
      %v6017 = vadd.f32 0.0, %v6016
      %v6018 = vpop.f32.mrf.mxu0
      %v6019 = vpop.f32.mrf.mxu0
      %v6020 = vadd.f32 0.0, %v6019
      %v6021 = vpop.f32.mrf.mxu0
      %6022 = vmatprep.mubr.bf16.mxu0 0
      %6023 = vmatmul.mubr.bf16.gmra.mxu0 %v5723
      %v6024 = vpop.f32.mrf.mxu0
      %v6025 = vadd.f32 0.0, %v6024
      %v6026 = vpop.f32.mrf.mxu0
      %v6027 = vpop.f32.mrf.mxu0
      %v6028 = vadd.f32 0.0, %v6027
      %v6029 = vpop.f32.mrf.mxu0
      %6030 = vmatprep.mubr.bf16.mxu0 0
      %6031 = vmatmul.mubr.bf16.gmra.mxu0 %v5732
      %v6032 = vpop.f32.mrf.mxu0
      %v6033 = vadd.f32 0.0, %v6032
      %v6034 = vpop.f32.mrf.mxu0
      %v6035 = vpop.f32.mrf.mxu0
      %v6036 = vadd.f32 0.0, %v6035
      %v6037 = vpop.f32.mrf.mxu0
      %6038 = vmatprep.mubr.bf16.mxu0 0
      %6039 = vmatmul.mubr.bf16.gmra.mxu0 %v5741
      %v6040 = vpop.f32.mrf.mxu0
      %v6041 = vadd.f32 0.0, %v6040
      %v6042 = vpop.f32.mrf.mxu0
      %v6043 = vpop.f32.mrf.mxu0
      %v6044 = vadd.f32 0.0, %v6043
      %v6045 = vpop.f32.mrf.mxu0
      %6046 = vmatprep.mubr.bf16.mxu0 0
      %6047 = vmatmul.mubr.bf16.gmra.mxu0 %v5750
      %v6048 = vpop.f32.mrf.mxu0
      %v6049 = vadd.f32 0.0, %v6048
      %v6050 = vpop.f32.mrf.mxu0
      %v6051 = vpop.f32.mrf.mxu0
      %v6052 = vadd.f32 0.0, %v6051
      %v6053 = vpop.f32.mrf.mxu0
      %6054 = vmatprep.mubr.bf16.mxu0 0
      %6055 = vmatmul.mubr.bf16.gmra.mxu0 %v5759
      %v6056 = vpop.f32.mrf.mxu0
      %v6057 = vadd.f32 0.0, %v6056
      %v6058 = vpop.f32.mrf.mxu0
      %v6059 = vpop.f32.mrf.mxu0
      %v6060 = vadd.f32 0.0, %v6059
      %v6061 = vpop.f32.mrf.mxu0
      %6062 = vmatprep.mubr.bf16.mxu0 0
      %6063 = vmatmul.mubr.bf16.gmra.mxu0 %v5768
      %v6064 = vpop.f32.mrf.mxu0
      %v6065 = vadd.f32 0.0, %v6064
      %v6066 = vpop.f32.mrf.mxu0
      %v6067 = vpop.f32.mrf.mxu0
      %v6068 = vadd.f32 0.0, %v6067
      %v6069 = vpop.f32.mrf.mxu0
      %6070 = vmatprep.mubr.bf16.mxu0 0
      %6071 = vmatmul.mubr.bf16.gmra.mxu0 %v5777
      %v6072 = vpop.f32.mrf.mxu0
      %v6073 = vadd.f32 0.0, %v6072
      %v6074 = vpop.f32.mrf.mxu0
      %v6075 = vpop.f32.mrf.mxu0
      %v6076 = vadd.f32 0.0, %v6075
      %v6077 = vpop.f32.mrf.mxu0
      %6078 = vmatprep.mubr.bf16.mxu0 0
      %6079 = vmatmul.mubr.bf16.gmra.mxu0 %v5786
      %v6080 = vpop.f32.mrf.mxu0
      %v6081 = vadd.f32 0.0, %v6080
      %v6082 = vpop.f32.mrf.mxu0
      %v6083 = vpop.f32.mrf.mxu0
      %v6084 = vadd.f32 0.0, %v6083
      %v6085 = vpop.f32.mrf.mxu0
      %6086 = vmatprep.mubr.bf16.mxu0 0
      %6087 = vmatmul.mubr.bf16.gmra.mxu0 %v5795
      %v6088 = vpop.f32.mrf.mxu0
      %v6089 = vadd.f32 0.0, %v6088
      %v6090 = vpop.f32.mrf.mxu0
      %v6091 = vpop.f32.mrf.mxu0
      %v6092 = vadd.f32 0.0, %v6091
      %v6093 = vpop.f32.mrf.mxu0
      %6094 = vmatprep.mubr.bf16.mxu0 0
      %6095 = vmatmul.mubr.bf16.gmra.mxu0 %v5804
      %v6096 = vpop.f32.mrf.mxu0
      %v6097 = vadd.f32 0.0, %v6096
      %v6098 = vpop.f32.mrf.mxu0
      %v6099 = vpop.f32.mrf.mxu0
      %v6100 = vadd.f32 0.0, %v6099
      %v6101 = vpop.f32.mrf.mxu0
      %6102 = vmatprep.mubr.bf16.mxu0 0
      %6103 = vmatmul.mubr.bf16.gmra.mxu0 %v5813
      %v6104 = vpop.f32.mrf.mxu0
      %v6105 = vadd.f32 0.0, %v6104
      %v6106 = vpop.f32.mrf.mxu0
      %v6107 = vpop.f32.mrf.mxu0
      %v6108 = vadd.f32 0.0, %v6107
      %v6109 = vpop.f32.mrf.mxu0
      %6110 = vdwg.mxu0
      %v6111 = vadd.f32 %v5353, %v5921
      %v6112 = vadd.f32 %v5354, %v5924
      %v6113 = vadd.f32 %v5355, %v5929
      %v6114 = vadd.f32 %v5356, %v5932
      %v6115 = vadd.f32 %v5357, %v5937
      %v6116 = vadd.f32 %v5358, %v5940
      %v6117 = vadd.f32 %v5359, %v5945
      %v6118 = vadd.f32 %v5360, %v5948
      %v6119 = vadd.f32 %v5361, %v5953
      %v6120 = vadd.f32 %v5362, %v5956
      %v6121 = vadd.f32 %v5363, %v5961
      %v6122 = vadd.f32 %v5364, %v5964
      %v6123 = vadd.f32 %v5365, %v5969
      %v6124 = vadd.f32 %v5366, %v5972
      %v6125 = vadd.f32 %v5367, %v5977
      %v6126 = vadd.f32 %v5368, %v5980
      %v6127 = vadd.f32 %v5369, %v5985
      %v6128 = vadd.f32 %v5370, %v5988
      %v6129 = vadd.f32 %v5371, %v5993
      %v6130 = vadd.f32 %v5372, %v5996
      %v6131 = vadd.f32 %v5373, %v6001
      %v6132 = vadd.f32 %v5374, %v6004
      %v6133 = vadd.f32 %v5375, %v6009
      %v6134 = vadd.f32 %v5376, %v6012
      %v6135 = vadd.f32 %v5377, %v6017
      %v6136 = vadd.f32 %v5378, %v6020
      %v6137 = vadd.f32 %v5379, %v6025
      %v6138 = vadd.f32 %v5380, %v6028
      %v6139 = vadd.f32 %v5381, %v6033
      %v6140 = vadd.f32 %v5382, %v6036
      %v6141 = vadd.f32 %v5383, %v6041
      %v6142 = vadd.f32 %v5384, %v6044
      %v6143 = vadd.f32 %v5385, %v6049
      %v6144 = vadd.f32 %v5386, %v6052
      %v6145 = vadd.f32 %v5387, %v6057
      %v6146 = vadd.f32 %v5388, %v6060
      %v6147 = vadd.f32 %v5389, %v6065
      %v6148 = vadd.f32 %v5390, %v6068
      %v6149 = vadd.f32 %v5391, %v6073
      %v6150 = vadd.f32 %v5392, %v6076
      %v6151 = vadd.f32 %v5393, %v6081
      %v6152 = vadd.f32 %v5394, %v6084
      %v6153 = vadd.f32 %v5395, %v6089
      %v6154 = vadd.f32 %v5396, %v6092
      %v6155 = vadd.f32 %v5397, %v6097
      %v6156 = vadd.f32 %v5398, %v6100
      %v6157 = vadd.f32 %v5399, %v6105
      %v6158 = vadd.f32 %v5400, %v6108
      %s6159 = scalar_lea.vmem %s3, 448
      %v6160 = vld [vmem:[%s6159] sm:$0xf]
      %v6161 = vld [vmem:[%s6159 + $0x4] sm:$0xf]
      %v6162 = vld [vmem:[%s6159 + $0x8] sm:$0xf]
      %v6163 = vld [vmem:[%s6159 + $0xc] sm:$0xf]
      %v6164 = vld [vmem:[%s6159 + $0x10] sm:$0xf]
      %v6165 = vld [vmem:[%s6159 + $0x14] sm:$0xf]
      %v6166 = vld [vmem:[%s6159 + $0x18] sm:$0xf]
      %v6167 = vld [vmem:[%s6159 + $0x1c] sm:$0xf]
      %v6168 = vld [vmem:[%s6159 + $0x20] sm:$0xf]
      %v6169 = vld [vmem:[%s6159 + $0x24] sm:$0xf]
      %v6170 = vld [vmem:[%s6159 + $0x28] sm:$0xf]
      %v6171 = vld [vmem:[%s6159 + $0x2c] sm:$0xf]
      %v6172 = vld [vmem:[%s6159 + $0x30] sm:$0xf]
      %v6173 = vld [vmem:[%s6159 + $0x34] sm:$0xf]
      %v6174 = vld [vmem:[%s6159 + $0x38] sm:$0xf]
      %v6175 = vld [vmem:[%s6159 + $0x3c] sm:$0xf]
      %v6176 = vpack.c.b16 %v5518, %v5517
      %v6177 = vpack.c.b16 %v5520, %v5519
      %v6178 = vpack.c.b16 %v5522, %v5521
      %v6179 = vpack.c.b16 %v5524, %v5523
      %v6180 = vpack.c.b16 %v5526, %v5525
      %v6181 = vpack.c.b16 %v5528, %v5527
      %v6182 = vpack.c.b16 %v5530, %v5529
      %v6183 = vpack.c.b16 %v5532, %v5531
      %v6184 = vpack.c.b16 %v5534, %v5533
      %v6185 = vpack.c.b16 %v5536, %v5535
      %v6186 = vpack.c.b16 %v5538, %v5537
      %v6187 = vpack.c.b16 %v5540, %v5539
      %v6188 = vpack.c.b16 %v5542, %v5541
      %v6189 = vpack.c.b16 %v5544, %v5543
      %v6190 = vpack.c.b16 %v5546, %v5545
      %v6191 = vpack.c.b16 %v5548, %v5547
      %v6192 = vpack.c.b16 %v5550, %v5549
      %v6193 = vpack.c.b16 %v5552, %v5551
      %v6194 = vpack.c.b16 %v5554, %v5553
      %v6195 = vpack.c.b16 %v5556, %v5555
      %v6196 = vpack.c.b16 %v5558, %v5557
      %v6197 = vpack.c.b16 %v5560, %v5559
      %v6198 = vpack.c.b16 %v5562, %v5561
      %v6199 = vpack.c.b16 %v5564, %v5563
      %v6240 = vunpack.c.l.b16 %v6160
      %v6241 = vunpack.c.l.b16 %v6161
      %v6242 = vunpack.c.l.b16 %v6162
      %v6243 = vunpack.c.l.b16 %v6163
      %v6244 = vunpack.c.l.b16 %v6164
      %v6245 = vunpack.c.l.b16 %v6165
      %v6246 = vunpack.c.l.b16 %v6166
      %v6247 = vunpack.c.l.b16 %v6167
      %v6248 = vunpack.c.l.b16 %v6168
      %v6249 = vunpack.c.l.b16 %v6169
      %v6250 = vunpack.c.l.b16 %v6170
      %v6251 = vunpack.c.l.b16 %v6171
      %v6252 = vunpack.c.l.b16 %v6172
      %v6253 = vunpack.c.l.b16 %v6173
      %v6254 = vunpack.c.l.b16 %v6174
      %v6255 = vunpack.c.l.b16 %v6175
      %v6256 = vpack.c.b16 %v6241, %v6240
      %v6257 = vpack.c.b16 %v6243, %v6242
      %v6258 = vpack.c.b16 %v6245, %v6244
      %v6259 = vpack.c.b16 %v6247, %v6246
      %v6260 = vpack.c.b16 %v6249, %v6248
      %v6261 = vpack.c.b16 %v6251, %v6250
      %v6262 = vpack.c.b16 %v6253, %v6252
      %v6263 = vpack.c.b16 %v6255, %v6254
      %6272 = vmatprep.subr.bf16.mxu0 0
      %6273 = vmatpush1.bf16.msra.mxu0 %v6263
      %6274 = vmatprep.subr.bf16.mxu0 0
      %6275 = vmatpush1.bf16.msra.mxu0 %v6262
      %6276 = vmatprep.subr.bf16.mxu0 0
      %6277 = vmatpush1.bf16.msra.mxu0 %v6261
      %6278 = vmatprep.subr.bf16.mxu0 0
      %6279 = vmatpush1.bf16.msra.mxu0 %v6260
      %6280 = vmatprep.subr.bf16.mxu0 0
      %6281 = vmatpush1.bf16.msra.mxu0 %v6259
      %6282 = vmatprep.subr.bf16.mxu0 0
      %6283 = vmatpush1.bf16.msra.mxu0 %v6258
      %6284 = vmatprep.subr.bf16.mxu0 0
      %6285 = vmatpush1.bf16.msra.mxu0 %v6257
      %6286 = vmatprep.subr.bf16.mxu0 0
      %6287 = vmatpush1.bf16.msra.mxu0 %v6256
      %6288 = vmatprep.subr.bf16.mxu0 0
      %6289 = vmatpush2.bf16.msra.mxu0 0
      %6290 = vmatprep.subr.bf16.mxu0 0
      %6291 = vmatpush2.bf16.msra.mxu0 0
      %6292 = vmatprep.subr.bf16.mxu0 0
      %6293 = vmatpush2.bf16.msra.mxu0 0
      %6294 = vmatprep.subr.bf16.mxu0 0
      %6295 = vmatpush2.bf16.msra.mxu0 0
      %6296 = vmatprep.subr.bf16.mxu0 0
      %6297 = vmatpush2.bf16.msra.mxu0 0
      %6298 = vmatprep.subr.bf16.mxu0 0
      %6299 = vmatpush2.bf16.msra.mxu0 0
      %6300 = vmatprep.subr.bf16.mxu0 0
      %6301 = vmatpush2.bf16.msra.mxu0 0
      %6302 = vmatprep.subr.bf16.mxu0 0
      %6303 = vmatpush2.bf16.msra.mxu0 0
      %6304 = vmatprep.mubr.bf16.mxu0 0
      %6305 = vmatmul.mubr.bf16.gmra.mxu0 %v6176
      %v6306 = vpop.f32.mrf.mxu0
      %v6307 = vadd.f32 0.0, %v6306
      %v6308 = vpop.f32.mrf.mxu0
      %v6309 = vpop.f32.mrf.mxu0
      %v6310 = vadd.f32 0.0, %v6309
      %v6311 = vpop.f32.mrf.mxu0
      %6312 = vmatprep.mubr.bf16.mxu0 0
      %6313 = vmatmul.mubr.bf16.gmra.mxu0 %v6177
      %v6314 = vpop.f32.mrf.mxu0
      %v6315 = vadd.f32 0.0, %v6314
      %v6316 = vpop.f32.mrf.mxu0
      %v6317 = vpop.f32.mrf.mxu0
      %v6318 = vadd.f32 0.0, %v6317
      %v6319 = vpop.f32.mrf.mxu0
      %6320 = vmatprep.mubr.bf16.mxu0 0
      %6321 = vmatmul.mubr.bf16.gmra.mxu0 %v6178
      %v6322 = vpop.f32.mrf.mxu0
      %v6323 = vadd.f32 0.0, %v6322
      %v6324 = vpop.f32.mrf.mxu0
      %v6325 = vpop.f32.mrf.mxu0
      %v6326 = vadd.f32 0.0, %v6325
      %v6327 = vpop.f32.mrf.mxu0
      %6328 = vmatprep.mubr.bf16.mxu0 0
      %6329 = vmatmul.mubr.bf16.gmra.mxu0 %v6179
      %v6330 = vpop.f32.mrf.mxu0
      %v6331 = vadd.f32 0.0, %v6330
      %v6332 = vpop.f32.mrf.mxu0
      %v6333 = vpop.f32.mrf.mxu0
      %v6334 = vadd.f32 0.0, %v6333
      %v6335 = vpop.f32.mrf.mxu0
      %6336 = vmatprep.mubr.bf16.mxu0 0
      %6337 = vmatmul.mubr.bf16.gmra.mxu0 %v6180
      %v6338 = vpop.f32.mrf.mxu0
      %v6339 = vadd.f32 0.0, %v6338
      %v6340 = vpop.f32.mrf.mxu0
      %v6341 = vpop.f32.mrf.mxu0
      %v6342 = vadd.f32 0.0, %v6341
      %v6343 = vpop.f32.mrf.mxu0
      %6344 = vmatprep.mubr.bf16.mxu0 0
      %6345 = vmatmul.mubr.bf16.gmra.mxu0 %v6181
      %v6346 = vpop.f32.mrf.mxu0
      %v6347 = vadd.f32 0.0, %v6346
      %v6348 = vpop.f32.mrf.mxu0
      %v6349 = vpop.f32.mrf.mxu0
      %v6350 = vadd.f32 0.0, %v6349
      %v6351 = vpop.f32.mrf.mxu0
      %6352 = vmatprep.mubr.bf16.mxu0 0
      %6353 = vmatmul.mubr.bf16.gmra.mxu0 %v6182
      %v6354 = vpop.f32.mrf.mxu0
      %v6355 = vadd.f32 0.0, %v6354
      %v6356 = vpop.f32.mrf.mxu0
      %v6357 = vpop.f32.mrf.mxu0
      %v6358 = vadd.f32 0.0, %v6357
      %v6359 = vpop.f32.mrf.mxu0
      %6360 = vmatprep.mubr.bf16.mxu0 0
      %6361 = vmatmul.mubr.bf16.gmra.mxu0 %v6183
      %v6362 = vpop.f32.mrf.mxu0
      %v6363 = vadd.f32 0.0, %v6362
      %v6364 = vpop.f32.mrf.mxu0
      %v6365 = vpop.f32.mrf.mxu0
      %v6366 = vadd.f32 0.0, %v6365
      %v6367 = vpop.f32.mrf.mxu0
      %6368 = vmatprep.mubr.bf16.mxu0 0
      %6369 = vmatmul.mubr.bf16.gmra.mxu0 %v6184
      %v6370 = vpop.f32.mrf.mxu0
      %v6371 = vadd.f32 0.0, %v6370
      %v6372 = vpop.f32.mrf.mxu0
      %v6373 = vpop.f32.mrf.mxu0
      %v6374 = vadd.f32 0.0, %v6373
      %v6375 = vpop.f32.mrf.mxu0
      %6376 = vmatprep.mubr.bf16.mxu0 0
      %6377 = vmatmul.mubr.bf16.gmra.mxu0 %v6185
      %v6378 = vpop.f32.mrf.mxu0
      %v6379 = vadd.f32 0.0, %v6378
      %v6380 = vpop.f32.mrf.mxu0
      %v6381 = vpop.f32.mrf.mxu0
      %v6382 = vadd.f32 0.0, %v6381
      %v6383 = vpop.f32.mrf.mxu0
      %6384 = vmatprep.mubr.bf16.mxu0 0
      %6385 = vmatmul.mubr.bf16.gmra.mxu0 %v6186
      %v6386 = vpop.f32.mrf.mxu0
      %v6387 = vadd.f32 0.0, %v6386
      %v6388 = vpop.f32.mrf.mxu0
      %v6389 = vpop.f32.mrf.mxu0
      %v6390 = vadd.f32 0.0, %v6389
      %v6391 = vpop.f32.mrf.mxu0
      %6392 = vmatprep.mubr.bf16.mxu0 0
      %6393 = vmatmul.mubr.bf16.gmra.mxu0 %v6187
      %v6394 = vpop.f32.mrf.mxu0
      %v6395 = vadd.f32 0.0, %v6394
      %v6396 = vpop.f32.mrf.mxu0
      %v6397 = vpop.f32.mrf.mxu0
      %v6398 = vadd.f32 0.0, %v6397
      %v6399 = vpop.f32.mrf.mxu0
      %6400 = vmatprep.mubr.bf16.mxu0 0
      %6401 = vmatmul.mubr.bf16.gmra.mxu0 %v6188
      %v6402 = vpop.f32.mrf.mxu0
      %v6403 = vadd.f32 0.0, %v6402
      %v6404 = vpop.f32.mrf.mxu0
      %v6405 = vpop.f32.mrf.mxu0
      %v6406 = vadd.f32 0.0, %v6405
      %v6407 = vpop.f32.mrf.mxu0
      %6408 = vmatprep.mubr.bf16.mxu0 0
      %6409 = vmatmul.mubr.bf16.gmra.mxu0 %v6189
      %v6410 = vpop.f32.mrf.mxu0
      %v6411 = vadd.f32 0.0, %v6410
      %v6412 = vpop.f32.mrf.mxu0
      %v6413 = vpop.f32.mrf.mxu0
      %v6414 = vadd.f32 0.0, %v6413
      %v6415 = vpop.f32.mrf.mxu0
      %6416 = vmatprep.mubr.bf16.mxu0 0
      %6417 = vmatmul.mubr.bf16.gmra.mxu0 %v6190
      %v6418 = vpop.f32.mrf.mxu0
      %v6419 = vadd.f32 0.0, %v6418
      %v6420 = vpop.f32.mrf.mxu0
      %v6421 = vpop.f32.mrf.mxu0
      %v6422 = vadd.f32 0.0, %v6421
      %v6423 = vpop.f32.mrf.mxu0
      %6424 = vmatprep.mubr.bf16.mxu0 0
      %6425 = vmatmul.mubr.bf16.gmra.mxu0 %v6191
      %v6426 = vpop.f32.mrf.mxu0
      %v6427 = vadd.f32 0.0, %v6426
      %v6428 = vpop.f32.mrf.mxu0
      %v6429 = vpop.f32.mrf.mxu0
      %v6430 = vadd.f32 0.0, %v6429
      %v6431 = vpop.f32.mrf.mxu0
      %6432 = vmatprep.mubr.bf16.mxu0 0
      %6433 = vmatmul.mubr.bf16.gmra.mxu0 %v6192
      %v6434 = vpop.f32.mrf.mxu0
      %v6435 = vadd.f32 0.0, %v6434
      %v6436 = vpop.f32.mrf.mxu0
      %v6437 = vpop.f32.mrf.mxu0
      %v6438 = vadd.f32 0.0, %v6437
      %v6439 = vpop.f32.mrf.mxu0
      %6440 = vmatprep.mubr.bf16.mxu0 0
      %6441 = vmatmul.mubr.bf16.gmra.mxu0 %v6193
      %v6442 = vpop.f32.mrf.mxu0
      %v6443 = vadd.f32 0.0, %v6442
      %v6444 = vpop.f32.mrf.mxu0
      %v6445 = vpop.f32.mrf.mxu0
      %v6446 = vadd.f32 0.0, %v6445
      %v6447 = vpop.f32.mrf.mxu0
      %6448 = vmatprep.mubr.bf16.mxu0 0
      %6449 = vmatmul.mubr.bf16.gmra.mxu0 %v6194
      %v6450 = vpop.f32.mrf.mxu0
      %v6451 = vadd.f32 0.0, %v6450
      %v6452 = vpop.f32.mrf.mxu0
      %v6453 = vpop.f32.mrf.mxu0
      %v6454 = vadd.f32 0.0, %v6453
      %v6455 = vpop.f32.mrf.mxu0
      %6456 = vmatprep.mubr.bf16.mxu0 0
      %6457 = vmatmul.mubr.bf16.gmra.mxu0 %v6195
      %v6458 = vpop.f32.mrf.mxu0
      %v6459 = vadd.f32 0.0, %v6458
      %v6460 = vpop.f32.mrf.mxu0
      %v6461 = vpop.f32.mrf.mxu0
      %v6462 = vadd.f32 0.0, %v6461
      %v6463 = vpop.f32.mrf.mxu0
      %6464 = vmatprep.mubr.bf16.mxu0 0
      %6465 = vmatmul.mubr.bf16.gmra.mxu0 %v6196
      %v6466 = vpop.f32.mrf.mxu0
      %v6467 = vadd.f32 0.0, %v6466
      %v6468 = vpop.f32.mrf.mxu0
      %v6469 = vpop.f32.mrf.mxu0
      %v6470 = vadd.f32 0.0, %v6469
      %v6471 = vpop.f32.mrf.mxu0
      %6472 = vmatprep.mubr.bf16.mxu0 0
      %6473 = vmatmul.mubr.bf16.gmra.mxu0 %v6197
      %v6474 = vpop.f32.mrf.mxu0
      %v6475 = vadd.f32 0.0, %v6474
      %v6476 = vpop.f32.mrf.mxu0
      %v6477 = vpop.f32.mrf.mxu0
      %v6478 = vadd.f32 0.0, %v6477
      %v6479 = vpop.f32.mrf.mxu0
      %6480 = vmatprep.mubr.bf16.mxu0 0
      %6481 = vmatmul.mubr.bf16.gmra.mxu0 %v6198
      %v6482 = vpop.f32.mrf.mxu0
      %v6483 = vadd.f32 0.0, %v6482
      %v6484 = vpop.f32.mrf.mxu0
      %v6485 = vpop.f32.mrf.mxu0
      %v6486 = vadd.f32 0.0, %v6485
      %v6487 = vpop.f32.mrf.mxu0
      %6488 = vmatprep.mubr.bf16.mxu0 0
      %6489 = vmatmul.mubr.bf16.gmra.mxu0 %v6199
      %v6490 = vpop.f32.mrf.mxu0
      %v6491 = vadd.f32 0.0, %v6490
      %v6492 = vpop.f32.mrf.mxu0
      %v6493 = vpop.f32.mrf.mxu0
      %v6494 = vadd.f32 0.0, %v6493
      %v6495 = vpop.f32.mrf.mxu0
      %6496 = vdwg.mxu0
      %v6497 = vadd.f32 %v6111, %v6307
      %v6498 = vadd.f32 %v6112, %v6310
      %v6499 = vadd.f32 %v6113, %v6315
      %v6500 = vadd.f32 %v6114, %v6318
      %v6501 = vadd.f32 %v6115, %v6323
      %v6502 = vadd.f32 %v6116, %v6326
      %v6503 = vadd.f32 %v6117, %v6331
      %v6504 = vadd.f32 %v6118, %v6334
      %v6505 = vadd.f32 %v6119, %v6339
      %v6506 = vadd.f32 %v6120, %v6342
      %v6507 = vadd.f32 %v6121, %v6347
      %v6508 = vadd.f32 %v6122, %v6350
      %v6509 = vadd.f32 %v6123, %v6355
      %v6510 = vadd.f32 %v6124, %v6358
      %v6511 = vadd.f32 %v6125, %v6363
      %v6512 = vadd.f32 %v6126, %v6366
      %v6513 = vadd.f32 %v6127, %v6371
      %v6514 = vadd.f32 %v6128, %v6374
      %v6515 = vadd.f32 %v6129, %v6379
      %v6516 = vadd.f32 %v6130, %v6382
      %v6517 = vadd.f32 %v6131, %v6387
      %v6518 = vadd.f32 %v6132, %v6390
      %v6519 = vadd.f32 %v6133, %v6395
      %v6520 = vadd.f32 %v6134, %v6398
      %v6521 = vadd.f32 %v6135, %v6403
      %v6522 = vadd.f32 %v6136, %v6406
      %v6523 = vadd.f32 %v6137, %v6411
      %v6524 = vadd.f32 %v6138, %v6414
      %v6525 = vadd.f32 %v6139, %v6419
      %v6526 = vadd.f32 %v6140, %v6422
      %v6527 = vadd.f32 %v6141, %v6427
      %v6528 = vadd.f32 %v6142, %v6430
      %v6529 = vadd.f32 %v6143, %v6435
      %v6530 = vadd.f32 %v6144, %v6438
      %v6531 = vadd.f32 %v6145, %v6443
      %v6532 = vadd.f32 %v6146, %v6446
      %v6533 = vadd.f32 %v6147, %v6451
      %v6534 = vadd.f32 %v6148, %v6454
      %v6535 = vadd.f32 %v6149, %v6459
      %v6536 = vadd.f32 %v6150, %v6462
      %v6537 = vadd.f32 %v6151, %v6467
      %v6538 = vadd.f32 %v6152, %v6470
      %v6539 = vadd.f32 %v6153, %v6475
      %v6540 = vadd.f32 %v6154, %v6478
      %v6541 = vadd.f32 %v6155, %v6483
      %v6542 = vadd.f32 %v6156, %v6486
      %v6543 = vadd.f32 %v6157, %v6491
      %v6544 = vadd.f32 %v6158, %v6494
      %v6545 = vld [vmem:[#allocation2 + $0x1c] sm:$0xf]
      %v6546 = vld [vmem:[#allocation2 + $0x20] sm:$0xf]
      %v6547 = vld [vmem:[#allocation2 + $0x24] sm:$0xf]
      %v6548 = vld [vmem:[#allocation2 + $0x28] sm:$0xf]
      %v6549 = vld [vmem:[#allocation2 + $0x2c] sm:$0xf]
      %v6550 = vld [vmem:[#allocation2 + $0x30] sm:$0xf]
      %v6551 = vld [vmem:[#allocation2 + $0x34] sm:$0xf]
      %v6552 = vld [vmem:[#allocation2 + $0x38] sm:$0xf]
      %v6553 = vld [vmem:[#allocation2 + $0x3c] sm:$0xf]
      %v6554 = vld [vmem:[#allocation2 + $0x40] sm:$0xf]
      %v6555 = vld [vmem:[#allocation2 + $0x44] sm:$0xf]
      %v6556 = vld [vmem:[#allocation2 + $0x48] sm:$0xf]
      %v6557 = vld [vmem:[#allocation2 + $0x4c] sm:$0xf]
      %v6558 = vld [vmem:[#allocation2 + $0x50] sm:$0xf]
      %v6559 = vld [vmem:[#allocation2 + $0x54] sm:$0xf]
      %v6560 = vld [vmem:[#allocation2 + $0x58] sm:$0xf]
      %v6561 = vld [vmem:[#allocation2 + $0x5c] sm:$0xf]
      %v6562 = vld [vmem:[#allocation2 + $0x60] sm:$0xf]
      %v6563 = vld [vmem:[#allocation2 + $0x64] sm:$0xf]
      %v6564 = vld [vmem:[#allocation2 + $0x68] sm:$0xf]
      %v6565 = vld [vmem:[#allocation2 + $0x6c] sm:$0xf]
      %v6566 = vld [vmem:[#allocation2 + $0x70] sm:$0xf]
      %v6567 = vld [vmem:[#allocation2 + $0x74] sm:$0xf]
      %v6568 = vld [vmem:[#allocation2 + $0x78] sm:$0xf]
      %v6569 = vld [vmem:[#allocation2 + $0x7c] sm:$0xf]
      %v6570 = vld [vmem:[#allocation2 + $0x80] sm:$0xf]
      %v6571 = vld [vmem:[#allocation2 + $0x84] sm:$0xf]
      %v6572 = vld [vmem:[#allocation2 + $0x88] sm:$0xf]
      %v6573 = vld [vmem:[#allocation2 + $0x8c] sm:$0xf]
      %v6574 = vld [vmem:[#allocation2 + $0x90] sm:$0xf]
      %v6575 = vld [vmem:[#allocation2 + $0x94] sm:$0xf]
      %v6576 = vld [vmem:[#allocation2 + $0x98] sm:$0xf]
      %v6577 = vld [vmem:[#allocation2 + $0x9c] sm:$0xf]
      %v6578 = vld [vmem:[#allocation2 + $0xa0] sm:$0xf]
      %v6579 = vld [vmem:[#allocation2 + $0xa4] sm:$0xf]
      %v6580 = vld [vmem:[#allocation2 + $0xa8] sm:$0xf]
      %v6581 = vld [vmem:[#allocation2 + $0xac] sm:$0xf]
      %v6582 = vld [vmem:[#allocation2 + $0xb0] sm:$0xf]
      %v6583 = vld [vmem:[#allocation2 + $0xb4] sm:$0xf]
      %v6584 = vld [vmem:[#allocation2 + $0xb8] sm:$0xf]
      %v6585 = vld [vmem:[#allocation2 + $0xbc] sm:$0xf]
      %v6586 = vld [vmem:[#allocation2 + $0xc0] sm:$0xf]
      %v6587 = vld [vmem:[#allocation2 + $0xc4] sm:$0xf]
      %v6588 = vld [vmem:[#allocation2 + $0xc8] sm:$0xf]
      %v6589 = vld [vmem:[#allocation2 + $0xcc] sm:$0xf]
      %v6590 = vld [vmem:[#allocation2 + $0xd0] sm:$0xf]
      %v6591 = vld [vmem:[#allocation2 + $0xd4] sm:$0xf]
      %v6592 = vld [vmem:[#allocation2 + $0xd8] sm:$0xf]
      %v6593 = vld [vmem:[#allocation2 + $0xdc] sm:$0x1]
      %s6594 = scalar_lea.vmem %s3, 512
      %v6595 = vld [vmem:[%s6594] sm:$0xf]
      %v6596 = vld [vmem:[%s6594 + $0x4] sm:$0xf]
      %v6597 = vld [vmem:[%s6594 + $0x8] sm:$0xf]
      %v6598 = vld [vmem:[%s6594 + $0xc] sm:$0xf]
      %v6599 = vld [vmem:[%s6594 + $0x10] sm:$0xf]
      %v6600 = vld [vmem:[%s6594 + $0x14] sm:$0xf]
      %v6601 = vld [vmem:[%s6594 + $0x18] sm:$0xf]
      %v6602 = vld [vmem:[%s6594 + $0x1c] sm:$0xf]
      %v6603 = vld [vmem:[%s6594 + $0x20] sm:$0xf]
      %v6604 = vld [vmem:[%s6594 + $0x24] sm:$0xf]
      %v6605 = vld [vmem:[%s6594 + $0x28] sm:$0xf]
      %v6606 = vld [vmem:[%s6594 + $0x2c] sm:$0xf]
      %v6607 = vld [vmem:[%s6594 + $0x30] sm:$0xf]
      %v6608 = vld [vmem:[%s6594 + $0x34] sm:$0xf]
      %v6609 = vld [vmem:[%s6594 + $0x38] sm:$0xf]
      %v6610 = vld [vmem:[%s6594 + $0x3c] sm:$0xf]
      %v6660 = vunpack.c.l.b16 %v6545
      %v6661 = vunpack.c.l.b16 %v6546
      %v6662 = vunpack.c.l.b16 %v6547
      %v6663 = vunpack.c.l.b16 %v6548
      %v6664 = vunpack.c.l.b16 %v6549
      %v6665 = vunpack.c.l.b16 %v6550
      %v6666 = vunpack.c.l.b16 %v6551
      %v6667 = vunpack.c.l.b16 %v6552
      %v6668 = vunpack.c.l.b16 %v6553
      %v6669 = vunpack.c.l.b16 %v6554
      %v6670 = vunpack.c.l.b16 %v6555
      %v6671 = vunpack.c.l.b16 %v6556
      %v6672 = vunpack.c.l.b16 %v6557
      %v6673 = vunpack.c.l.b16 %v6558
      %v6674 = vunpack.c.l.b16 %v6559
      %v6675 = vunpack.c.l.b16 %v6560
      %v6676 = vunpack.c.l.b16 %v6561
      %v6677 = vunpack.c.l.b16 %v6562
      %v6678 = vunpack.c.l.b16 %v6563
      %v6679 = vunpack.c.l.b16 %v6564
      %v6680 = vunpack.c.l.b16 %v6565
      %v6681 = vunpack.c.l.b16 %v6566
      %v6682 = vunpack.c.l.b16 %v6567
      %v6683 = vunpack.c.l.b16 %v6568
      %v6684 = vunpack.c.l.b16 %v6569
      %v6685 = vunpack.c.l.b16 %v6570
      %v6686 = vunpack.c.l.b16 %v6571
      %v6687 = vunpack.c.l.b16 %v6572
      %v6688 = vunpack.c.l.b16 %v6573
      %v6689 = vunpack.c.l.b16 %v6574
      %v6690 = vunpack.c.l.b16 %v6575
      %v6691 = vunpack.c.l.b16 %v6576
      %v6692 = vunpack.c.l.b16 %v6577
      %v6693 = vunpack.c.l.b16 %v6578
      %v6694 = vunpack.c.l.b16 %v6579
      %v6695 = vunpack.c.l.b16 %v6580
      %v6696 = vunpack.c.l.b16 %v6581
      %v6697 = vunpack.c.l.b16 %v6582
      %v6698 = vunpack.c.l.b16 %v6583
      %v6699 = vunpack.c.l.b16 %v6584
      %v6700 = vunpack.c.l.b16 %v6585
      %v6701 = vunpack.c.l.b16 %v6586
      %v6702 = vunpack.c.l.b16 %v6587
      %v6703 = vunpack.c.l.b16 %v6588
      %v6704 = vunpack.c.l.b16 %v6589
      %v6705 = vunpack.c.l.b16 %v6590
      %v6706 = vunpack.c.l.b16 %v6591
      %v6707 = vunpack.c.l.b16 %v6592
      %v6708 = vunpack.c.l.b16 %v6593
      %v6709 = vpack.c.b16 %v6661, %v6660
      %v6710 = vpack.c.b16 %v6663, %v6662
      %v6711 = vpack.c.b16 %v6665, %v6664
      %v6712 = vpack.c.b16 %v6667, %v6666
      %v6713 = vpack.c.b16 %v6669, %v6668
      %v6714 = vpack.c.b16 %v6671, %v6670
      %v6715 = vpack.c.b16 %v6673, %v6672
      %v6716 = vpack.c.b16 %v6675, %v6674
      %v6717 = vpack.c.b16 %v6677, %v6676
      %v6718 = vpack.c.b16 %v6679, %v6678
      %v6719 = vpack.c.b16 %v6681, %v6680
      %v6720 = vpack.c.b16 %v6683, %v6682
      %v6721 = vpack.c.b16 %v6685, %v6684
      %v6722 = vpack.c.b16 %v6687, %v6686
      %v6723 = vpack.c.b16 %v6689, %v6688
      %v6724 = vpack.c.b16 %v6691, %v6690
      %v6725 = vpack.c.b16 %v6693, %v6692
      %v6726 = vpack.c.b16 %v6695, %v6694
      %v6727 = vpack.c.b16 %v6697, %v6696
      %v6728 = vpack.c.b16 %v6699, %v6698
      %v6729 = vpack.c.b16 %v6701, %v6700
      %v6730 = vpack.c.b16 %v6703, %v6702
      %v6731 = vpack.c.b16 %v6705, %v6704
      %v6732 = vpack.c.b16 %v6707, %v6706
      %v6733 = vpack.c.b16 %v6708, %v6708
      %v6735 = vshrl.u32 %v6709, 16
      %v6737 = vshll.u32 %v6709, 16
      %v6739 = vrot.slane %v6737, 1
      %v6740 = vor.u32 %v6735, %v6739
      %v6742 = vshll.u32 %v6710, 16
      %v6744 = vrot.slane %v6742, 1
      %v6745 = vsel %vm2985, %v6740, %v6744
      %v6746 = vshrl.u32 %v6710, 16
      %v6748 = vor.u32 %v6746, %v6744
      %v6750 = vshll.u32 %v6711, 16
      %v6752 = vrot.slane %v6750, 1
      %v6753 = vsel %vm2985, %v6748, %v6752
      %v6754 = vshrl.u32 %v6711, 16
      %v6756 = vor.u32 %v6754, %v6752
      %v6758 = vshll.u32 %v6712, 16
      %v6760 = vrot.slane %v6758, 1
      %v6761 = vsel %vm2985, %v6756, %v6760
      %v6762 = vshrl.u32 %v6712, 16
      %v6764 = vor.u32 %v6762, %v6760
      %v6766 = vshll.u32 %v6713, 16
      %v6768 = vrot.slane %v6766, 1
      %v6769 = vsel %vm2985, %v6764, %v6768
      %v6770 = vshrl.u32 %v6713, 16
      %v6772 = vor.u32 %v6770, %v6768
      %v6774 = vshll.u32 %v6714, 16
      %v6776 = vrot.slane %v6774, 1
      %v6777 = vsel %vm2985, %v6772, %v6776
      %v6778 = vshrl.u32 %v6714, 16
      %v6780 = vor.u32 %v6778, %v6776
      %v6782 = vshll.u32 %v6715, 16
      %v6784 = vrot.slane %v6782, 1
      %v6785 = vsel %vm2985, %v6780, %v6784
      %v6786 = vshrl.u32 %v6715, 16
      %v6788 = vor.u32 %v6786, %v6784
      %v6790 = vshll.u32 %v6716, 16
      %v6792 = vrot.slane %v6790, 1
      %v6793 = vsel %vm2985, %v6788, %v6792
      %v6794 = vshrl.u32 %v6716, 16
      %v6796 = vor.u32 %v6794, %v6792
      %v6798 = vshll.u32 %v6717, 16
      %v6800 = vrot.slane %v6798, 1
      %v6801 = vsel %vm2985, %v6796, %v6800
      %v6802 = vshrl.u32 %v6717, 16
      %v6804 = vor.u32 %v6802, %v6800
      %v6806 = vshll.u32 %v6718, 16
      %v6808 = vrot.slane %v6806, 1
      %v6809 = vsel %vm2985, %v6804, %v6808
      %v6810 = vshrl.u32 %v6718, 16
      %v6812 = vor.u32 %v6810, %v6808
      %v6814 = vshll.u32 %v6719, 16
      %v6816 = vrot.slane %v6814, 1
      %v6817 = vsel %vm2985, %v6812, %v6816
      %v6818 = vshrl.u32 %v6719, 16
      %v6820 = vor.u32 %v6818, %v6816
      %v6822 = vshll.u32 %v6720, 16
      %v6824 = vrot.slane %v6822, 1
      %v6825 = vsel %vm2985, %v6820, %v6824
      %v6826 = vshrl.u32 %v6720, 16
      %v6828 = vor.u32 %v6826, %v6824
      %v6830 = vshll.u32 %v6721, 16
      %v6832 = vrot.slane %v6830, 1
      %v6833 = vsel %vm2985, %v6828, %v6832
      %v6834 = vshrl.u32 %v6721, 16
      %v6836 = vor.u32 %v6834, %v6832
      %v6838 = vshll.u32 %v6722, 16
      %v6840 = vrot.slane %v6838, 1
      %v6841 = vsel %vm2985, %v6836, %v6840
      %v6842 = vshrl.u32 %v6722, 16
      %v6844 = vor.u32 %v6842, %v6840
      %v6846 = vshll.u32 %v6723, 16
      %v6848 = vrot.slane %v6846, 1
      %v6849 = vsel %vm2985, %v6844, %v6848
      %v6850 = vshrl.u32 %v6723, 16
      %v6852 = vor.u32 %v6850, %v6848
      %v6854 = vshll.u32 %v6724, 16
      %v6856 = vrot.slane %v6854, 1
      %v6857 = vsel %vm2985, %v6852, %v6856
      %v6858 = vshrl.u32 %v6724, 16
      %v6860 = vor.u32 %v6858, %v6856
      %v6862 = vshll.u32 %v6725, 16
      %v6864 = vrot.slane %v6862, 1
      %v6865 = vsel %vm2985, %v6860, %v6864
      %v6866 = vshrl.u32 %v6725, 16
      %v6868 = vor.u32 %v6866, %v6864
      %v6870 = vshll.u32 %v6726, 16
      %v6872 = vrot.slane %v6870, 1
      %v6873 = vsel %vm2985, %v6868, %v6872
      %v6874 = vshrl.u32 %v6726, 16
      %v6876 = vor.u32 %v6874, %v6872
      %v6878 = vshll.u32 %v6727, 16
      %v6880 = vrot.slane %v6878, 1
      %v6881 = vsel %vm2985, %v6876, %v6880
      %v6882 = vshrl.u32 %v6727, 16
      %v6884 = vor.u32 %v6882, %v6880
      %v6886 = vshll.u32 %v6728, 16
      %v6888 = vrot.slane %v6886, 1
      %v6889 = vsel %vm2985, %v6884, %v6888
      %v6890 = vshrl.u32 %v6728, 16
      %v6892 = vor.u32 %v6890, %v6888
      %v6894 = vshll.u32 %v6729, 16
      %v6896 = vrot.slane %v6894, 1
      %v6897 = vsel %vm2985, %v6892, %v6896
      %v6898 = vshrl.u32 %v6729, 16
      %v6900 = vor.u32 %v6898, %v6896
      %v6902 = vshll.u32 %v6730, 16
      %v6904 = vrot.slane %v6902, 1
      %v6905 = vsel %vm2985, %v6900, %v6904
      %v6906 = vshrl.u32 %v6730, 16
      %v6908 = vor.u32 %v6906, %v6904
      %v6910 = vshll.u32 %v6731, 16
      %v6912 = vrot.slane %v6910, 1
      %v6913 = vsel %vm2985, %v6908, %v6912
      %v6914 = vshrl.u32 %v6731, 16
      %v6916 = vor.u32 %v6914, %v6912
      %v6918 = vshll.u32 %v6732, 16
      %v6920 = vrot.slane %v6918, 1
      %v6921 = vsel %vm2985, %v6916, %v6920
      %v6922 = vshrl.u32 %v6732, 16
      %v6924 = vor.u32 %v6922, %v6920
      %v6926 = vshll.u32 %v6733, 16
      %v6928 = vrot.slane %v6926, 1
      %v6929 = vsel %vm2985, %v6924, %v6928
      %v6970 = vunpack.c.l.b16 %v6595
      %v6971 = vunpack.c.l.b16 %v6596
      %v6972 = vunpack.c.l.b16 %v6597
      %v6973 = vunpack.c.l.b16 %v6598
      %v6974 = vunpack.c.l.b16 %v6599
      %v6975 = vunpack.c.l.b16 %v6600
      %v6976 = vunpack.c.l.b16 %v6601
      %v6977 = vunpack.c.l.b16 %v6602
      %v6978 = vunpack.c.l.b16 %v6603
      %v6979 = vunpack.c.l.b16 %v6604
      %v6980 = vunpack.c.l.b16 %v6605
      %v6981 = vunpack.c.l.b16 %v6606
      %v6982 = vunpack.c.l.b16 %v6607
      %v6983 = vunpack.c.l.b16 %v6608
      %v6984 = vunpack.c.l.b16 %v6609
      %v6985 = vunpack.c.l.b16 %v6610
      %v6986 = vpack.c.b16 %v6971, %v6970
      %v6987 = vpack.c.b16 %v6973, %v6972
      %v6988 = vpack.c.b16 %v6975, %v6974
      %v6989 = vpack.c.b16 %v6977, %v6976
      %v6990 = vpack.c.b16 %v6979, %v6978
      %v6991 = vpack.c.b16 %v6981, %v6980
      %v6992 = vpack.c.b16 %v6983, %v6982
      %v6993 = vpack.c.b16 %v6985, %v6984
      %7002 = vmatprep.subr.bf16.mxu0 0
      %7003 = vmatpush1.bf16.msra.mxu0 %v6993
      %7004 = vmatprep.subr.bf16.mxu0 0
      %7005 = vmatpush1.bf16.msra.mxu0 %v6992
      %7006 = vmatprep.subr.bf16.mxu0 0
      %7007 = vmatpush1.bf16.msra.mxu0 %v6991
      %7008 = vmatprep.subr.bf16.mxu0 0
      %7009 = vmatpush1.bf16.msra.mxu0 %v6990
      %7010 = vmatprep.subr.bf16.mxu0 0
      %7011 = vmatpush1.bf16.msra.mxu0 %v6989
      %7012 = vmatprep.subr.bf16.mxu0 0
      %7013 = vmatpush1.bf16.msra.mxu0 %v6988
      %7014 = vmatprep.subr.bf16.mxu0 0
      %7015 = vmatpush1.bf16.msra.mxu0 %v6987
      %7016 = vmatprep.subr.bf16.mxu0 0
      %7017 = vmatpush1.bf16.msra.mxu0 %v6986
      %7018 = vmatprep.subr.bf16.mxu0 0
      %7019 = vmatpush2.bf16.msra.mxu0 0
      %7020 = vmatprep.subr.bf16.mxu0 0
      %7021 = vmatpush2.bf16.msra.mxu0 0
      %7022 = vmatprep.subr.bf16.mxu0 0
      %7023 = vmatpush2.bf16.msra.mxu0 0
      %7024 = vmatprep.subr.bf16.mxu0 0
      %7025 = vmatpush2.bf16.msra.mxu0 0
      %7026 = vmatprep.subr.bf16.mxu0 0
      %7027 = vmatpush2.bf16.msra.mxu0 0
      %7028 = vmatprep.subr.bf16.mxu0 0
      %7029 = vmatpush2.bf16.msra.mxu0 0
      %7030 = vmatprep.subr.bf16.mxu0 0
      %7031 = vmatpush2.bf16.msra.mxu0 0
      %7032 = vmatprep.subr.bf16.mxu0 0
      %7033 = vmatpush2.bf16.msra.mxu0 0
      %7034 = vmatprep.mubr.bf16.mxu0 0
      %7035 = vmatmul.mubr.bf16.gmra.mxu0 %v6745
      %v7036 = vpop.f32.mrf.mxu0
      %v7037 = vadd.f32 0.0, %v7036
      %v7038 = vpop.f32.mrf.mxu0
      %v7039 = vpop.f32.mrf.mxu0
      %v7040 = vadd.f32 0.0, %v7039
      %v7041 = vpop.f32.mrf.mxu0
      %7042 = vmatprep.mubr.bf16.mxu0 0
      %7043 = vmatmul.mubr.bf16.gmra.mxu0 %v6753
      %v7044 = vpop.f32.mrf.mxu0
      %v7045 = vadd.f32 0.0, %v7044
      %v7046 = vpop.f32.mrf.mxu0
      %v7047 = vpop.f32.mrf.mxu0
      %v7048 = vadd.f32 0.0, %v7047
      %v7049 = vpop.f32.mrf.mxu0
      %7050 = vmatprep.mubr.bf16.mxu0 0
      %7051 = vmatmul.mubr.bf16.gmra.mxu0 %v6761
      %v7052 = vpop.f32.mrf.mxu0
      %v7053 = vadd.f32 0.0, %v7052
      %v7054 = vpop.f32.mrf.mxu0
      %v7055 = vpop.f32.mrf.mxu0
      %v7056 = vadd.f32 0.0, %v7055
      %v7057 = vpop.f32.mrf.mxu0
      %7058 = vmatprep.mubr.bf16.mxu0 0
      %7059 = vmatmul.mubr.bf16.gmra.mxu0 %v6769
      %v7060 = vpop.f32.mrf.mxu0
      %v7061 = vadd.f32 0.0, %v7060
      %v7062 = vpop.f32.mrf.mxu0
      %v7063 = vpop.f32.mrf.mxu0
      %v7064 = vadd.f32 0.0, %v7063
      %v7065 = vpop.f32.mrf.mxu0
      %7066 = vmatprep.mubr.bf16.mxu0 0
      %7067 = vmatmul.mubr.bf16.gmra.mxu0 %v6777
      %v7068 = vpop.f32.mrf.mxu0
      %v7069 = vadd.f32 0.0, %v7068
      %v7070 = vpop.f32.mrf.mxu0
      %v7071 = vpop.f32.mrf.mxu0
      %v7072 = vadd.f32 0.0, %v7071
      %v7073 = vpop.f32.mrf.mxu0
      %7074 = vmatprep.mubr.bf16.mxu0 0
      %7075 = vmatmul.mubr.bf16.gmra.mxu0 %v6785
      %v7076 = vpop.f32.mrf.mxu0
      %v7077 = vadd.f32 0.0, %v7076
      %v7078 = vpop.f32.mrf.mxu0
      %v7079 = vpop.f32.mrf.mxu0
      %v7080 = vadd.f32 0.0, %v7079
      %v7081 = vpop.f32.mrf.mxu0
      %7082 = vmatprep.mubr.bf16.mxu0 0
      %7083 = vmatmul.mubr.bf16.gmra.mxu0 %v6793
      %v7084 = vpop.f32.mrf.mxu0
      %v7085 = vadd.f32 0.0, %v7084
      %v7086 = vpop.f32.mrf.mxu0
      %v7087 = vpop.f32.mrf.mxu0
      %v7088 = vadd.f32 0.0, %v7087
      %v7089 = vpop.f32.mrf.mxu0
      %7090 = vmatprep.mubr.bf16.mxu0 0
      %7091 = vmatmul.mubr.bf16.gmra.mxu0 %v6801
      %v7092 = vpop.f32.mrf.mxu0
      %v7093 = vadd.f32 0.0, %v7092
      %v7094 = vpop.f32.mrf.mxu0
      %v7095 = vpop.f32.mrf.mxu0
      %v7096 = vadd.f32 0.0, %v7095
      %v7097 = vpop.f32.mrf.mxu0
      %7098 = vmatprep.mubr.bf16.mxu0 0
      %7099 = vmatmul.mubr.bf16.gmra.mxu0 %v6809
      %v7100 = vpop.f32.mrf.mxu0
      %v7101 = vadd.f32 0.0, %v7100
      %v7102 = vpop.f32.mrf.mxu0
      %v7103 = vpop.f32.mrf.mxu0
      %v7104 = vadd.f32 0.0, %v7103
      %v7105 = vpop.f32.mrf.mxu0
      %7106 = vmatprep.mubr.bf16.mxu0 0
      %7107 = vmatmul.mubr.bf16.gmra.mxu0 %v6817
      %v7108 = vpop.f32.mrf.mxu0
      %v7109 = vadd.f32 0.0, %v7108
      %v7110 = vpop.f32.mrf.mxu0
      %v7111 = vpop.f32.mrf.mxu0
      %v7112 = vadd.f32 0.0, %v7111
      %v7113 = vpop.f32.mrf.mxu0
      %7114 = vmatprep.mubr.bf16.mxu0 0
      %7115 = vmatmul.mubr.bf16.gmra.mxu0 %v6825
      %v7116 = vpop.f32.mrf.mxu0
      %v7117 = vadd.f32 0.0, %v7116
      %v7118 = vpop.f32.mrf.mxu0
      %v7119 = vpop.f32.mrf.mxu0
      %v7120 = vadd.f32 0.0, %v7119
      %v7121 = vpop.f32.mrf.mxu0
      %7122 = vmatprep.mubr.bf16.mxu0 0
      %7123 = vmatmul.mubr.bf16.gmra.mxu0 %v6833
      %v7124 = vpop.f32.mrf.mxu0
      %v7125 = vadd.f32 0.0, %v7124
      %v7126 = vpop.f32.mrf.mxu0
      %v7127 = vpop.f32.mrf.mxu0
      %v7128 = vadd.f32 0.0, %v7127
      %v7129 = vpop.f32.mrf.mxu0
      %7130 = vmatprep.mubr.bf16.mxu0 0
      %7131 = vmatmul.mubr.bf16.gmra.mxu0 %v6841
      %v7132 = vpop.f32.mrf.mxu0
      %v7133 = vadd.f32 0.0, %v7132
      %v7134 = vpop.f32.mrf.mxu0
      %v7135 = vpop.f32.mrf.mxu0
      %v7136 = vadd.f32 0.0, %v7135
      %v7137 = vpop.f32.mrf.mxu0
      %7138 = vmatprep.mubr.bf16.mxu0 0
      %7139 = vmatmul.mubr.bf16.gmra.mxu0 %v6849
      %v7140 = vpop.f32.mrf.mxu0
      %v7141 = vadd.f32 0.0, %v7140
      %v7142 = vpop.f32.mrf.mxu0
      %v7143 = vpop.f32.mrf.mxu0
      %v7144 = vadd.f32 0.0, %v7143
      %v7145 = vpop.f32.mrf.mxu0
      %7146 = vmatprep.mubr.bf16.mxu0 0
      %7147 = vmatmul.mubr.bf16.gmra.mxu0 %v6857
      %v7148 = vpop.f32.mrf.mxu0
      %v7149 = vadd.f32 0.0, %v7148
      %v7150 = vpop.f32.mrf.mxu0
      %v7151 = vpop.f32.mrf.mxu0
      %v7152 = vadd.f32 0.0, %v7151
      %v7153 = vpop.f32.mrf.mxu0
      %7154 = vmatprep.mubr.bf16.mxu0 0
      %7155 = vmatmul.mubr.bf16.gmra.mxu0 %v6865
      %v7156 = vpop.f32.mrf.mxu0
      %v7157 = vadd.f32 0.0, %v7156
      %v7158 = vpop.f32.mrf.mxu0
      %v7159 = vpop.f32.mrf.mxu0
      %v7160 = vadd.f32 0.0, %v7159
      %v7161 = vpop.f32.mrf.mxu0
      %7162 = vmatprep.mubr.bf16.mxu0 0
      %7163 = vmatmul.mubr.bf16.gmra.mxu0 %v6873
      %v7164 = vpop.f32.mrf.mxu0
      %v7165 = vadd.f32 0.0, %v7164
      %v7166 = vpop.f32.mrf.mxu0
      %v7167 = vpop.f32.mrf.mxu0
      %v7168 = vadd.f32 0.0, %v7167
      %v7169 = vpop.f32.mrf.mxu0
      %7170 = vmatprep.mubr.bf16.mxu0 0
      %7171 = vmatmul.mubr.bf16.gmra.mxu0 %v6881
      %v7172 = vpop.f32.mrf.mxu0
      %v7173 = vadd.f32 0.0, %v7172
      %v7174 = vpop.f32.mrf.mxu0
      %v7175 = vpop.f32.mrf.mxu0
      %v7176 = vadd.f32 0.0, %v7175
      %v7177 = vpop.f32.mrf.mxu0
      %7178 = vmatprep.mubr.bf16.mxu0 0
      %7179 = vmatmul.mubr.bf16.gmra.mxu0 %v6889
      %v7180 = vpop.f32.mrf.mxu0
      %v7181 = vadd.f32 0.0, %v7180
      %v7182 = vpop.f32.mrf.mxu0
      %v7183 = vpop.f32.mrf.mxu0
      %v7184 = vadd.f32 0.0, %v7183
      %v7185 = vpop.f32.mrf.mxu0
      %7186 = vmatprep.mubr.bf16.mxu0 0
      %7187 = vmatmul.mubr.bf16.gmra.mxu0 %v6897
      %v7188 = vpop.f32.mrf.mxu0
      %v7189 = vadd.f32 0.0, %v7188
      %v7190 = vpop.f32.mrf.mxu0
      %v7191 = vpop.f32.mrf.mxu0
      %v7192 = vadd.f32 0.0, %v7191
      %v7193 = vpop.f32.mrf.mxu0
      %7194 = vmatprep.mubr.bf16.mxu0 0
      %7195 = vmatmul.mubr.bf16.gmra.mxu0 %v6905
      %v7196 = vpop.f32.mrf.mxu0
      %v7197 = vadd.f32 0.0, %v7196
      %v7198 = vpop.f32.mrf.mxu0
      %v7199 = vpop.f32.mrf.mxu0
      %v7200 = vadd.f32 0.0, %v7199
      %v7201 = vpop.f32.mrf.mxu0
      %7202 = vmatprep.mubr.bf16.mxu0 0
      %7203 = vmatmul.mubr.bf16.gmra.mxu0 %v6913
      %v7204 = vpop.f32.mrf.mxu0
      %v7205 = vadd.f32 0.0, %v7204
      %v7206 = vpop.f32.mrf.mxu0
      %v7207 = vpop.f32.mrf.mxu0
      %v7208 = vadd.f32 0.0, %v7207
      %v7209 = vpop.f32.mrf.mxu0
      %7210 = vmatprep.mubr.bf16.mxu0 0
      %7211 = vmatmul.mubr.bf16.gmra.mxu0 %v6921
      %v7212 = vpop.f32.mrf.mxu0
      %v7213 = vadd.f32 0.0, %v7212
      %v7214 = vpop.f32.mrf.mxu0
      %v7215 = vpop.f32.mrf.mxu0
      %v7216 = vadd.f32 0.0, %v7215
      %v7217 = vpop.f32.mrf.mxu0
      %7218 = vmatprep.mubr.bf16.mxu0 0
      %7219 = vmatmul.mubr.bf16.gmra.mxu0 %v6929
      %v7220 = vpop.f32.mrf.mxu0
      %v7221 = vadd.f32 0.0, %v7220
      %v7222 = vpop.f32.mrf.mxu0
      %v7223 = vpop.f32.mrf.mxu0
      %v7224 = vadd.f32 0.0, %v7223
      %v7225 = vpop.f32.mrf.mxu0
      %7226 = vdwg.mxu0
      %v7227 = vadd.f32 %v6497, %v7037
      %v7228 = vadd.f32 %v6498, %v7040
      %v7229 = vadd.f32 %v6499, %v7045
      %v7230 = vadd.f32 %v6500, %v7048
      %v7231 = vadd.f32 %v6501, %v7053
      %v7232 = vadd.f32 %v6502, %v7056
      %v7233 = vadd.f32 %v6503, %v7061
      %v7234 = vadd.f32 %v6504, %v7064
      %v7235 = vadd.f32 %v6505, %v7069
      %v7236 = vadd.f32 %v6506, %v7072
      %v7237 = vadd.f32 %v6507, %v7077
      %v7238 = vadd.f32 %v6508, %v7080
      %v7239 = vadd.f32 %v6509, %v7085
      %v7240 = vadd.f32 %v6510, %v7088
      %v7241 = vadd.f32 %v6511, %v7093
      %v7242 = vadd.f32 %v6512, %v7096
      %v7243 = vadd.f32 %v6513, %v7101
      %v7244 = vadd.f32 %v6514, %v7104
      %v7245 = vadd.f32 %v6515, %v7109
      %v7246 = vadd.f32 %v6516, %v7112
      %v7247 = vadd.f32 %v6517, %v7117
      %v7248 = vadd.f32 %v6518, %v7120
      %v7249 = vadd.f32 %v6519, %v7125
      %v7250 = vadd.f32 %v6520, %v7128
      %v7251 = vadd.f32 %v6521, %v7133
      %v7252 = vadd.f32 %v6522, %v7136
      %v7253 = vadd.f32 %v6523, %v7141
      %v7254 = vadd.f32 %v6524, %v7144
      %v7255 = vadd.f32 %v6525, %v7149
      %v7256 = vadd.f32 %v6526, %v7152
      %v7257 = vadd.f32 %v6527, %v7157
      %v7258 = vadd.f32 %v6528, %v7160
      %v7259 = vadd.f32 %v6529, %v7165
      %v7260 = vadd.f32 %v6530, %v7168
      %v7261 = vadd.f32 %v6531, %v7173
      %v7262 = vadd.f32 %v6532, %v7176
      %v7263 = vadd.f32 %v6533, %v7181
      %v7264 = vadd.f32 %v6534, %v7184
      %v7265 = vadd.f32 %v6535, %v7189
      %v7266 = vadd.f32 %v6536, %v7192
      %v7267 = vadd.f32 %v6537, %v7197
      %v7268 = vadd.f32 %v6538, %v7200
      %v7269 = vadd.f32 %v6539, %v7205
      %v7270 = vadd.f32 %v6540, %v7208
      %v7271 = vadd.f32 %v6541, %v7213
      %v7272 = vadd.f32 %v6542, %v7216
      %v7273 = vadd.f32 %v6543, %v7221
      %v7274 = vadd.f32 %v6544, %v7224
      %v7275 = vsel %vm1404, %v7227, 0.0
      %v7276 = vsel %vm1405, %v7228, 0.0
      %v7277 = vsel %vm1406, %v7229, 0.0
      %v7278 = vsel %vm1407, %v7230, 0.0
      %v7279 = vsel %vm1408, %v7231, 0.0
      %v7280 = vsel %vm1409, %v7232, 0.0
      %v7281 = vsel %vm1410, %v7233, 0.0
      %v7282 = vsel %vm1411, %v7234, 0.0
      %v7283 = vsel %vm1412, %v7235, 0.0
      %v7284 = vsel %vm1413, %v7236, 0.0
      %v7285 = vsel %vm1414, %v7237, 0.0
      %v7286 = vsel %vm1415, %v7238, 0.0
      %v7287 = vsel %vm1416, %v7239, 0.0
      %v7288 = vsel %vm1417, %v7240, 0.0
      %v7289 = vsel %vm1418, %v7241, 0.0
      %v7290 = vsel %vm1419, %v7242, 0.0
      %v7291 = vsel %vm1420, %v7243, 0.0
      %v7292 = vsel %vm1421, %v7244, 0.0
      %v7293 = vsel %vm1422, %v7245, 0.0
      %v7294 = vsel %vm1423, %v7246, 0.0
      %v7295 = vsel %vm1424, %v7247, 0.0
      %v7296 = vsel %vm1425, %v7248, 0.0
      %v7297 = vsel %vm1426, %v7249, 0.0
      %v7298 = vsel %vm1427, %v7250, 0.0
      %v7299 = vsel %vm1428, %v7251, 0.0
      %v7300 = vsel %vm1429, %v7252, 0.0
      %v7301 = vsel %vm1430, %v7253, 0.0
      %v7302 = vsel %vm1431, %v7254, 0.0
      %v7303 = vsel %vm1432, %v7255, 0.0
      %v7304 = vsel %vm1433, %v7256, 0.0
      %v7305 = vsel %vm1434, %v7257, 0.0
      %v7306 = vsel %vm1435, %v7258, 0.0
      %v7307 = vsel %vm1436, %v7259, 0.0
      %v7308 = vsel %vm1437, %v7260, 0.0
      %v7309 = vsel %vm1438, %v7261, 0.0
      %v7310 = vsel %vm1439, %v7262, 0.0
      %v7311 = vsel %vm1440, %v7263, 0.0
      %v7312 = vsel %vm1441, %v7264, 0.0
      %v7313 = vsel %vm1442, %v7265, 0.0
      %v7314 = vsel %vm1443, %v7266, 0.0
      %v7315 = vsel %vm1444, %v7267, 0.0
      %v7316 = vsel %vm1445, %v7268, 0.0
      %v7317 = vsel %vm1446, %v7269, 0.0
      %v7318 = vsel %vm1447, %v7270, 0.0
      %v7319 = vsel %vm1448, %v7271, 0.0
      %v7320 = vsel %vm1449, %v7272, 0.0
      %v7321 = vsel %vm1450, %v7273, 0.0
      %v7322 = vsel %vm1451, %v7274, 0.0
      %v7323 = vpack.c.bf16 %v7276, %v7275
      %v7324 = vpack.c.bf16 %v7278, %v7277
      %v7325 = vpack.c.bf16 %v7280, %v7279
      %v7326 = vpack.c.bf16 %v7282, %v7281
      %v7327 = vpack.c.bf16 %v7284, %v7283
      %v7328 = vpack.c.bf16 %v7286, %v7285
      %v7329 = vpack.c.bf16 %v7288, %v7287
      %v7330 = vpack.c.bf16 %v7290, %v7289
      %v7331 = vpack.c.bf16 %v7292, %v7291
      %v7332 = vpack.c.bf16 %v7294, %v7293
      %v7333 = vpack.c.bf16 %v7296, %v7295
      %v7334 = vpack.c.bf16 %v7298, %v7297
      %v7335 = vpack.c.bf16 %v7300, %v7299
      %v7336 = vpack.c.bf16 %v7302, %v7301
      %v7337 = vpack.c.bf16 %v7304, %v7303
      %v7338 = vpack.c.bf16 %v7306, %v7305
      %v7339 = vpack.c.bf16 %v7308, %v7307
      %v7340 = vpack.c.bf16 %v7310, %v7309
      %v7341 = vpack.c.bf16 %v7312, %v7311
      %v7342 = vpack.c.bf16 %v7314, %v7313
      %v7343 = vpack.c.bf16 %v7316, %v7315
      %v7344 = vpack.c.bf16 %v7318, %v7317
      %v7345 = vpack.c.bf16 %v7320, %v7319
      %v7346 = vpack.c.bf16 %v7322, %v7321
      %v7371 = vunpack.c.l.b16 %v7323
      %v7372 = vunpack.c.h.b16 %v7323
      %v7373 = vunpack.c.l.b16 %v7324
      %v7374 = vunpack.c.h.b16 %v7324
      %v7375 = vunpack.c.l.b16 %v7325
      %v7376 = vunpack.c.h.b16 %v7325
      %v7377 = vunpack.c.l.b16 %v7326
      %v7378 = vunpack.c.h.b16 %v7326
      %v7379 = vunpack.c.l.b16 %v7327
      %v7380 = vunpack.c.h.b16 %v7327
      %v7381 = vunpack.c.l.b16 %v7328
      %v7382 = vunpack.c.h.b16 %v7328
      %v7383 = vunpack.c.l.b16 %v7329
      %v7384 = vunpack.c.h.b16 %v7329
      %v7385 = vunpack.c.l.b16 %v7330
      %v7386 = vunpack.c.h.b16 %v7330
      %v7387 = vunpack.c.l.b16 %v7331
      %v7388 = vunpack.c.h.b16 %v7331
      %v7389 = vunpack.c.l.b16 %v7332
      %v7390 = vunpack.c.h.b16 %v7332
      %v7391 = vunpack.c.l.b16 %v7333
      %v7392 = vunpack.c.h.b16 %v7333
      %v7393 = vunpack.c.l.b16 %v7334
      %v7394 = vunpack.c.h.b16 %v7334
      %v7395 = vunpack.c.l.b16 %v7335
      %v7396 = vunpack.c.h.b16 %v7335
      %v7397 = vunpack.c.l.b16 %v7336
      %v7398 = vunpack.c.h.b16 %v7336
      %v7399 = vunpack.c.l.b16 %v7337
      %v7400 = vunpack.c.h.b16 %v7337
      %v7401 = vunpack.c.l.b16 %v7338
      %v7402 = vunpack.c.h.b16 %v7338
      %v7403 = vunpack.c.l.b16 %v7339
      %v7404 = vunpack.c.h.b16 %v7339
      %v7405 = vunpack.c.l.b16 %v7340
      %v7406 = vunpack.c.h.b16 %v7340
      %v7407 = vunpack.c.l.b16 %v7341
      %v7408 = vunpack.c.h.b16 %v7341
      %v7409 = vunpack.c.l.b16 %v7342
      %v7410 = vunpack.c.h.b16 %v7342
      %v7411 = vunpack.c.l.b16 %v7343
      %v7412 = vunpack.c.h.b16 %v7343
      %v7413 = vunpack.c.l.b16 %v7344
      %v7414 = vunpack.c.h.b16 %v7344
      %v7415 = vunpack.c.l.b16 %v7345
      %v7416 = vunpack.c.h.b16 %v7345
      %v7417 = vunpack.c.l.b16 %v7346
      %v7418 = vunpack.c.h.b16 %v7346
      %v7419 = vpack.c.b16 %v7371, %v7371
      %v7420 = vpack.c.b16 %v7372, %v7372
      %v7421 = vpack.c.b16 %v7373, %v7373
      %v7422 = vpack.c.b16 %v7374, %v7374
      %v7423 = vpack.c.b16 %v7375, %v7375
      %v7424 = vpack.c.b16 %v7376, %v7376
      %v7425 = vpack.c.b16 %v7377, %v7377
      %v7426 = vpack.c.b16 %v7378, %v7378
      %v7427 = vpack.c.b16 %v7379, %v7379
      %v7428 = vpack.c.b16 %v7380, %v7380
      %v7429 = vpack.c.b16 %v7381, %v7381
      %v7430 = vpack.c.b16 %v7382, %v7382
      %v7431 = vpack.c.b16 %v7383, %v7383
      %v7432 = vpack.c.b16 %v7384, %v7384
      %v7433 = vpack.c.b16 %v7385, %v7385
      %v7434 = vpack.c.b16 %v7386, %v7386
      %v7435 = vpack.c.b16 %v7387, %v7387
      %v7436 = vpack.c.b16 %v7388, %v7388
      %v7437 = vpack.c.b16 %v7389, %v7389
      %v7438 = vpack.c.b16 %v7390, %v7390
      %v7439 = vpack.c.b16 %v7391, %v7391
      %v7440 = vpack.c.b16 %v7392, %v7392
      %v7441 = vpack.c.b16 %v7393, %v7393
      %v7442 = vpack.c.b16 %v7394, %v7394
      %v7443 = vpack.c.b16 %v7395, %v7395
      %v7444 = vpack.c.b16 %v7396, %v7396
      %v7445 = vpack.c.b16 %v7397, %v7397
      %v7446 = vpack.c.b16 %v7398, %v7398
      %v7447 = vpack.c.b16 %v7399, %v7399
      %v7448 = vpack.c.b16 %v7400, %v7400
      %v7449 = vpack.c.b16 %v7401, %v7401
      %v7450 = vpack.c.b16 %v7402, %v7402
      %v7451 = vpack.c.b16 %v7403, %v7403
      %v7452 = vpack.c.b16 %v7404, %v7404
      %v7453 = vpack.c.b16 %v7405, %v7405
      %v7454 = vpack.c.b16 %v7406, %v7406
      %v7455 = vpack.c.b16 %v7407, %v7407
      %v7456 = vpack.c.b16 %v7408, %v7408
      %v7457 = vpack.c.b16 %v7409, %v7409
      %v7458 = vpack.c.b16 %v7410, %v7410
      %v7459 = vpack.c.b16 %v7411, %v7411
      %v7460 = vpack.c.b16 %v7412, %v7412
      %v7461 = vpack.c.b16 %v7413, %v7413
      %v7462 = vpack.c.b16 %v7414, %v7414
      %v7463 = vpack.c.b16 %v7415, %v7415
      %v7464 = vpack.c.b16 %v7416, %v7416
      %v7465 = vpack.c.b16 %v7417, %v7417
      %v7466 = vpack.c.b16 %v7418, %v7418
      %7515 = vst [vmem:[%s231] sm:$0xf] %v7419
      %7516 = vst [vmem:[%s231 + $0x4] sm:$0xf] %v7420
      %7517 = vst [vmem:[%s231 + $0x8] sm:$0xf] %v7421
      %7518 = vst [vmem:[%s231 + $0xc] sm:$0xf] %v7422
      %7519 = vst [vmem:[%s231 + $0x10] sm:$0xf] %v7423
      %7520 = vst [vmem:[%s231 + $0x14] sm:$0xf] %v7424
      %7521 = vst [vmem:[%s231 + $0x18] sm:$0xf] %v7425
      %7522 = vst [vmem:[%s231 + $0x1c] sm:$0xf] %v7426
      %7523 = vst [vmem:[%s231 + $0x20] sm:$0xf] %v7427
      %7524 = vst [vmem:[%s231 + $0x24] sm:$0xf] %v7428
      %7525 = vst [vmem:[%s231 + $0x28] sm:$0xf] %v7429
      %7526 = vst [vmem:[%s231 + $0x2c] sm:$0xf] %v7430
      %7527 = vst [vmem:[%s231 + $0x30] sm:$0xf] %v7431
      %7528 = vst [vmem:[%s231 + $0x34] sm:$0xf] %v7432
      %7529 = vst [vmem:[%s231 + $0x38] sm:$0xf] %v7433
      %7530 = vst [vmem:[%s231 + $0x3c] sm:$0xf] %v7434
      %7531 = vst [vmem:[%s231 + $0x40] sm:$0xf] %v7435
      %7532 = vst [vmem:[%s231 + $0x44] sm:$0xf] %v7436
      %7533 = vst [vmem:[%s231 + $0x48] sm:$0xf] %v7437
      %7534 = vst [vmem:[%s231 + $0x4c] sm:$0xf] %v7438
      %7535 = vst [vmem:[%s231 + $0x50] sm:$0xf] %v7439
      %7536 = vst [vmem:[%s231 + $0x54] sm:$0xf] %v7440
      %7537 = vst [vmem:[%s231 + $0x58] sm:$0xf] %v7441
      %7538 = vst [vmem:[%s231 + $0x5c] sm:$0xf] %v7442
      %7539 = vst [vmem:[%s231 + $0x60] sm:$0xf] %v7443
      %7540 = vst [vmem:[%s231 + $0x64] sm:$0xf] %v7444
      %7541 = vst [vmem:[%s231 + $0x68] sm:$0xf] %v7445
      %7542 = vst [vmem:[%s231 + $0x6c] sm:$0xf] %v7446
      %7543 = vst [vmem:[%s231 + $0x70] sm:$0xf] %v7447
      %7544 = vst [vmem:[%s231 + $0x74] sm:$0xf] %v7448
      %7545 = vst [vmem:[%s231 + $0x78] sm:$0xf] %v7449
      %7546 = vst [vmem:[%s231 + $0x7c] sm:$0xf] %v7450
      %7547 = vst [vmem:[%s231 + $0x80] sm:$0xf] %v7451
      %7548 = vst [vmem:[%s231 + $0x84] sm:$0xf] %v7452
      %7549 = vst [vmem:[%s231 + $0x88] sm:$0xf] %v7453
      %7550 = vst [vmem:[%s231 + $0x8c] sm:$0xf] %v7454
      %7551 = vst [vmem:[%s231 + $0x90] sm:$0xf] %v7455
      %7552 = vst [vmem:[%s231 + $0x94] sm:$0xf] %v7456
      %7553 = vst [vmem:[%s231 + $0x98] sm:$0xf] %v7457
      %7554 = vst [vmem:[%s231 + $0x9c] sm:$0xf] %v7458
      %7555 = vst [vmem:[%s231 + $0xa0] sm:$0xf] %v7459
      %7556 = vst [vmem:[%s231 + $0xa4] sm:$0xf] %v7460
      %7557 = vst [vmem:[%s231 + $0xa8] sm:$0xf] %v7461
      %7558 = vst [vmem:[%s231 + $0xac] sm:$0xf] %v7462
      %7559 = vst [vmem:[%s231 + $0xb0] sm:$0xf] %v7463
      %7560 = vst [vmem:[%s231 + $0xb4] sm:$0xf] %v7464
      %7561 = vst [vmem:[%s231 + $0xb8] sm:$0xf] %v7465
      %7562 = vst [vmem:[%s231 + $0xbc] sm:$0xf] %v7466
      %v7563 = vadd.f32 %v7275, %v7276
      %v7564 = vadd.f32 %v7563, %v7277
      %v7565 = vadd.f32 %v7564, %v7278
      %v7566 = vadd.f32 %v7565, %v7279
      %v7567 = vadd.f32 %v7566, %v7280
      %v7568 = vadd.f32 %v7567, %v7281
      %v7569 = vadd.f32 %v7568, %v7282
      %v7570 = vadd.f32 %v7569, %v7283
      %v7571 = vadd.f32 %v7570, %v7284
      %v7572 = vadd.f32 %v7571, %v7285
      %v7573 = vadd.f32 %v7572, %v7286
      %v7574 = vadd.f32 %v7573, %v7287
      %v7575 = vadd.f32 %v7574, %v7288
      %v7576 = vadd.f32 %v7575, %v7289
      %v7577 = vadd.f32 %v7576, %v7290
      %v7578 = vadd.f32 %v7577, %v7291
      %v7579 = vadd.f32 %v7578, %v7292
      %v7580 = vadd.f32 %v7579, %v7293
      %v7581 = vadd.f32 %v7580, %v7294
      %v7582 = vadd.f32 %v7581, %v7295
      %v7583 = vadd.f32 %v7582, %v7296
      %v7584 = vadd.f32 %v7583, %v7297
      %v7585 = vadd.f32 %v7584, %v7298
      %v7586 = vadd.f32 %v7585, %v7299
      %v7587 = vadd.f32 %v7586, %v7300
      %v7588 = vadd.f32 %v7587, %v7301
      %v7589 = vadd.f32 %v7588, %v7302
      %v7590 = vadd.f32 %v7589, %v7303
      %v7591 = vadd.f32 %v7590, %v7304
      %v7592 = vadd.f32 %v7591, %v7305
      %v7593 = vadd.f32 %v7592, %v7306
      %v7594 = vadd.f32 %v7593, %v7307
      %v7595 = vadd.f32 %v7594, %v7308
      %v7596 = vadd.f32 %v7595, %v7309
      %v7597 = vadd.f32 %v7596, %v7310
      %v7598 = vadd.f32 %v7597, %v7311
      %v7599 = vadd.f32 %v7598, %v7312
      %v7600 = vadd.f32 %v7599, %v7313
      %v7601 = vadd.f32 %v7600, %v7314
      %v7602 = vadd.f32 %v7601, %v7315
      %v7603 = vadd.f32 %v7602, %v7316
      %v7604 = vadd.f32 %v7603, %v7317
      %v7605 = vadd.f32 %v7604, %v7318
      %v7606 = vadd.f32 %v7605, %v7319
      %v7607 = vadd.f32 %v7606, %v7320
      %v7608 = vadd.f32 %v7607, %v7321
      %v7609 = vadd.f32 %v7608, %v7322
      %v7610 = vrot.slane %v7609, 4
      %v7611 = vadd.f32 %v7609, %v7610
      %v7612 = vrot.slane %v7611, 2
      %v7613 = vadd.f32 %v7611, %v7612
      %v7614 = vrot.slane %v7613, 1
      %v7615 = vadd.f32 %v7613, %v7614
      %7616 = vst [vmem:[%s235] sm:$0x1] %v7615
      %v7617 = vmul.f32 %v7275, %v7275
      %v7618 = vmul.f32 %v7276, %v7276
      %v7619 = vmul.f32 %v7277, %v7277
      %v7620 = vmul.f32 %v7278, %v7278
      %v7621 = vmul.f32 %v7279, %v7279
      %v7622 = vmul.f32 %v7280, %v7280
      %v7623 = vmul.f32 %v7281, %v7281
      %v7624 = vmul.f32 %v7282, %v7282
      %v7625 = vmul.f32 %v7283, %v7283
      %v7626 = vmul.f32 %v7284, %v7284
      %v7627 = vmul.f32 %v7285, %v7285
      %v7628 = vmul.f32 %v7286, %v7286
      %v7629 = vmul.f32 %v7287, %v7287
      %v7630 = vmul.f32 %v7288, %v7288
      %v7631 = vmul.f32 %v7289, %v7289
      %v7632 = vmul.f32 %v7290, %v7290
      %v7633 = vmul.f32 %v7291, %v7291
      %v7634 = vmul.f32 %v7292, %v7292
      %v7635 = vmul.f32 %v7293, %v7293
      %v7636 = vmul.f32 %v7294, %v7294
      %v7637 = vmul.f32 %v7295, %v7295
      %v7638 = vmul.f32 %v7296, %v7296
      %v7639 = vmul.f32 %v7297, %v7297
      %v7640 = vmul.f32 %v7298, %v7298
      %v7641 = vmul.f32 %v7299, %v7299
      %v7642 = vmul.f32 %v7300, %v7300
      %v7643 = vmul.f32 %v7301, %v7301
      %v7644 = vmul.f32 %v7302, %v7302
      %v7645 = vmul.f32 %v7303, %v7303
      %v7646 = vmul.f32 %v7304, %v7304
      %v7647 = vmul.f32 %v7305, %v7305
      %v7648 = vmul.f32 %v7306, %v7306
      %v7649 = vmul.f32 %v7307, %v7307
      %v7650 = vmul.f32 %v7308, %v7308
      %v7651 = vmul.f32 %v7309, %v7309
      %v7652 = vmul.f32 %v7310, %v7310
      %v7653 = vmul.f32 %v7311, %v7311
      %v7654 = vmul.f32 %v7312, %v7312
      %v7655 = vmul.f32 %v7313, %v7313
      %v7656 = vmul.f32 %v7314, %v7314
      %v7657 = vmul.f32 %v7315, %v7315
      %v7658 = vmul.f32 %v7316, %v7316
      %v7659 = vmul.f32 %v7317, %v7317
      %v7660 = vmul.f32 %v7318, %v7318
      %v7661 = vmul.f32 %v7319, %v7319
      %v7662 = vmul.f32 %v7320, %v7320
      %v7663 = vmul.f32 %v7321, %v7321
      %v7664 = vmul.f32 %v7322, %v7322
      %v7665 = vadd.f32 %v7617, %v7618
      %v7666 = vadd.f32 %v7665, %v7619
      %v7667 = vadd.f32 %v7666, %v7620
      %v7668 = vadd.f32 %v7667, %v7621
      %v7669 = vadd.f32 %v7668, %v7622
      %v7670 = vadd.f32 %v7669, %v7623
      %v7671 = vadd.f32 %v7670, %v7624
      %v7672 = vadd.f32 %v7671, %v7625
      %v7673 = vadd.f32 %v7672, %v7626
      %v7674 = vadd.f32 %v7673, %v7627
      %v7675 = vadd.f32 %v7674, %v7628
      %v7676 = vadd.f32 %v7675, %v7629
      %v7677 = vadd.f32 %v7676, %v7630
      %v7678 = vadd.f32 %v7677, %v7631
      %v7679 = vadd.f32 %v7678, %v7632
      %v7680 = vadd.f32 %v7679, %v7633
      %v7681 = vadd.f32 %v7680, %v7634
      %v7682 = vadd.f32 %v7681, %v7635
      %v7683 = vadd.f32 %v7682, %v7636
      %v7684 = vadd.f32 %v7683, %v7637
      %v7685 = vadd.f32 %v7684, %v7638
      %v7686 = vadd.f32 %v7685, %v7639
      %v7687 = vadd.f32 %v7686, %v7640
      %v7688 = vadd.f32 %v7687, %v7641
      %v7689 = vadd.f32 %v7688, %v7642
      %v7690 = vadd.f32 %v7689, %v7643
      %v7691 = vadd.f32 %v7690, %v7644
      %v7692 = vadd.f32 %v7691, %v7645
      %v7693 = vadd.f32 %v7692, %v7646
      %v7694 = vadd.f32 %v7693, %v7647
      %v7695 = vadd.f32 %v7694, %v7648
      %v7696 = vadd.f32 %v7695, %v7649
      %v7697 = vadd.f32 %v7696, %v7650
      %v7698 = vadd.f32 %v7697, %v7651
      %v7699 = vadd.f32 %v7698, %v7652
      %v7700 = vadd.f32 %v7699, %v7653
      %v7701 = vadd.f32 %v7700, %v7654
      %v7702 = vadd.f32 %v7701, %v7655
      %v7703 = vadd.f32 %v7702, %v7656
      %v7704 = vadd.f32 %v7703, %v7657
      %v7705 = vadd.f32 %v7704, %v7658
      %v7706 = vadd.f32 %v7705, %v7659
      %v7707 = vadd.f32 %v7706, %v7660
      %v7708 = vadd.f32 %v7707, %v7661
      %v7709 = vadd.f32 %v7708, %v7662
      %v7710 = vadd.f32 %v7709, %v7663
      %v7711 = vadd.f32 %v7710, %v7664
      %v7712 = vrot.slane %v7711, 4
      %v7713 = vadd.f32 %v7711, %v7712
      %v7714 = vrot.slane %v7713, 2
      %v7715 = vadd.f32 %v7713, %v7714
      %v7716 = vrot.slane %v7715, 1
      %v7717 = vadd.f32 %v7715, %v7716
      %7718 = vst [vmem:[%s235 + $0x1] sm:$0x1] %v7717
      %p7719 = scmp.lt.s32.totalorder %s17, 1
      %s7720 = scalar_select %p7719, %s17, 1
      %s7721 = smul.addr %s7720, 48
      %s7722 = smul.addr %s7721, 4
      %s7723 = scalar_lea.vmem %s4, %s7722
      %p7724 = scmp.lt.s32.totalorder %s17, 1
      %s7725 = scalar_select %p7724, %s17, 1
      %s7726 = smul.addr %s7725, 2
      %s7727 = scalar_lea.vmem %s5, %s7726
      // Predicated region
      $region37: #{encoder_block_pallas.4} parent=35 // pred_check
        %p7728 = pneg %p124
      $region38: #{encoder_block_pallas.4} parent=35 // pred_check_branch
        %7730 = sbr.rel (%p7728) target = $region40
      $region39: #{encoder_block_pallas.4} parent=35 // pred_region
        _
      $region40: #{encoder_block_pallas.4} parent=35 // pred_fallthru
        _
      // Predicated region
      $region41: #{encoder_block_pallas.4} parent=35 // pred_check
        %p7731 = pneg %p150
      $region42: #{encoder_block_pallas.4} parent=35 // pred_check_branch
        %7733 = sbr.rel (%p7731) target = $region44
      $region43: #{encoder_block_pallas.4} parent=35 // pred_region
        _
      $region44: #{encoder_block_pallas.4} parent=35 // pred_fallthru
        _
    $region36: #{encoder_block_pallas.4} parent=5 // pred_fallthru
      _
    %p7734 = scmp.le.s32.totalorder 2, %s12
    // Predicated region
    $region45: #{encoder_block_pallas.4} parent=5 // pred_check
      %p7735 = pneg %p7734
    $region46: #{encoder_block_pallas.4} parent=5 // pred_check_branch
      %7737 = sbr.rel (%p7735) target = $region48
    $region47: #{encoder_block_pallas.4} parent=5 // pred_region
      %s7738 = ssub.s32 %s12, 2
      // Predicated region
      $region49: #{encoder_block_pallas.4} parent=47 // pred_check
        %p7739 = pneg %p130
      $region50: #{encoder_block_pallas.4} parent=47 // pred_check_branch
        %7741 = sbr.rel (%p7739) target = $region52
      $region51: #{encoder_block_pallas.4} parent=47 // pred_region
        %p7742 = scmp.lt.s32.totalorder %s18, 1
        %s7743 = scalar_select %p7742, %s18, 1
        %s7744 = smul.addr %s7743, 48
        %s7745 = smul.addr %s7744, 4
        %s7746 = scalar_lea.vmem %s4, %s7745
      $region52: #{encoder_block_pallas.4} parent=47 // pred_fallthru
        _
      // Predicated region
      $region53: #{encoder_block_pallas.4} parent=47 // pred_check
        %p7747 = pneg %p156
      $region54: #{encoder_block_pallas.4} parent=47 // pred_check_branch
        %7749 = sbr.rel (%p7747) target = $region56
      $region55: #{encoder_block_pallas.4} parent=47 // pred_region
        %p7750 = scmp.lt.s32.totalorder %s18, 1
        %s7751 = scalar_select %p7750, %s18, 1
        %s7752 = smul.addr %s7751, 2
        %s7753 = scalar_lea.vmem %s5, %s7752
      $region56: #{encoder_block_pallas.4} parent=47 // pred_fallthru
        _
    $region48: #{encoder_block_pallas.4} parent=5 // pred_fallthru
      _
  $region6: #{encoder_block_pallas.4} parent=0 // loop_footer
    %s16 = sadd.s32 1, %s12
  $region7: #{encoder_block_pallas.4} parent=0 // loop_footer_branch
    %11 = sbr.rel target = $region3
  $region8: #{encoder_block_pallas.4} parent=0 // loop_exit
    _

</llo_original>
